<compile_context>
chip_gen: v5e
topology: v5e:2x2
jax: 0.10.0
libtpu: 0.0.40
codegen_flags: <defaults>
</compile_context>

<pallas_src>
import functools

import jax
import jax.numpy as jnp
from jax.experimental import pallas as pl
from jax.experimental.pallas import tpu as pltpu


LANE = 128
_VEC_ROWS = ("bo", "ln1g", "ln1b", "b2", "ln2g", "ln2b")


def _round_up(x, m):
    return (x + m - 1) // m * m


def _pad2(a, rows, cols):
    return jnp.pad(a, ((0, rows - a.shape[0]), (0, cols - a.shape[1])))


def _pick_tile(total, cap):
    """Largest multiple of 128 <= cap that divides `total` (total % 128 == 0)."""
    best = min(LANE, total)
    t = LANE
    while t <= min(cap, total):
        if total % t == 0:
            best = t
        t += LANE
    return best


def _const_spec(block_shape, index_map):
    """BlockSpec for a grid-invariant operand, single-buffered to save VMEM
    (matters on v7x's 64 MiB). Falls back to default buffering if this JAX
    build does not accept pipeline_mode."""
    try:
        return pl.BlockSpec(block_shape, index_map, pipeline_mode=pl.Buffered(1))
    except (TypeError, AttributeError):
        return pl.BlockSpec(block_shape, index_map)


# ----------------------------------------------------------------------------
# Kernel 1: input embedding + fused q/k/v projection (lane-dense outputs)
# ----------------------------------------------------------------------------
def embed_qkv_kernel(mm_dtype, x_ref, wemb_ref, bemb_ref, wqkv_ref, bqkv_ref,
                     h_ref, q_ref, k_ref, v_ref):
    # x_ref: (1, TT, Dp) f32; weights mm_dtype; biases f32.
    hp = h_ref.shape[-1]
    x = x_ref[0].astype(mm_dtype)
    h = jnp.dot(x, wemb_ref[...], preferred_element_type=jnp.float32) + bemb_ref[...]
    h_mm = h.astype(mm_dtype)
    h_ref[0] = h_mm
    qkv = jnp.dot(h_mm, wqkv_ref[...],
                  preferred_element_type=jnp.float32) + bqkv_ref[...]
    # lane-aligned static splits (offsets are multiples of h_pad=128): cheap,
    # keeps every HBM write lane-dense (no head-minor layouts in HBM).
    q_ref[0] = qkv[:, 0:hp].astype(q_ref.dtype)
    k_ref[0] = qkv[:, hp:2 * hp].astype(k_ref.dtype)
    v_ref[0] = qkv[:, 2 * hp:3 * hp].astype(v_ref.dtype)


# ----------------------------------------------------------------------------
# Kernel 2: flash-style attention (online softmax over KV tiles) + FFN + LNs
# ----------------------------------------------------------------------------
def _layer_norm_padded(x, gamma, beta, n_valid, eps=1e-5):
    # x: (T, Hp) where columns >= n_valid are identically zero (zero-padded
    # weights/biases/gammas guarantee this); correct the stats for that.
    n_pad = x.shape[-1] - n_valid
    inv_n = 1.0 / float(n_valid)
    mean = jnp.sum(x, axis=-1, keepdims=True) * inv_n
    ss = jnp.sum((x - mean) * (x - mean), axis=-1, keepdims=True)
    var = (ss - float(n_pad) * mean * mean) * inv_n
    return (x - mean) * jax.lax.rsqrt(var + eps) * gamma + beta


def attn_ffn_kernel(hidden, num_heads, seq_len, needs_mask, mm_dtype,
                    h_ref, q_ref, k_ref, v_ref,
                    wo_ref, w1_ref, b1_ref, w2_ref, vec_ref,
                    o_ref, m_sc, l_sc, acc_sc):
    # h_ref: (1, TQ, Hp) mm_dtype   residual stream for this query tile
    # q_ref: (1, TQ, Hp) mm_dtype   already scaled by 1/sqrt(hd)
    # k_ref/v_ref: (1, TK, Hp)      current KV tile (flash loop over grid axis 2)
    # wo_ref: (Hp, Hp)  w1: (Hp, Fp)  b1: (1, Fp)  w2: (Fp, Hp)
    # vec_ref: (6, Hp) rows = [bo, ln1_g, ln1_b, b2, ln2_g, ln2_b]
    hd = hidden // num_heads
    kj = pl.program_id(2)
    tile_k = k_ref.shape[1]

    @pl.when(kj == 0)
    def _():
        m_sc[...] = jnp.full_like(m_sc, -1e30)
        l_sc[...] = jnp.zeros_like(l_sc)
        acc_sc[...] = jnp.zeros_like(acc_sc)

    # --- on-chip head split (static lane slices, no HBM transpose) -----------
    q2 = q_ref[0]
    k2 = k_ref[0]
    v2 = v_ref[0]

    def heads(x2d):  # (Tt, Hp) -> (NH, Tt, hd)
        return jnp.concatenate(
            [x2d[None, :, n * hd:(n + 1) * hd] for n in range(num_heads)], axis=0)

    q_h = heads(q2)
    k_h = heads(k2)
    v_h = heads(v2)

    # --- online softmax update for this KV tile ------------------------------
    s = jax.lax.dot_general(q_h, k_h, (((2,), (2,)), ((0,), (0,))),
                            preferred_element_type=jnp.float32)     # (NH, TQ, TK)
    if needs_mask:
        key_ids = kj * tile_k + jax.lax.broadcasted_iota(
            jnp.int32, (1, 1, tile_k), 2)
        s = jnp.where(key_ids < seq_len, s, -1e30)                  # mask padded keys

    m_prev = m_sc[...]
    m_new = jnp.maximum(m_prev, jnp.max(s, axis=-1, keepdims=True))
    alpha = jnp.exp(m_prev - m_new)
    p = jnp.exp(s - m_new)                                          # un-normalized
    l_sc[...] = alpha * l_sc[...] + jnp.sum(p, axis=-1, keepdims=True)
    acc_sc[...] = alpha * acc_sc[...] + jax.lax.dot_general(
        p.astype(mm_dtype), v_h, (((2,), (1,)), ((0,), (0,))),
        preferred_element_type=jnp.float32)                         # (NH, TQ, hd)
    m_sc[...] = m_new

    # --- on the last KV tile: normalize, project, residual/LN, FFN, LN -------
    @pl.when(kj == pl.num_programs(2) - 1)
    def _():
        # normalize AFTER p@v: divide (NH,TQ,hd) instead of (NH,TQ,T)
        if jnp.dtype(mm_dtype) == jnp.dtype(jnp.float32):
            inv_l = 1.0 / l_sc[...]                 # exact path for f32 checks
        else:
            inv_l = pl.reciprocal(l_sc[...], approx=True)
        ctx = acc_sc[...] * inv_l                                   # (NH, TQ, hd)

        # relayout heads back to lane-dense (TQ, Hp) for ONE full-depth matmul
        hp = o_ref.shape[-1]
        parts = [ctx[n] for n in range(num_heads)]
        if hp > hidden:
            parts.append(jnp.zeros((ctx.shape[1], hp - hidden), jnp.float32))
        ctx2 = jnp.concatenate(parts, axis=-1)                      # (TQ, Hp)
        attn = jnp.dot(ctx2.astype(mm_dtype), wo_ref[...],
                       preferred_element_type=jnp.float32) + vec_ref[0:1, :]

        h = h_ref[0].astype(jnp.float32)
        x1 = _layer_norm_padded(h + attn, vec_ref[1:2, :], vec_ref[2:3, :], hidden)
        f = jnp.dot(x1.astype(mm_dtype), w1_ref[...],
                    preferred_element_type=jnp.float32) + b1_ref[...]
        f = jnp.maximum(f, 0.0)
        f = jnp.dot(f.astype(mm_dtype), w2_ref[...],
                    preferred_element_type=jnp.float32) + vec_ref[3:4, :]
        x2 = _layer_norm_padded(x1 + f, vec_ref[4:5, :], vec_ref[5:6, :], hidden)
        o_ref[0] = x2.astype(o_ref.dtype)


# ----------------------------------------------------------------------------
# Parameter preparation: lane-padding, q-scale folding, bias packing
# ----------------------------------------------------------------------------
def _prepare_params(params, num_heads, d_pad, h_pad, f_pad, mm_dtype):
    H = params["w_emb"].shape[1]
    hd = H // num_heads
    scale = 1.0 / float(hd) ** 0.5   # folded into q weights/bias

    w_emb = _pad2(params["w_emb"], d_pad, h_pad).astype(mm_dtype)
    b_emb = _pad2(params["b_emb"], 1, h_pad)

    wq = _pad2(params["wq"] * scale, h_pad, h_pad)
    wk = _pad2(params["wk"], h_pad, h_pad)
    wv = _pad2(params["wv"], h_pad, h_pad)
    w_qkv = jnp.concatenate([wq, wk, wv], axis=1).astype(mm_dtype)   # (Hp, 3Hp)
    b_qkv = jnp.concatenate([_pad2(params["bq"] * scale, 1, h_pad),
                             _pad2(params["bk"], 1, h_pad),
                             _pad2(params["bv"], 1, h_pad)], axis=1)  # (1, 3Hp)

    wo = _pad2(params["wo"], h_pad, h_pad).astype(mm_dtype)
    w1 = _pad2(params["w1"], h_pad, f_pad).astype(mm_dtype)
    b1 = _pad2(params["b1"], 1, f_pad)
    w2 = _pad2(params["w2"], f_pad, h_pad).astype(mm_dtype)

    # INVARIANT: every padded weight column / bias / LN gamma-beta is ZERO, so
    # padded hidden columns stay exactly zero through the whole block; the
    # padded-LayerNorm statistics correction relies on this.
    vecs = jnp.concatenate([_pad2(params[k], 1, h_pad) for k in _VEC_ROWS], axis=0)
    return w_emb, b_emb, w_qkv, b_qkv, wo, w1, b1, w2, vecs


# ----------------------------------------------------------------------------
# Wrapper (= DefaultEncoder.forward)
# ----------------------------------------------------------------------------
def default_encoder_forward(feats, params, num_heads, matmul_dtype=jnp.bfloat16):
    B, T, D = feats.shape
    H = params["w_emb"].shape[1]
    F = params["w1"].shape[1]
    assert H % num_heads == 0
    hd = H // num_heads

    # feats_length = ones(feats[:, :, 0].shape).sum(-1): statically == T.
    # TODO(synk): torch returns int64 lengths; JAX x64 off by default -> int32.
    feats_length = jnp.full((B,), T, dtype=jnp.int32)

    d_pad = _round_up(D, LANE)
    h_pad = _round_up(H, LANE)
    f_pad = _round_up(F, LANE)
    t_pad = _round_up(T, LANE)          # always (8,128)-aligned; padded keys masked
    tile_t1 = _pick_tile(t_pad, 512)    # kernel-1 time tile
    tile_q = _pick_tile(t_pad, 256)     # kernel-2 query tile (fills 256x256 MXU)
    tile_k = tile_q                     # kernel-2 KV tile (flash loop)
    n_t1 = t_pad // tile_t1
    n_q = t_pad // tile_q
    n_kv = t_pad // tile_k
    mm_bytes = jnp.dtype(matmul_dtype).itemsize

    (w_emb, b_emb, w_qkv, b_qkv, wo, w1, b1, w2, vecs) = _prepare_params(
        params, num_heads, d_pad, h_pad, f_pad, matmul_dtype)

    x_p = jnp.pad(feats, ((0, 0), (0, t_pad - T), (0, d_pad - D)))

    # ---- kernel 1: embedding + fused q/k/v projection -----------------------
    cost1 = pl.CostEstimate(
        flops=2 * B * t_pad * d_pad * h_pad + 2 * B * t_pad * h_pad * 3 * h_pad,
        transcendentals=0,
        bytes_accessed=(B * t_pad * d_pad * 4
                        + (d_pad * h_pad + 3 * h_pad * h_pad) * mm_bytes
                        + 4 * h_pad * 4
                        + 4 * B * t_pad * h_pad * mm_bytes))
    h_out, q, k, v = pl.pallas_call(
        functools.partial(embed_qkv_kernel, matmul_dtype),
        grid=(B, n_t1),
        in_specs=[
            pl.BlockSpec((1, tile_t1, d_pad), lambda b, i: (b, i, 0)),
            _const_spec((d_pad, h_pad), lambda b, i: (0, 0)),
            _const_spec((1, h_pad), lambda b, i: (0, 0)),
            _const_spec((h_pad, 3 * h_pad), lambda b, i: (0, 0)),
            _const_spec((1, 3 * h_pad), lambda b, i: (0, 0)),
        ],
        out_specs=[
            pl.BlockSpec((1, tile_t1, h_pad), lambda b, i: (b, i, 0)),
            pl.BlockSpec((1, tile_t1, h_pad), lambda b, i: (b, i, 0)),
            pl.BlockSpec((1, tile_t1, h_pad), lambda b, i: (b, i, 0)),
            pl.BlockSpec((1, tile_t1, h_pad), lambda b, i: (b, i, 0)),
        ],
        out_shape=[
            jax.ShapeDtypeStruct((B, t_pad, h_pad), matmul_dtype),   # h (residual)
            jax.ShapeDtypeStruct((B, t_pad, h_pad), matmul_dtype),   # q (pre-scaled)
            jax.ShapeDtypeStruct((B, t_pad, h_pad), matmul_dtype),   # k
            jax.ShapeDtypeStruct((B, t_pad, h_pad), matmul_dtype),   # v
        ],
        compiler_params=pltpu.CompilerParams(
            dimension_semantics=("parallel", "parallel"),
            vmem_limit_bytes=32 * 1024 * 1024),
        cost_estimate=cost1,
    )(x_p, w_emb, b_emb, w_qkv, b_qkv)

    # ---- kernel 2: flash attention + FFN + LayerNorms ------------------------
    cost2 = pl.CostEstimate(
        flops=(4 * B * num_heads * t_pad * t_pad * hd       # scores + p@v
               + 2 * B * t_pad * h_pad * h_pad              # output projection
               + 4 * B * t_pad * h_pad * f_pad),            # FFN
        transcendentals=B * num_heads * t_pad * t_pad,      # softmax exp
        bytes_accessed=(2 * B * t_pad * h_pad * mm_bytes              # h + q
                        + 2 * B * n_q * t_pad * h_pad * mm_bytes      # k + v per q tile
                        + (h_pad * h_pad + 2 * h_pad * f_pad) * mm_bytes
                        + (f_pad + 6 * h_pad) * 4
                        + B * t_pad * h_pad * 4))
    out_pad = pl.pallas_call(
        functools.partial(attn_ffn_kernel, H, num_heads, T, t_pad > T, matmul_dtype),
        grid=(B, n_q, n_kv),
        in_specs=[
            pl.BlockSpec((1, tile_q, h_pad), lambda b, i, j: (b, i, 0)),   # h tile
            pl.BlockSpec((1, tile_q, h_pad), lambda b, i, j: (b, i, 0)),   # q tile
            pl.BlockSpec((1, tile_k, h_pad), lambda b, i, j: (b, j, 0)),   # k tile
            pl.BlockSpec((1, tile_k, h_pad), lambda b, i, j: (b, j, 0)),   # v tile
            _const_spec((h_pad, h_pad), lambda b, i, j: (0, 0)),           # wo
            _const_spec((h_pad, f_pad), lambda b, i, j: (0, 0)),           # w1
            _const_spec((1, f_pad), lambda b, i, j: (0, 0)),               # b1
            _const_spec((f_pad, h_pad), lambda b, i, j: (0, 0)),           # w2
            _const_spec((6, h_pad), lambda b, i, j: (0, 0)),               # packed vecs
        ],
        out_specs=pl.BlockSpec((1, tile_q, h_pad), lambda b, i, j: (b, i, 0)),
        out_shape=jax.ShapeDtypeStruct((B, t_pad, h_pad), jnp.float32),
        scratch_shapes=[
            pltpu.VMEM((num_heads, tile_q, 1), jnp.float32),    # running max
            pltpu.VMEM((num_heads, tile_q, 1), jnp.float32),    # running sum
            pltpu.VMEM((num_heads, tile_q, hd), jnp.float32),   # output accumulator
        ],
        compiler_params=pltpu.CompilerParams(
            dimension_semantics=("parallel", "parallel", "arbitrary"),
            vmem_limit_bytes=48 * 1024 * 1024),
        cost_estimate=cost2,
    )(h_out, q, k, v, wo, w1, b1, w2, vecs)

    encoder_out = out_pad[:, :T, :H]
    encoder_out_lens = feats_length          # no subsampling modeled
    return encoder_out, encoder_out_lens


# ----------------------------------------------------------------------------
# Pure-JAX reference of the same forward (for verification)
# ----------------------------------------------------------------------------
def reference_forward(feats, params, num_heads):
    B, T, _ = feats.shape
    H = params["w_emb"].shape[1]
    hd = H // num_heads
    scale = 1.0 / float(hd) ** 0.5

    def ln(x, g, b, eps=1e-5):
        m = jnp.mean(x, axis=-1, keepdims=True)
        var = jnp.mean((x - m) ** 2, axis=-1, keepdims=True)
        return (x - m) * jax.lax.rsqrt(var + eps) * g + b

    h = feats @ params["w_emb"] + params["b_emb"]
    q = (h @ params["wq"] + params["bq"]) * scale
    k = h @ params["wk"] + params["bk"]
    v = h @ params["wv"] + params["bv"]
    qh = q.reshape(B, T, num_heads, hd).transpose(0, 2, 1, 3)
    kh = k.reshape(B, T, num_heads, hd).transpose(0, 2, 1, 3)
    vh = v.reshape(B, T, num_heads, hd).transpose(0, 2, 1, 3)
    s = jnp.einsum("bntd,bnsd->bnts", qh, kh)
    p = jax.nn.softmax(s, axis=-1)
    ctx = jnp.einsum("bnts,bnsd->bntd", p, vh)
    ctx = ctx.transpose(0, 2, 1, 3).reshape(B, T, H)
    attn = ctx @ params["wo"] + params["bo"]
    x1 = ln(h + attn, params["ln1g"], params["ln1b"])
    f = jnp.maximum(x1 @ params["w1"] + params["b1"], 0.0)
    f = f @ params["w2"] + params["b2"]
    x2 = ln(x1 + f, params["ln2g"], params["ln2b"])
    lens = jnp.ones(feats[:, :, 0].shape).sum(axis=-1).astype(jnp.int32)
    return x2, lens


# ----------------------------------------------------------------------------
# Deterministic parameter init (synthetic; shapes implied by the module)
# ----------------------------------------------------------------------------
def init_params(key, feats_dim, hidden, ffn_dim, scale=0.1):
    ks = jax.random.split(key, 12)
    w = lambda k, shp: jax.random.normal(k, shp, jnp.float32) * scale
    b = lambda k, n: jax.random.normal(k, (1, n), jnp.float32) * 0.05
    g = lambda k, n: 1.0 + jax.random.normal(k, (1, n), jnp.float32) * 0.1
    fk = lambda i: jax.random.fold_in(key, i)
    return {
        "w_emb": w(ks[0], (feats_dim, hidden)), "b_emb": b(ks[1], hidden),
        "wq": w(ks[2], (hidden, hidden)), "bq": b(ks[3], hidden),
        "wk": w(ks[4], (hidden, hidden)), "bk": b(ks[5], hidden),
        "wv": w(ks[6], (hidden, hidden)), "bv": b(ks[7], hidden),
        "wo": w(ks[8], (hidden, hidden)), "bo": b(ks[9], hidden),
        "ln1g": g(fk(1), hidden), "ln1b": b(fk(2), hidden),
        "w1": w(ks[10], (hidden, ffn_dim)), "b1": b(fk(3), ffn_dim),
        "w2": w(ks[11], (ffn_dim, hidden)), "b2": b(fk(4), hidden),
        "ln2g": g(fk(5), hidden), "ln2b": b(fk(6), hidden),
    }


if __name__ == "__main__":
    # T=320 is NOT a multiple of 128: exercises time padding + key masking and
    # the multi-tile flash KV loop (t_pad=384 -> three 128-row q/kv tiles).
    B, T, D = 2, 320, 80          # feats_dim=80 is the module default
    H, NH, FFN = 96, 4, 192       # hidden not a multiple of 128 -> exercises lane padding

    key = jax.random.PRNGKey(0)
    pkey, fkey = jax.random.split(key)
    params = init_params(pkey, D, H, FFN)
    feats = jax.random.normal(fkey, (B, T, D), jnp.float32)

    fwd = jax.jit(default_encoder_forward,
                  static_argnames=("num_heads", "matmul_dtype"))

    with jax.default_matmul_precision("highest"):
        ref_out, ref_lens = reference_forward(feats, params, NH)

    # exact-ish path: f32 matmul operands, exact softmax normalization
    out_f32, lens = fwd(feats, params, num_heads=NH, matmul_dtype=jnp.float32)
    jax.block_until_ready((out_f32, lens))
    err_f32 = float(jnp.max(jnp.abs(out_f32 - ref_out)))

    # fast path: bf16 matmul operands + bf16 residual, f32 accum/softmax/LN
    out_bf16, _ = fwd(feats, params, num_heads=NH, matmul_dtype=jnp.bfloat16)
    jax.block_until_ready(out_bf16)
    err_bf16 = float(jnp.max(jnp.abs(out_bf16 - ref_out)))

    assert out_f32.shape == (B, T, H) and out_f32.dtype == jnp.float32
    assert lens.shape == (B,) and bool(jnp.all(lens == T))
    assert bool(jnp.all(lens == ref_lens))
    assert bool(jnp.all(jnp.isfinite(out_f32)))
    assert bool(jnp.all(jnp.isfinite(out_bf16)))
    # remaining f32 gap is MXU f32-pass behavior, not the (now exact) softmax recip
    assert err_f32 < 5e-2, f"f32 path mismatch vs reference: {err_f32}"
    assert err_bf16 < 2.5e-1, f"bf16 path mismatch vs reference: {err_bf16}"
    print("KERNEL_OK")
</pallas_src>

<mosaic_0001>
module attributes {stable_mosaic.version = 11 : i64} {
  func.func @embed_qkv_kernel(%arg0: i32, %arg1: i32, %arg2: memref<1x384x128xf32, #tpu.memory_space<vmem>>, %arg3: memref<128x128xf32, #tpu.memory_space<vmem>>, %arg4: memref<1x128xf32, #tpu.memory_space<vmem>>, %arg5: memref<128x384xf32, #tpu.memory_space<vmem>>, %arg6: memref<1x384xf32, #tpu.memory_space<vmem>>, %arg7: memref<1x384x128xf32, #tpu.memory_space<vmem>>, %arg8: memref<1x384x128xf32, #tpu.memory_space<vmem>>, %arg9: memref<1x384x128xf32, #tpu.memory_space<vmem>>, %arg10: memref<1x384x128xf32, #tpu.memory_space<vmem>>) attributes {dimension_semantics = [#tpu.dimension_semantics<parallel>, #tpu.dimension_semantics<parallel>], iteration_bounds = array<i64: 2, 1>, scalar_prefetch = 0 : i64, scratch_operands = 0 : i64, tpu.core_type = #tpu.core_type<tc>, window_params = [{transform_indices = @transform_0, window_bounds = array<i64: 1, 384, 128>}, {pipeline_mode = #tpu.pipeline_mode<synchronous>, transform_indices = @transform_1, window_bounds = array<i64: 128, 128>}, {pipeline_mode = #tpu.pipeline_mode<synchronous>, transform_indices = @transform_2, window_bounds = array<i64: 1, 128>}, {pipeline_mode = #tpu.pipeline_mode<synchronous>, transform_indices = @transform_3, window_bounds = array<i64: 128, 384>}, {pipeline_mode = #tpu.pipeline_mode<synchronous>, transform_indices = @transform_4, window_bounds = array<i64: 1, 384>}, {transform_indices = @transform_5, window_bounds = array<i64: 1, 384, 128>}, {transform_indices = @transform_6, window_bounds = array<i64: 1, 384, 128>}, {transform_indices = @transform_7, window_bounds = array<i64: 1, 384, 128>}, {transform_indices = @transform_8, window_bounds = array<i64: 1, 384, 128>}]} {
    %c0 = arith.constant 0 : index
    %c0_0 = arith.constant 0 : index
    %c0_1 = arith.constant 0 : index
    %0 = vector.load %arg2[%c0, %c0_0, %c0_1] : memref<1x384x128xf32, #tpu.memory_space<vmem>>, vector<1x384x128xf32>
    %1 = vector.shape_cast %0 : vector<1x384x128xf32> to vector<384x128xf32>
    %c0_2 = arith.constant 0 : index
    %c0_3 = arith.constant 0 : index
    %2 = vector.load %arg3[%c0_2, %c0_3] : memref<128x128xf32, #tpu.memory_space<vmem>>, vector<128x128xf32>
    %cst = arith.constant dense<0.000000e+00> : vector<384x128xf32>
    %3 = tpu.matmul %1, %2, %cst {dimension_numbers = #tpu.dot_dimension_numbers<[1], [0], [0], [1], [0, 0, 1, 1], [], []>} : vector<384x128xf32>, vector<128x128xf32>, vector<384x128xf32> -> vector<384x128xf32>
    %c0_4 = arith.constant 0 : index
    %c0_5 = arith.constant 0 : index
    %4 = vector.load %arg4[%c0_4, %c0_5] : memref<1x128xf32, #tpu.memory_space<vmem>>, vector<1x128xf32>
    %5 = vector.broadcast %4 : vector<1x128xf32> to vector<384x128xf32>
    %6 = arith.addf %3, %5 : vector<384x128xf32>
    %c0_6 = arith.constant 0 : index
    %c0_7 = arith.constant 0 : index
    %c0_8 = arith.constant 0 : index
    %7 = vector.load %arg7[%c0_6, %c0_7, %c0_8] : memref<1x384x128xf32, #tpu.memory_space<vmem>>, vector<1x384x128xf32>
    %8 = vector.shape_cast %7 : vector<1x384x128xf32> to vector<384x128xf32>
    %9 = vector.shape_cast %6 : vector<384x128xf32> to vector<1x384x128xf32>
    tpu.vector_store %arg7[%c0_6, %c0_7, %c0_8], %9 {strides = array<i32>} : memref<1x384x128xf32, #tpu.memory_space<vmem>>, vector<1x384x128xf32>,
    %c0_9 = arith.constant 0 : index
    %c0_10 = arith.constant 0 : index
    %10 = vector.load %arg5[%c0_9, %c0_10] : memref<128x384xf32, #tpu.memory_space<vmem>>, vector<128x384xf32>
    %cst_11 = arith.constant dense<0.000000e+00> : vector<384x384xf32>
    %11 = tpu.matmul %6, %10, %cst_11 {dimension_numbers = #tpu.dot_dimension_numbers<[1], [0], [0], [1], [0, 0, 1, 1], [], []>} : vector<384x128xf32>, vector<128x384xf32>, vector<384x384xf32> -> vector<384x384xf32>
    %c0_12 = arith.constant 0 : index
    %c0_13 = arith.constant 0 : index
    %12 = vector.load %arg6[%c0_12, %c0_13] : memref<1x384xf32, #tpu.memory_space<vmem>>, vector<1x384xf32>
    %13 = vector.broadcast %12 : vector<1x384xf32> to vector<384x384xf32>
    %14 = arith.addf %11, %13 : vector<384x384xf32>
    %15 = vector.extract_strided_slice %14 {offsets = [0, 0], sizes = [384, 128], strides = [1, 1]} : vector<384x384xf32> to vector<384x128xf32>
    %c0_14 = arith.constant 0 : index
    %c0_15 = arith.constant 0 : index
    %c0_16 = arith.constant 0 : index
    %16 = vector.load %arg8[%c0_14, %c0_15, %c0_16] : memref<1x384x128xf32, #tpu.memory_space<vmem>>, vector<1x384x128xf32>
    %17 = vector.shape_cast %16 : vector<1x384x128xf32> to vector<384x128xf32>
    %18 = vector.shape_cast %15 : vector<384x128xf32> to vector<1x384x128xf32>
    tpu.vector_store %arg8[%c0_14, %c0_15, %c0_16], %18 {strides = array<i32>} : memref<1x384x128xf32, #tpu.memory_space<vmem>>, vector<1x384x128xf32>,
    %19 = vector.extract_strided_slice %14 {offsets = [0, 128], sizes = [384, 128], strides = [1, 1]} : vector<384x384xf32> to vector<384x128xf32>
    %c0_17 = arith.constant 0 : index
    %c0_18 = arith.constant 0 : index
    %c0_19 = arith.constant 0 : index
    %20 = vector.load %arg9[%c0_17, %c0_18, %c0_19] : memref<1x384x128xf32, #tpu.memory_space<vmem>>, vector<1x384x128xf32>
    %21 = vector.shape_cast %20 : vector<1x384x128xf32> to vector<384x128xf32>
    %22 = vector.shape_cast %19 : vector<384x128xf32> to vector<1x384x128xf32>
    tpu.vector_store %arg9[%c0_17, %c0_18, %c0_19], %22 {strides = array<i32>} : memref<1x384x128xf32, #tpu.memory_space<vmem>>, vector<1x384x128xf32>,
    %23 = vector.extract_strided_slice %14 {offsets = [0, 256], sizes = [384, 128], strides = [1, 1]} : vector<384x384xf32> to vector<384x128xf32>
    %c0_20 = arith.constant 0 : index
    %c0_21 = arith.constant 0 : index
    %c0_22 = arith.constant 0 : index
    %24 = vector.load %arg10[%c0_20, %c0_21, %c0_22] : memref<1x384x128xf32, #tpu.memory_space<vmem>>, vector<1x384x128xf32>
    %25 = vector.shape_cast %24 : vector<1x384x128xf32> to vector<384x128xf32>
    %26 = vector.shape_cast %23 : vector<384x128xf32> to vector<1x384x128xf32>
    tpu.vector_store %arg10[%c0_20, %c0_21, %c0_22], %26 {strides = array<i32>} : memref<1x384x128xf32, #tpu.memory_space<vmem>>, vector<1x384x128xf32>,
    return
  }
  func.func @transform_0(%arg0: i32, %arg1: i32) -> (i32, i32, i32) {
    %c0_i32 = arith.constant 0 : i32
    %c0_i32_0 = arith.constant 0 : i32
    return %arg0, %arg1, %c0_i32 : i32, i32, i32
  }
  func.func @transform_1(%arg0: i32, %arg1: i32) -> (i32, i32) {
    %c0_i32 = arith.constant 0 : i32
    %c0_i32_0 = arith.constant 0 : i32
    %c0_i32_1 = arith.constant 0 : i32
    return %c0_i32, %c0_i32_0 : i32, i32
  }
  func.func @transform_2(%arg0: i32, %arg1: i32) -> (i32, i32) {
    %c0_i32 = arith.constant 0 : i32
    %c0_i32_0 = arith.constant 0 : i32
    %c0_i32_1 = arith.constant 0 : i32
    return %c0_i32, %c0_i32_0 : i32, i32
  }
  func.func @transform_3(%arg0: i32, %arg1: i32) -> (i32, i32) {
    %c0_i32 = arith.constant 0 : i32
    %c0_i32_0 = arith.constant 0 : i32
    %c0_i32_1 = arith.constant 0 : i32
    return %c0_i32, %c0_i32_0 : i32, i32
  }
  func.func @transform_4(%arg0: i32, %arg1: i32) -> (i32, i32) {
    %c0_i32 = arith.constant 0 : i32
    %c0_i32_0 = arith.constant 0 : i32
    %c0_i32_1 = arith.constant 0 : i32
    return %c0_i32, %c0_i32_0 : i32, i32
  }
  func.func @transform_5(%arg0: i32, %arg1: i32) -> (i32, i32, i32) {
    %c0_i32 = arith.constant 0 : i32
    %c0_i32_0 = arith.constant 0 : i32
    return %arg0, %arg1, %c0_i32 : i32, i32, i32
  }
  func.func @transform_6(%arg0: i32, %arg1: i32) -> (i32, i32, i32) {
    %c0_i32 = arith.constant 0 : i32
    %c0_i32_0 = arith.constant 0 : i32
    return %arg0, %arg1, %c0_i32 : i32, i32, i32
  }
  func.func @transform_7(%arg0: i32, %arg1: i32) -> (i32, i32, i32) {
    %c0_i32 = arith.constant 0 : i32
    %c0_i32_0 = arith.constant 0 : i32
    return %arg0, %arg1, %c0_i32 : i32, i32, i32
  }
  func.func @transform_8(%arg0: i32, %arg1: i32) -> (i32, i32, i32) {
    %c0_i32 = arith.constant 0 : i32
    %c0_i32_0 = arith.constant 0 : i32
    return %arg0, %arg1, %c0_i32 : i32, i32, i32
  }
}

module attributes {stable_mosaic.version = 11 : i64} {
  func.func @attn_ffn_kernel(%arg0: i32, %arg1: i32, %arg2: i32, %arg3: memref<1x128x128xf32, #tpu.memory_space<vmem>>, %arg4: memref<1x128x128xf32, #tpu.memory_space<vmem>>, %arg5: memref<1x128x128xf32, #tpu.memory_space<vmem>>, %arg6: memref<1x128x128xf32, #tpu.memory_space<vmem>>, %arg7: memref<128x128xf32, #tpu.memory_space<vmem>>, %arg8: memref<128x256xf32, #tpu.memory_space<vmem>>, %arg9: memref<1x256xf32, #tpu.memory_space<vmem>>, %arg10: memref<256x128xf32, #tpu.memory_space<vmem>>, %arg11: memref<6x128xf32, #tpu.memory_space<vmem>>, %arg12: memref<1x128x128xf32, #tpu.memory_space<vmem>>, %arg13: memref<4x128x1xf32, #tpu.memory_space<vmem>>, %arg14: memref<4x128x1xf32, #tpu.memory_space<vmem>>, %arg15: memref<4x128x24xf32, #tpu.memory_space<vmem>>) attributes {dimension_semantics = [#tpu.dimension_semantics<parallel>, #tpu.dimension_semantics<parallel>, #tpu.dimension_semantics<arbitrary>], iteration_bounds = array<i64: 2, 3, 3>, scalar_prefetch = 0 : i64, scratch_operands = 3 : i64, tpu.core_type = #tpu.core_type<tc>, window_params = [{transform_indices = @transform_0, window_bounds = array<i64: 1, 128, 128>}, {transform_indices = @transform_1, window_bounds = array<i64: 1, 128, 128>}, {transform_indices = @transform_2, window_bounds = array<i64: 1, 128, 128>}, {transform_indices = @transform_3, window_bounds = array<i64: 1, 128, 128>}, {pipeline_mode = #tpu.pipeline_mode<synchronous>, transform_indices = @transform_4, window_bounds = array<i64: 128, 128>}, {pipeline_mode = #tpu.pipeline_mode<synchronous>, transform_indices = @transform_5, window_bounds = array<i64: 128, 256>}, {pipeline_mode = #tpu.pipeline_mode<synchronous>, transform_indices = @transform_6, window_bounds = array<i64: 1, 256>}, {pipeline_mode = #tpu.pipeline_mode<synchronous>, transform_indices = @transform_7, window_bounds = array<i64: 256, 128>}, {pipeline_mode = #tpu.pipeline_mode<synchronous>, transform_indices = @transform_8, window_bounds = array<i64: 6, 128>}, {transform_indices = @transform_9, window_bounds = array<i64: 1, 128, 128>}]} {
    %c0_i32 = arith.constant 0 : i32
    %0 = arith.cmpi eq, %arg2, %c0_i32 : i32
    %1 = arith.extui %0 : i1 to i32
    %c0_i32_0 = arith.constant 0 : i32
    %2 = arith.cmpi ne, %1, %c0_i32_0 : i32
    scf.if %2 {
      %cst_32 = arith.constant -1.000000e+30 : f32
      %72 = vector.broadcast %cst_32 : f32 to vector<4x128x1xf32>
      %c0_33 = arith.constant 0 : index
      %c0_34 = arith.constant 0 : index
      %c0_35 = arith.constant 0 : index
      %73 = vector.load %arg13[%c0_33, %c0_34, %c0_35] : memref<4x128x1xf32, #tpu.memory_space<vmem>>, vector<4x128x1xf32>
      tpu.vector_store %arg13[%c0_33, %c0_34, %c0_35], %72 {strides = array<i32>} : memref<4x128x1xf32, #tpu.memory_space<vmem>>, vector<4x128x1xf32>,
      %cst_36 = arith.constant 0.000000e+00 : f32
      %74 = vector.broadcast %cst_36 : f32 to vector<4x128x1xf32>
      %c0_37 = arith.constant 0 : index
      %c0_38 = arith.constant 0 : index
      %c0_39 = arith.constant 0 : index
      %75 = vector.load %arg14[%c0_37, %c0_38, %c0_39] : memref<4x128x1xf32, #tpu.memory_space<vmem>>, vector<4x128x1xf32>
      tpu.vector_store %arg14[%c0_37, %c0_38, %c0_39], %74 {strides = array<i32>} : memref<4x128x1xf32, #tpu.memory_space<vmem>>, vector<4x128x1xf32>,
      %cst_40 = arith.constant 0.000000e+00 : f32
      %76 = vector.broadcast %cst_40 : f32 to vector<4x128x24xf32>
      %c0_41 = arith.constant 0 : index
      %c0_42 = arith.constant 0 : index
      %c0_43 = arith.constant 0 : index
      %77 = vector.load %arg15[%c0_41, %c0_42, %c0_43] : memref<4x128x24xf32, #tpu.memory_space<vmem>>, vector<4x128x24xf32>
      tpu.vector_store %arg15[%c0_41, %c0_42, %c0_43], %76 {strides = array<i32>} : memref<4x128x24xf32, #tpu.memory_space<vmem>>, vector<4x128x24xf32>,
    } else {
    }
    %c0 = arith.constant 0 : index
    %c0_1 = arith.constant 0 : index
    %c0_2 = arith.constant 0 : index
    %3 = vector.load %arg4[%c0, %c0_1, %c0_2] : memref<1x128x128xf32, #tpu.memory_space<vmem>>, vector<1x128x128xf32>
    %4 = vector.shape_cast %3 : vector<1x128x128xf32> to vector<128x128xf32>
    %c0_3 = arith.constant 0 : index
    %c0_4 = arith.constant 0 : index
    %c0_5 = arith.constant 0 : index
    %5 = vector.load %arg5[%c0_3, %c0_4, %c0_5] : memref<1x128x128xf32, #tpu.memory_space<vmem>>, vector<1x128x128xf32>
    %6 = vector.shape_cast %5 : vector<1x128x128xf32> to vector<128x128xf32>
    %c0_6 = arith.constant 0 : index
    %c0_7 = arith.constant 0 : index
    %c0_8 = arith.constant 0 : index
    %7 = vector.load %arg6[%c0_6, %c0_7, %c0_8] : memref<1x128x128xf32, #tpu.memory_space<vmem>>, vector<1x128x128xf32>
    %8 = vector.shape_cast %7 : vector<1x128x128xf32> to vector<128x128xf32>
    %9 = vector.extract_strided_slice %4 {offsets = [0, 0], sizes = [128, 24], strides = [1, 1]} : vector<128x128xf32> to vector<128x24xf32>
    %10 = vector.shape_cast %9 : vector<128x24xf32> to vector<1x128x24xf32>
    %11 = vector.extract_strided_slice %4 {offsets = [0, 24], sizes = [128, 24], strides = [1, 1]} : vector<128x128xf32> to vector<128x24xf32>
    %12 = vector.shape_cast %11 : vector<128x24xf32> to vector<1x128x24xf32>
    %13 = vector.extract_strided_slice %4 {offsets = [0, 48], sizes = [128, 24], strides = [1, 1]} : vector<128x128xf32> to vector<128x24xf32>
    %14 = vector.shape_cast %13 : vector<128x24xf32> to vector<1x128x24xf32>
    %15 = vector.extract_strided_slice %4 {offsets = [0, 72], sizes = [128, 24], strides = [1, 1]} : vector<128x128xf32> to vector<128x24xf32>
    %16 = vector.shape_cast %15 : vector<128x24xf32> to vector<1x128x24xf32>
    %17 = tpu.concatenate %10, %12, %14, %16 in 0 : vector<1x128x24xf32>, vector<1x128x24xf32>, vector<1x128x24xf32>, vector<1x128x24xf32> -> vector<4x128x24xf32>
    %18 = vector.extract_strided_slice %6 {offsets = [0, 0], sizes = [128, 24], strides = [1, 1]} : vector<128x128xf32> to vector<128x24xf32>
    %19 = vector.shape_cast %18 : vector<128x24xf32> to vector<1x128x24xf32>
    %20 = vector.extract_strided_slice %6 {offsets = [0, 24], sizes = [128, 24], strides = [1, 1]} : vector<128x128xf32> to vector<128x24xf32>
    %21 = vector.shape_cast %20 : vector<128x24xf32> to vector<1x128x24xf32>
    %22 = vector.extract_strided_slice %6 {offsets = [0, 48], sizes = [128, 24], strides = [1, 1]} : vector<128x128xf32> to vector<128x24xf32>
    %23 = vector.shape_cast %22 : vector<128x24xf32> to vector<1x128x24xf32>
    %24 = vector.extract_strided_slice %6 {offsets = [0, 72], sizes = [128, 24], strides = [1, 1]} : vector<128x128xf32> to vector<128x24xf32>
    %25 = vector.shape_cast %24 : vector<128x24xf32> to vector<1x128x24xf32>
    %26 = tpu.concatenate %19, %21, %23, %25 in 0 : vector<1x128x24xf32>, vector<1x128x24xf32>, vector<1x128x24xf32>, vector<1x128x24xf32> -> vector<4x128x24xf32>
    %27 = vector.extract_strided_slice %8 {offsets = [0, 0], sizes = [128, 24], strides = [1, 1]} : vector<128x128xf32> to vector<128x24xf32>
    %28 = vector.shape_cast %27 : vector<128x24xf32> to vector<1x128x24xf32>
    %29 = vector.extract_strided_slice %8 {offsets = [0, 24], sizes = [128, 24], strides = [1, 1]} : vector<128x128xf32> to vector<128x24xf32>
    %30 = vector.shape_cast %29 : vector<128x24xf32> to vector<1x128x24xf32>
    %31 = vector.extract_strided_slice %8 {offsets = [0, 48], sizes = [128, 24], strides = [1, 1]} : vector<128x128xf32> to vector<128x24xf32>
    %32 = vector.shape_cast %31 : vector<128x24xf32> to vector<1x128x24xf32>
    %33 = vector.extract_strided_slice %8 {offsets = [0, 72], sizes = [128, 24], strides = [1, 1]} : vector<128x128xf32> to vector<128x24xf32>
    %34 = vector.shape_cast %33 : vector<128x24xf32> to vector<1x128x24xf32>
    %35 = tpu.concatenate %28, %30, %32, %34 in 0 : vector<1x128x24xf32>, vector<1x128x24xf32>, vector<1x128x24xf32>, vector<1x128x24xf32> -> vector<4x128x24xf32>
    %cst = arith.constant dense<0.000000e+00> : vector<4x128x128xf32>
    %36 = tpu.matmul %17, %26, %cst {dimension_numbers = #tpu.dot_dimension_numbers<[2], [2], [1], [1], [0, 0, 0, 1, 1, 1], [0], [0]>} : vector<4x128x24xf32>, vector<4x128x24xf32>, vector<4x128x128xf32> -> vector<4x128x128xf32>
    %c128_i32 = arith.constant 128 : i32
    %37 = arith.muli %arg2, %c128_i32 : i32
    %38 = tpu.iota {dimensions = array<i32: 2>} : vector<1x1x128xi32>
    %39 = vector.broadcast %37 : i32 to vector<1x1x128xi32>
    %40 = arith.addi %39, %38 : vector<1x1x128xi32>
    %c320_i32 = arith.constant 320 : i32
    %41 = vector.broadcast %c320_i32 : i32 to vector<1x1x128xi32>
    %42 = arith.cmpi slt, %40, %41 : vector<1x1x128xi32>
    %cst_9 = arith.constant -1.000000e+30 : f32
    %43 = vector.shape_cast %42 : vector<1x1x128xi1> to vector<1x1x128xi1>
    %44 = vector.broadcast %43 : vector<1x1x128xi1> to vector<4x128x128xi1>
    %45 = vector.broadcast %cst_9 : f32 to vector<4x128x128xf32>
    %46 = arith.select %44, %36, %45 : vector<4x128x128xi1>, vector<4x128x128xf32>
    %c0_10 = arith.constant 0 : index
    %c0_11 = arith.constant 0 : index
    %c0_12 = arith.constant 0 : index
    %47 = vector.load %arg13[%c0_10, %c0_11, %c0_12] : memref<4x128x1xf32, #tpu.memory_space<vmem>>, vector<4x128x1xf32>
    %cst_13 = arith.constant dense<0xFF800000> : vector<4x128xf32>
    %48 = vector.multi_reduction <maximumf>, %46, %cst_13 [2] : vector<4x128x128xf32> to vector<4x128xf32>
    %49 = vector.shape_cast %48 : vector<4x128xf32> to vector<4x128x1xf32>
    %50 = arith.maximumf %47, %49 : vector<4x128x1xf32>
    %51 = arith.subf %47, %50 : vector<4x128x1xf32>
    %52 = math.exp %51 : vector<4x128x1xf32>
    %53 = vector.broadcast %50 : vector<4x128x1xf32> to vector<4x128x128xf32>
    %54 = arith.subf %46, %53 : vector<4x128x128xf32>
    %55 = math.exp %54 : vector<4x128x128xf32>
    %c0_14 = arith.constant 0 : index
    %c0_15 = arith.constant 0 : index
    %c0_16 = arith.constant 0 : index
    %56 = vector.load %arg14[%c0_14, %c0_15, %c0_16] : memref<4x128x1xf32, #tpu.memory_space<vmem>>, vector<4x128x1xf32>
    %57 = arith.mulf %52, %56 : vector<4x128x1xf32>
    %cst_17 = arith.constant dense<0.000000e+00> : vector<4x128xf32>
    %58 = vector.multi_reduction <add>, %55, %cst_17 [2] : vector<4x128x128xf32> to vector<4x128xf32>
    %59 = vector.shape_cast %58 : vector<4x128xf32> to vector<4x128x1xf32>
    %60 = arith.addf %57, %59 : vector<4x128x1xf32>
    %c0_18 = arith.constant 0 : index
    %c0_19 = arith.constant 0 : index
    %c0_20 = arith.constant 0 : index
    %61 = vector.load %arg14[%c0_18, %c0_19, %c0_20] : memref<4x128x1xf32, #tpu.memory_space<vmem>>, vector<4x128x1xf32>
    tpu.vector_store %arg14[%c0_18, %c0_19, %c0_20], %60 {strides = array<i32>} : memref<4x128x1xf32, #tpu.memory_space<vmem>>, vector<4x128x1xf32>,
    %c0_21 = arith.constant 0 : index
    %c0_22 = arith.constant 0 : index
    %c0_23 = arith.constant 0 : index
    %62 = vector.load %arg15[%c0_21, %c0_22, %c0_23] : memref<4x128x24xf32, #tpu.memory_space<vmem>>, vector<4x128x24xf32>
    %63 = vector.broadcast %52 : vector<4x128x1xf32> to vector<4x128x24xf32>
    %64 = arith.mulf %63, %62 : vector<4x128x24xf32>
    %cst_24 = arith.constant dense<0.000000e+00> : vector<4x128x24xf32>
    %65 = tpu.matmul %55, %35, %cst_24 {dimension_numbers = #tpu.dot_dimension_numbers<[2], [1], [1], [2], [0, 0, 0, 1, 1, 2], [0], [0]>} : vector<4x128x128xf32>, vector<4x128x24xf32>, vector<4x128x24xf32> -> vector<4x128x24xf32>
    %66 = arith.addf %64, %65 : vector<4x128x24xf32>
    %c0_25 = arith.constant 0 : index
    %c0_26 = arith.constant 0 : index
    %c0_27 = arith.constant 0 : index
    %67 = vector.load %arg15[%c0_25, %c0_26, %c0_27] : memref<4x128x24xf32, #tpu.memory_space<vmem>>, vector<4x128x24xf32>
    tpu.vector_store %arg15[%c0_25, %c0_26, %c0_27], %66 {strides = array<i32>} : memref<4x128x24xf32, #tpu.memory_space<vmem>>, vector<4x128x24xf32>,
    %c0_28 = arith.constant 0 : index
    %c0_29 = arith.constant 0 : index
    %c0_30 = arith.constant 0 : index
    %68 = vector.load %arg13[%c0_28, %c0_29, %c0_30] : memref<4x128x1xf32, #tpu.memory_space<vmem>>, vector<4x128x1xf32>
    tpu.vector_store %arg13[%c0_28, %c0_29, %c0_30], %50 {strides = array<i32>} : memref<4x128x1xf32, #tpu.memory_space<vmem>>, vector<4x128x1xf32>,
    %c2_i32 = arith.constant 2 : i32
    %69 = arith.cmpi eq, %arg2, %c2_i32 : i32
    %70 = arith.extui %69 : i1 to i32
    %c0_i32_31 = arith.constant 0 : i32
    %71 = arith.cmpi ne, %70, %c0_i32_31 : i32
    scf.if %71 {
      %c0_32 = arith.constant 0 : index
      %c0_33 = arith.constant 0 : index
      %c0_34 = arith.constant 0 : index
      %72 = vector.load %arg14[%c0_32, %c0_33, %c0_34] : memref<4x128x1xf32, #tpu.memory_space<vmem>>, vector<4x128x1xf32>
      %cst_35 = arith.constant 1.000000e+00 : f32
      %73 = vector.broadcast %cst_35 : f32 to vector<4x128x1xf32>
      %74 = arith.divf %73, %72 : vector<4x128x1xf32>
      %c0_36 = arith.constant 0 : index
      %c0_37 = arith.constant 0 : index
      %c0_38 = arith.constant 0 : index
      %75 = vector.load %arg15[%c0_36, %c0_37, %c0_38] : memref<4x128x24xf32, #tpu.memory_space<vmem>>, vector<4x128x24xf32>
      %76 = vector.broadcast %74 : vector<4x128x1xf32> to vector<4x128x24xf32>
      %77 = arith.mulf %75, %76 : vector<4x128x24xf32>
      %78 = vector.extract_strided_slice %77 {offsets = [0, 0, 0], sizes = [1, 128, 24], strides = [1, 1, 1]} : vector<4x128x24xf32> to vector<1x128x24xf32>
      %79 = vector.shape_cast %78 : vector<1x128x24xf32> to vector<128x24xf32>
      %80 = vector.extract_strided_slice %77 {offsets = [1, 0, 0], sizes = [1, 128, 24], strides = [1, 1, 1]} : vector<4x128x24xf32> to vector<1x128x24xf32>
      %81 = vector.shape_cast %80 : vector<1x128x24xf32> to vector<128x24xf32>
      %82 = vector.extract_strided_slice %77 {offsets = [2, 0, 0], sizes = [1, 128, 24], strides = [1, 1, 1]} : vector<4x128x24xf32> to vector<1x128x24xf32>
      %83 = vector.shape_cast %82 : vector<1x128x24xf32> to vector<128x24xf32>
      %84 = vector.extract_strided_slice %77 {offsets = [3, 0, 0], sizes = [1, 128, 24], strides = [1, 1, 1]} : vector<4x128x24xf32> to vector<1x128x24xf32>
      %85 = vector.shape_cast %84 : vector<1x128x24xf32> to vector<128x24xf32>
      %cst_39 = arith.constant 0.000000e+00 : f32
      %86 = vector.broadcast %cst_39 : f32 to vector<128x32xf32>
      %87 = tpu.concatenate %79, %81, %83, %85, %86 in 1 : vector<128x24xf32>, vector<128x24xf32>, vector<128x24xf32>, vector<128x24xf32>, vector<128x32xf32> -> vector<128x128xf32>
      %c0_40 = arith.constant 0 : index
      %c0_41 = arith.constant 0 : index
      %88 = vector.load %arg7[%c0_40, %c0_41] : memref<128x128xf32, #tpu.memory_space<vmem>>, vector<128x128xf32>
      %cst_42 = arith.constant dense<0.000000e+00> : vector<128x128xf32>
      %89 = tpu.matmul %87, %88, %cst_42 {dimension_numbers = #tpu.dot_dimension_numbers<[1], [0], [0], [1], [0, 0, 1, 1], [], []>} : vector<128x128xf32>, vector<128x128xf32>, vector<128x128xf32> -> vector<128x128xf32>
      %c0_43 = arith.constant 0 : index
      %c0_44 = arith.constant 0 : index
      %90 = vector.load %arg11[%c0_43, %c0_44] : memref<6x128xf32, #tpu.memory_space<vmem>>, vector<1x128xf32>
      %91 = vector.broadcast %90 : vector<1x128xf32> to vector<128x128xf32>
      %92 = arith.addf %89, %91 : vector<128x128xf32>
      %c0_45 = arith.constant 0 : index
      %c0_46 = arith.constant 0 : index
      %c0_47 = arith.constant 0 : index
      %93 = vector.load %arg3[%c0_45, %c0_46, %c0_47] : memref<1x128x128xf32, #tpu.memory_space<vmem>>, vector<1x128x128xf32>
      %94 = vector.shape_cast %93 : vector<1x128x128xf32> to vector<128x128xf32>
      %95 = arith.addf %94, %92 : vector<128x128xf32>
      %c1 = arith.constant 1 : index
      %c0_48 = arith.constant 0 : index
      %96 = vector.load %arg11[%c1, %c0_48] : memref<6x128xf32, #tpu.memory_space<vmem>>, vector<1x128xf32>
      %c2 = arith.constant 2 : index
      %c0_49 = arith.constant 0 : index
      %97 = vector.load %arg11[%c2, %c0_49] : memref<6x128xf32, #tpu.memory_space<vmem>>, vector<1x128xf32>
      %cst_50 = arith.constant dense<0.000000e+00> : vector<128xf32>
      %98 = vector.multi_reduction <add>, %95, %cst_50 [1] : vector<128x128xf32> to vector<128xf32>
      %99 = vector.shape_cast %98 : vector<128xf32> to vector<128x1xf32>
      %cst_51 = arith.constant 0.010416667 : f32
      %100 = vector.broadcast %cst_51 : f32 to vector<128x1xf32>
      %101 = arith.mulf %99, %100 : vector<128x1xf32>
      %102 = vector.broadcast %101 : vector<128x1xf32> to vector<128x128xf32>
      %103 = arith.subf %95, %102 : vector<128x128xf32>
      %104 = vector.broadcast %101 : vector<128x1xf32> to vector<128x128xf32>
      %105 = arith.subf %95, %104 : vector<128x128xf32>
      %106 = arith.mulf %103, %105 : vector<128x128xf32>
      %cst_52 = arith.constant dense<0.000000e+00> : vector<128xf32>
      %107 = vector.multi_reduction <add>, %106, %cst_52 [1] : vector<128x128xf32> to vector<128xf32>
      %108 = vector.shape_cast %107 : vector<128xf32> to vector<128x1xf32>
      %cst_53 = arith.constant 3.200000e+01 : f32
      %109 = vector.broadcast %cst_53 : f32 to vector<128x1xf32>
      %110 = arith.mulf %109, %101 : vector<128x1xf32>
      %111 = arith.mulf %110, %101 : vector<128x1xf32>
      %112 = arith.subf %108, %111 : vector<128x1xf32>
      %cst_54 = arith.constant 0.010416667 : f32
      %113 = vector.broadcast %cst_54 : f32 to vector<128x1xf32>
      %114 = arith.mulf %112, %113 : vector<128x1xf32>
      %115 = vector.broadcast %101 : vector<128x1xf32> to vector<128x128xf32>
      %116 = arith.subf %95, %115 : vector<128x128xf32>
      %cst_55 = arith.constant 9.99999974E-6 : f32
      %117 = vector.broadcast %cst_55 : f32 to vector<128x1xf32>
      %118 = arith.addf %114, %117 : vector<128x1xf32>
      %119 = math.rsqrt %118 : vector<128x1xf32>
      %120 = vector.broadcast %119 : vector<128x1xf32> to vector<128x128xf32>
      %121 = arith.mulf %116, %120 : vector<128x128xf32>
      %122 = vector.broadcast %96 : vector<1x128xf32> to vector<128x128xf32>
      %123 = arith.mulf %121, %122 : vector<128x128xf32>
      %124 = vector.broadcast %97 : vector<1x128xf32> to vector<128x128xf32>
      %125 = arith.addf %123, %124 : vector<128x128xf32>
      %c0_56 = arith.constant 0 : index
      %c0_57 = arith.constant 0 : index
      %126 = vector.load %arg8[%c0_56, %c0_57] : memref<128x256xf32, #tpu.memory_space<vmem>>, vector<128x256xf32>
      %cst_58 = arith.constant dense<0.000000e+00> : vector<128x256xf32>
      %127 = tpu.matmul %125, %126, %cst_58 {dimension_numbers = #tpu.dot_dimension_numbers<[1], [0], [0], [1], [0, 0, 1, 1], [], []>} : vector<128x128xf32>, vector<128x256xf32>, vector<128x256xf32> -> vector<128x256xf32>
      %c0_59 = arith.constant 0 : index
      %c0_60 = arith.constant 0 : index
      %128 = vector.load %arg9[%c0_59, %c0_60] : memref<1x256xf32, #tpu.memory_space<vmem>>, vector<1x256xf32>
      %129 = vector.broadcast %128 : vector<1x256xf32> to vector<128x256xf32>
      %130 = arith.addf %127, %129 : vector<128x256xf32>
      %cst_61 = arith.constant 0.000000e+00 : f32
      %131 = vector.broadcast %cst_61 : f32 to vector<128x256xf32>
      %132 = arith.maximumf %130, %131 : vector<128x256xf32>
      %c0_62 = arith.constant 0 : index
      %c0_63 = arith.constant 0 : index
      %133 = vector.load %arg10[%c0_62, %c0_63] : memref<256x128xf32, #tpu.memory_space<vmem>>, vector<256x128xf32>
      %cst_64 = arith.constant dense<0.000000e+00> : vector<128x128xf32>
      %134 = tpu.matmul %132, %133, %cst_64 {dimension_numbers = #tpu.dot_dimension_numbers<[1], [0], [0], [1], [0, 0, 1, 1], [], []>} : vector<128x256xf32>, vector<256x128xf32>, vector<128x128xf32> -> vector<128x128xf32>
      %c3 = arith.constant 3 : index
      %c0_65 = arith.constant 0 : index
      %135 = vector.load %arg11[%c3, %c0_65] : memref<6x128xf32, #tpu.memory_space<vmem>>, vector<1x128xf32>
      %136 = vector.broadcast %135 : vector<1x128xf32> to vector<128x128xf32>
      %137 = arith.addf %134, %136 : vector<128x128xf32>
      %138 = arith.addf %125, %137 : vector<128x128xf32>
      %c4 = arith.constant 4 : index
      %c0_66 = arith.constant 0 : index
      %139 = vector.load %arg11[%c4, %c0_66] : memref<6x128xf32, #tpu.memory_space<vmem>>, vector<1x128xf32>
      %c5 = arith.constant 5 : index
      %c0_67 = arith.constant 0 : index
      %140 = vector.load %arg11[%c5, %c0_67] : memref<6x128xf32, #tpu.memory_space<vmem>>, vector<1x128xf32>
      %cst_68 = arith.constant dense<0.000000e+00> : vector<128xf32>
      %141 = vector.multi_reduction <add>, %138, %cst_68 [1] : vector<128x128xf32> to vector<128xf32>
      %142 = vector.shape_cast %141 : vector<128xf32> to vector<128x1xf32>
      %cst_69 = arith.constant 0.010416667 : f32
      %143 = vector.broadcast %cst_69 : f32 to vector<128x1xf32>
      %144 = arith.mulf %142, %143 : vector<128x1xf32>
      %145 = vector.broadcast %144 : vector<128x1xf32> to vector<128x128xf32>
      %146 = arith.subf %138, %145 : vector<128x128xf32>
      %147 = vector.broadcast %144 : vector<128x1xf32> to vector<128x128xf32>
      %148 = arith.subf %138, %147 : vector<128x128xf32>
      %149 = arith.mulf %146, %148 : vector<128x128xf32>
      %cst_70 = arith.constant dense<0.000000e+00> : vector<128xf32>
      %150 = vector.multi_reduction <add>, %149, %cst_70 [1] : vector<128x128xf32> to vector<128xf32>
      %151 = vector.shape_cast %150 : vector<128xf32> to vector<128x1xf32>
      %cst_71 = arith.constant 3.200000e+01 : f32
      %152 = vector.broadcast %cst_71 : f32 to vector<128x1xf32>
      %153 = arith.mulf %152, %144 : vector<128x1xf32>
      %154 = arith.mulf %153, %144 : vector<128x1xf32>
      %155 = arith.subf %151, %154 : vector<128x1xf32>
      %cst_72 = arith.constant 0.010416667 : f32
      %156 = vector.broadcast %cst_72 : f32 to vector<128x1xf32>
      %157 = arith.mulf %155, %156 : vector<128x1xf32>
      %158 = vector.broadcast %144 : vector<128x1xf32> to vector<128x128xf32>
      %159 = arith.subf %138, %158 : vector<128x128xf32>
      %cst_73 = arith.constant 9.99999974E-6 : f32
      %160 = vector.broadcast %cst_73 : f32 to vector<128x1xf32>
      %161 = arith.addf %157, %160 : vector<128x1xf32>
      %162 = math.rsqrt %161 : vector<128x1xf32>
      %163 = vector.broadcast %162 : vector<128x1xf32> to vector<128x128xf32>
      %164 = arith.mulf %159, %163 : vector<128x128xf32>
      %165 = vector.broadcast %139 : vector<1x128xf32> to vector<128x128xf32>
      %166 = arith.mulf %164, %165 : vector<128x128xf32>
      %167 = vector.broadcast %140 : vector<1x128xf32> to vector<128x128xf32>
      %168 = arith.addf %166, %167 : vector<128x128xf32>
      %c0_74 = arith.constant 0 : index
      %c0_75 = arith.constant 0 : index
      %c0_76 = arith.constant 0 : index
      %169 = vector.load %arg12[%c0_74, %c0_75, %c0_76] : memref<1x128x128xf32, #tpu.memory_space<vmem>>, vector<1x128x128xf32>
      %170 = vector.shape_cast %169 : vector<1x128x128xf32> to vector<128x128xf32>
      %171 = vector.shape_cast %168 : vector<128x128xf32> to vector<1x128x128xf32>
      tpu.vector_store %arg12[%c0_74, %c0_75, %c0_76], %171 {strides = array<i32>} : memref<1x128x128xf32, #tpu.memory_space<vmem>>, vector<1x128x128xf32>,
    } else {
    }
    return
  }
  func.func @transform_0(%arg0: i32, %arg1: i32, %arg2: i32) -> (i32, i32, i32) {
    %c0_i32 = arith.constant 0 : i32
    %c0_i32_0 = arith.constant 0 : i32
    return %arg0, %arg1, %c0_i32 : i32, i32, i32
  }
  func.func @transform_1(%arg0: i32, %arg1: i32, %arg2: i32) -> (i32, i32, i32) {
    %c0_i32 = arith.constant 0 : i32
    %c0_i32_0 = arith.constant 0 : i32
    return %arg0, %arg1, %c0_i32 : i32, i32, i32
  }
  func.func @transform_2(%arg0: i32, %arg1: i32, %arg2: i32) -> (i32, i32, i32) {
    %c0_i32 = arith.constant 0 : i32
    %c0_i32_0 = arith.constant 0 : i32
    return %arg0, %arg2, %c0_i32 : i32, i32, i32
  }
  func.func @transform_3(%arg0: i32, %arg1: i32, %arg2: i32) -> (i32, i32, i32) {
    %c0_i32 = arith.constant 0 : i32
    %c0_i32_0 = arith.constant 0 : i32
    return %arg0, %arg2, %c0_i32 : i32, i32, i32
  }
  func.func @transform_4(%arg0: i32, %arg1: i32, %arg2: i32) -> (i32, i32) {
    %c0_i32 = arith.constant 0 : i32
    %c0_i32_0 = arith.constant 0 : i32
    %c0_i32_1 = arith.constant 0 : i32
    return %c0_i32, %c0_i32_0 : i32, i32
  }
  func.func @transform_5(%arg0: i32, %arg1: i32, %arg2: i32) -> (i32, i32) {
    %c0_i32 = arith.constant 0 : i32
    %c0_i32_0 = arith.constant 0 : i32
    %c0_i32_1 = arith.constant 0 : i32
    return %c0_i32, %c0_i32_0 : i32, i32
  }
  func.func @transform_6(%arg0: i32, %arg1: i32, %arg2: i32) -> (i32, i32) {
    %c0_i32 = arith.constant 0 : i32
    %c0_i32_0 = arith.constant 0 : i32
    %c0_i32_1 = arith.constant 0 : i32
    return %c0_i32, %c0_i32_0 : i32, i32
  }
  func.func @transform_7(%arg0: i32, %arg1: i32, %arg2: i32) -> (i32, i32) {
    %c0_i32 = arith.constant 0 : i32
    %c0_i32_0 = arith.constant 0 : i32
    %c0_i32_1 = arith.constant 0 : i32
    return %c0_i32, %c0_i32_0 : i32, i32
  }
  func.func @transform_8(%arg0: i32, %arg1: i32, %arg2: i32) -> (i32, i32) {
    %c0_i32 = arith.constant 0 : i32
    %c0_i32_0 = arith.constant 0 : i32
    %c0_i32_1 = arith.constant 0 : i32
    return %c0_i32, %c0_i32_0 : i32, i32
  }
  func.func @transform_9(%arg0: i32, %arg1: i32, %arg2: i32) -> (i32, i32, i32) {
    %c0_i32 = arith.constant 0 : i32
    %c0_i32_0 = arith.constant 0 : i32
    return %arg0, %arg1, %c0_i32 : i32, i32, i32
  }
}

</mosaic_0001>

<llo_original>
// kernel: default_encoder_forward.2
$region0: #{default_encoder_forward.2}
  #allocation0 [shape = 'u32[]', space=smem, size = 0x4, offset = 0x4, fixed_abs, tag = 'smem constant byte address 0x4 - core index']
  #allocation1 [shape = 'u32[72,128]{1,0:T(1,128)}', space=vmem, size = 0x9000, scoped, tag = 'internal scratch']
  %s0 = inlined_call_operand.vmem [shape: f32[2,384,128], index: 0, kind: input, shape index: {}]
  %s1 = inlined_call_operand.vmem [shape: f32[128,128], index: 1, kind: input, shape index: {}]
  %s2 = inlined_call_operand.vmem [shape: f32[1,128], index: 2, kind: input, shape index: {}]
  %s3 = inlined_call_operand.vmem [shape: f32[128,384], index: 3, kind: input, shape index: {}]
  %s4 = inlined_call_operand.vmem [shape: f32[1,384], index: 4, kind: input, shape index: {}]
  %s5 = inlined_call_operand.vmem [shape: f32[2,384,128], index: 5, kind: output, shape index: {0}]
  %s6 = inlined_call_operand.vmem [shape: f32[2,384,128], index: 6, kind: output, shape index: {1}]
  %s7 = inlined_call_operand.vmem [shape: f32[2,384,128], index: 7, kind: output, shape index: {2}]
  %s8 = inlined_call_operand.vmem [shape: f32[2,384,128], index: 8, kind: output, shape index: {3}]
  %9 = xla_tuple %s5, %s6, %s7, %s8
  %s10 = sld [smem:[#allocation0]]
  $region77: #{default_encoder_forward.2} parent=0
    _
  %s12 = ssub.s32 1, %s10
  %s13 = scalar_select 0, %s12, %s10
  loop: start=0, step=1, limit=4
  $region2: #{default_encoder_forward.2} parent=0 // loop_pre_header
    _
  $region3: #{default_encoder_forward.2} parent=0 // loop_header
    %s15 = sphi 0, %s19
    %p16 = scmp.ge.s32.totalorder %s15, 4
    %s22 = sphi 0, %s34
    %s23 = sphi 0, %s30
    %s24 = sphi 0, %s22
    %s25 = sphi 0, %s23
    %s26 = sphi 0, %s24
    %s27 = sphi 0, %s25
    %s39 = sphi 0, %s41
    %s42 = sphi 0, %s39
    %s43 = sphi 0, %s42
    %s59 = sphi 0, %s43
    %s63 = sphi 0, %s63
    %s65 = sphi 0, %s63
    %s66 = sphi 0, %s65
    %s80 = sphi 0, %s66
    %s84 = sphi 0, %s84
    %s86 = sphi 0, %s84
    %s87 = sphi 0, %s86
    %s101 = sphi 0, %s87
    %s105 = sphi 0, %s105
    %s107 = sphi 0, %s105
    %s108 = sphi 0, %s107
    %s122 = sphi 0, %s108
    %s126 = sphi 0, %s126
    %s128 = sphi 0, %s126
    %s129 = sphi 0, %s128
    %s143 = sphi 0, %s129
    %s151 = sphi 0, %s153
    %s154 = sphi 0, %s151
    %s155 = sphi 0, %s154
    %s171 = sphi 0, %s155
    %s179 = sphi 0, %s181
    %s182 = sphi 0, %s179
    %s183 = sphi 0, %s182
    %s199 = sphi 0, %s183
    %s207 = sphi 0, %s209
    %s210 = sphi 0, %s207
    %s211 = sphi 0, %s210
    %s227 = sphi 0, %s211
    %s235 = sphi 0, %s237
    %s238 = sphi 0, %s235
    %s239 = sphi 0, %s238
    %s255 = sphi 0, %s239
  $region4: #{default_encoder_forward.2} parent=0 // loop_header_branch
    %18 = sbr.rel (%p16) target = $region8
  $region5: #{default_encoder_forward.2} parent=0 // loop_body
    %s20 = ssub.s32 %s15, 1
    %s21 = ssub.s32 %s15, 2
    %s28 = sadd.s32 1, %s23
    %p29 = scmp.ge.s32.totalorder %s28, 1
    %s30 = scalar_select %p29, 0, %s28
    %s31 = sadd.s32 1, %s22
    %s32 = scalar_select %p29, %s31, %s22
    %p33 = scmp.ge.s32.totalorder %s32, 2
    %s34 = scalar_select %p33, 0, %s32
    %s35 = ssub.s32 %s22, %s34
    %s36 = ssub.s32 %s23, %s30
    %s37 = sor.u32 %s35, %s36
    %p38 = scmp.eq.s32.totalorder %s37, 0
    %s40 = sadd.s32 %s39, 1
    %s41 = scalar_select %p38, %s39, %s40
    %p44 = pneg %p38
    %p45 = scmp.eq.s32.totalorder %s15, 1
    %p46 = por %p44, %p45
    %p47 = scmp.ne.s32.totalorder %s39, %s42
    %p48 = scmp.eq.s32.totalorder %s15, 0
    %p49 = por %p47, %p48
    %p50 = scmp.ne.s32.totalorder %s39, %s42
    %p51 = scmp.eq.s32.totalorder %s20, 1
    %p52 = por %p50, %p51
    %p53 = scmp.ne.s32.totalorder %s42, %s43
    %p54 = scmp.eq.s32.totalorder %s20, 0
    %p55 = por %p53, %p54
    %p56 = scmp.ne.s32.totalorder %s42, %s43
    %p57 = scmp.eq.s32.totalorder %s21, 1
    %p58 = por %p56, %p57
    %p60 = scmp.ne.s32.totalorder %s43, %s59
    %p61 = scmp.eq.s32.totalorder %s21, 0
    %p62 = por %p60, %p61
    %s64 = sadd.s32 %s63, 1
    %p67 = scmp.eq.s32.totalorder %s15, 1
    %p68 = scmp.ne.s32.totalorder %s63, %s65
    %p69 = scmp.eq.s32.totalorder %s15, 0
    %p70 = por %p68, %p69
    %p71 = scmp.ne.s32.totalorder %s63, %s65
    %p72 = scmp.eq.s32.totalorder %s20, 1
    %p73 = por %p71, %p72
    %p74 = scmp.ne.s32.totalorder %s65, %s66
    %p75 = scmp.eq.s32.totalorder %s20, 0
    %p76 = por %p74, %p75
    %p77 = scmp.ne.s32.totalorder %s65, %s66
    %p78 = scmp.eq.s32.totalorder %s21, 1
    %p79 = por %p77, %p78
    %p81 = scmp.ne.s32.totalorder %s66, %s80
    %p82 = scmp.eq.s32.totalorder %s21, 0
    %p83 = por %p81, %p82
    %s85 = sadd.s32 %s84, 1
    %p88 = scmp.eq.s32.totalorder %s15, 1
    %p89 = scmp.ne.s32.totalorder %s84, %s86
    %p90 = scmp.eq.s32.totalorder %s15, 0
    %p91 = por %p89, %p90
    %p92 = scmp.ne.s32.totalorder %s84, %s86
    %p93 = scmp.eq.s32.totalorder %s20, 1
    %p94 = por %p92, %p93
    %p95 = scmp.ne.s32.totalorder %s86, %s87
    %p96 = scmp.eq.s32.totalorder %s20, 0
    %p97 = por %p95, %p96
    %p98 = scmp.ne.s32.totalorder %s86, %s87
    %p99 = scmp.eq.s32.totalorder %s21, 1
    %p100 = por %p98, %p99
    %p102 = scmp.ne.s32.totalorder %s87, %s101
    %p103 = scmp.eq.s32.totalorder %s21, 0
    %p104 = por %p102, %p103
    %s106 = sadd.s32 %s105, 1
    %p109 = scmp.eq.s32.totalorder %s15, 1
    %p110 = scmp.ne.s32.totalorder %s105, %s107
    %p111 = scmp.eq.s32.totalorder %s15, 0
    %p112 = por %p110, %p111
    %p113 = scmp.ne.s32.totalorder %s105, %s107
    %p114 = scmp.eq.s32.totalorder %s20, 1
    %p115 = por %p113, %p114
    %p116 = scmp.ne.s32.totalorder %s107, %s108
    %p117 = scmp.eq.s32.totalorder %s20, 0
    %p118 = por %p116, %p117
    %p119 = scmp.ne.s32.totalorder %s107, %s108
    %p120 = scmp.eq.s32.totalorder %s21, 1
    %p121 = por %p119, %p120
    %p123 = scmp.ne.s32.totalorder %s108, %s122
    %p124 = scmp.eq.s32.totalorder %s21, 0
    %p125 = por %p123, %p124
    %s127 = sadd.s32 %s126, 1
    %p130 = scmp.eq.s32.totalorder %s15, 1
    %p131 = scmp.ne.s32.totalorder %s126, %s128
    %p132 = scmp.eq.s32.totalorder %s15, 0
    %p133 = por %p131, %p132
    %p134 = scmp.ne.s32.totalorder %s126, %s128
    %p135 = scmp.eq.s32.totalorder %s20, 1
    %p136 = por %p134, %p135
    %p137 = scmp.ne.s32.totalorder %s128, %s129
    %p138 = scmp.eq.s32.totalorder %s20, 0
    %p139 = por %p137, %p138
    %p140 = scmp.ne.s32.totalorder %s128, %s129
    %p141 = scmp.eq.s32.totalorder %s21, 1
    %p142 = por %p140, %p141
    %p144 = scmp.ne.s32.totalorder %s129, %s143
    %p145 = scmp.eq.s32.totalorder %s21, 0
    %p146 = por %p144, %p145
    %s147 = ssub.s32 %s22, %s34
    %s148 = ssub.s32 %s23, %s30
    %s149 = sor.u32 %s147, %s148
    %p150 = scmp.eq.s32.totalorder %s149, 0
    %s152 = sadd.s32 %s151, 1
    %s153 = scalar_select %p150, %s151, %s152
    %p156 = pneg %p150
    %p157 = scmp.eq.s32.totalorder %s15, 1
    %p158 = por %p156, %p157
    %p159 = scmp.ne.s32.totalorder %s151, %s154
    %p160 = scmp.eq.s32.totalorder %s15, 0
    %p161 = por %p159, %p160
    %p162 = scmp.ne.s32.totalorder %s151, %s154
    %p163 = scmp.eq.s32.totalorder %s20, 1
    %p164 = por %p162, %p163
    %p165 = scmp.ne.s32.totalorder %s154, %s155
    %p166 = scmp.eq.s32.totalorder %s20, 0
    %p167 = por %p165, %p166
    %p168 = scmp.ne.s32.totalorder %s154, %s155
    %p169 = scmp.eq.s32.totalorder %s21, 1
    %p170 = por %p168, %p169
    %p172 = scmp.ne.s32.totalorder %s155, %s171
    %p173 = scmp.eq.s32.totalorder %s21, 0
    %p174 = por %p172, %p173
    %s175 = ssub.s32 %s22, %s34
    %s176 = ssub.s32 %s23, %s30
    %s177 = sor.u32 %s175, %s176
    %p178 = scmp.eq.s32.totalorder %s177, 0
    %s180 = sadd.s32 %s179, 1
    %s181 = scalar_select %p178, %s179, %s180
    %p184 = pneg %p178
    %p185 = scmp.eq.s32.totalorder %s15, 1
    %p186 = por %p184, %p185
    %p187 = scmp.ne.s32.totalorder %s179, %s182
    %p188 = scmp.eq.s32.totalorder %s15, 0
    %p189 = por %p187, %p188
    %p190 = scmp.ne.s32.totalorder %s179, %s182
    %p191 = scmp.eq.s32.totalorder %s20, 1
    %p192 = por %p190, %p191
    %p193 = scmp.ne.s32.totalorder %s182, %s183
    %p194 = scmp.eq.s32.totalorder %s20, 0
    %p195 = por %p193, %p194
    %p196 = scmp.ne.s32.totalorder %s182, %s183
    %p197 = scmp.eq.s32.totalorder %s21, 1
    %p198 = por %p196, %p197
    %p200 = scmp.ne.s32.totalorder %s183, %s199
    %p201 = scmp.eq.s32.totalorder %s21, 0
    %p202 = por %p200, %p201
    %s203 = ssub.s32 %s22, %s34
    %s204 = ssub.s32 %s23, %s30
    %s205 = sor.u32 %s203, %s204
    %p206 = scmp.eq.s32.totalorder %s205, 0
    %s208 = sadd.s32 %s207, 1
    %s209 = scalar_select %p206, %s207, %s208
    %p212 = pneg %p206
    %p213 = scmp.eq.s32.totalorder %s15, 1
    %p214 = por %p212, %p213
    %p215 = scmp.ne.s32.totalorder %s207, %s210
    %p216 = scmp.eq.s32.totalorder %s15, 0
    %p217 = por %p215, %p216
    %p218 = scmp.ne.s32.totalorder %s207, %s210
    %p219 = scmp.eq.s32.totalorder %s20, 1
    %p220 = por %p218, %p219
    %p221 = scmp.ne.s32.totalorder %s210, %s211
    %p222 = scmp.eq.s32.totalorder %s20, 0
    %p223 = por %p221, %p222
    %p224 = scmp.ne.s32.totalorder %s210, %s211
    %p225 = scmp.eq.s32.totalorder %s21, 1
    %p226 = por %p224, %p225
    %p228 = scmp.ne.s32.totalorder %s211, %s227
    %p229 = scmp.eq.s32.totalorder %s21, 0
    %p230 = por %p228, %p229
    %s231 = ssub.s32 %s22, %s34
    %s232 = ssub.s32 %s23, %s30
    %s233 = sor.u32 %s231, %s232
    %p234 = scmp.eq.s32.totalorder %s233, 0
    %s236 = sadd.s32 %s235, 1
    %s237 = scalar_select %p234, %s235, %s236
    %p240 = pneg %p234
    %p241 = scmp.eq.s32.totalorder %s15, 1
    %p242 = por %p240, %p241
    %p243 = scmp.ne.s32.totalorder %s235, %s238
    %p244 = scmp.eq.s32.totalorder %s15, 0
    %p245 = por %p243, %p244
    %p246 = scmp.ne.s32.totalorder %s235, %s238
    %p247 = scmp.eq.s32.totalorder %s20, 1
    %p248 = por %p246, %p247
    %p249 = scmp.ne.s32.totalorder %s238, %s239
    %p250 = scmp.eq.s32.totalorder %s20, 0
    %p251 = por %p249, %p250
    %p252 = scmp.ne.s32.totalorder %s238, %s239
    %p253 = scmp.eq.s32.totalorder %s21, 1
    %p254 = por %p252, %p253
    %p256 = scmp.ne.s32.totalorder %s239, %s255
    %p257 = scmp.eq.s32.totalorder %s21, 0
    %p258 = por %p256, %p257
    %p259 = scmp.le.s32.totalorder 1, %s15
    %p260 = scmp.lt.s32.totalorder %s15, 3
    %p261 = pnand %p259, %p260
    %p262 = pneg %p261
    // Predicated region
    $region9: #{default_encoder_forward.2} parent=5 // pred_check
      _
    $region10: #{default_encoder_forward.2} parent=5 // pred_check_branch
      %264 = sbr.rel (%p261) target = $region12
    $region11: #{default_encoder_forward.2} parent=5 // pred_region
      %s265 = ssub.s32 %s15, 1
      // Predicated region
      $region13: #{default_encoder_forward.2} parent=11 // pred_check
        %p266 = pneg %p76
      $region14: #{default_encoder_forward.2} parent=11 // pred_check_branch
        %268 = sbr.rel (%p266) target = $region16
      $region15: #{default_encoder_forward.2} parent=11 // pred_region
        _
      $region16: #{default_encoder_forward.2} parent=11 // pred_fallthru
        _
      // Predicated region
      $region17: #{default_encoder_forward.2} parent=11 // pred_check
        %p269 = pneg %p97
      $region18: #{default_encoder_forward.2} parent=11 // pred_check_branch
        %271 = sbr.rel (%p269) target = $region20
      $region19: #{default_encoder_forward.2} parent=11 // pred_region
        _
      $region20: #{default_encoder_forward.2} parent=11 // pred_fallthru
        _
      // Predicated region
      $region21: #{default_encoder_forward.2} parent=11 // pred_check
        %p272 = pneg %p118
      $region22: #{default_encoder_forward.2} parent=11 // pred_check_branch
        %274 = sbr.rel (%p272) target = $region24
      $region23: #{default_encoder_forward.2} parent=11 // pred_region
        _
      $region24: #{default_encoder_forward.2} parent=11 // pred_fallthru
        _
      // Predicated region
      $region25: #{default_encoder_forward.2} parent=11 // pred_check
        %p275 = pneg %p139
      $region26: #{default_encoder_forward.2} parent=11 // pred_check_branch
        %277 = sbr.rel (%p275) target = $region28
      $region27: #{default_encoder_forward.2} parent=11 // pred_region
        _
      $region28: #{default_encoder_forward.2} parent=11 // pred_fallthru
        _
    $region12: #{default_encoder_forward.2} parent=5 // pred_fallthru
      _
    %p278 = scmp.lt.s32.totalorder %s15, 2
    // Predicated region
    $region29: #{default_encoder_forward.2} parent=5 // pred_check
      %p279 = pneg %p278
    $region30: #{default_encoder_forward.2} parent=5 // pred_check_branch
      %281 = sbr.rel (%p279) target = $region32
    $region31: #{default_encoder_forward.2} parent=5 // pred_region
      // Predicated region
      $region33: #{default_encoder_forward.2} parent=31 // pred_check
        %p282 = pneg %p49
      $region34: #{default_encoder_forward.2} parent=31 // pred_check_branch
        %284 = sbr.rel (%p282) target = $region36
      $region35: #{default_encoder_forward.2} parent=31 // pred_region
        %s285 = smul.u32 48, %s23
        %p286 = scmp.lt.s32.totalorder %s22, 1
        %s287 = scalar_select %p286, %s22, 1
        %p288 = scmp.lt.s32.totalorder %s285, 47
        %s289 = scalar_select %p288, %s285, 47
        %s290 = smul.addr %s287, 48
        %s291 = sadd.s32 %s289, %s290
        %s292 = smul.addr %s291, 8
        %s293 = scalar_lea.vmem %s0, %s292
        %s294 = smul.u32 48, %s23
      $region36: #{default_encoder_forward.2} parent=31 // pred_fallthru
        _
    $region32: #{default_encoder_forward.2} parent=5 // pred_fallthru
      _
    %p295 = scmp.le.s32.totalorder 1, %s15
    %p296 = scmp.lt.s32.totalorder %s15, 3
    %p297 = pnand %p295, %p296
    %p298 = pneg %p297
    // Predicated region
    $region37: #{default_encoder_forward.2} parent=5 // pred_check
      _
    $region38: #{default_encoder_forward.2} parent=5 // pred_check_branch
      %300 = sbr.rel (%p297) target = $region40
    $region39: #{default_encoder_forward.2} parent=5 // pred_region
      %s301 = ssub.s32 %s15, 1
      %s302 = smul.u32 48, %s25
      %p303 = scmp.lt.s32.totalorder %s24, 1
      %s304 = scalar_select %p303, %s24, 1
      %p305 = scmp.lt.s32.totalorder %s302, 47
      %s306 = scalar_select %p305, %s302, 47
      %s307 = smul.addr %s304, 48
      %s308 = sadd.s32 %s306, %s307
      %s309 = smul.addr %s308, 8
      %s310 = scalar_lea.vmem %s0, %s309
      %p311 = pneg %p55
      %p312 = pneg %p52
      %p313 = pneg %p76
      %p314 = pneg %p73
      %p315 = pneg %p97
      %p316 = pneg %p94
      %p317 = pneg %p118
      %p318 = pneg %p115
      %p319 = pneg %p139
      %p320 = pneg %p136
      %p321 = pneg %p167
      %p322 = pneg %p164
      %s323 = smul.u32 48, %s25
      %p324 = scmp.lt.s32.totalorder %s24, 1
      %s325 = scalar_select %p324, %s24, 1
      %p326 = scmp.lt.s32.totalorder %s323, 47
      %s327 = scalar_select %p326, %s323, 47
      %s328 = smul.addr %s325, 48
      %s329 = sadd.s32 %s327, %s328
      %s330 = smul.addr %s329, 8
      %s331 = scalar_lea.vmem %s5, %s330
      %p332 = pneg %p195
      %p333 = pneg %p192
      %s334 = smul.u32 48, %s25
      %p335 = scmp.lt.s32.totalorder %s24, 1
      %s336 = scalar_select %p335, %s24, 1
      %p337 = scmp.lt.s32.totalorder %s334, 47
      %s338 = scalar_select %p337, %s334, 47
      %s339 = smul.addr %s336, 48
      %s340 = sadd.s32 %s338, %s339
      %s341 = smul.addr %s340, 8
      %s342 = scalar_lea.vmem %s6, %s341
      %p343 = pneg %p223
      %p344 = pneg %p220
      %s345 = smul.u32 48, %s25
      %p346 = scmp.lt.s32.totalorder %s24, 1
      %s347 = scalar_select %p346, %s24, 1
      %p348 = scmp.lt.s32.totalorder %s345, 47
      %s349 = scalar_select %p348, %s345, 47
      %s350 = smul.addr %s347, 48
      %s351 = sadd.s32 %s349, %s350
      %s352 = smul.addr %s351, 8
      %s353 = scalar_lea.vmem %s7, %s352
      %p354 = pneg %p251
      %p355 = pneg %p248
      %s356 = smul.u32 48, %s25
      %p357 = scmp.lt.s32.totalorder %s24, 1
      %s358 = scalar_select %p357, %s24, 1
      %p359 = scmp.lt.s32.totalorder %s356, 47
      %s360 = scalar_select %p359, %s356, 47
      %s361 = smul.addr %s358, 48
      %s362 = sadd.s32 %s360, %s361
      %s363 = smul.addr %s362, 8
      %s364 = scalar_lea.vmem %s8, %s363
      %s365 = smul.u32 48, %s25
      %p366 = scmp.lt.s32.totalorder %s24, 1
      %s367 = scalar_select %p366, %s24, 1
      %p368 = scmp.lt.s32.totalorder %s365, 47
      %s369 = scalar_select %p368, %s365, 47
      %s370 = smul.addr %s367, 48
      %s371 = sadd.s32 %s369, %s370
      %s372 = smul.addr %s371, 8
      %s373 = scalar_lea.vmem %s0, %s372
      %s374 = smul.u32 48, %s25
      %s375 = smul.u32 48, %s25
      %p376 = scmp.lt.s32.totalorder %s24, 1
      %s377 = scalar_select %p376, %s24, 1
      %p378 = scmp.lt.s32.totalorder %s375, 47
      %s379 = scalar_select %p378, %s375, 47
      %s380 = smul.addr %s377, 48
      %s381 = sadd.s32 %s379, %s380
      %s382 = smul.addr %s381, 8
      %s383 = scalar_lea.vmem %s5, %s382
      %s384 = smul.u32 48, %s25
      %s385 = smul.u32 48, %s25
      %p386 = scmp.lt.s32.totalorder %s24, 1
      %s387 = scalar_select %p386, %s24, 1
      %p388 = scmp.lt.s32.totalorder %s385, 47
      %s389 = scalar_select %p388, %s385, 47
      %s390 = smul.addr %s387, 48
      %s391 = sadd.s32 %s389, %s390
      %s392 = smul.addr %s391, 8
      %s393 = scalar_lea.vmem %s6, %s392
      %s394 = smul.u32 48, %s25
      %s395 = smul.u32 48, %s25
      %p396 = scmp.lt.s32.totalorder %s24, 1
      %s397 = scalar_select %p396, %s24, 1
      %p398 = scmp.lt.s32.totalorder %s395, 47
      %s399 = scalar_select %p398, %s395, 47
      %s400 = smul.addr %s397, 48
      %s401 = sadd.s32 %s399, %s400
      %s402 = smul.addr %s401, 8
      %s403 = scalar_lea.vmem %s7, %s402
      %s404 = smul.u32 48, %s25
      %s405 = smul.u32 48, %s25
      %p406 = scmp.lt.s32.totalorder %s24, 1
      %s407 = scalar_select %p406, %s24, 1
      %p408 = scmp.lt.s32.totalorder %s405, 47
      %s409 = scalar_select %p408, %s405, 47
      %s410 = smul.addr %s407, 48
      %s411 = sadd.s32 %s409, %s410
      %s412 = smul.addr %s411, 8
      %s413 = scalar_lea.vmem %s8, %s412
      %s414 = smul.u32 48, %s25
      %v415 = vld [vmem:[%s373] sm:$0xff]
      %v416 = vld [vmem:[%s373 + $0x8] sm:$0xff]
      %v417 = vld [vmem:[%s373 + $0x10] sm:$0xff]
      %v418 = vld [vmem:[%s373 + $0x18] sm:$0xff]
      %v419 = vld [vmem:[%s373 + $0x20] sm:$0xff]
      %v420 = vld [vmem:[%s373 + $0x28] sm:$0xff]
      %v421 = vld [vmem:[%s373 + $0x30] sm:$0xff]
      %v422 = vld [vmem:[%s373 + $0x38] sm:$0xff]
      %v423 = vld [vmem:[%s373 + $0x40] sm:$0xff]
      %v424 = vld [vmem:[%s373 + $0x48] sm:$0xff]
      %v425 = vld [vmem:[%s373 + $0x50] sm:$0xff]
      %v426 = vld [vmem:[%s373 + $0x58] sm:$0xff]
      %v427 = vld [vmem:[%s373 + $0x60] sm:$0xff]
      %v428 = vld [vmem:[%s373 + $0x68] sm:$0xff]
      %v429 = vld [vmem:[%s373 + $0x70] sm:$0xff]
      %v430 = vld [vmem:[%s373 + $0x78] sm:$0xff]
      %v431 = vld [vmem:[%s373 + $0x80] sm:$0xff]
      %v432 = vld [vmem:[%s373 + $0x88] sm:$0xff]
      %v433 = vld [vmem:[%s373 + $0x90] sm:$0xff]
      %v434 = vld [vmem:[%s373 + $0x98] sm:$0xff]
      %v435 = vld [vmem:[%s373 + $0xa0] sm:$0xff]
      %v436 = vld [vmem:[%s373 + $0xa8] sm:$0xff]
      %v437 = vld [vmem:[%s373 + $0xb0] sm:$0xff]
      %v438 = vld [vmem:[%s373 + $0xb8] sm:$0xff]
      %v439 = vld [vmem:[%s373 + $0xc0] sm:$0xff]
      %v440 = vld [vmem:[%s373 + $0xc8] sm:$0xff]
      %v441 = vld [vmem:[%s373 + $0xd0] sm:$0xff]
      %v442 = vld [vmem:[%s373 + $0xd8] sm:$0xff]
      %v443 = vld [vmem:[%s373 + $0xe0] sm:$0xff]
      %v444 = vld [vmem:[%s373 + $0xe8] sm:$0xff]
      %v445 = vld [vmem:[%s373 + $0xf0] sm:$0xff]
      %v446 = vld [vmem:[%s373 + $0xf8] sm:$0xff]
      %v447 = vld [vmem:[%s373 + $0x100] sm:$0xff]
      %v448 = vld [vmem:[%s373 + $0x108] sm:$0xff]
      %v449 = vld [vmem:[%s373 + $0x110] sm:$0xff]
      %v450 = vld [vmem:[%s373 + $0x118] sm:$0xff]
      %v451 = vld [vmem:[%s373 + $0x120] sm:$0xff]
      %v452 = vld [vmem:[%s373 + $0x128] sm:$0xff]
      %v453 = vld [vmem:[%s373 + $0x130] sm:$0xff]
      %v454 = vld [vmem:[%s373 + $0x138] sm:$0xff]
      %v455 = vld [vmem:[%s373 + $0x140] sm:$0xff]
      %v456 = vld [vmem:[%s373 + $0x148] sm:$0xff]
      %v457 = vld [vmem:[%s373 + $0x150] sm:$0xff]
      %v458 = vld [vmem:[%s373 + $0x158] sm:$0xff]
      %v459 = vld [vmem:[%s373 + $0x160] sm:$0xff]
      %v460 = vld [vmem:[%s373 + $0x168] sm:$0xff]
      %v461 = vld [vmem:[%s373 + $0x170] sm:$0xff]
      %v462 = vld [vmem:[%s373 + $0x178] sm:$0xff]
      %v463 = vld [vmem:[%s1] sm:$0xff]
      %v464 = vld [vmem:[%s1 + $0x8] sm:$0xff]
      %v465 = vld [vmem:[%s1 + $0x10] sm:$0xff]
      %v466 = vld [vmem:[%s1 + $0x18] sm:$0xff]
      %v467 = vld [vmem:[%s1 + $0x20] sm:$0xff]
      %v468 = vld [vmem:[%s1 + $0x28] sm:$0xff]
      %v469 = vld [vmem:[%s1 + $0x30] sm:$0xff]
      %v470 = vld [vmem:[%s1 + $0x38] sm:$0xff]
      %v471 = vld [vmem:[%s1 + $0x40] sm:$0xff]
      %v472 = vld [vmem:[%s1 + $0x48] sm:$0xff]
      %v473 = vld [vmem:[%s1 + $0x50] sm:$0xff]
      %v474 = vld [vmem:[%s1 + $0x58] sm:$0xff]
      %v475 = vld [vmem:[%s1 + $0x60] sm:$0xff]
      %v476 = vld [vmem:[%s1 + $0x68] sm:$0xff]
      %v477 = vld [vmem:[%s1 + $0x70] sm:$0xff]
      %v478 = vld [vmem:[%s1 + $0x78] sm:$0xff]
      %v479 = vld [vmem:[%s2] sm:$0x1]
      %v481 = vperm.slane %v479, 0
      %483 = vmatpush.msra.mxu0 %v478
      %484 = vmatpush.msra.mxu0 %v477
      %485 = vmatpush.msra.mxu0 %v476
      %486 = vmatpush.msra.mxu0 %v475
      %487 = vmatpush.msra.mxu0 %v474
      %488 = vmatpush.msra.mxu0 %v473
      %489 = vmatpush.msra.mxu0 %v472
      %490 = vmatpush.msra.mxu0 %v471
      %491 = vmatpush.msra.mxu0 %v470
      %492 = vmatpush.msra.mxu0 %v469
      %493 = vmatpush.msra.mxu0 %v468
      %494 = vmatpush.msra.mxu0 %v467
      %495 = vmatpush.msra.mxu0 %v466
      %496 = vmatpush.msra.mxu0 %v465
      %497 = vmatpush.msra.mxu0 %v464
      %498 = vmatpush.msra.mxu0 %v463
      %499 = vmatmul.f32.gmra.mxu0 %v415
      %v500 = vpop.f32.mrf.mxu0
      %v501 = vadd.f32 %v481, %v500
      %502 = vmatmul.f32.gmra.mxu0 %v416
      %v503 = vpop.f32.mrf.mxu0
      %v504 = vadd.f32 %v481, %v503
      %505 = vmatmul.f32.gmra.mxu0 %v417
      %v506 = vpop.f32.mrf.mxu0
      %v507 = vadd.f32 %v481, %v506
      %508 = vmatmul.f32.gmra.mxu0 %v418
      %v509 = vpop.f32.mrf.mxu0
      %v510 = vadd.f32 %v481, %v509
      %511 = vmatmul.f32.gmra.mxu0 %v419
      %v512 = vpop.f32.mrf.mxu0
      %v513 = vadd.f32 %v481, %v512
      %514 = vmatmul.f32.gmra.mxu0 %v420
      %v515 = vpop.f32.mrf.mxu0
      %v516 = vadd.f32 %v481, %v515
      %517 = vmatmul.f32.gmra.mxu0 %v421
      %v518 = vpop.f32.mrf.mxu0
      %v519 = vadd.f32 %v481, %v518
      %520 = vmatmul.f32.gmra.mxu0 %v422
      %v521 = vpop.f32.mrf.mxu0
      %v522 = vadd.f32 %v481, %v521
      %523 = vmatmul.f32.gmra.mxu0 %v423
      %v524 = vpop.f32.mrf.mxu0
      %v525 = vadd.f32 %v481, %v524
      %526 = vmatmul.f32.gmra.mxu0 %v424
      %v527 = vpop.f32.mrf.mxu0
      %v528 = vadd.f32 %v481, %v527
      %529 = vmatmul.f32.gmra.mxu0 %v425
      %v530 = vpop.f32.mrf.mxu0
      %v531 = vadd.f32 %v481, %v530
      %532 = vmatmul.f32.gmra.mxu0 %v426
      %v533 = vpop.f32.mrf.mxu0
      %v534 = vadd.f32 %v481, %v533
      %535 = vmatmul.f32.gmra.mxu0 %v427
      %v536 = vpop.f32.mrf.mxu0
      %v537 = vadd.f32 %v481, %v536
      %538 = vmatmul.f32.gmra.mxu0 %v428
      %v539 = vpop.f32.mrf.mxu0
      %v540 = vadd.f32 %v481, %v539
      %541 = vmatmul.f32.gmra.mxu0 %v429
      %v542 = vpop.f32.mrf.mxu0
      %v543 = vadd.f32 %v481, %v542
      %544 = vmatmul.f32.gmra.mxu0 %v430
      %v545 = vpop.f32.mrf.mxu0
      %v546 = vadd.f32 %v481, %v545
      %547 = vmatmul.f32.gmra.mxu0 %v431
      %v548 = vpop.f32.mrf.mxu0
      %v549 = vadd.f32 %v481, %v548
      %550 = vmatmul.f32.gmra.mxu0 %v432
      %v551 = vpop.f32.mrf.mxu0
      %v552 = vadd.f32 %v481, %v551
      %553 = vmatmul.f32.gmra.mxu0 %v433
      %v554 = vpop.f32.mrf.mxu0
      %v555 = vadd.f32 %v481, %v554
      %556 = vmatmul.f32.gmra.mxu0 %v434
      %v557 = vpop.f32.mrf.mxu0
      %v558 = vadd.f32 %v481, %v557
      %559 = vmatmul.f32.gmra.mxu0 %v435
      %v560 = vpop.f32.mrf.mxu0
      %v561 = vadd.f32 %v481, %v560
      %562 = vmatmul.f32.gmra.mxu0 %v436
      %v563 = vpop.f32.mrf.mxu0
      %v564 = vadd.f32 %v481, %v563
      %565 = vmatmul.f32.gmra.mxu0 %v437
      %v566 = vpop.f32.mrf.mxu0
      %v567 = vadd.f32 %v481, %v566
      %568 = vmatmul.f32.gmra.mxu0 %v438
      %v569 = vpop.f32.mrf.mxu0
      %v570 = vadd.f32 %v481, %v569
      %571 = vmatmul.f32.gmra.mxu0 %v439
      %v572 = vpop.f32.mrf.mxu0
      %v573 = vadd.f32 %v481, %v572
      %574 = vmatmul.f32.gmra.mxu0 %v440
      %v575 = vpop.f32.mrf.mxu0
      %v576 = vadd.f32 %v481, %v575
      %577 = vmatmul.f32.gmra.mxu0 %v441
      %v578 = vpop.f32.mrf.mxu0
      %v579 = vadd.f32 %v481, %v578
      %580 = vmatmul.f32.gmra.mxu0 %v442
      %v581 = vpop.f32.mrf.mxu0
      %v582 = vadd.f32 %v481, %v581
      %583 = vmatmul.f32.gmra.mxu0 %v443
      %v584 = vpop.f32.mrf.mxu0
      %v585 = vadd.f32 %v481, %v584
      %586 = vmatmul.f32.gmra.mxu0 %v444
      %v587 = vpop.f32.mrf.mxu0
      %v588 = vadd.f32 %v481, %v587
      %589 = vmatmul.f32.gmra.mxu0 %v445
      %v590 = vpop.f32.mrf.mxu0
      %v591 = vadd.f32 %v481, %v590
      %592 = vmatmul.f32.gmra.mxu0 %v446
      %v593 = vpop.f32.mrf.mxu0
      %v594 = vadd.f32 %v481, %v593
      %595 = vmatmul.f32.gmra.mxu0 %v447
      %v596 = vpop.f32.mrf.mxu0
      %v597 = vadd.f32 %v481, %v596
      %598 = vmatmul.f32.gmra.mxu0 %v448
      %v599 = vpop.f32.mrf.mxu0
      %v600 = vadd.f32 %v481, %v599
      %601 = vmatmul.f32.gmra.mxu0 %v449
      %v602 = vpop.f32.mrf.mxu0
      %v603 = vadd.f32 %v481, %v602
      %604 = vmatmul.f32.gmra.mxu0 %v450
      %v605 = vpop.f32.mrf.mxu0
      %v606 = vadd.f32 %v481, %v605
      %607 = vmatmul.f32.gmra.mxu0 %v451
      %v608 = vpop.f32.mrf.mxu0
      %v609 = vadd.f32 %v481, %v608
      %610 = vmatmul.f32.gmra.mxu0 %v452
      %v611 = vpop.f32.mrf.mxu0
      %v612 = vadd.f32 %v481, %v611
      %613 = vmatmul.f32.gmra.mxu0 %v453
      %v614 = vpop.f32.mrf.mxu0
      %v615 = vadd.f32 %v481, %v614
      %616 = vmatmul.f32.gmra.mxu0 %v454
      %v617 = vpop.f32.mrf.mxu0
      %v618 = vadd.f32 %v481, %v617
      %619 = vmatmul.f32.gmra.mxu0 %v455
      %v620 = vpop.f32.mrf.mxu0
      %v621 = vadd.f32 %v481, %v620
      %622 = vmatmul.f32.gmra.mxu0 %v456
      %v623 = vpop.f32.mrf.mxu0
      %v624 = vadd.f32 %v481, %v623
      %625 = vmatmul.f32.gmra.mxu0 %v457
      %v626 = vpop.f32.mrf.mxu0
      %v627 = vadd.f32 %v481, %v626
      %628 = vmatmul.f32.gmra.mxu0 %v458
      %v629 = vpop.f32.mrf.mxu0
      %v630 = vadd.f32 %v481, %v629
      %631 = vmatmul.f32.gmra.mxu0 %v459
      %v632 = vpop.f32.mrf.mxu0
      %v633 = vadd.f32 %v481, %v632
      %634 = vmatmul.f32.gmra.mxu0 %v460
      %v635 = vpop.f32.mrf.mxu0
      %v636 = vadd.f32 %v481, %v635
      %637 = vmatmul.f32.gmra.mxu0 %v461
      %v638 = vpop.f32.mrf.mxu0
      %v639 = vadd.f32 %v481, %v638
      %640 = vmatmul.f32.gmra.mxu0 %v462
      %v641 = vpop.f32.mrf.mxu0
      %v642 = vadd.f32 %v481, %v641
      %643 = vdwg.mxu0
      %644 = vst [vmem:[%s383] sm:$0xff] %v501
      %645 = vst [vmem:[%s383 + $0x8] sm:$0xff] %v504
      %646 = vst [vmem:[%s383 + $0x10] sm:$0xff] %v507
      %647 = vst [vmem:[%s383 + $0x18] sm:$0xff] %v510
      %648 = vst [vmem:[%s383 + $0x20] sm:$0xff] %v513
      %649 = vst [vmem:[%s383 + $0x28] sm:$0xff] %v516
      %650 = vst [vmem:[%s383 + $0x30] sm:$0xff] %v519
      %651 = vst [vmem:[%s383 + $0x38] sm:$0xff] %v522
      %652 = vst [vmem:[%s383 + $0x40] sm:$0xff] %v525
      %653 = vst [vmem:[%s383 + $0x48] sm:$0xff] %v528
      %654 = vst [vmem:[%s383 + $0x50] sm:$0xff] %v531
      %655 = vst [vmem:[%s383 + $0x58] sm:$0xff] %v534
      %656 = vst [vmem:[%s383 + $0x60] sm:$0xff] %v537
      %657 = vst [vmem:[%s383 + $0x68] sm:$0xff] %v540
      %658 = vst [vmem:[%s383 + $0x70] sm:$0xff] %v543
      %659 = vst [vmem:[%s383 + $0x78] sm:$0xff] %v546
      %660 = vst [vmem:[%s383 + $0x80] sm:$0xff] %v549
      %661 = vst [vmem:[%s383 + $0x88] sm:$0xff] %v552
      %662 = vst [vmem:[%s383 + $0x90] sm:$0xff] %v555
      %663 = vst [vmem:[%s383 + $0x98] sm:$0xff] %v558
      %664 = vst [vmem:[%s383 + $0xa0] sm:$0xff] %v561
      %665 = vst [vmem:[%s383 + $0xa8] sm:$0xff] %v564
      %666 = vst [vmem:[%s383 + $0xb0] sm:$0xff] %v567
      %667 = vst [vmem:[%s383 + $0xb8] sm:$0xff] %v570
      %668 = vst [vmem:[%s383 + $0xc0] sm:$0xff] %v573
      %669 = vst [vmem:[%s383 + $0xc8] sm:$0xff] %v576
      %670 = vst [vmem:[%s383 + $0xd0] sm:$0xff] %v579
      %671 = vst [vmem:[%s383 + $0xd8] sm:$0xff] %v582
      %672 = vst [vmem:[%s383 + $0xe0] sm:$0xff] %v585
      %673 = vst [vmem:[%s383 + $0xe8] sm:$0xff] %v588
      %674 = vst [vmem:[%s383 + $0xf0] sm:$0xff] %v591
      %675 = vst [vmem:[%s383 + $0xf8] sm:$0xff] %v594
      %676 = vst [vmem:[%s383 + $0x100] sm:$0xff] %v597
      %677 = vst [vmem:[%s383 + $0x108] sm:$0xff] %v600
      %678 = vst [vmem:[%s383 + $0x110] sm:$0xff] %v603
      %679 = vst [vmem:[%s383 + $0x118] sm:$0xff] %v606
      %680 = vst [vmem:[%s383 + $0x120] sm:$0xff] %v609
      %681 = vst [vmem:[%s383 + $0x128] sm:$0xff] %v612
      %682 = vst [vmem:[%s383 + $0x130] sm:$0xff] %v615
      %683 = vst [vmem:[%s383 + $0x138] sm:$0xff] %v618
      %684 = vst [vmem:[%s383 + $0x140] sm:$0xff] %v621
      %685 = vst [vmem:[%s383 + $0x148] sm:$0xff] %v624
      %686 = vst [vmem:[%s383 + $0x150] sm:$0xff] %v627
      %687 = vst [vmem:[%s383 + $0x158] sm:$0xff] %v630
      %688 = vst [vmem:[%s383 + $0x160] sm:$0xff] %v633
      %689 = vst [vmem:[%s383 + $0x168] sm:$0xff] %v636
      %690 = vst [vmem:[%s383 + $0x170] sm:$0xff] %v639
      %691 = vst [vmem:[%s383 + $0x178] sm:$0xff] %v642
      %v692 = vld [vmem:[%s3] sm:$0xff]
      %v693 = vld [vmem:[%s3 + $0x8] sm:$0xff]
      %v694 = vld [vmem:[%s3 + $0x10] sm:$0xff]
      %v695 = vld [vmem:[%s3 + $0x18] sm:$0xff]
      %v696 = vld [vmem:[%s3 + $0x20] sm:$0xff]
      %v697 = vld [vmem:[%s3 + $0x28] sm:$0xff]
      %v698 = vld [vmem:[%s3 + $0x30] sm:$0xff]
      %v699 = vld [vmem:[%s3 + $0x38] sm:$0xff]
      %v700 = vld [vmem:[%s3 + $0x40] sm:$0xff]
      %v701 = vld [vmem:[%s3 + $0x48] sm:$0xff]
      %v702 = vld [vmem:[%s3 + $0x50] sm:$0xff]
      %v703 = vld [vmem:[%s3 + $0x58] sm:$0xff]
      %v704 = vld [vmem:[%s3 + $0x60] sm:$0xff]
      %v705 = vld [vmem:[%s3 + $0x68] sm:$0xff]
      %v706 = vld [vmem:[%s3 + $0x70] sm:$0xff]
      %v707 = vld [vmem:[%s3 + $0x78] sm:$0xff]
      %v708 = vld [vmem:[%s3 + $0x80] sm:$0xff]
      %v709 = vld [vmem:[%s3 + $0x88] sm:$0xff]
      %v710 = vld [vmem:[%s3 + $0x90] sm:$0xff]
      %v711 = vld [vmem:[%s3 + $0x98] sm:$0xff]
      %v712 = vld [vmem:[%s3 + $0xa0] sm:$0xff]
      %v713 = vld [vmem:[%s3 + $0xa8] sm:$0xff]
      %v714 = vld [vmem:[%s3 + $0xb0] sm:$0xff]
      %v715 = vld [vmem:[%s3 + $0xb8] sm:$0xff]
      %v716 = vld [vmem:[%s3 + $0xc0] sm:$0xff]
      %v717 = vld [vmem:[%s3 + $0xc8] sm:$0xff]
      %v718 = vld [vmem:[%s3 + $0xd0] sm:$0xff]
      %v719 = vld [vmem:[%s3 + $0xd8] sm:$0xff]
      %v720 = vld [vmem:[%s3 + $0xe0] sm:$0xff]
      %v721 = vld [vmem:[%s3 + $0xe8] sm:$0xff]
      %v722 = vld [vmem:[%s3 + $0xf0] sm:$0xff]
      %v723 = vld [vmem:[%s3 + $0xf8] sm:$0xff]
      %v724 = vld [vmem:[%s3 + $0x100] sm:$0xff]
      %v725 = vld [vmem:[%s3 + $0x108] sm:$0xff]
      %v726 = vld [vmem:[%s3 + $0x110] sm:$0xff]
      %v727 = vld [vmem:[%s3 + $0x118] sm:$0xff]
      %v728 = vld [vmem:[%s3 + $0x120] sm:$0xff]
      %v729 = vld [vmem:[%s3 + $0x128] sm:$0xff]
      %v730 = vld [vmem:[%s3 + $0x130] sm:$0xff]
      %v731 = vld [vmem:[%s3 + $0x138] sm:$0xff]
      %v732 = vld [vmem:[%s3 + $0x140] sm:$0xff]
      %v733 = vld [vmem:[%s3 + $0x148] sm:$0xff]
      %v734 = vld [vmem:[%s3 + $0x150] sm:$0xff]
      %v735 = vld [vmem:[%s3 + $0x158] sm:$0xff]
      %v736 = vld [vmem:[%s3 + $0x160] sm:$0xff]
      %v737 = vld [vmem:[%s3 + $0x168] sm:$0xff]
      %v738 = vld [vmem:[%s3 + $0x170] sm:$0xff]
      %v739 = vld [vmem:[%s3 + $0x178] sm:$0xff]
      %v740 = vld [vmem:[%s4] sm:$0x7]
      %v742 = vperm.slane %v740, 0
      %v743 = vperm.slane %v740, 1
      %v744 = vperm.slane %v740, 2
      %748 = vmatpush.msra.mxu0 %v737
      %749 = vmatpush.msra.mxu0 %v734
      %750 = vmatpush.msra.mxu0 %v731
      %751 = vmatpush.msra.mxu0 %v728
      %752 = vmatpush.msra.mxu0 %v725
      %753 = vmatpush.msra.mxu0 %v722
      %754 = vmatpush.msra.mxu0 %v719
      %755 = vmatpush.msra.mxu0 %v716
      %756 = vmatpush.msra.mxu0 %v713
      %757 = vmatpush.msra.mxu0 %v710
      %758 = vmatpush.msra.mxu0 %v707
      %759 = vmatpush.msra.mxu0 %v704
      %760 = vmatpush.msra.mxu0 %v701
      %761 = vmatpush.msra.mxu0 %v698
      %762 = vmatpush.msra.mxu0 %v695
      %763 = vmatpush.msra.mxu0 %v692
      %764 = vmatmul.f32.gmra.mxu0 %v501
      %v765 = vpop.f32.mrf.mxu0
      %v766 = vadd.f32 %v742, %v765
      %767 = vmatmul.f32.gmra.mxu0 %v504
      %v768 = vpop.f32.mrf.mxu0
      %v769 = vadd.f32 %v742, %v768
      %770 = vmatmul.f32.gmra.mxu0 %v507
      %v771 = vpop.f32.mrf.mxu0
      %v772 = vadd.f32 %v742, %v771
      %773 = vmatmul.f32.gmra.mxu0 %v510
      %v774 = vpop.f32.mrf.mxu0
      %v775 = vadd.f32 %v742, %v774
      %776 = vmatmul.f32.gmra.mxu0 %v513
      %v777 = vpop.f32.mrf.mxu0
      %v778 = vadd.f32 %v742, %v777
      %779 = vmatmul.f32.gmra.mxu0 %v516
      %v780 = vpop.f32.mrf.mxu0
      %v781 = vadd.f32 %v742, %v780
      %782 = vmatmul.f32.gmra.mxu0 %v519
      %v783 = vpop.f32.mrf.mxu0
      %v784 = vadd.f32 %v742, %v783
      %785 = vmatmul.f32.gmra.mxu0 %v522
      %v786 = vpop.f32.mrf.mxu0
      %v787 = vadd.f32 %v742, %v786
      %788 = vmatmul.f32.gmra.mxu0 %v525
      %v789 = vpop.f32.mrf.mxu0
      %v790 = vadd.f32 %v742, %v789
      %791 = vmatmul.f32.gmra.mxu0 %v528
      %v792 = vpop.f32.mrf.mxu0
      %v793 = vadd.f32 %v742, %v792
      %794 = vmatmul.f32.gmra.mxu0 %v531
      %v795 = vpop.f32.mrf.mxu0
      %v796 = vadd.f32 %v742, %v795
      %797 = vmatmul.f32.gmra.mxu0 %v534
      %v798 = vpop.f32.mrf.mxu0
      %v799 = vadd.f32 %v742, %v798
      %800 = vmatmul.f32.gmra.mxu0 %v537
      %v801 = vpop.f32.mrf.mxu0
      %v802 = vadd.f32 %v742, %v801
      %803 = vmatmul.f32.gmra.mxu0 %v540
      %v804 = vpop.f32.mrf.mxu0
      %v805 = vadd.f32 %v742, %v804
      %806 = vmatmul.f32.gmra.mxu0 %v543
      %v807 = vpop.f32.mrf.mxu0
      %v808 = vadd.f32 %v742, %v807
      %809 = vmatmul.f32.gmra.mxu0 %v546
      %v810 = vpop.f32.mrf.mxu0
      %v811 = vadd.f32 %v742, %v810
      %812 = vmatmul.f32.gmra.mxu0 %v549
      %v813 = vpop.f32.mrf.mxu0
      %v814 = vadd.f32 %v742, %v813
      %815 = vmatmul.f32.gmra.mxu0 %v552
      %v816 = vpop.f32.mrf.mxu0
      %v817 = vadd.f32 %v742, %v816
      %818 = vmatmul.f32.gmra.mxu0 %v555
      %v819 = vpop.f32.mrf.mxu0
      %v820 = vadd.f32 %v742, %v819
      %821 = vmatmul.f32.gmra.mxu0 %v558
      %v822 = vpop.f32.mrf.mxu0
      %v823 = vadd.f32 %v742, %v822
      %824 = vmatmul.f32.gmra.mxu0 %v561
      %v825 = vpop.f32.mrf.mxu0
      %v826 = vadd.f32 %v742, %v825
      %827 = vmatmul.f32.gmra.mxu0 %v564
      %v828 = vpop.f32.mrf.mxu0
      %v829 = vadd.f32 %v742, %v828
      %830 = vmatmul.f32.gmra.mxu0 %v567
      %v831 = vpop.f32.mrf.mxu0
      %v832 = vadd.f32 %v742, %v831
      %833 = vmatmul.f32.gmra.mxu0 %v570
      %v834 = vpop.f32.mrf.mxu0
      %v835 = vadd.f32 %v742, %v834
      %836 = vmatmul.f32.gmra.mxu0 %v573
      %v837 = vpop.f32.mrf.mxu0
      %v838 = vadd.f32 %v742, %v837
      %839 = vmatmul.f32.gmra.mxu0 %v576
      %v840 = vpop.f32.mrf.mxu0
      %v841 = vadd.f32 %v742, %v840
      %842 = vmatmul.f32.gmra.mxu0 %v579
      %v843 = vpop.f32.mrf.mxu0
      %v844 = vadd.f32 %v742, %v843
      %845 = vmatmul.f32.gmra.mxu0 %v582
      %v846 = vpop.f32.mrf.mxu0
      %v847 = vadd.f32 %v742, %v846
      %848 = vmatmul.f32.gmra.mxu0 %v585
      %v849 = vpop.f32.mrf.mxu0
      %v850 = vadd.f32 %v742, %v849
      %851 = vmatmul.f32.gmra.mxu0 %v588
      %v852 = vpop.f32.mrf.mxu0
      %v853 = vadd.f32 %v742, %v852
      %854 = vmatmul.f32.gmra.mxu0 %v591
      %v855 = vpop.f32.mrf.mxu0
      %v856 = vadd.f32 %v742, %v855
      %857 = vmatmul.f32.gmra.mxu0 %v594
      %v858 = vpop.f32.mrf.mxu0
      %v859 = vadd.f32 %v742, %v858
      %860 = vmatmul.f32.gmra.mxu0 %v597
      %v861 = vpop.f32.mrf.mxu0
      %v862 = vadd.f32 %v742, %v861
      %863 = vmatmul.f32.gmra.mxu0 %v600
      %v864 = vpop.f32.mrf.mxu0
      %v865 = vadd.f32 %v742, %v864
      %866 = vmatmul.f32.gmra.mxu0 %v603
      %v867 = vpop.f32.mrf.mxu0
      %v868 = vadd.f32 %v742, %v867
      %869 = vmatmul.f32.gmra.mxu0 %v606
      %v870 = vpop.f32.mrf.mxu0
      %v871 = vadd.f32 %v742, %v870
      %872 = vmatmul.f32.gmra.mxu0 %v609
      %v873 = vpop.f32.mrf.mxu0
      %v874 = vadd.f32 %v742, %v873
      %875 = vmatmul.f32.gmra.mxu0 %v612
      %v876 = vpop.f32.mrf.mxu0
      %v877 = vadd.f32 %v742, %v876
      %878 = vmatmul.f32.gmra.mxu0 %v615
      %v879 = vpop.f32.mrf.mxu0
      %v880 = vadd.f32 %v742, %v879
      %881 = vmatmul.f32.gmra.mxu0 %v618
      %v882 = vpop.f32.mrf.mxu0
      %v883 = vadd.f32 %v742, %v882
      %884 = vmatmul.f32.gmra.mxu0 %v621
      %v885 = vpop.f32.mrf.mxu0
      %v886 = vadd.f32 %v742, %v885
      %887 = vmatmul.f32.gmra.mxu0 %v624
      %v888 = vpop.f32.mrf.mxu0
      %v889 = vadd.f32 %v742, %v888
      %890 = vmatmul.f32.gmra.mxu0 %v627
      %v891 = vpop.f32.mrf.mxu0
      %v892 = vadd.f32 %v742, %v891
      %893 = vmatmul.f32.gmra.mxu0 %v630
      %v894 = vpop.f32.mrf.mxu0
      %v895 = vadd.f32 %v742, %v894
      %896 = vmatmul.f32.gmra.mxu0 %v633
      %v897 = vpop.f32.mrf.mxu0
      %v898 = vadd.f32 %v742, %v897
      %899 = vmatmul.f32.gmra.mxu0 %v636
      %v900 = vpop.f32.mrf.mxu0
      %v901 = vadd.f32 %v742, %v900
      %902 = vmatmul.f32.gmra.mxu0 %v639
      %v903 = vpop.f32.mrf.mxu0
      %v904 = vadd.f32 %v742, %v903
      %905 = vmatmul.f32.gmra.mxu0 %v642
      %v906 = vpop.f32.mrf.mxu0
      %v907 = vadd.f32 %v742, %v906
      %908 = vdwg.mxu0
      %909 = vmatpush.msra.mxu0 %v738
      %910 = vmatpush.msra.mxu0 %v735
      %911 = vmatpush.msra.mxu0 %v732
      %912 = vmatpush.msra.mxu0 %v729
      %913 = vmatpush.msra.mxu0 %v726
      %914 = vmatpush.msra.mxu0 %v723
      %915 = vmatpush.msra.mxu0 %v720
      %916 = vmatpush.msra.mxu0 %v717
      %917 = vmatpush.msra.mxu0 %v714
      %918 = vmatpush.msra.mxu0 %v711
      %919 = vmatpush.msra.mxu0 %v708
      %920 = vmatpush.msra.mxu0 %v705
      %921 = vmatpush.msra.mxu0 %v702
      %922 = vmatpush.msra.mxu0 %v699
      %923 = vmatpush.msra.mxu0 %v696
      %924 = vmatpush.msra.mxu0 %v693
      %925 = vmatmul.f32.gmra.mxu0 %v501
      %v926 = vpop.f32.mrf.mxu0
      %v927 = vadd.f32 %v743, %v926
      %928 = vmatmul.f32.gmra.mxu0 %v504
      %v929 = vpop.f32.mrf.mxu0
      %v930 = vadd.f32 %v743, %v929
      %931 = vmatmul.f32.gmra.mxu0 %v507
      %v932 = vpop.f32.mrf.mxu0
      %v933 = vadd.f32 %v743, %v932
      %934 = vmatmul.f32.gmra.mxu0 %v510
      %v935 = vpop.f32.mrf.mxu0
      %v936 = vadd.f32 %v743, %v935
      %937 = vmatmul.f32.gmra.mxu0 %v513
      %v938 = vpop.f32.mrf.mxu0
      %v939 = vadd.f32 %v743, %v938
      %940 = vmatmul.f32.gmra.mxu0 %v516
      %v941 = vpop.f32.mrf.mxu0
      %v942 = vadd.f32 %v743, %v941
      %943 = vmatmul.f32.gmra.mxu0 %v519
      %v944 = vpop.f32.mrf.mxu0
      %v945 = vadd.f32 %v743, %v944
      %946 = vmatmul.f32.gmra.mxu0 %v522
      %v947 = vpop.f32.mrf.mxu0
      %v948 = vadd.f32 %v743, %v947
      %949 = vmatmul.f32.gmra.mxu0 %v525
      %v950 = vpop.f32.mrf.mxu0
      %v951 = vadd.f32 %v743, %v950
      %952 = vmatmul.f32.gmra.mxu0 %v528
      %v953 = vpop.f32.mrf.mxu0
      %v954 = vadd.f32 %v743, %v953
      %955 = vmatmul.f32.gmra.mxu0 %v531
      %v956 = vpop.f32.mrf.mxu0
      %v957 = vadd.f32 %v743, %v956
      %958 = vmatmul.f32.gmra.mxu0 %v534
      %v959 = vpop.f32.mrf.mxu0
      %v960 = vadd.f32 %v743, %v959
      %961 = vmatmul.f32.gmra.mxu0 %v537
      %v962 = vpop.f32.mrf.mxu0
      %v963 = vadd.f32 %v743, %v962
      %964 = vmatmul.f32.gmra.mxu0 %v540
      %v965 = vpop.f32.mrf.mxu0
      %v966 = vadd.f32 %v743, %v965
      %967 = vmatmul.f32.gmra.mxu0 %v543
      %v968 = vpop.f32.mrf.mxu0
      %v969 = vadd.f32 %v743, %v968
      %970 = vmatmul.f32.gmra.mxu0 %v546
      %v971 = vpop.f32.mrf.mxu0
      %v972 = vadd.f32 %v743, %v971
      %973 = vmatmul.f32.gmra.mxu0 %v549
      %v974 = vpop.f32.mrf.mxu0
      %v975 = vadd.f32 %v743, %v974
      %976 = vmatmul.f32.gmra.mxu0 %v552
      %v977 = vpop.f32.mrf.mxu0
      %v978 = vadd.f32 %v743, %v977
      %979 = vmatmul.f32.gmra.mxu0 %v555
      %v980 = vpop.f32.mrf.mxu0
      %v981 = vadd.f32 %v743, %v980
      %982 = vmatmul.f32.gmra.mxu0 %v558
      %v983 = vpop.f32.mrf.mxu0
      %v984 = vadd.f32 %v743, %v983
      %985 = vmatmul.f32.gmra.mxu0 %v561
      %v986 = vpop.f32.mrf.mxu0
      %v987 = vadd.f32 %v743, %v986
      %988 = vmatmul.f32.gmra.mxu0 %v564
      %v989 = vpop.f32.mrf.mxu0
      %v990 = vadd.f32 %v743, %v989
      %991 = vmatmul.f32.gmra.mxu0 %v567
      %v992 = vpop.f32.mrf.mxu0
      %v993 = vadd.f32 %v743, %v992
      %994 = vmatmul.f32.gmra.mxu0 %v570
      %v995 = vpop.f32.mrf.mxu0
      %v996 = vadd.f32 %v743, %v995
      %997 = vmatmul.f32.gmra.mxu0 %v573
      %v998 = vpop.f32.mrf.mxu0
      %v999 = vadd.f32 %v743, %v998
      %1000 = vmatmul.f32.gmra.mxu0 %v576
      %v1001 = vpop.f32.mrf.mxu0
      %v1002 = vadd.f32 %v743, %v1001
      %1003 = vmatmul.f32.gmra.mxu0 %v579
      %v1004 = vpop.f32.mrf.mxu0
      %v1005 = vadd.f32 %v743, %v1004
      %1006 = vmatmul.f32.gmra.mxu0 %v582
      %v1007 = vpop.f32.mrf.mxu0
      %v1008 = vadd.f32 %v743, %v1007
      %1009 = vmatmul.f32.gmra.mxu0 %v585
      %v1010 = vpop.f32.mrf.mxu0
      %v1011 = vadd.f32 %v743, %v1010
      %1012 = vmatmul.f32.gmra.mxu0 %v588
      %v1013 = vpop.f32.mrf.mxu0
      %v1014 = vadd.f32 %v743, %v1013
      %1015 = vmatmul.f32.gmra.mxu0 %v591
      %v1016 = vpop.f32.mrf.mxu0
      %v1017 = vadd.f32 %v743, %v1016
      %1018 = vmatmul.f32.gmra.mxu0 %v594
      %v1019 = vpop.f32.mrf.mxu0
      %v1020 = vadd.f32 %v743, %v1019
      %1021 = vmatmul.f32.gmra.mxu0 %v597
      %v1022 = vpop.f32.mrf.mxu0
      %v1023 = vadd.f32 %v743, %v1022
      %1024 = vmatmul.f32.gmra.mxu0 %v600
      %v1025 = vpop.f32.mrf.mxu0
      %v1026 = vadd.f32 %v743, %v1025
      %1027 = vmatmul.f32.gmra.mxu0 %v603
      %v1028 = vpop.f32.mrf.mxu0
      %v1029 = vadd.f32 %v743, %v1028
      %1030 = vmatmul.f32.gmra.mxu0 %v606
      %v1031 = vpop.f32.mrf.mxu0
      %v1032 = vadd.f32 %v743, %v1031
      %1033 = vmatmul.f32.gmra.mxu0 %v609
      %v1034 = vpop.f32.mrf.mxu0
      %v1035 = vadd.f32 %v743, %v1034
      %1036 = vmatmul.f32.gmra.mxu0 %v612
      %v1037 = vpop.f32.mrf.mxu0
      %v1038 = vadd.f32 %v743, %v1037
      %1039 = vmatmul.f32.gmra.mxu0 %v615
      %v1040 = vpop.f32.mrf.mxu0
      %v1041 = vadd.f32 %v743, %v1040
      %1042 = vmatmul.f32.gmra.mxu0 %v618
      %v1043 = vpop.f32.mrf.mxu0
      %v1044 = vadd.f32 %v743, %v1043
      %1045 = vmatmul.f32.gmra.mxu0 %v621
      %v1046 = vpop.f32.mrf.mxu0
      %v1047 = vadd.f32 %v743, %v1046
      %1048 = vmatmul.f32.gmra.mxu0 %v624
      %v1049 = vpop.f32.mrf.mxu0
      %v1050 = vadd.f32 %v743, %v1049
      %1051 = vmatmul.f32.gmra.mxu0 %v627
      %v1052 = vpop.f32.mrf.mxu0
      %v1053 = vadd.f32 %v743, %v1052
      %1054 = vmatmul.f32.gmra.mxu0 %v630
      %v1055 = vpop.f32.mrf.mxu0
      %v1056 = vadd.f32 %v743, %v1055
      %1057 = vmatmul.f32.gmra.mxu0 %v633
      %v1058 = vpop.f32.mrf.mxu0
      %v1059 = vadd.f32 %v743, %v1058
      %1060 = vmatmul.f32.gmra.mxu0 %v636
      %v1061 = vpop.f32.mrf.mxu0
      %v1062 = vadd.f32 %v743, %v1061
      %1063 = vmatmul.f32.gmra.mxu0 %v639
      %v1064 = vpop.f32.mrf.mxu0
      %v1065 = vadd.f32 %v743, %v1064
      %1066 = vmatmul.f32.gmra.mxu0 %v642
      %v1067 = vpop.f32.mrf.mxu0
      %v1068 = vadd.f32 %v743, %v1067
      %1069 = vdwg.mxu0
      %1070 = vmatpush.msra.mxu0 %v739
      %1071 = vmatpush.msra.mxu0 %v736
      %1072 = vmatpush.msra.mxu0 %v733
      %1073 = vmatpush.msra.mxu0 %v730
      %1074 = vmatpush.msra.mxu0 %v727
      %1075 = vmatpush.msra.mxu0 %v724
      %1076 = vmatpush.msra.mxu0 %v721
      %1077 = vmatpush.msra.mxu0 %v718
      %1078 = vmatpush.msra.mxu0 %v715
      %1079 = vmatpush.msra.mxu0 %v712
      %1080 = vmatpush.msra.mxu0 %v709
      %1081 = vmatpush.msra.mxu0 %v706
      %1082 = vmatpush.msra.mxu0 %v703
      %1083 = vmatpush.msra.mxu0 %v700
      %1084 = vmatpush.msra.mxu0 %v697
      %1085 = vmatpush.msra.mxu0 %v694
      %1086 = vmatmul.f32.gmra.mxu0 %v501
      %v1087 = vpop.f32.mrf.mxu0
      %v1088 = vadd.f32 %v744, %v1087
      %1089 = vmatmul.f32.gmra.mxu0 %v504
      %v1090 = vpop.f32.mrf.mxu0
      %v1091 = vadd.f32 %v744, %v1090
      %1092 = vmatmul.f32.gmra.mxu0 %v507
      %v1093 = vpop.f32.mrf.mxu0
      %v1094 = vadd.f32 %v744, %v1093
      %1095 = vmatmul.f32.gmra.mxu0 %v510
      %v1096 = vpop.f32.mrf.mxu0
      %v1097 = vadd.f32 %v744, %v1096
      %1098 = vmatmul.f32.gmra.mxu0 %v513
      %v1099 = vpop.f32.mrf.mxu0
      %v1100 = vadd.f32 %v744, %v1099
      %1101 = vmatmul.f32.gmra.mxu0 %v516
      %v1102 = vpop.f32.mrf.mxu0
      %v1103 = vadd.f32 %v744, %v1102
      %1104 = vmatmul.f32.gmra.mxu0 %v519
      %v1105 = vpop.f32.mrf.mxu0
      %v1106 = vadd.f32 %v744, %v1105
      %1107 = vmatmul.f32.gmra.mxu0 %v522
      %v1108 = vpop.f32.mrf.mxu0
      %v1109 = vadd.f32 %v744, %v1108
      %1110 = vmatmul.f32.gmra.mxu0 %v525
      %v1111 = vpop.f32.mrf.mxu0
      %v1112 = vadd.f32 %v744, %v1111
      %1113 = vmatmul.f32.gmra.mxu0 %v528
      %v1114 = vpop.f32.mrf.mxu0
      %v1115 = vadd.f32 %v744, %v1114
      %1116 = vmatmul.f32.gmra.mxu0 %v531
      %v1117 = vpop.f32.mrf.mxu0
      %v1118 = vadd.f32 %v744, %v1117
      %1119 = vmatmul.f32.gmra.mxu0 %v534
      %v1120 = vpop.f32.mrf.mxu0
      %v1121 = vadd.f32 %v744, %v1120
      %1122 = vmatmul.f32.gmra.mxu0 %v537
      %v1123 = vpop.f32.mrf.mxu0
      %v1124 = vadd.f32 %v744, %v1123
      %1125 = vmatmul.f32.gmra.mxu0 %v540
      %v1126 = vpop.f32.mrf.mxu0
      %v1127 = vadd.f32 %v744, %v1126
      %1128 = vmatmul.f32.gmra.mxu0 %v543
      %v1129 = vpop.f32.mrf.mxu0
      %v1130 = vadd.f32 %v744, %v1129
      %1131 = vmatmul.f32.gmra.mxu0 %v546
      %v1132 = vpop.f32.mrf.mxu0
      %v1133 = vadd.f32 %v744, %v1132
      %1134 = vmatmul.f32.gmra.mxu0 %v549
      %v1135 = vpop.f32.mrf.mxu0
      %v1136 = vadd.f32 %v744, %v1135
      %1137 = vmatmul.f32.gmra.mxu0 %v552
      %v1138 = vpop.f32.mrf.mxu0
      %v1139 = vadd.f32 %v744, %v1138
      %1140 = vmatmul.f32.gmra.mxu0 %v555
      %v1141 = vpop.f32.mrf.mxu0
      %v1142 = vadd.f32 %v744, %v1141
      %1143 = vmatmul.f32.gmra.mxu0 %v558
      %v1144 = vpop.f32.mrf.mxu0
      %v1145 = vadd.f32 %v744, %v1144
      %1146 = vmatmul.f32.gmra.mxu0 %v561
      %v1147 = vpop.f32.mrf.mxu0
      %v1148 = vadd.f32 %v744, %v1147
      %1149 = vmatmul.f32.gmra.mxu0 %v564
      %v1150 = vpop.f32.mrf.mxu0
      %v1151 = vadd.f32 %v744, %v1150
      %1152 = vmatmul.f32.gmra.mxu0 %v567
      %v1153 = vpop.f32.mrf.mxu0
      %v1154 = vadd.f32 %v744, %v1153
      %1155 = vmatmul.f32.gmra.mxu0 %v570
      %v1156 = vpop.f32.mrf.mxu0
      %v1157 = vadd.f32 %v744, %v1156
      %1158 = vmatmul.f32.gmra.mxu0 %v573
      %v1159 = vpop.f32.mrf.mxu0
      %v1160 = vadd.f32 %v744, %v1159
      %1161 = vmatmul.f32.gmra.mxu0 %v576
      %v1162 = vpop.f32.mrf.mxu0
      %v1163 = vadd.f32 %v744, %v1162
      %1164 = vmatmul.f32.gmra.mxu0 %v579
      %v1165 = vpop.f32.mrf.mxu0
      %v1166 = vadd.f32 %v744, %v1165
      %1167 = vmatmul.f32.gmra.mxu0 %v582
      %v1168 = vpop.f32.mrf.mxu0
      %v1169 = vadd.f32 %v744, %v1168
      %1170 = vmatmul.f32.gmra.mxu0 %v585
      %v1171 = vpop.f32.mrf.mxu0
      %v1172 = vadd.f32 %v744, %v1171
      %1173 = vmatmul.f32.gmra.mxu0 %v588
      %v1174 = vpop.f32.mrf.mxu0
      %v1175 = vadd.f32 %v744, %v1174
      %1176 = vmatmul.f32.gmra.mxu0 %v591
      %v1177 = vpop.f32.mrf.mxu0
      %v1178 = vadd.f32 %v744, %v1177
      %1179 = vmatmul.f32.gmra.mxu0 %v594
      %v1180 = vpop.f32.mrf.mxu0
      %v1181 = vadd.f32 %v744, %v1180
      %1182 = vmatmul.f32.gmra.mxu0 %v597
      %v1183 = vpop.f32.mrf.mxu0
      %v1184 = vadd.f32 %v744, %v1183
      %1185 = vmatmul.f32.gmra.mxu0 %v600
      %v1186 = vpop.f32.mrf.mxu0
      %v1187 = vadd.f32 %v744, %v1186
      %1188 = vmatmul.f32.gmra.mxu0 %v603
      %v1189 = vpop.f32.mrf.mxu0
      %v1190 = vadd.f32 %v744, %v1189
      %1191 = vmatmul.f32.gmra.mxu0 %v606
      %v1192 = vpop.f32.mrf.mxu0
      %v1193 = vadd.f32 %v744, %v1192
      %1194 = vmatmul.f32.gmra.mxu0 %v609
      %v1195 = vpop.f32.mrf.mxu0
      %v1196 = vadd.f32 %v744, %v1195
      %1197 = vmatmul.f32.gmra.mxu0 %v612
      %v1198 = vpop.f32.mrf.mxu0
      %v1199 = vadd.f32 %v744, %v1198
      %1200 = vmatmul.f32.gmra.mxu0 %v615
      %v1201 = vpop.f32.mrf.mxu0
      %v1202 = vadd.f32 %v744, %v1201
      %1203 = vmatmul.f32.gmra.mxu0 %v618
      %v1204 = vpop.f32.mrf.mxu0
      %v1205 = vadd.f32 %v744, %v1204
      %1206 = vmatmul.f32.gmra.mxu0 %v621
      %v1207 = vpop.f32.mrf.mxu0
      %v1208 = vadd.f32 %v744, %v1207
      %1209 = vmatmul.f32.gmra.mxu0 %v624
      %v1210 = vpop.f32.mrf.mxu0
      %v1211 = vadd.f32 %v744, %v1210
      %1212 = vmatmul.f32.gmra.mxu0 %v627
      %v1213 = vpop.f32.mrf.mxu0
      %v1214 = vadd.f32 %v744, %v1213
      %1215 = vmatmul.f32.gmra.mxu0 %v630
      %v1216 = vpop.f32.mrf.mxu0
      %v1217 = vadd.f32 %v744, %v1216
      %1218 = vmatmul.f32.gmra.mxu0 %v633
      %v1219 = vpop.f32.mrf.mxu0
      %v1220 = vadd.f32 %v744, %v1219
      %1221 = vmatmul.f32.gmra.mxu0 %v636
      %v1222 = vpop.f32.mrf.mxu0
      %v1223 = vadd.f32 %v744, %v1222
      %1224 = vmatmul.f32.gmra.mxu0 %v639
      %v1225 = vpop.f32.mrf.mxu0
      %v1226 = vadd.f32 %v744, %v1225
      %1227 = vmatmul.f32.gmra.mxu0 %v642
      %v1228 = vpop.f32.mrf.mxu0
      %v1229 = vadd.f32 %v744, %v1228
      %1230 = vdwg.mxu0
      %1231 = vst [vmem:[%s393] sm:$0xff] %v766
      %1232 = vst [vmem:[%s393 + $0x8] sm:$0xff] %v769
      %1233 = vst [vmem:[%s393 + $0x10] sm:$0xff] %v772
      %1234 = vst [vmem:[%s393 + $0x18] sm:$0xff] %v775
      %1235 = vst [vmem:[%s393 + $0x20] sm:$0xff] %v778
      %1236 = vst [vmem:[%s393 + $0x28] sm:$0xff] %v781
      %1237 = vst [vmem:[%s393 + $0x30] sm:$0xff] %v784
      %1238 = vst [vmem:[%s393 + $0x38] sm:$0xff] %v787
      %1239 = vst [vmem:[%s393 + $0x40] sm:$0xff] %v790
      %1240 = vst [vmem:[%s393 + $0x48] sm:$0xff] %v793
      %1241 = vst [vmem:[%s393 + $0x50] sm:$0xff] %v796
      %1242 = vst [vmem:[%s393 + $0x58] sm:$0xff] %v799
      %1243 = vst [vmem:[%s393 + $0x60] sm:$0xff] %v802
      %1244 = vst [vmem:[%s393 + $0x68] sm:$0xff] %v805
      %1245 = vst [vmem:[%s393 + $0x70] sm:$0xff] %v808
      %1246 = vst [vmem:[%s393 + $0x78] sm:$0xff] %v811
      %1247 = vst [vmem:[%s393 + $0x80] sm:$0xff] %v814
      %1248 = vst [vmem:[%s393 + $0x88] sm:$0xff] %v817
      %1249 = vst [vmem:[%s393 + $0x90] sm:$0xff] %v820
      %1250 = vst [vmem:[%s393 + $0x98] sm:$0xff] %v823
      %1251 = vst [vmem:[%s393 + $0xa0] sm:$0xff] %v826
      %1252 = vst [vmem:[%s393 + $0xa8] sm:$0xff] %v829
      %1253 = vst [vmem:[%s393 + $0xb0] sm:$0xff] %v832
      %1254 = vst [vmem:[%s393 + $0xb8] sm:$0xff] %v835
      %1255 = vst [vmem:[%s393 + $0xc0] sm:$0xff] %v838
      %1256 = vst [vmem:[%s393 + $0xc8] sm:$0xff] %v841
      %1257 = vst [vmem:[%s393 + $0xd0] sm:$0xff] %v844
      %1258 = vst [vmem:[%s393 + $0xd8] sm:$0xff] %v847
      %1259 = vst [vmem:[%s393 + $0xe0] sm:$0xff] %v850
      %1260 = vst [vmem:[%s393 + $0xe8] sm:$0xff] %v853
      %1261 = vst [vmem:[%s393 + $0xf0] sm:$0xff] %v856
      %1262 = vst [vmem:[%s393 + $0xf8] sm:$0xff] %v859
      %1263 = vst [vmem:[%s393 + $0x100] sm:$0xff] %v862
      %1264 = vst [vmem:[%s393 + $0x108] sm:$0xff] %v865
      %1265 = vst [vmem:[%s393 + $0x110] sm:$0xff] %v868
      %1266 = vst [vmem:[%s393 + $0x118] sm:$0xff] %v871
      %1267 = vst [vmem:[%s393 + $0x120] sm:$0xff] %v874
      %1268 = vst [vmem:[%s393 + $0x128] sm:$0xff] %v877
      %1269 = vst [vmem:[%s393 + $0x130] sm:$0xff] %v880
      %1270 = vst [vmem:[%s393 + $0x138] sm:$0xff] %v883
      %1271 = vst [vmem:[%s393 + $0x140] sm:$0xff] %v886
      %1272 = vst [vmem:[%s393 + $0x148] sm:$0xff] %v889
      %1273 = vst [vmem:[%s393 + $0x150] sm:$0xff] %v892
      %1274 = vst [vmem:[%s393 + $0x158] sm:$0xff] %v895
      %1275 = vst [vmem:[%s393 + $0x160] sm:$0xff] %v898
      %1276 = vst [vmem:[%s393 + $0x168] sm:$0xff] %v901
      %1277 = vst [vmem:[%s393 + $0x170] sm:$0xff] %v904
      %1278 = vst [vmem:[%s393 + $0x178] sm:$0xff] %v907
      %1279 = vst [vmem:[%s403] sm:$0xff] %v927
      %1280 = vst [vmem:[%s403 + $0x8] sm:$0xff] %v930
      %1281 = vst [vmem:[%s403 + $0x10] sm:$0xff] %v933
      %1282 = vst [vmem:[%s403 + $0x18] sm:$0xff] %v936
      %1283 = vst [vmem:[%s403 + $0x20] sm:$0xff] %v939
      %1284 = vst [vmem:[%s403 + $0x28] sm:$0xff] %v942
      %1285 = vst [vmem:[%s403 + $0x30] sm:$0xff] %v945
      %1286 = vst [vmem:[%s403 + $0x38] sm:$0xff] %v948
      %1287 = vst [vmem:[%s403 + $0x40] sm:$0xff] %v951
      %1288 = vst [vmem:[%s403 + $0x48] sm:$0xff] %v954
      %1289 = vst [vmem:[%s403 + $0x50] sm:$0xff] %v957
      %1290 = vst [vmem:[%s403 + $0x58] sm:$0xff] %v960
      %1291 = vst [vmem:[%s403 + $0x60] sm:$0xff] %v963
      %1292 = vst [vmem:[%s403 + $0x68] sm:$0xff] %v966
      %1293 = vst [vmem:[%s403 + $0x70] sm:$0xff] %v969
      %1294 = vst [vmem:[%s403 + $0x78] sm:$0xff] %v972
      %1295 = vst [vmem:[%s403 + $0x80] sm:$0xff] %v975
      %1296 = vst [vmem:[%s403 + $0x88] sm:$0xff] %v978
      %1297 = vst [vmem:[%s403 + $0x90] sm:$0xff] %v981
      %1298 = vst [vmem:[%s403 + $0x98] sm:$0xff] %v984
      %1299 = vst [vmem:[%s403 + $0xa0] sm:$0xff] %v987
      %1300 = vst [vmem:[%s403 + $0xa8] sm:$0xff] %v990
      %1301 = vst [vmem:[%s403 + $0xb0] sm:$0xff] %v993
      %1302 = vst [vmem:[%s403 + $0xb8] sm:$0xff] %v996
      %1303 = vst [vmem:[%s403 + $0xc0] sm:$0xff] %v999
      %1304 = vst [vmem:[%s403 + $0xc8] sm:$0xff] %v1002
      %1305 = vst [vmem:[%s403 + $0xd0] sm:$0xff] %v1005
      %1306 = vst [vmem:[%s403 + $0xd8] sm:$0xff] %v1008
      %1307 = vst [vmem:[%s403 + $0xe0] sm:$0xff] %v1011
      %1308 = vst [vmem:[%s403 + $0xe8] sm:$0xff] %v1014
      %1309 = vst [vmem:[%s403 + $0xf0] sm:$0xff] %v1017
      %1310 = vst [vmem:[%s403 + $0xf8] sm:$0xff] %v1020
      %1311 = vst [vmem:[%s403 + $0x100] sm:$0xff] %v1023
      %1312 = vst [vmem:[%s403 + $0x108] sm:$0xff] %v1026
      %1313 = vst [vmem:[%s403 + $0x110] sm:$0xff] %v1029
      %1314 = vst [vmem:[%s403 + $0x118] sm:$0xff] %v1032
      %1315 = vst [vmem:[%s403 + $0x120] sm:$0xff] %v1035
      %1316 = vst [vmem:[%s403 + $0x128] sm:$0xff] %v1038
      %1317 = vst [vmem:[%s403 + $0x130] sm:$0xff] %v1041
      %1318 = vst [vmem:[%s403 + $0x138] sm:$0xff] %v1044
      %1319 = vst [vmem:[%s403 + $0x140] sm:$0xff] %v1047
      %1320 = vst [vmem:[%s403 + $0x148] sm:$0xff] %v1050
      %1321 = vst [vmem:[%s403 + $0x150] sm:$0xff] %v1053
      %1322 = vst [vmem:[%s403 + $0x158] sm:$0xff] %v1056
      %1323 = vst [vmem:[%s403 + $0x160] sm:$0xff] %v1059
      %1324 = vst [vmem:[%s403 + $0x168] sm:$0xff] %v1062
      %1325 = vst [vmem:[%s403 + $0x170] sm:$0xff] %v1065
      %1326 = vst [vmem:[%s403 + $0x178] sm:$0xff] %v1068
      %1327 = vst [vmem:[%s413] sm:$0xff] %v1088
      %1328 = vst [vmem:[%s413 + $0x8] sm:$0xff] %v1091
      %1329 = vst [vmem:[%s413 + $0x10] sm:$0xff] %v1094
      %1330 = vst [vmem:[%s413 + $0x18] sm:$0xff] %v1097
      %1331 = vst [vmem:[%s413 + $0x20] sm:$0xff] %v1100
      %1332 = vst [vmem:[%s413 + $0x28] sm:$0xff] %v1103
      %1333 = vst [vmem:[%s413 + $0x30] sm:$0xff] %v1106
      %1334 = vst [vmem:[%s413 + $0x38] sm:$0xff] %v1109
      %1335 = vst [vmem:[%s413 + $0x40] sm:$0xff] %v1112
      %1336 = vst [vmem:[%s413 + $0x48] sm:$0xff] %v1115
      %1337 = vst [vmem:[%s413 + $0x50] sm:$0xff] %v1118
      %1338 = vst [vmem:[%s413 + $0x58] sm:$0xff] %v1121
      %1339 = vst [vmem:[%s413 + $0x60] sm:$0xff] %v1124
      %1340 = vst [vmem:[%s413 + $0x68] sm:$0xff] %v1127
      %1341 = vst [vmem:[%s413 + $0x70] sm:$0xff] %v1130
      %1342 = vst [vmem:[%s413 + $0x78] sm:$0xff] %v1133
      %1343 = vst [vmem:[%s413 + $0x80] sm:$0xff] %v1136
      %1344 = vst [vmem:[%s413 + $0x88] sm:$0xff] %v1139
      %1345 = vst [vmem:[%s413 + $0x90] sm:$0xff] %v1142
      %1346 = vst [vmem:[%s413 + $0x98] sm:$0xff] %v1145
      %1347 = vst [vmem:[%s413 + $0xa0] sm:$0xff] %v1148
      %1348 = vst [vmem:[%s413 + $0xa8] sm:$0xff] %v1151
      %1349 = vst [vmem:[%s413 + $0xb0] sm:$0xff] %v1154
      %1350 = vst [vmem:[%s413 + $0xb8] sm:$0xff] %v1157
      %1351 = vst [vmem:[%s413 + $0xc0] sm:$0xff] %v1160
      %1352 = vst [vmem:[%s413 + $0xc8] sm:$0xff] %v1163
      %1353 = vst [vmem:[%s413 + $0xd0] sm:$0xff] %v1166
      %1354 = vst [vmem:[%s413 + $0xd8] sm:$0xff] %v1169
      %1355 = vst [vmem:[%s413 + $0xe0] sm:$0xff] %v1172
      %1356 = vst [vmem:[%s413 + $0xe8] sm:$0xff] %v1175
      %1357 = vst [vmem:[%s413 + $0xf0] sm:$0xff] %v1178
      %1358 = vst [vmem:[%s413 + $0xf8] sm:$0xff] %v1181
      %1359 = vst [vmem:[%s413 + $0x100] sm:$0xff] %v1184
      %1360 = vst [vmem:[%s413 + $0x108] sm:$0xff] %v1187
      %1361 = vst [vmem:[%s413 + $0x110] sm:$0xff] %v1190
      %1362 = vst [vmem:[%s413 + $0x118] sm:$0xff] %v1193
      %1363 = vst [vmem:[%s413 + $0x120] sm:$0xff] %v1196
      %1364 = vst [vmem:[%s413 + $0x128] sm:$0xff] %v1199
      %1365 = vst [vmem:[%s413 + $0x130] sm:$0xff] %v1202
      %1366 = vst [vmem:[%s413 + $0x138] sm:$0xff] %v1205
      %1367 = vst [vmem:[%s413 + $0x140] sm:$0xff] %v1208
      %1368 = vst [vmem:[%s413 + $0x148] sm:$0xff] %v1211
      %1369 = vst [vmem:[%s413 + $0x150] sm:$0xff] %v1214
      %1370 = vst [vmem:[%s413 + $0x158] sm:$0xff] %v1217
      %1371 = vst [vmem:[%s413 + $0x160] sm:$0xff] %v1220
      %1372 = vst [vmem:[%s413 + $0x168] sm:$0xff] %v1223
      %1373 = vst [vmem:[%s413 + $0x170] sm:$0xff] %v1226
      %1374 = vst [vmem:[%s413 + $0x178] sm:$0xff] %v1229
      %s1375 = smul.u32 48, %s25
      %p1376 = scmp.lt.s32.totalorder %s24, 1
      %s1377 = scalar_select %p1376, %s24, 1
      %p1378 = scmp.lt.s32.totalorder %s1375, 47
      %s1379 = scalar_select %p1378, %s1375, 47
      %s1380 = smul.addr %s1377, 48
      %s1381 = sadd.s32 %s1379, %s1380
      %s1382 = smul.addr %s1381, 8
      %s1383 = scalar_lea.vmem %s5, %s1382
      %s1384 = smul.u32 48, %s25
      %p1385 = scmp.lt.s32.totalorder %s24, 1
      %s1386 = scalar_select %p1385, %s24, 1
      %p1387 = scmp.lt.s32.totalorder %s1384, 47
      %s1388 = scalar_select %p1387, %s1384, 47
      %s1389 = smul.addr %s1386, 48
      %s1390 = sadd.s32 %s1388, %s1389
      %s1391 = smul.addr %s1390, 8
      %s1392 = scalar_lea.vmem %s6, %s1391
      %s1393 = smul.u32 48, %s25
      %p1394 = scmp.lt.s32.totalorder %s24, 1
      %s1395 = scalar_select %p1394, %s24, 1
      %p1396 = scmp.lt.s32.totalorder %s1393, 47
      %s1397 = scalar_select %p1396, %s1393, 47
      %s1398 = smul.addr %s1395, 48
      %s1399 = sadd.s32 %s1397, %s1398
      %s1400 = smul.addr %s1399, 8
      %s1401 = scalar_lea.vmem %s7, %s1400
      %s1402 = smul.u32 48, %s25
      %p1403 = scmp.lt.s32.totalorder %s24, 1
      %s1404 = scalar_select %p1403, %s24, 1
      %p1405 = scmp.lt.s32.totalorder %s1402, 47
      %s1406 = scalar_select %p1405, %s1402, 47
      %s1407 = smul.addr %s1404, 48
      %s1408 = sadd.s32 %s1406, %s1407
      %s1409 = smul.addr %s1408, 8
      %s1410 = scalar_lea.vmem %s8, %s1409
      // Predicated region
      $region41: #{default_encoder_forward.2} parent=39 // pred_check
        %p1411 = pneg %p164
      $region42: #{default_encoder_forward.2} parent=39 // pred_check_branch
        %1413 = sbr.rel (%p1411) target = $region44
      $region43: #{default_encoder_forward.2} parent=39 // pred_region
        %s1414 = smul.u32 48, %s25
      $region44: #{default_encoder_forward.2} parent=39 // pred_fallthru
        _
      // Predicated region
      $region45: #{default_encoder_forward.2} parent=39 // pred_check
        %p1415 = pneg %p192
      $region46: #{default_encoder_forward.2} parent=39 // pred_check_branch
        %1417 = sbr.rel (%p1415) target = $region48
      $region47: #{default_encoder_forward.2} parent=39 // pred_region
        %s1418 = smul.u32 48, %s25
      $region48: #{default_encoder_forward.2} parent=39 // pred_fallthru
        _
      // Predicated region
      $region49: #{default_encoder_forward.2} parent=39 // pred_check
        %p1419 = pneg %p220
      $region50: #{default_encoder_forward.2} parent=39 // pred_check_branch
        %1421 = sbr.rel (%p1419) target = $region52
      $region51: #{default_encoder_forward.2} parent=39 // pred_region
        %s1422 = smul.u32 48, %s25
      $region52: #{default_encoder_forward.2} parent=39 // pred_fallthru
        _
      // Predicated region
      $region53: #{default_encoder_forward.2} parent=39 // pred_check
        %p1423 = pneg %p248
      $region54: #{default_encoder_forward.2} parent=39 // pred_check_branch
        %1425 = sbr.rel (%p1423) target = $region56
      $region55: #{default_encoder_forward.2} parent=39 // pred_region
        %s1426 = smul.u32 48, %s25
      $region56: #{default_encoder_forward.2} parent=39 // pred_fallthru
        _
    $region40: #{default_encoder_forward.2} parent=5 // pred_fallthru
      _
    %p1427 = scmp.le.s32.totalorder 2, %s15
    // Predicated region
    $region57: #{default_encoder_forward.2} parent=5 // pred_check
      %p1428 = pneg %p1427
    $region58: #{default_encoder_forward.2} parent=5 // pred_check_branch
      %1430 = sbr.rel (%p1428) target = $region60
    $region59: #{default_encoder_forward.2} parent=5 // pred_region
      %s1431 = ssub.s32 %s15, 2
      // Predicated region
      $region61: #{default_encoder_forward.2} parent=59 // pred_check
        %p1432 = pneg %p170
      $region62: #{default_encoder_forward.2} parent=59 // pred_check_branch
        %1434 = sbr.rel (%p1432) target = $region64
      $region63: #{default_encoder_forward.2} parent=59 // pred_region
        %s1435 = smul.u32 48, %s27
        %p1436 = scmp.lt.s32.totalorder %s26, 1
        %s1437 = scalar_select %p1436, %s26, 1
        %p1438 = scmp.lt.s32.totalorder %s1435, 47
        %s1439 = scalar_select %p1438, %s1435, 47
        %s1440 = smul.addr %s1437, 48
        %s1441 = sadd.s32 %s1439, %s1440
        %s1442 = smul.addr %s1441, 8
        %s1443 = scalar_lea.vmem %s5, %s1442
      $region64: #{default_encoder_forward.2} parent=59 // pred_fallthru
        _
      // Predicated region
      $region65: #{default_encoder_forward.2} parent=59 // pred_check
        %p1444 = pneg %p198
      $region66: #{default_encoder_forward.2} parent=59 // pred_check_branch
        %1446 = sbr.rel (%p1444) target = $region68
      $region67: #{default_encoder_forward.2} parent=59 // pred_region
        %s1447 = smul.u32 48, %s27
        %p1448 = scmp.lt.s32.totalorder %s26, 1
        %s1449 = scalar_select %p1448, %s26, 1
        %p1450 = scmp.lt.s32.totalorder %s1447, 47
        %s1451 = scalar_select %p1450, %s1447, 47
        %s1452 = smul.addr %s1449, 48
        %s1453 = sadd.s32 %s1451, %s1452
        %s1454 = smul.addr %s1453, 8
        %s1455 = scalar_lea.vmem %s6, %s1454
      $region68: #{default_encoder_forward.2} parent=59 // pred_fallthru
        _
      // Predicated region
      $region69: #{default_encoder_forward.2} parent=59 // pred_check
        %p1456 = pneg %p226
      $region70: #{default_encoder_forward.2} parent=59 // pred_check_branch
        %1458 = sbr.rel (%p1456) target = $region72
      $region71: #{default_encoder_forward.2} parent=59 // pred_region
        %s1459 = smul.u32 48, %s27
        %p1460 = scmp.lt.s32.totalorder %s26, 1
        %s1461 = scalar_select %p1460, %s26, 1
        %p1462 = scmp.lt.s32.totalorder %s1459, 47
        %s1463 = scalar_select %p1462, %s1459, 47
        %s1464 = smul.addr %s1461, 48
        %s1465 = sadd.s32 %s1463, %s1464
        %s1466 = smul.addr %s1465, 8
        %s1467 = scalar_lea.vmem %s7, %s1466
      $region72: #{default_encoder_forward.2} parent=59 // pred_fallthru
        _
      // Predicated region
      $region73: #{default_encoder_forward.2} parent=59 // pred_check
        %p1468 = pneg %p254
      $region74: #{default_encoder_forward.2} parent=59 // pred_check_branch
        %1470 = sbr.rel (%p1468) target = $region76
      $region75: #{default_encoder_forward.2} parent=59 // pred_region
        %s1471 = smul.u32 48, %s27
        %p1472 = scmp.lt.s32.totalorder %s26, 1
        %s1473 = scalar_select %p1472, %s26, 1
        %p1474 = scmp.lt.s32.totalorder %s1471, 47
        %s1475 = scalar_select %p1474, %s1471, 47
        %s1476 = smul.addr %s1473, 48
        %s1477 = sadd.s32 %s1475, %s1476
        %s1478 = smul.addr %s1477, 8
        %s1479 = scalar_lea.vmem %s8, %s1478
      $region76: #{default_encoder_forward.2} parent=59 // pred_fallthru
        _
    $region60: #{default_encoder_forward.2} parent=5 // pred_fallthru
      _
  $region6: #{default_encoder_forward.2} parent=0 // loop_footer
    %s19 = sadd.s32 1, %s15
  $region7: #{default_encoder_forward.2} parent=0 // loop_footer_branch
    %14 = sbr.rel target = $region3
  $region8: #{default_encoder_forward.2} parent=0 // loop_exit
    _

// kernel: default_encoder_forward.3
$region0: #{default_encoder_forward.3}
  #allocation0 [shape = 'u32[]', space=smem, size = 0x4, offset = 0x4, fixed_abs, tag = 'smem constant byte address 0x4 - core index']
  #allocation1 [shape = 'u32[72,128]{1,0:T(1,128)}', space=vmem, size = 0x9000, scoped, tag = 'internal scratch']
  #allocation2 [shape = 'f32[4,128,1]{2,1,0:T(8,128)}', space=vmem, size = 0x40000, scoped, tag = 'scratch operand']
  #allocation3 [shape = 'f32[4,128,1]{2,1,0:T(8,128)}', space=vmem, size = 0x40000, scoped, tag = 'scratch operand']
  #allocation4 [shape = 'f32[4,128,24]{2,1,0:T(8,128)}', space=vmem, size = 0x40000, scoped, tag = 'scratch operand']
  %s0 = inlined_call_operand.vmem [shape: f32[2,384,128], index: 0, kind: input, shape index: {}]
  %s1 = inlined_call_operand.vmem [shape: f32[2,384,128], index: 1, kind: input, shape index: {}]
  %s2 = inlined_call_operand.vmem [shape: f32[2,384,128], index: 2, kind: input, shape index: {}]
  %s3 = inlined_call_operand.vmem [shape: f32[2,384,128], index: 3, kind: input, shape index: {}]
  %s4 = inlined_call_operand.vmem [shape: f32[128,128], index: 4, kind: input, shape index: {}]
  %s5 = inlined_call_operand.vmem [shape: f32[128,256], index: 5, kind: input, shape index: {}]
  %s6 = inlined_call_operand.vmem [shape: f32[1,256], index: 6, kind: input, shape index: {}]
  %s7 = inlined_call_operand.vmem [shape: f32[256,128], index: 7, kind: input, shape index: {}]
  %s8 = inlined_call_operand.vmem [shape: f32[6,128], index: 8, kind: input, shape index: {}]
  %s9 = inlined_call_operand.vmem [shape: f32[2,384,128], index: 9, kind: output, shape index: {}]
  %s10 = sld [smem:[#allocation0]]
  $region77: #{default_encoder_forward.3} parent=0
    _
  %s12 = ssub.s32 1, %s10
  %s13 = scalar_select 0, %s12, %s10
  loop: start=0, step=1, limit=20
  $region2: #{default_encoder_forward.3} parent=0 // loop_pre_header
    _
  $region3: #{default_encoder_forward.3} parent=0 // loop_header
    %s15 = sphi 0, %s19
    %p16 = scmp.ge.s32.totalorder %s15, 20
    %s22 = sphi 0, %s41
    %s23 = sphi 0, %s37
    %s24 = sphi 0, %s33
    %s25 = sphi 0, %s22
    %s26 = sphi 0, %s23
    %s27 = sphi 0, %s24
    %s28 = sphi 0, %s25
    %s29 = sphi 0, %s26
    %s30 = sphi 0, %s27
    %s46 = sphi 0, %s48
    %s49 = sphi 0, %s46
    %s50 = sphi 0, %s49
    %s66 = sphi 0, %s50
    %s74 = sphi 0, %s76
    %s77 = sphi 0, %s74
    %s78 = sphi 0, %s77
    %s94 = sphi 0, %s78
    %s102 = sphi 0, %s104
    %s105 = sphi 0, %s102
    %s106 = sphi 0, %s105
    %s122 = sphi 0, %s106
    %s130 = sphi 0, %s132
    %s133 = sphi 0, %s130
    %s134 = sphi 0, %s133
    %s150 = sphi 0, %s134
    %s154 = sphi 0, %s154
    %s156 = sphi 0, %s154
    %s157 = sphi 0, %s156
    %s171 = sphi 0, %s157
    %s175 = sphi 0, %s175
    %s177 = sphi 0, %s175
    %s178 = sphi 0, %s177
    %s192 = sphi 0, %s178
    %s196 = sphi 0, %s196
    %s198 = sphi 0, %s196
    %s199 = sphi 0, %s198
    %s213 = sphi 0, %s199
    %s217 = sphi 0, %s217
    %s219 = sphi 0, %s217
    %s220 = sphi 0, %s219
    %s234 = sphi 0, %s220
    %s238 = sphi 0, %s238
    %s240 = sphi 0, %s238
    %s241 = sphi 0, %s240
    %s255 = sphi 0, %s241
    %s263 = sphi 0, %s265
    %s266 = sphi 0, %s263
    %s267 = sphi 0, %s266
    %s283 = sphi 0, %s267
  $region4: #{default_encoder_forward.3} parent=0 // loop_header_branch
    %18 = sbr.rel (%p16) target = $region8
  $region5: #{default_encoder_forward.3} parent=0 // loop_body
    %s20 = ssub.s32 %s15, 1
    %s21 = ssub.s32 %s15, 2
    %s31 = sadd.s32 1, %s24
    %p32 = scmp.ge.s32.totalorder %s31, 3
    %s33 = scalar_select %p32, 0, %s31
    %s34 = sadd.s32 1, %s23
    %s35 = scalar_select %p32, %s34, %s23
    %p36 = scmp.ge.s32.totalorder %s35, 3
    %s37 = scalar_select %p36, 0, %s35
    %s38 = sadd.s32 1, %s22
    %s39 = scalar_select %p36, %s38, %s22
    %p40 = scmp.ge.s32.totalorder %s39, 2
    %s41 = scalar_select %p40, 0, %s39
    %s42 = ssub.s32 %s22, %s41
    %s43 = ssub.s32 %s23, %s37
    %s44 = sor.u32 %s42, %s43
    %p45 = scmp.eq.s32.totalorder %s44, 0
    %s47 = sadd.s32 %s46, 1
    %s48 = scalar_select %p45, %s46, %s47
    %p51 = pneg %p45
    %p52 = scmp.eq.s32.totalorder %s15, 17
    %p53 = por %p51, %p52
    %p54 = scmp.ne.s32.totalorder %s46, %s49
    %p55 = scmp.eq.s32.totalorder %s15, 0
    %p56 = por %p54, %p55
    %p57 = scmp.ne.s32.totalorder %s46, %s49
    %p58 = scmp.eq.s32.totalorder %s20, 17
    %p59 = por %p57, %p58
    %p60 = scmp.ne.s32.totalorder %s49, %s50
    %p61 = scmp.eq.s32.totalorder %s20, 0
    %p62 = por %p60, %p61
    %p63 = scmp.ne.s32.totalorder %s49, %s50
    %p64 = scmp.eq.s32.totalorder %s21, 17
    %p65 = por %p63, %p64
    %p67 = scmp.ne.s32.totalorder %s50, %s66
    %p68 = scmp.eq.s32.totalorder %s21, 0
    %p69 = por %p67, %p68
    %s70 = ssub.s32 %s22, %s41
    %s71 = ssub.s32 %s23, %s37
    %s72 = sor.u32 %s70, %s71
    %p73 = scmp.eq.s32.totalorder %s72, 0
    %s75 = sadd.s32 %s74, 1
    %s76 = scalar_select %p73, %s74, %s75
    %p79 = pneg %p73
    %p80 = scmp.eq.s32.totalorder %s15, 17
    %p81 = por %p79, %p80
    %p82 = scmp.ne.s32.totalorder %s74, %s77
    %p83 = scmp.eq.s32.totalorder %s15, 0
    %p84 = por %p82, %p83
    %p85 = scmp.ne.s32.totalorder %s74, %s77
    %p86 = scmp.eq.s32.totalorder %s20, 17
    %p87 = por %p85, %p86
    %p88 = scmp.ne.s32.totalorder %s77, %s78
    %p89 = scmp.eq.s32.totalorder %s20, 0
    %p90 = por %p88, %p89
    %p91 = scmp.ne.s32.totalorder %s77, %s78
    %p92 = scmp.eq.s32.totalorder %s21, 17
    %p93 = por %p91, %p92
    %p95 = scmp.ne.s32.totalorder %s78, %s94
    %p96 = scmp.eq.s32.totalorder %s21, 0
    %p97 = por %p95, %p96
    %s98 = ssub.s32 %s22, %s41
    %s99 = ssub.s32 %s24, %s33
    %s100 = sor.u32 %s98, %s99
    %p101 = scmp.eq.s32.totalorder %s100, 0
    %s103 = sadd.s32 %s102, 1
    %s104 = scalar_select %p101, %s102, %s103
    %p107 = pneg %p101
    %p108 = scmp.eq.s32.totalorder %s15, 17
    %p109 = por %p107, %p108
    %p110 = scmp.ne.s32.totalorder %s102, %s105
    %p111 = scmp.eq.s32.totalorder %s15, 0
    %p112 = por %p110, %p111
    %p113 = scmp.ne.s32.totalorder %s102, %s105
    %p114 = scmp.eq.s32.totalorder %s20, 17
    %p115 = por %p113, %p114
    %p116 = scmp.ne.s32.totalorder %s105, %s106
    %p117 = scmp.eq.s32.totalorder %s20, 0
    %p118 = por %p116, %p117
    %p119 = scmp.ne.s32.totalorder %s105, %s106
    %p120 = scmp.eq.s32.totalorder %s21, 17
    %p121 = por %p119, %p120
    %p123 = scmp.ne.s32.totalorder %s106, %s122
    %p124 = scmp.eq.s32.totalorder %s21, 0
    %p125 = por %p123, %p124
    %s126 = ssub.s32 %s22, %s41
    %s127 = ssub.s32 %s24, %s33
    %s128 = sor.u32 %s126, %s127
    %p129 = scmp.eq.s32.totalorder %s128, 0
    %s131 = sadd.s32 %s130, 1
    %s132 = scalar_select %p129, %s130, %s131
    %p135 = pneg %p129
    %p136 = scmp.eq.s32.totalorder %s15, 17
    %p137 = por %p135, %p136
    %p138 = scmp.ne.s32.totalorder %s130, %s133
    %p139 = scmp.eq.s32.totalorder %s15, 0
    %p140 = por %p138, %p139
    %p141 = scmp.ne.s32.totalorder %s130, %s133
    %p142 = scmp.eq.s32.totalorder %s20, 17
    %p143 = por %p141, %p142
    %p144 = scmp.ne.s32.totalorder %s133, %s134
    %p145 = scmp.eq.s32.totalorder %s20, 0
    %p146 = por %p144, %p145
    %p147 = scmp.ne.s32.totalorder %s133, %s134
    %p148 = scmp.eq.s32.totalorder %s21, 17
    %p149 = por %p147, %p148
    %p151 = scmp.ne.s32.totalorder %s134, %s150
    %p152 = scmp.eq.s32.totalorder %s21, 0
    %p153 = por %p151, %p152
    %s155 = sadd.s32 %s154, 1
    %p158 = scmp.eq.s32.totalorder %s15, 17
    %p159 = scmp.ne.s32.totalorder %s154, %s156
    %p160 = scmp.eq.s32.totalorder %s15, 0
    %p161 = por %p159, %p160
    %p162 = scmp.ne.s32.totalorder %s154, %s156
    %p163 = scmp.eq.s32.totalorder %s20, 17
    %p164 = por %p162, %p163
    %p165 = scmp.ne.s32.totalorder %s156, %s157
    %p166 = scmp.eq.s32.totalorder %s20, 0
    %p167 = por %p165, %p166
    %p168 = scmp.ne.s32.totalorder %s156, %s157
    %p169 = scmp.eq.s32.totalorder %s21, 17
    %p170 = por %p168, %p169
    %p172 = scmp.ne.s32.totalorder %s157, %s171
    %p173 = scmp.eq.s32.totalorder %s21, 0
    %p174 = por %p172, %p173
    %s176 = sadd.s32 %s175, 1
    %p179 = scmp.eq.s32.totalorder %s15, 17
    %p180 = scmp.ne.s32.totalorder %s175, %s177
    %p181 = scmp.eq.s32.totalorder %s15, 0
    %p182 = por %p180, %p181
    %p183 = scmp.ne.s32.totalorder %s175, %s177
    %p184 = scmp.eq.s32.totalorder %s20, 17
    %p185 = por %p183, %p184
    %p186 = scmp.ne.s32.totalorder %s177, %s178
    %p187 = scmp.eq.s32.totalorder %s20, 0
    %p188 = por %p186, %p187
    %p189 = scmp.ne.s32.totalorder %s177, %s178
    %p190 = scmp.eq.s32.totalorder %s21, 17
    %p191 = por %p189, %p190
    %p193 = scmp.ne.s32.totalorder %s178, %s192
    %p194 = scmp.eq.s32.totalorder %s21, 0
    %p195 = por %p193, %p194
    %s197 = sadd.s32 %s196, 1
    %p200 = scmp.eq.s32.totalorder %s15, 17
    %p201 = scmp.ne.s32.totalorder %s196, %s198
    %p202 = scmp.eq.s32.totalorder %s15, 0
    %p203 = por %p201, %p202
    %p204 = scmp.ne.s32.totalorder %s196, %s198
    %p205 = scmp.eq.s32.totalorder %s20, 17
    %p206 = por %p204, %p205
    %p207 = scmp.ne.s32.totalorder %s198, %s199
    %p208 = scmp.eq.s32.totalorder %s20, 0
    %p209 = por %p207, %p208
    %p210 = scmp.ne.s32.totalorder %s198, %s199
    %p211 = scmp.eq.s32.totalorder %s21, 17
    %p212 = por %p210, %p211
    %p214 = scmp.ne.s32.totalorder %s199, %s213
    %p215 = scmp.eq.s32.totalorder %s21, 0
    %p216 = por %p214, %p215
    %s218 = sadd.s32 %s217, 1
    %p221 = scmp.eq.s32.totalorder %s15, 17
    %p222 = scmp.ne.s32.totalorder %s217, %s219
    %p223 = scmp.eq.s32.totalorder %s15, 0
    %p224 = por %p222, %p223
    %p225 = scmp.ne.s32.totalorder %s217, %s219
    %p226 = scmp.eq.s32.totalorder %s20, 17
    %p227 = por %p225, %p226
    %p228 = scmp.ne.s32.totalorder %s219, %s220
    %p229 = scmp.eq.s32.totalorder %s20, 0
    %p230 = por %p228, %p229
    %p231 = scmp.ne.s32.totalorder %s219, %s220
    %p232 = scmp.eq.s32.totalorder %s21, 17
    %p233 = por %p231, %p232
    %p235 = scmp.ne.s32.totalorder %s220, %s234
    %p236 = scmp.eq.s32.totalorder %s21, 0
    %p237 = por %p235, %p236
    %s239 = sadd.s32 %s238, 1
    %p242 = scmp.eq.s32.totalorder %s15, 17
    %p243 = scmp.ne.s32.totalorder %s238, %s240
    %p244 = scmp.eq.s32.totalorder %s15, 0
    %p245 = por %p243, %p244
    %p246 = scmp.ne.s32.totalorder %s238, %s240
    %p247 = scmp.eq.s32.totalorder %s20, 17
    %p248 = por %p246, %p247
    %p249 = scmp.ne.s32.totalorder %s240, %s241
    %p250 = scmp.eq.s32.totalorder %s20, 0
    %p251 = por %p249, %p250
    %p252 = scmp.ne.s32.totalorder %s240, %s241
    %p253 = scmp.eq.s32.totalorder %s21, 17
    %p254 = por %p252, %p253
    %p256 = scmp.ne.s32.totalorder %s241, %s255
    %p257 = scmp.eq.s32.totalorder %s21, 0
    %p258 = por %p256, %p257
    %s259 = ssub.s32 %s22, %s41
    %s260 = ssub.s32 %s23, %s37
    %s261 = sor.u32 %s259, %s260
    %p262 = scmp.eq.s32.totalorder %s261, 0
    %s264 = sadd.s32 %s263, 1
    %s265 = scalar_select %p262, %s263, %s264
    %p268 = pneg %p262
    %p269 = scmp.eq.s32.totalorder %s15, 17
    %p270 = por %p268, %p269
    %p271 = scmp.ne.s32.totalorder %s263, %s266
    %p272 = scmp.eq.s32.totalorder %s15, 0
    %p273 = por %p271, %p272
    %p274 = scmp.ne.s32.totalorder %s263, %s266
    %p275 = scmp.eq.s32.totalorder %s20, 17
    %p276 = por %p274, %p275
    %p277 = scmp.ne.s32.totalorder %s266, %s267
    %p278 = scmp.eq.s32.totalorder %s20, 0
    %p279 = por %p277, %p278
    %p280 = scmp.ne.s32.totalorder %s266, %s267
    %p281 = scmp.eq.s32.totalorder %s21, 17
    %p282 = por %p280, %p281
    %p284 = scmp.ne.s32.totalorder %s267, %s283
    %p285 = scmp.eq.s32.totalorder %s21, 0
    %p286 = por %p284, %p285
    %p287 = scmp.le.s32.totalorder 1, %s15
    %p288 = scmp.lt.s32.totalorder %s15, 19
    %p289 = pnand %p287, %p288
    %p290 = pneg %p289
    // Predicated region
    $region9: #{default_encoder_forward.3} parent=5 // pred_check
      _
    $region10: #{default_encoder_forward.3} parent=5 // pred_check_branch
      %292 = sbr.rel (%p289) target = $region12
    $region11: #{default_encoder_forward.3} parent=5 // pred_region
      %s293 = ssub.s32 %s15, 1
      // Predicated region
      $region13: #{default_encoder_forward.3} parent=11 // pred_check
        %p294 = pneg %p167
      $region14: #{default_encoder_forward.3} parent=11 // pred_check_branch
        %296 = sbr.rel (%p294) target = $region16
      $region15: #{default_encoder_forward.3} parent=11 // pred_region
        _
      $region16: #{default_encoder_forward.3} parent=11 // pred_fallthru
        _
      // Predicated region
      $region17: #{default_encoder_forward.3} parent=11 // pred_check
        %p297 = pneg %p188
      $region18: #{default_encoder_forward.3} parent=11 // pred_check_branch
        %299 = sbr.rel (%p297) target = $region20
      $region19: #{default_encoder_forward.3} parent=11 // pred_region
        _
      $region20: #{default_encoder_forward.3} parent=11 // pred_fallthru
        _
      // Predicated region
      $region21: #{default_encoder_forward.3} parent=11 // pred_check
        %p300 = pneg %p209
      $region22: #{default_encoder_forward.3} parent=11 // pred_check_branch
        %302 = sbr.rel (%p300) target = $region24
      $region23: #{default_encoder_forward.3} parent=11 // pred_region
        _
      $region24: #{default_encoder_forward.3} parent=11 // pred_fallthru
        _
      // Predicated region
      $region25: #{default_encoder_forward.3} parent=11 // pred_check
        %p303 = pneg %p230
      $region26: #{default_encoder_forward.3} parent=11 // pred_check_branch
        %305 = sbr.rel (%p303) target = $region28
      $region27: #{default_encoder_forward.3} parent=11 // pred_region
        _
      $region28: #{default_encoder_forward.3} parent=11 // pred_fallthru
        _
      // Predicated region
      $region29: #{default_encoder_forward.3} parent=11 // pred_check
        %p306 = pneg %p251
      $region30: #{default_encoder_forward.3} parent=11 // pred_check_branch
        %308 = sbr.rel (%p306) target = $region32
      $region31: #{default_encoder_forward.3} parent=11 // pred_region
        _
      $region32: #{default_encoder_forward.3} parent=11 // pred_fallthru
        _
    $region12: #{default_encoder_forward.3} parent=5 // pred_fallthru
      _
    %p309 = scmp.lt.s32.totalorder %s15, 18
    // Predicated region
    $region33: #{default_encoder_forward.3} parent=5 // pred_check
      %p310 = pneg %p309
    $region34: #{default_encoder_forward.3} parent=5 // pred_check_branch
      %312 = sbr.rel (%p310) target = $region36
    $region35: #{default_encoder_forward.3} parent=5 // pred_region
      // Predicated region
      $region37: #{default_encoder_forward.3} parent=35 // pred_check
        %p313 = pneg %p56
      $region38: #{default_encoder_forward.3} parent=35 // pred_check_branch
        %315 = sbr.rel (%p313) target = $region40
      $region39: #{default_encoder_forward.3} parent=35 // pred_region
        %s316 = smul.u32 16, %s23
        %p317 = scmp.lt.s32.totalorder %s22, 1
        %s318 = scalar_select %p317, %s22, 1
        %p319 = scmp.lt.s32.totalorder %s316, 47
        %s320 = scalar_select %p319, %s316, 47
        %s321 = smul.addr %s318, 48
        %s322 = sadd.s32 %s320, %s321
        %s323 = smul.addr %s322, 8
        %s324 = scalar_lea.vmem %s0, %s323
        %s325 = smul.u32 16, %s23
      $region40: #{default_encoder_forward.3} parent=35 // pred_fallthru
        _
      // Predicated region
      $region41: #{default_encoder_forward.3} parent=35 // pred_check
        %p326 = pneg %p84
      $region42: #{default_encoder_forward.3} parent=35 // pred_check_branch
        %328 = sbr.rel (%p326) target = $region44
      $region43: #{default_encoder_forward.3} parent=35 // pred_region
        %s329 = smul.u32 16, %s23
        %p330 = scmp.lt.s32.totalorder %s22, 1
        %s331 = scalar_select %p330, %s22, 1
        %p332 = scmp.lt.s32.totalorder %s329, 47
        %s333 = scalar_select %p332, %s329, 47
        %s334 = smul.addr %s331, 48
        %s335 = sadd.s32 %s333, %s334
        %s336 = smul.addr %s335, 8
        %s337 = scalar_lea.vmem %s1, %s336
        %s338 = smul.u32 16, %s23
      $region44: #{default_encoder_forward.3} parent=35 // pred_fallthru
        _
      // Predicated region
      $region45: #{default_encoder_forward.3} parent=35 // pred_check
        %p339 = pneg %p112
      $region46: #{default_encoder_forward.3} parent=35 // pred_check_branch
        %341 = sbr.rel (%p339) target = $region48
      $region47: #{default_encoder_forward.3} parent=35 // pred_region
        %s342 = smul.u32 16, %s24
        %p343 = scmp.lt.s32.totalorder %s22, 1
        %s344 = scalar_select %p343, %s22, 1
        %p345 = scmp.lt.s32.totalorder %s342, 47
        %s346 = scalar_select %p345, %s342, 47
        %s347 = smul.addr %s344, 48
        %s348 = sadd.s32 %s346, %s347
        %s349 = smul.addr %s348, 8
        %s350 = scalar_lea.vmem %s2, %s349
        %s351 = smul.u32 16, %s24
      $region48: #{default_encoder_forward.3} parent=35 // pred_fallthru
        _
      // Predicated region
      $region49: #{default_encoder_forward.3} parent=35 // pred_check
        %p352 = pneg %p140
      $region50: #{default_encoder_forward.3} parent=35 // pred_check_branch
        %354 = sbr.rel (%p352) target = $region52
      $region51: #{default_encoder_forward.3} parent=35 // pred_region
        %s355 = smul.u32 16, %s24
        %p356 = scmp.lt.s32.totalorder %s22, 1
        %s357 = scalar_select %p356, %s22, 1
        %p358 = scmp.lt.s32.totalorder %s355, 47
        %s359 = scalar_select %p358, %s355, 47
        %s360 = smul.addr %s357, 48
        %s361 = sadd.s32 %s359, %s360
        %s362 = smul.addr %s361, 8
        %s363 = scalar_lea.vmem %s3, %s362
        %s364 = smul.u32 16, %s24
      $region52: #{default_encoder_forward.3} parent=35 // pred_fallthru
        _
    $region36: #{default_encoder_forward.3} parent=5 // pred_fallthru
      _
    %p365 = scmp.le.s32.totalorder 1, %s15
    %p366 = scmp.lt.s32.totalorder %s15, 19
    %p367 = pnand %p365, %p366
    %p368 = pneg %p367
    // Predicated region
    $region53: #{default_encoder_forward.3} parent=5 // pred_check
      _
    $region54: #{default_encoder_forward.3} parent=5 // pred_check_branch
      %370 = sbr.rel (%p367) target = $region56
    $region55: #{default_encoder_forward.3} parent=5 // pred_region
      %s371 = ssub.s32 %s15, 1
      %s372 = smul.u32 16, %s26
      %p373 = scmp.lt.s32.totalorder %s25, 1
      %s374 = scalar_select %p373, %s25, 1
      %p375 = scmp.lt.s32.totalorder %s372, 47
      %s376 = scalar_select %p375, %s372, 47
      %s377 = smul.addr %s374, 48
      %s378 = sadd.s32 %s376, %s377
      %s379 = smul.addr %s378, 8
      %s380 = scalar_lea.vmem %s0, %s379
      %p381 = pneg %p62
      %p382 = pneg %p59
      %s383 = smul.u32 16, %s26
      %p384 = scmp.lt.s32.totalorder %s25, 1
      %s385 = scalar_select %p384, %s25, 1
      %p386 = scmp.lt.s32.totalorder %s383, 47
      %s387 = scalar_select %p386, %s383, 47
      %s388 = smul.addr %s385, 48
      %s389 = sadd.s32 %s387, %s388
      %s390 = smul.addr %s389, 8
      %s391 = scalar_lea.vmem %s1, %s390
      %p392 = pneg %p90
      %p393 = pneg %p87
      %s394 = smul.u32 16, %s27
      %p395 = scmp.lt.s32.totalorder %s25, 1
      %s396 = scalar_select %p395, %s25, 1
      %p397 = scmp.lt.s32.totalorder %s394, 47
      %s398 = scalar_select %p397, %s394, 47
      %s399 = smul.addr %s396, 48
      %s400 = sadd.s32 %s398, %s399
      %s401 = smul.addr %s400, 8
      %s402 = scalar_lea.vmem %s2, %s401
      %p403 = pneg %p118
      %p404 = pneg %p115
      %s405 = smul.u32 16, %s27
      %p406 = scmp.lt.s32.totalorder %s25, 1
      %s407 = scalar_select %p406, %s25, 1
      %p408 = scmp.lt.s32.totalorder %s405, 47
      %s409 = scalar_select %p408, %s405, 47
      %s410 = smul.addr %s407, 48
      %s411 = sadd.s32 %s409, %s410
      %s412 = smul.addr %s411, 8
      %s413 = scalar_lea.vmem %s3, %s412
      %p414 = pneg %p146
      %p415 = pneg %p143
      %p416 = pneg %p167
      %p417 = pneg %p164
      %p418 = pneg %p188
      %p419 = pneg %p185
      %p420 = pneg %p209
      %p421 = pneg %p206
      %p422 = pneg %p230
      %p423 = pneg %p227
      %p424 = pneg %p251
      %p425 = pneg %p248
      %p426 = pneg %p279
      %p427 = pneg %p276
      %s428 = smul.u32 16, %s26
      %p429 = scmp.lt.s32.totalorder %s25, 1
      %s430 = scalar_select %p429, %s25, 1
      %p431 = scmp.lt.s32.totalorder %s428, 47
      %s432 = scalar_select %p431, %s428, 47
      %s433 = smul.addr %s430, 48
      %s434 = sadd.s32 %s432, %s433
      %s435 = smul.addr %s434, 8
      %s436 = scalar_lea.vmem %s9, %s435
      %s437 = smul.u32 16, %s26
      %p438 = scmp.lt.s32.totalorder %s25, 1
      %s439 = scalar_select %p438, %s25, 1
      %p440 = scmp.lt.s32.totalorder %s437, 47
      %s441 = scalar_select %p440, %s437, 47
      %s442 = smul.addr %s439, 48
      %s443 = sadd.s32 %s441, %s442
      %s444 = smul.addr %s443, 8
      %s445 = scalar_lea.vmem %s0, %s444
      %s446 = smul.u32 16, %s26
      %s447 = smul.u32 16, %s26
      %p448 = scmp.lt.s32.totalorder %s25, 1
      %s449 = scalar_select %p448, %s25, 1
      %p450 = scmp.lt.s32.totalorder %s447, 47
      %s451 = scalar_select %p450, %s447, 47
      %s452 = smul.addr %s449, 48
      %s453 = sadd.s32 %s451, %s452
      %s454 = smul.addr %s453, 8
      %s455 = scalar_lea.vmem %s1, %s454
      %s456 = smul.u32 16, %s26
      %s457 = smul.u32 16, %s27
      %p458 = scmp.lt.s32.totalorder %s25, 1
      %s459 = scalar_select %p458, %s25, 1
      %p460 = scmp.lt.s32.totalorder %s457, 47
      %s461 = scalar_select %p460, %s457, 47
      %s462 = smul.addr %s459, 48
      %s463 = sadd.s32 %s461, %s462
      %s464 = smul.addr %s463, 8
      %s465 = scalar_lea.vmem %s2, %s464
      %s466 = smul.u32 16, %s27
      %s467 = smul.u32 16, %s27
      %p468 = scmp.lt.s32.totalorder %s25, 1
      %s469 = scalar_select %p468, %s25, 1
      %p470 = scmp.lt.s32.totalorder %s467, 47
      %s471 = scalar_select %p470, %s467, 47
      %s472 = smul.addr %s469, 48
      %s473 = sadd.s32 %s471, %s472
      %s474 = smul.addr %s473, 8
      %s475 = scalar_lea.vmem %s3, %s474
      %s476 = smul.u32 16, %s27
      %s477 = smul.u32 16, %s26
      %p478 = scmp.lt.s32.totalorder %s25, 1
      %s479 = scalar_select %p478, %s25, 1
      %p480 = scmp.lt.s32.totalorder %s477, 47
      %s481 = scalar_select %p480, %s477, 47
      %s482 = smul.addr %s479, 48
      %s483 = sadd.s32 %s481, %s482
      %s484 = smul.addr %s483, 8
      %s485 = scalar_lea.vmem %s9, %s484
      %s486 = smul.u32 16, %s26
      %p487 = scmp.eq.s32.totalorder %s27, 0
      // Predicated region
      $region57: #{default_encoder_forward.3} parent=55 // pred_check
        %p488 = pneg %p487
      $region58: #{default_encoder_forward.3} parent=55 // pred_check_branch
        %490 = sbr.rel (%p488) target = $region60
      $region59: #{default_encoder_forward.3} parent=55 // pred_region
        %vm491 = vcmask 7168
        %492 = vst.msk [vmem:[#allocation2] sm:$0xff] %vm491, -1e+30
        %493 = vst.msk [vmem:[#allocation2 + $0x8] sm:$0xff] %vm491, -1e+30
        %494 = vst.msk [vmem:[#allocation2 + $0x10] sm:$0xff] %vm491, -1e+30
        %495 = vst.msk [vmem:[#allocation2 + $0x18] sm:$0xff] %vm491, -1e+30
        %496 = vst.msk [vmem:[#allocation2 + $0x20] sm:$0xff] %vm491, -1e+30
        %497 = vst.msk [vmem:[#allocation2 + $0x28] sm:$0xff] %vm491, -1e+30
        %498 = vst.msk [vmem:[#allocation2 + $0x30] sm:$0xff] %vm491, -1e+30
        %499 = vst.msk [vmem:[#allocation2 + $0x38] sm:$0xff] %vm491, -1e+30
        %500 = vst.msk [vmem:[#allocation2 + $0x40] sm:$0xff] %vm491, -1e+30
        %501 = vst.msk [vmem:[#allocation2 + $0x48] sm:$0xff] %vm491, -1e+30
        %502 = vst.msk [vmem:[#allocation2 + $0x50] sm:$0xff] %vm491, -1e+30
        %503 = vst.msk [vmem:[#allocation2 + $0x58] sm:$0xff] %vm491, -1e+30
        %504 = vst.msk [vmem:[#allocation2 + $0x60] sm:$0xff] %vm491, -1e+30
        %505 = vst.msk [vmem:[#allocation2 + $0x68] sm:$0xff] %vm491, -1e+30
        %506 = vst.msk [vmem:[#allocation2 + $0x70] sm:$0xff] %vm491, -1e+30
        %507 = vst.msk [vmem:[#allocation2 + $0x78] sm:$0xff] %vm491, -1e+30
        %508 = vst.msk [vmem:[#allocation2 + $0x80] sm:$0xff] %vm491, -1e+30
        %509 = vst.msk [vmem:[#allocation2 + $0x88] sm:$0xff] %vm491, -1e+30
        %510 = vst.msk [vmem:[#allocation2 + $0x90] sm:$0xff] %vm491, -1e+30
        %511 = vst.msk [vmem:[#allocation2 + $0x98] sm:$0xff] %vm491, -1e+30
        %512 = vst.msk [vmem:[#allocation2 + $0xa0] sm:$0xff] %vm491, -1e+30
        %513 = vst.msk [vmem:[#allocation2 + $0xa8] sm:$0xff] %vm491, -1e+30
        %514 = vst.msk [vmem:[#allocation2 + $0xb0] sm:$0xff] %vm491, -1e+30
        %515 = vst.msk [vmem:[#allocation2 + $0xb8] sm:$0xff] %vm491, -1e+30
        %516 = vst.msk [vmem:[#allocation2 + $0xc0] sm:$0xff] %vm491, -1e+30
        %517 = vst.msk [vmem:[#allocation2 + $0xc8] sm:$0xff] %vm491, -1e+30
        %518 = vst.msk [vmem:[#allocation2 + $0xd0] sm:$0xff] %vm491, -1e+30
        %519 = vst.msk [vmem:[#allocation2 + $0xd8] sm:$0xff] %vm491, -1e+30
        %520 = vst.msk [vmem:[#allocation2 + $0xe0] sm:$0xff] %vm491, -1e+30
        %521 = vst.msk [vmem:[#allocation2 + $0xe8] sm:$0xff] %vm491, -1e+30
        %522 = vst.msk [vmem:[#allocation2 + $0xf0] sm:$0xff] %vm491, -1e+30
        %523 = vst.msk [vmem:[#allocation2 + $0xf8] sm:$0xff] %vm491, -1e+30
        %524 = vst.msk [vmem:[#allocation2 + $0x100] sm:$0xff] %vm491, -1e+30
        %525 = vst.msk [vmem:[#allocation2 + $0x108] sm:$0xff] %vm491, -1e+30
        %526 = vst.msk [vmem:[#allocation2 + $0x110] sm:$0xff] %vm491, -1e+30
        %527 = vst.msk [vmem:[#allocation2 + $0x118] sm:$0xff] %vm491, -1e+30
        %528 = vst.msk [vmem:[#allocation2 + $0x120] sm:$0xff] %vm491, -1e+30
        %529 = vst.msk [vmem:[#allocation2 + $0x128] sm:$0xff] %vm491, -1e+30
        %530 = vst.msk [vmem:[#allocation2 + $0x130] sm:$0xff] %vm491, -1e+30
        %531 = vst.msk [vmem:[#allocation2 + $0x138] sm:$0xff] %vm491, -1e+30
        %532 = vst.msk [vmem:[#allocation2 + $0x140] sm:$0xff] %vm491, -1e+30
        %533 = vst.msk [vmem:[#allocation2 + $0x148] sm:$0xff] %vm491, -1e+30
        %534 = vst.msk [vmem:[#allocation2 + $0x150] sm:$0xff] %vm491, -1e+30
        %535 = vst.msk [vmem:[#allocation2 + $0x158] sm:$0xff] %vm491, -1e+30
        %536 = vst.msk [vmem:[#allocation2 + $0x160] sm:$0xff] %vm491, -1e+30
        %537 = vst.msk [vmem:[#allocation2 + $0x168] sm:$0xff] %vm491, -1e+30
        %538 = vst.msk [vmem:[#allocation2 + $0x170] sm:$0xff] %vm491, -1e+30
        %539 = vst.msk [vmem:[#allocation2 + $0x178] sm:$0xff] %vm491, -1e+30
        %540 = vst.msk [vmem:[#allocation2 + $0x180] sm:$0xff] %vm491, -1e+30
        %541 = vst.msk [vmem:[#allocation2 + $0x188] sm:$0xff] %vm491, -1e+30
        %542 = vst.msk [vmem:[#allocation2 + $0x190] sm:$0xff] %vm491, -1e+30
        %543 = vst.msk [vmem:[#allocation2 + $0x198] sm:$0xff] %vm491, -1e+30
        %544 = vst.msk [vmem:[#allocation2 + $0x1a0] sm:$0xff] %vm491, -1e+30
        %545 = vst.msk [vmem:[#allocation2 + $0x1a8] sm:$0xff] %vm491, -1e+30
        %546 = vst.msk [vmem:[#allocation2 + $0x1b0] sm:$0xff] %vm491, -1e+30
        %547 = vst.msk [vmem:[#allocation2 + $0x1b8] sm:$0xff] %vm491, -1e+30
        %548 = vst.msk [vmem:[#allocation2 + $0x1c0] sm:$0xff] %vm491, -1e+30
        %549 = vst.msk [vmem:[#allocation2 + $0x1c8] sm:$0xff] %vm491, -1e+30
        %550 = vst.msk [vmem:[#allocation2 + $0x1d0] sm:$0xff] %vm491, -1e+30
        %551 = vst.msk [vmem:[#allocation2 + $0x1d8] sm:$0xff] %vm491, -1e+30
        %552 = vst.msk [vmem:[#allocation2 + $0x1e0] sm:$0xff] %vm491, -1e+30
        %553 = vst.msk [vmem:[#allocation2 + $0x1e8] sm:$0xff] %vm491, -1e+30
        %554 = vst.msk [vmem:[#allocation2 + $0x1f0] sm:$0xff] %vm491, -1e+30
        %555 = vst.msk [vmem:[#allocation2 + $0x1f8] sm:$0xff] %vm491, -1e+30
        %556 = vst.msk [vmem:[#allocation3] sm:$0xff] %vm491, 0.0
        %557 = vst.msk [vmem:[#allocation3 + $0x8] sm:$0xff] %vm491, 0.0
        %558 = vst.msk [vmem:[#allocation3 + $0x10] sm:$0xff] %vm491, 0.0
        %559 = vst.msk [vmem:[#allocation3 + $0x18] sm:$0xff] %vm491, 0.0
        %560 = vst.msk [vmem:[#allocation3 + $0x20] sm:$0xff] %vm491, 0.0
        %561 = vst.msk [vmem:[#allocation3 + $0x28] sm:$0xff] %vm491, 0.0
        %562 = vst.msk [vmem:[#allocation3 + $0x30] sm:$0xff] %vm491, 0.0
        %563 = vst.msk [vmem:[#allocation3 + $0x38] sm:$0xff] %vm491, 0.0
        %564 = vst.msk [vmem:[#allocation3 + $0x40] sm:$0xff] %vm491, 0.0
        %565 = vst.msk [vmem:[#allocation3 + $0x48] sm:$0xff] %vm491, 0.0
        %566 = vst.msk [vmem:[#allocation3 + $0x50] sm:$0xff] %vm491, 0.0
        %567 = vst.msk [vmem:[#allocation3 + $0x58] sm:$0xff] %vm491, 0.0
        %568 = vst.msk [vmem:[#allocation3 + $0x60] sm:$0xff] %vm491, 0.0
        %569 = vst.msk [vmem:[#allocation3 + $0x68] sm:$0xff] %vm491, 0.0
        %570 = vst.msk [vmem:[#allocation3 + $0x70] sm:$0xff] %vm491, 0.0
        %571 = vst.msk [vmem:[#allocation3 + $0x78] sm:$0xff] %vm491, 0.0
        %572 = vst.msk [vmem:[#allocation3 + $0x80] sm:$0xff] %vm491, 0.0
        %573 = vst.msk [vmem:[#allocation3 + $0x88] sm:$0xff] %vm491, 0.0
        %574 = vst.msk [vmem:[#allocation3 + $0x90] sm:$0xff] %vm491, 0.0
        %575 = vst.msk [vmem:[#allocation3 + $0x98] sm:$0xff] %vm491, 0.0
        %576 = vst.msk [vmem:[#allocation3 + $0xa0] sm:$0xff] %vm491, 0.0
        %577 = vst.msk [vmem:[#allocation3 + $0xa8] sm:$0xff] %vm491, 0.0
        %578 = vst.msk [vmem:[#allocation3 + $0xb0] sm:$0xff] %vm491, 0.0
        %579 = vst.msk [vmem:[#allocation3 + $0xb8] sm:$0xff] %vm491, 0.0
        %580 = vst.msk [vmem:[#allocation3 + $0xc0] sm:$0xff] %vm491, 0.0
        %581 = vst.msk [vmem:[#allocation3 + $0xc8] sm:$0xff] %vm491, 0.0
        %582 = vst.msk [vmem:[#allocation3 + $0xd0] sm:$0xff] %vm491, 0.0
        %583 = vst.msk [vmem:[#allocation3 + $0xd8] sm:$0xff] %vm491, 0.0
        %584 = vst.msk [vmem:[#allocation3 + $0xe0] sm:$0xff] %vm491, 0.0
        %585 = vst.msk [vmem:[#allocation3 + $0xe8] sm:$0xff] %vm491, 0.0
        %586 = vst.msk [vmem:[#allocation3 + $0xf0] sm:$0xff] %vm491, 0.0
        %587 = vst.msk [vmem:[#allocation3 + $0xf8] sm:$0xff] %vm491, 0.0
        %588 = vst.msk [vmem:[#allocation3 + $0x100] sm:$0xff] %vm491, 0.0
        %589 = vst.msk [vmem:[#allocation3 + $0x108] sm:$0xff] %vm491, 0.0
        %590 = vst.msk [vmem:[#allocation3 + $0x110] sm:$0xff] %vm491, 0.0
        %591 = vst.msk [vmem:[#allocation3 + $0x118] sm:$0xff] %vm491, 0.0
        %592 = vst.msk [vmem:[#allocation3 + $0x120] sm:$0xff] %vm491, 0.0
        %593 = vst.msk [vmem:[#allocation3 + $0x128] sm:$0xff] %vm491, 0.0
        %594 = vst.msk [vmem:[#allocation3 + $0x130] sm:$0xff] %vm491, 0.0
        %595 = vst.msk [vmem:[#allocation3 + $0x138] sm:$0xff] %vm491, 0.0
        %596 = vst.msk [vmem:[#allocation3 + $0x140] sm:$0xff] %vm491, 0.0
        %597 = vst.msk [vmem:[#allocation3 + $0x148] sm:$0xff] %vm491, 0.0
        %598 = vst.msk [vmem:[#allocation3 + $0x150] sm:$0xff] %vm491, 0.0
        %599 = vst.msk [vmem:[#allocation3 + $0x158] sm:$0xff] %vm491, 0.0
        %600 = vst.msk [vmem:[#allocation3 + $0x160] sm:$0xff] %vm491, 0.0
        %601 = vst.msk [vmem:[#allocation3 + $0x168] sm:$0xff] %vm491, 0.0
        %602 = vst.msk [vmem:[#allocation3 + $0x170] sm:$0xff] %vm491, 0.0
        %603 = vst.msk [vmem:[#allocation3 + $0x178] sm:$0xff] %vm491, 0.0
        %604 = vst.msk [vmem:[#allocation3 + $0x180] sm:$0xff] %vm491, 0.0
        %605 = vst.msk [vmem:[#allocation3 + $0x188] sm:$0xff] %vm491, 0.0
        %606 = vst.msk [vmem:[#allocation3 + $0x190] sm:$0xff] %vm491, 0.0
        %607 = vst.msk [vmem:[#allocation3 + $0x198] sm:$0xff] %vm491, 0.0
        %608 = vst.msk [vmem:[#allocation3 + $0x1a0] sm:$0xff] %vm491, 0.0
        %609 = vst.msk [vmem:[#allocation3 + $0x1a8] sm:$0xff] %vm491, 0.0
        %610 = vst.msk [vmem:[#allocation3 + $0x1b0] sm:$0xff] %vm491, 0.0
        %611 = vst.msk [vmem:[#allocation3 + $0x1b8] sm:$0xff] %vm491, 0.0
        %612 = vst.msk [vmem:[#allocation3 + $0x1c0] sm:$0xff] %vm491, 0.0
        %613 = vst.msk [vmem:[#allocation3 + $0x1c8] sm:$0xff] %vm491, 0.0
        %614 = vst.msk [vmem:[#allocation3 + $0x1d0] sm:$0xff] %vm491, 0.0
        %615 = vst.msk [vmem:[#allocation3 + $0x1d8] sm:$0xff] %vm491, 0.0
        %616 = vst.msk [vmem:[#allocation3 + $0x1e0] sm:$0xff] %vm491, 0.0
        %617 = vst.msk [vmem:[#allocation3 + $0x1e8] sm:$0xff] %vm491, 0.0
        %618 = vst.msk [vmem:[#allocation3 + $0x1f0] sm:$0xff] %vm491, 0.0
        %619 = vst.msk [vmem:[#allocation3 + $0x1f8] sm:$0xff] %vm491, 0.0
        %vm620 = vcmask 195584
        %621 = vst.msk [vmem:[#allocation4] sm:$0xff] %vm620, 0.0
        %622 = vst.msk [vmem:[#allocation4 + $0x8] sm:$0xff] %vm620, 0.0
        %623 = vst.msk [vmem:[#allocation4 + $0x10] sm:$0xff] %vm620, 0.0
        %624 = vst.msk [vmem:[#allocation4 + $0x18] sm:$0xff] %vm620, 0.0
        %625 = vst.msk [vmem:[#allocation4 + $0x20] sm:$0xff] %vm620, 0.0
        %626 = vst.msk [vmem:[#allocation4 + $0x28] sm:$0xff] %vm620, 0.0
        %627 = vst.msk [vmem:[#allocation4 + $0x30] sm:$0xff] %vm620, 0.0
        %628 = vst.msk [vmem:[#allocation4 + $0x38] sm:$0xff] %vm620, 0.0
        %629 = vst.msk [vmem:[#allocation4 + $0x40] sm:$0xff] %vm620, 0.0
        %630 = vst.msk [vmem:[#allocation4 + $0x48] sm:$0xff] %vm620, 0.0
        %631 = vst.msk [vmem:[#allocation4 + $0x50] sm:$0xff] %vm620, 0.0
        %632 = vst.msk [vmem:[#allocation4 + $0x58] sm:$0xff] %vm620, 0.0
        %633 = vst.msk [vmem:[#allocation4 + $0x60] sm:$0xff] %vm620, 0.0
        %634 = vst.msk [vmem:[#allocation4 + $0x68] sm:$0xff] %vm620, 0.0
        %635 = vst.msk [vmem:[#allocation4 + $0x70] sm:$0xff] %vm620, 0.0
        %636 = vst.msk [vmem:[#allocation4 + $0x78] sm:$0xff] %vm620, 0.0
        %637 = vst.msk [vmem:[#allocation4 + $0x80] sm:$0xff] %vm620, 0.0
        %638 = vst.msk [vmem:[#allocation4 + $0x88] sm:$0xff] %vm620, 0.0
        %639 = vst.msk [vmem:[#allocation4 + $0x90] sm:$0xff] %vm620, 0.0
        %640 = vst.msk [vmem:[#allocation4 + $0x98] sm:$0xff] %vm620, 0.0
        %641 = vst.msk [vmem:[#allocation4 + $0xa0] sm:$0xff] %vm620, 0.0
        %642 = vst.msk [vmem:[#allocation4 + $0xa8] sm:$0xff] %vm620, 0.0
        %643 = vst.msk [vmem:[#allocation4 + $0xb0] sm:$0xff] %vm620, 0.0
        %644 = vst.msk [vmem:[#allocation4 + $0xb8] sm:$0xff] %vm620, 0.0
        %645 = vst.msk [vmem:[#allocation4 + $0xc0] sm:$0xff] %vm620, 0.0
        %646 = vst.msk [vmem:[#allocation4 + $0xc8] sm:$0xff] %vm620, 0.0
        %647 = vst.msk [vmem:[#allocation4 + $0xd0] sm:$0xff] %vm620, 0.0
        %648 = vst.msk [vmem:[#allocation4 + $0xd8] sm:$0xff] %vm620, 0.0
        %649 = vst.msk [vmem:[#allocation4 + $0xe0] sm:$0xff] %vm620, 0.0
        %650 = vst.msk [vmem:[#allocation4 + $0xe8] sm:$0xff] %vm620, 0.0
        %651 = vst.msk [vmem:[#allocation4 + $0xf0] sm:$0xff] %vm620, 0.0
        %652 = vst.msk [vmem:[#allocation4 + $0xf8] sm:$0xff] %vm620, 0.0
        %653 = vst.msk [vmem:[#allocation4 + $0x100] sm:$0xff] %vm620, 0.0
        %654 = vst.msk [vmem:[#allocation4 + $0x108] sm:$0xff] %vm620, 0.0
        %655 = vst.msk [vmem:[#allocation4 + $0x110] sm:$0xff] %vm620, 0.0
        %656 = vst.msk [vmem:[#allocation4 + $0x118] sm:$0xff] %vm620, 0.0
        %657 = vst.msk [vmem:[#allocation4 + $0x120] sm:$0xff] %vm620, 0.0
        %658 = vst.msk [vmem:[#allocation4 + $0x128] sm:$0xff] %vm620, 0.0
        %659 = vst.msk [vmem:[#allocation4 + $0x130] sm:$0xff] %vm620, 0.0
        %660 = vst.msk [vmem:[#allocation4 + $0x138] sm:$0xff] %vm620, 0.0
        %661 = vst.msk [vmem:[#allocation4 + $0x140] sm:$0xff] %vm620, 0.0
        %662 = vst.msk [vmem:[#allocation4 + $0x148] sm:$0xff] %vm620, 0.0
        %663 = vst.msk [vmem:[#allocation4 + $0x150] sm:$0xff] %vm620, 0.0
        %664 = vst.msk [vmem:[#allocation4 + $0x158] sm:$0xff] %vm620, 0.0
        %665 = vst.msk [vmem:[#allocation4 + $0x160] sm:$0xff] %vm620, 0.0
        %666 = vst.msk [vmem:[#allocation4 + $0x168] sm:$0xff] %vm620, 0.0
        %667 = vst.msk [vmem:[#allocation4 + $0x170] sm:$0xff] %vm620, 0.0
        %668 = vst.msk [vmem:[#allocation4 + $0x178] sm:$0xff] %vm620, 0.0
        %669 = vst.msk [vmem:[#allocation4 + $0x180] sm:$0xff] %vm620, 0.0
        %670 = vst.msk [vmem:[#allocation4 + $0x188] sm:$0xff] %vm620, 0.0
        %671 = vst.msk [vmem:[#allocation4 + $0x190] sm:$0xff] %vm620, 0.0
        %672 = vst.msk [vmem:[#allocation4 + $0x198] sm:$0xff] %vm620, 0.0
        %673 = vst.msk [vmem:[#allocation4 + $0x1a0] sm:$0xff] %vm620, 0.0
        %674 = vst.msk [vmem:[#allocation4 + $0x1a8] sm:$0xff] %vm620, 0.0
        %675 = vst.msk [vmem:[#allocation4 + $0x1b0] sm:$0xff] %vm620, 0.0
        %676 = vst.msk [vmem:[#allocation4 + $0x1b8] sm:$0xff] %vm620, 0.0
        %677 = vst.msk [vmem:[#allocation4 + $0x1c0] sm:$0xff] %vm620, 0.0
        %678 = vst.msk [vmem:[#allocation4 + $0x1c8] sm:$0xff] %vm620, 0.0
        %679 = vst.msk [vmem:[#allocation4 + $0x1d0] sm:$0xff] %vm620, 0.0
        %680 = vst.msk [vmem:[#allocation4 + $0x1d8] sm:$0xff] %vm620, 0.0
        %681 = vst.msk [vmem:[#allocation4 + $0x1e0] sm:$0xff] %vm620, 0.0
        %682 = vst.msk [vmem:[#allocation4 + $0x1e8] sm:$0xff] %vm620, 0.0
        %683 = vst.msk [vmem:[#allocation4 + $0x1f0] sm:$0xff] %vm620, 0.0
        %684 = vst.msk [vmem:[#allocation4 + $0x1f8] sm:$0xff] %vm620, 0.0
      $region60: #{default_encoder_forward.3} parent=55 // pred_fallthru
        _
      %v685 = vld [vmem:[%s455] sm:$0xff]
      %v686 = vld [vmem:[%s455 + $0x8] sm:$0xff]
      %v687 = vld [vmem:[%s455 + $0x10] sm:$0xff]
      %v688 = vld [vmem:[%s455 + $0x18] sm:$0xff]
      %v689 = vld [vmem:[%s455 + $0x20] sm:$0xff]
      %v690 = vld [vmem:[%s455 + $0x28] sm:$0xff]
      %v691 = vld [vmem:[%s455 + $0x30] sm:$0xff]
      %v692 = vld [vmem:[%s455 + $0x38] sm:$0xff]
      %v693 = vld [vmem:[%s455 + $0x40] sm:$0xff]
      %v694 = vld [vmem:[%s455 + $0x48] sm:$0xff]
      %v695 = vld [vmem:[%s455 + $0x50] sm:$0xff]
      %v696 = vld [vmem:[%s455 + $0x58] sm:$0xff]
      %v697 = vld [vmem:[%s455 + $0x60] sm:$0xff]
      %v698 = vld [vmem:[%s455 + $0x68] sm:$0xff]
      %v699 = vld [vmem:[%s455 + $0x70] sm:$0xff]
      %v700 = vld [vmem:[%s455 + $0x78] sm:$0xff]
      %v701 = vld [vmem:[%s465] sm:$0xff]
      %v702 = vld [vmem:[%s465 + $0x8] sm:$0xff]
      %v703 = vld [vmem:[%s465 + $0x10] sm:$0xff]
      %v704 = vld [vmem:[%s465 + $0x18] sm:$0xff]
      %v705 = vld [vmem:[%s465 + $0x20] sm:$0xff]
      %v706 = vld [vmem:[%s465 + $0x28] sm:$0xff]
      %v707 = vld [vmem:[%s465 + $0x30] sm:$0xff]
      %v708 = vld [vmem:[%s465 + $0x38] sm:$0xff]
      %v709 = vld [vmem:[%s465 + $0x40] sm:$0xff]
      %v710 = vld [vmem:[%s465 + $0x48] sm:$0xff]
      %v711 = vld [vmem:[%s465 + $0x50] sm:$0xff]
      %v712 = vld [vmem:[%s465 + $0x58] sm:$0xff]
      %v713 = vld [vmem:[%s465 + $0x60] sm:$0xff]
      %v714 = vld [vmem:[%s465 + $0x68] sm:$0xff]
      %v715 = vld [vmem:[%s465 + $0x70] sm:$0xff]
      %v716 = vld [vmem:[%s465 + $0x78] sm:$0xff]
      %v717 = vld [vmem:[%s475] sm:$0xff]
      %v718 = vld [vmem:[%s475 + $0x8] sm:$0xff]
      %v719 = vld [vmem:[%s475 + $0x10] sm:$0xff]
      %v720 = vld [vmem:[%s475 + $0x18] sm:$0xff]
      %v721 = vld [vmem:[%s475 + $0x20] sm:$0xff]
      %v722 = vld [vmem:[%s475 + $0x28] sm:$0xff]
      %v723 = vld [vmem:[%s475 + $0x30] sm:$0xff]
      %v724 = vld [vmem:[%s475 + $0x38] sm:$0xff]
      %v725 = vld [vmem:[%s475 + $0x40] sm:$0xff]
      %v726 = vld [vmem:[%s475 + $0x48] sm:$0xff]
      %v727 = vld [vmem:[%s475 + $0x50] sm:$0xff]
      %v728 = vld [vmem:[%s475 + $0x58] sm:$0xff]
      %v729 = vld [vmem:[%s475 + $0x60] sm:$0xff]
      %v730 = vld [vmem:[%s475 + $0x68] sm:$0xff]
      %v731 = vld [vmem:[%s475 + $0x70] sm:$0xff]
      %v732 = vld [vmem:[%s475 + $0x78] sm:$0xff]
      %749 = vrot.lane.b32.xlu0 %v685, 104
      %v750 = vpop.permute.xlu0 %749
      %751 = vrot.lane.b32.xlu0 %v686, 104
      %v752 = vpop.permute.xlu0 %751
      %753 = vrot.lane.b32.xlu0 %v687, 104
      %v754 = vpop.permute.xlu0 %753
      %755 = vrot.lane.b32.xlu0 %v688, 104
      %v756 = vpop.permute.xlu0 %755
      %757 = vrot.lane.b32.xlu0 %v689, 104
      %v758 = vpop.permute.xlu0 %757
      %759 = vrot.lane.b32.xlu0 %v690, 104
      %v760 = vpop.permute.xlu0 %759
      %761 = vrot.lane.b32.xlu0 %v691, 104
      %v762 = vpop.permute.xlu0 %761
      %763 = vrot.lane.b32.xlu0 %v692, 104
      %v764 = vpop.permute.xlu0 %763
      %765 = vrot.lane.b32.xlu0 %v693, 104
      %v766 = vpop.permute.xlu0 %765
      %767 = vrot.lane.b32.xlu0 %v694, 104
      %v768 = vpop.permute.xlu0 %767
      %769 = vrot.lane.b32.xlu0 %v695, 104
      %v770 = vpop.permute.xlu0 %769
      %771 = vrot.lane.b32.xlu0 %v696, 104
      %v772 = vpop.permute.xlu0 %771
      %773 = vrot.lane.b32.xlu0 %v697, 104
      %v774 = vpop.permute.xlu0 %773
      %775 = vrot.lane.b32.xlu0 %v698, 104
      %v776 = vpop.permute.xlu0 %775
      %777 = vrot.lane.b32.xlu0 %v699, 104
      %v778 = vpop.permute.xlu0 %777
      %779 = vrot.lane.b32.xlu0 %v700, 104
      %v780 = vpop.permute.xlu0 %779
      %781 = vrot.lane.b32.xlu0 %v685, 80
      %v782 = vpop.permute.xlu0 %781
      %783 = vrot.lane.b32.xlu0 %v686, 80
      %v784 = vpop.permute.xlu0 %783
      %785 = vrot.lane.b32.xlu0 %v687, 80
      %v786 = vpop.permute.xlu0 %785
      %787 = vrot.lane.b32.xlu0 %v688, 80
      %v788 = vpop.permute.xlu0 %787
      %789 = vrot.lane.b32.xlu0 %v689, 80
      %v790 = vpop.permute.xlu0 %789
      %791 = vrot.lane.b32.xlu0 %v690, 80
      %v792 = vpop.permute.xlu0 %791
      %793 = vrot.lane.b32.xlu0 %v691, 80
      %v794 = vpop.permute.xlu0 %793
      %795 = vrot.lane.b32.xlu0 %v692, 80
      %v796 = vpop.permute.xlu0 %795
      %797 = vrot.lane.b32.xlu0 %v693, 80
      %v798 = vpop.permute.xlu0 %797
      %799 = vrot.lane.b32.xlu0 %v694, 80
      %v800 = vpop.permute.xlu0 %799
      %801 = vrot.lane.b32.xlu0 %v695, 80
      %v802 = vpop.permute.xlu0 %801
      %803 = vrot.lane.b32.xlu0 %v696, 80
      %v804 = vpop.permute.xlu0 %803
      %805 = vrot.lane.b32.xlu0 %v697, 80
      %v806 = vpop.permute.xlu0 %805
      %807 = vrot.lane.b32.xlu0 %v698, 80
      %v808 = vpop.permute.xlu0 %807
      %809 = vrot.lane.b32.xlu0 %v699, 80
      %v810 = vpop.permute.xlu0 %809
      %811 = vrot.lane.b32.xlu0 %v700, 80
      %v812 = vpop.permute.xlu0 %811
      %813 = vrot.lane.b32.xlu0 %v685, 56
      %v814 = vpop.permute.xlu0 %813
      %815 = vrot.lane.b32.xlu0 %v686, 56
      %v816 = vpop.permute.xlu0 %815
      %817 = vrot.lane.b32.xlu0 %v687, 56
      %v818 = vpop.permute.xlu0 %817
      %819 = vrot.lane.b32.xlu0 %v688, 56
      %v820 = vpop.permute.xlu0 %819
      %821 = vrot.lane.b32.xlu0 %v689, 56
      %v822 = vpop.permute.xlu0 %821
      %823 = vrot.lane.b32.xlu0 %v690, 56
      %v824 = vpop.permute.xlu0 %823
      %825 = vrot.lane.b32.xlu0 %v691, 56
      %v826 = vpop.permute.xlu0 %825
      %827 = vrot.lane.b32.xlu0 %v692, 56
      %v828 = vpop.permute.xlu0 %827
      %829 = vrot.lane.b32.xlu0 %v693, 56
      %v830 = vpop.permute.xlu0 %829
      %831 = vrot.lane.b32.xlu0 %v694, 56
      %v832 = vpop.permute.xlu0 %831
      %833 = vrot.lane.b32.xlu0 %v695, 56
      %v834 = vpop.permute.xlu0 %833
      %835 = vrot.lane.b32.xlu0 %v696, 56
      %v836 = vpop.permute.xlu0 %835
      %837 = vrot.lane.b32.xlu0 %v697, 56
      %v838 = vpop.permute.xlu0 %837
      %839 = vrot.lane.b32.xlu0 %v698, 56
      %v840 = vpop.permute.xlu0 %839
      %841 = vrot.lane.b32.xlu0 %v699, 56
      %v842 = vpop.permute.xlu0 %841
      %843 = vrot.lane.b32.xlu0 %v700, 56
      %v844 = vpop.permute.xlu0 %843
      %861 = vrot.lane.b32.xlu0 %v701, 104
      %v862 = vpop.permute.xlu0 %861
      %863 = vrot.lane.b32.xlu0 %v702, 104
      %v864 = vpop.permute.xlu0 %863
      %865 = vrot.lane.b32.xlu0 %v703, 104
      %v866 = vpop.permute.xlu0 %865
      %867 = vrot.lane.b32.xlu0 %v704, 104
      %v868 = vpop.permute.xlu0 %867
      %869 = vrot.lane.b32.xlu0 %v705, 104
      %v870 = vpop.permute.xlu0 %869
      %871 = vrot.lane.b32.xlu0 %v706, 104
      %v872 = vpop.permute.xlu0 %871
      %873 = vrot.lane.b32.xlu0 %v707, 104
      %v874 = vpop.permute.xlu0 %873
      %875 = vrot.lane.b32.xlu0 %v708, 104
      %v876 = vpop.permute.xlu0 %875
      %877 = vrot.lane.b32.xlu0 %v709, 104
      %v878 = vpop.permute.xlu0 %877
      %879 = vrot.lane.b32.xlu0 %v710, 104
      %v880 = vpop.permute.xlu0 %879
      %881 = vrot.lane.b32.xlu0 %v711, 104
      %v882 = vpop.permute.xlu0 %881
      %883 = vrot.lane.b32.xlu0 %v712, 104
      %v884 = vpop.permute.xlu0 %883
      %885 = vrot.lane.b32.xlu0 %v713, 104
      %v886 = vpop.permute.xlu0 %885
      %887 = vrot.lane.b32.xlu0 %v714, 104
      %v888 = vpop.permute.xlu0 %887
      %889 = vrot.lane.b32.xlu0 %v715, 104
      %v890 = vpop.permute.xlu0 %889
      %891 = vrot.lane.b32.xlu0 %v716, 104
      %v892 = vpop.permute.xlu0 %891
      %893 = vrot.lane.b32.xlu0 %v701, 80
      %v894 = vpop.permute.xlu0 %893
      %895 = vrot.lane.b32.xlu0 %v702, 80
      %v896 = vpop.permute.xlu0 %895
      %897 = vrot.lane.b32.xlu0 %v703, 80
      %v898 = vpop.permute.xlu0 %897
      %899 = vrot.lane.b32.xlu0 %v704, 80
      %v900 = vpop.permute.xlu0 %899
      %901 = vrot.lane.b32.xlu0 %v705, 80
      %v902 = vpop.permute.xlu0 %901
      %903 = vrot.lane.b32.xlu0 %v706, 80
      %v904 = vpop.permute.xlu0 %903
      %905 = vrot.lane.b32.xlu0 %v707, 80
      %v906 = vpop.permute.xlu0 %905
      %907 = vrot.lane.b32.xlu0 %v708, 80
      %v908 = vpop.permute.xlu0 %907
      %909 = vrot.lane.b32.xlu0 %v709, 80
      %v910 = vpop.permute.xlu0 %909
      %911 = vrot.lane.b32.xlu0 %v710, 80
      %v912 = vpop.permute.xlu0 %911
      %913 = vrot.lane.b32.xlu0 %v711, 80
      %v914 = vpop.permute.xlu0 %913
      %915 = vrot.lane.b32.xlu0 %v712, 80
      %v916 = vpop.permute.xlu0 %915
      %917 = vrot.lane.b32.xlu0 %v713, 80
      %v918 = vpop.permute.xlu0 %917
      %919 = vrot.lane.b32.xlu0 %v714, 80
      %v920 = vpop.permute.xlu0 %919
      %921 = vrot.lane.b32.xlu0 %v715, 80
      %v922 = vpop.permute.xlu0 %921
      %923 = vrot.lane.b32.xlu0 %v716, 80
      %v924 = vpop.permute.xlu0 %923
      %925 = vrot.lane.b32.xlu0 %v701, 56
      %v926 = vpop.permute.xlu0 %925
      %927 = vrot.lane.b32.xlu0 %v702, 56
      %v928 = vpop.permute.xlu0 %927
      %929 = vrot.lane.b32.xlu0 %v703, 56
      %v930 = vpop.permute.xlu0 %929
      %931 = vrot.lane.b32.xlu0 %v704, 56
      %v932 = vpop.permute.xlu0 %931
      %933 = vrot.lane.b32.xlu0 %v705, 56
      %v934 = vpop.permute.xlu0 %933
      %935 = vrot.lane.b32.xlu0 %v706, 56
      %v936 = vpop.permute.xlu0 %935
      %937 = vrot.lane.b32.xlu0 %v707, 56
      %v938 = vpop.permute.xlu0 %937
      %939 = vrot.lane.b32.xlu0 %v708, 56
      %v940 = vpop.permute.xlu0 %939
      %941 = vrot.lane.b32.xlu0 %v709, 56
      %v942 = vpop.permute.xlu0 %941
      %943 = vrot.lane.b32.xlu0 %v710, 56
      %v944 = vpop.permute.xlu0 %943
      %945 = vrot.lane.b32.xlu0 %v711, 56
      %v946 = vpop.permute.xlu0 %945
      %947 = vrot.lane.b32.xlu0 %v712, 56
      %v948 = vpop.permute.xlu0 %947
      %949 = vrot.lane.b32.xlu0 %v713, 56
      %v950 = vpop.permute.xlu0 %949
      %951 = vrot.lane.b32.xlu0 %v714, 56
      %v952 = vpop.permute.xlu0 %951
      %953 = vrot.lane.b32.xlu0 %v715, 56
      %v954 = vpop.permute.xlu0 %953
      %955 = vrot.lane.b32.xlu0 %v716, 56
      %v956 = vpop.permute.xlu0 %955
      %973 = vrot.lane.b32.xlu0 %v717, 104
      %v974 = vpop.permute.xlu0 %973
      %975 = vrot.lane.b32.xlu0 %v718, 104
      %v976 = vpop.permute.xlu0 %975
      %977 = vrot.lane.b32.xlu0 %v719, 104
      %v978 = vpop.permute.xlu0 %977
      %979 = vrot.lane.b32.xlu0 %v720, 104
      %v980 = vpop.permute.xlu0 %979
      %981 = vrot.lane.b32.xlu0 %v721, 104
      %v982 = vpop.permute.xlu0 %981
      %983 = vrot.lane.b32.xlu0 %v722, 104
      %v984 = vpop.permute.xlu0 %983
      %985 = vrot.lane.b32.xlu0 %v723, 104
      %v986 = vpop.permute.xlu0 %985
      %987 = vrot.lane.b32.xlu0 %v724, 104
      %v988 = vpop.permute.xlu0 %987
      %989 = vrot.lane.b32.xlu0 %v725, 104
      %v990 = vpop.permute.xlu0 %989
      %991 = vrot.lane.b32.xlu0 %v726, 104
      %v992 = vpop.permute.xlu0 %991
      %993 = vrot.lane.b32.xlu0 %v727, 104
      %v994 = vpop.permute.xlu0 %993
      %995 = vrot.lane.b32.xlu0 %v728, 104
      %v996 = vpop.permute.xlu0 %995
      %997 = vrot.lane.b32.xlu0 %v729, 104
      %v998 = vpop.permute.xlu0 %997
      %999 = vrot.lane.b32.xlu0 %v730, 104
      %v1000 = vpop.permute.xlu0 %999
      %1001 = vrot.lane.b32.xlu0 %v731, 104
      %v1002 = vpop.permute.xlu0 %1001
      %1003 = vrot.lane.b32.xlu0 %v732, 104
      %v1004 = vpop.permute.xlu0 %1003
      %1021 = vrot.lane.b32.xlu0 %v717, 80
      %v1022 = vpop.permute.xlu0 %1021
      %1023 = vrot.lane.b32.xlu0 %v718, 80
      %v1024 = vpop.permute.xlu0 %1023
      %1025 = vrot.lane.b32.xlu0 %v719, 80
      %v1026 = vpop.permute.xlu0 %1025
      %1027 = vrot.lane.b32.xlu0 %v720, 80
      %v1028 = vpop.permute.xlu0 %1027
      %1029 = vrot.lane.b32.xlu0 %v721, 80
      %v1030 = vpop.permute.xlu0 %1029
      %1031 = vrot.lane.b32.xlu0 %v722, 80
      %v1032 = vpop.permute.xlu0 %1031
      %1033 = vrot.lane.b32.xlu0 %v723, 80
      %v1034 = vpop.permute.xlu0 %1033
      %1035 = vrot.lane.b32.xlu0 %v724, 80
      %v1036 = vpop.permute.xlu0 %1035
      %1037 = vrot.lane.b32.xlu0 %v725, 80
      %v1038 = vpop.permute.xlu0 %1037
      %1039 = vrot.lane.b32.xlu0 %v726, 80
      %v1040 = vpop.permute.xlu0 %1039
      %1041 = vrot.lane.b32.xlu0 %v727, 80
      %v1042 = vpop.permute.xlu0 %1041
      %1043 = vrot.lane.b32.xlu0 %v728, 80
      %v1044 = vpop.permute.xlu0 %1043
      %1045 = vrot.lane.b32.xlu0 %v729, 80
      %v1046 = vpop.permute.xlu0 %1045
      %1047 = vrot.lane.b32.xlu0 %v730, 80
      %v1048 = vpop.permute.xlu0 %1047
      %1049 = vrot.lane.b32.xlu0 %v731, 80
      %v1050 = vpop.permute.xlu0 %1049
      %1051 = vrot.lane.b32.xlu0 %v732, 80
      %v1052 = vpop.permute.xlu0 %1051
      %1069 = vrot.lane.b32.xlu0 %v717, 56
      %v1070 = vpop.permute.xlu0 %1069
      %1071 = vrot.lane.b32.xlu0 %v718, 56
      %v1072 = vpop.permute.xlu0 %1071
      %1073 = vrot.lane.b32.xlu0 %v719, 56
      %v1074 = vpop.permute.xlu0 %1073
      %1075 = vrot.lane.b32.xlu0 %v720, 56
      %v1076 = vpop.permute.xlu0 %1075
      %1077 = vrot.lane.b32.xlu0 %v721, 56
      %v1078 = vpop.permute.xlu0 %1077
      %1079 = vrot.lane.b32.xlu0 %v722, 56
      %v1080 = vpop.permute.xlu0 %1079
      %1081 = vrot.lane.b32.xlu0 %v723, 56
      %v1082 = vpop.permute.xlu0 %1081
      %1083 = vrot.lane.b32.xlu0 %v724, 56
      %v1084 = vpop.permute.xlu0 %1083
      %1085 = vrot.lane.b32.xlu0 %v725, 56
      %v1086 = vpop.permute.xlu0 %1085
      %1087 = vrot.lane.b32.xlu0 %v726, 56
      %v1088 = vpop.permute.xlu0 %1087
      %1089 = vrot.lane.b32.xlu0 %v727, 56
      %v1090 = vpop.permute.xlu0 %1089
      %1091 = vrot.lane.b32.xlu0 %v728, 56
      %v1092 = vpop.permute.xlu0 %1091
      %1093 = vrot.lane.b32.xlu0 %v729, 56
      %v1094 = vpop.permute.xlu0 %1093
      %1095 = vrot.lane.b32.xlu0 %v730, 56
      %v1096 = vpop.permute.xlu0 %1095
      %1097 = vrot.lane.b32.xlu0 %v731, 56
      %v1098 = vpop.permute.xlu0 %1097
      %1099 = vrot.lane.b32.xlu0 %v732, 56
      %v1100 = vpop.permute.xlu0 %1099
      %vm1117 = vcmask 195584
      %v1118 = vsel %vm1117, %v685, 0
      %v1120 = vsel %vm1117, %v686, 0
      %v1122 = vsel %vm1117, %v687, 0
      %v1124 = vsel %vm1117, %v688, 0
      %v1126 = vsel %vm1117, %v689, 0
      %v1128 = vsel %vm1117, %v690, 0
      %v1130 = vsel %vm1117, %v691, 0
      %v1132 = vsel %vm1117, %v692, 0
      %v1134 = vsel %vm1117, %v693, 0
      %v1136 = vsel %vm1117, %v694, 0
      %v1138 = vsel %vm1117, %v695, 0
      %v1140 = vsel %vm1117, %v696, 0
      %v1142 = vsel %vm1117, %v697, 0
      %v1144 = vsel %vm1117, %v698, 0
      %v1146 = vsel %vm1117, %v699, 0
      %v1148 = vsel %vm1117, %v700, 0
      %v1150 = vsel %vm1117, %v701, 0
      %v1152 = vsel %vm1117, %v702, 0
      %v1154 = vsel %vm1117, %v703, 0
      %v1156 = vsel %vm1117, %v704, 0
      %v1158 = vsel %vm1117, %v705, 0
      %v1160 = vsel %vm1117, %v706, 0
      %v1162 = vsel %vm1117, %v707, 0
      %v1164 = vsel %vm1117, %v708, 0
      %v1166 = vsel %vm1117, %v709, 0
      %v1168 = vsel %vm1117, %v710, 0
      %v1170 = vsel %vm1117, %v711, 0
      %v1172 = vsel %vm1117, %v712, 0
      %v1174 = vsel %vm1117, %v713, 0
      %v1176 = vsel %vm1117, %v714, 0
      %v1178 = vsel %vm1117, %v715, 0
      %v1180 = vsel %vm1117, %v716, 0
      %1182 = vmatpush.xpose.msra.mxu0 %v1180
      %1183 = vmatpush.xpose.msra.mxu0 %v1178
      %1184 = vmatpush.xpose.msra.mxu0 %v1176
      %1185 = vmatpush.xpose.msra.mxu0 %v1174
      %1186 = vmatpush.xpose.msra.mxu0 %v1172
      %1187 = vmatpush.xpose.msra.mxu0 %v1170
      %1188 = vmatpush.xpose.msra.mxu0 %v1168
      %1189 = vmatpush.xpose.msra.mxu0 %v1166
      %1190 = vmatpush.xpose.msra.mxu0 %v1164
      %1191 = vmatpush.xpose.msra.mxu0 %v1162
      %1192 = vmatpush.xpose.msra.mxu0 %v1160
      %1193 = vmatpush.xpose.msra.mxu0 %v1158
      %1194 = vmatpush.xpose.msra.mxu0 %v1156
      %1195 = vmatpush.xpose.msra.mxu0 %v1154
      %1196 = vmatpush.xpose.msra.mxu0 %v1152
      %1197 = vmatpush.xpose.msra.mxu0 %v1150
      %1198 = vmatmul.f32.gmra.mxu0 %v1118
      %v1199 = vpop.f32.mrf.mxu0
      %v1200 = vadd.f32 0.0, %v1199
      %1201 = vmatmul.f32.gmra.mxu0 %v1120
      %v1202 = vpop.f32.mrf.mxu0
      %v1203 = vadd.f32 0.0, %v1202
      %1204 = vmatmul.f32.gmra.mxu0 %v1122
      %v1205 = vpop.f32.mrf.mxu0
      %v1206 = vadd.f32 0.0, %v1205
      %1207 = vmatmul.f32.gmra.mxu0 %v1124
      %v1208 = vpop.f32.mrf.mxu0
      %v1209 = vadd.f32 0.0, %v1208
      %1210 = vmatmul.f32.gmra.mxu0 %v1126
      %v1211 = vpop.f32.mrf.mxu0
      %v1212 = vadd.f32 0.0, %v1211
      %1213 = vmatmul.f32.gmra.mxu0 %v1128
      %v1214 = vpop.f32.mrf.mxu0
      %v1215 = vadd.f32 0.0, %v1214
      %1216 = vmatmul.f32.gmra.mxu0 %v1130
      %v1217 = vpop.f32.mrf.mxu0
      %v1218 = vadd.f32 0.0, %v1217
      %1219 = vmatmul.f32.gmra.mxu0 %v1132
      %v1220 = vpop.f32.mrf.mxu0
      %v1221 = vadd.f32 0.0, %v1220
      %1222 = vmatmul.f32.gmra.mxu0 %v1134
      %v1223 = vpop.f32.mrf.mxu0
      %v1224 = vadd.f32 0.0, %v1223
      %1225 = vmatmul.f32.gmra.mxu0 %v1136
      %v1226 = vpop.f32.mrf.mxu0
      %v1227 = vadd.f32 0.0, %v1226
      %1228 = vmatmul.f32.gmra.mxu0 %v1138
      %v1229 = vpop.f32.mrf.mxu0
      %v1230 = vadd.f32 0.0, %v1229
      %1231 = vmatmul.f32.gmra.mxu0 %v1140
      %v1232 = vpop.f32.mrf.mxu0
      %v1233 = vadd.f32 0.0, %v1232
      %1234 = vmatmul.f32.gmra.mxu0 %v1142
      %v1235 = vpop.f32.mrf.mxu0
      %v1236 = vadd.f32 0.0, %v1235
      %1237 = vmatmul.f32.gmra.mxu0 %v1144
      %v1238 = vpop.f32.mrf.mxu0
      %v1239 = vadd.f32 0.0, %v1238
      %1240 = vmatmul.f32.gmra.mxu0 %v1146
      %v1241 = vpop.f32.mrf.mxu0
      %v1242 = vadd.f32 0.0, %v1241
      %1243 = vmatmul.f32.gmra.mxu0 %v1148
      %v1244 = vpop.f32.mrf.mxu0
      %v1245 = vadd.f32 0.0, %v1244
      %1246 = vdwg.mxu0
      %v1247 = vsel %vm1117, %v750, 0
      %v1249 = vsel %vm1117, %v752, 0
      %v1251 = vsel %vm1117, %v754, 0
      %v1253 = vsel %vm1117, %v756, 0
      %v1255 = vsel %vm1117, %v758, 0
      %v1257 = vsel %vm1117, %v760, 0
      %v1259 = vsel %vm1117, %v762, 0
      %v1261 = vsel %vm1117, %v764, 0
      %v1263 = vsel %vm1117, %v766, 0
      %v1265 = vsel %vm1117, %v768, 0
      %v1267 = vsel %vm1117, %v770, 0
      %v1269 = vsel %vm1117, %v772, 0
      %v1271 = vsel %vm1117, %v774, 0
      %v1273 = vsel %vm1117, %v776, 0
      %v1275 = vsel %vm1117, %v778, 0
      %v1277 = vsel %vm1117, %v780, 0
      %v1279 = vsel %vm1117, %v862, 0
      %v1281 = vsel %vm1117, %v864, 0
      %v1283 = vsel %vm1117, %v866, 0
      %v1285 = vsel %vm1117, %v868, 0
      %v1287 = vsel %vm1117, %v870, 0
      %v1289 = vsel %vm1117, %v872, 0
      %v1291 = vsel %vm1117, %v874, 0
      %v1293 = vsel %vm1117, %v876, 0
      %v1295 = vsel %vm1117, %v878, 0
      %v1297 = vsel %vm1117, %v880, 0
      %v1299 = vsel %vm1117, %v882, 0
      %v1301 = vsel %vm1117, %v884, 0
      %v1303 = vsel %vm1117, %v886, 0
      %v1305 = vsel %vm1117, %v888, 0
      %v1307 = vsel %vm1117, %v890, 0
      %v1309 = vsel %vm1117, %v892, 0
      %1311 = vmatpush.xpose.msra.mxu0 %v1309
      %1312 = vmatpush.xpose.msra.mxu0 %v1307
      %1313 = vmatpush.xpose.msra.mxu0 %v1305
      %1314 = vmatpush.xpose.msra.mxu0 %v1303
      %1315 = vmatpush.xpose.msra.mxu0 %v1301
      %1316 = vmatpush.xpose.msra.mxu0 %v1299
      %1317 = vmatpush.xpose.msra.mxu0 %v1297
      %1318 = vmatpush.xpose.msra.mxu0 %v1295
      %1319 = vmatpush.xpose.msra.mxu0 %v1293
      %1320 = vmatpush.xpose.msra.mxu0 %v1291
      %1321 = vmatpush.xpose.msra.mxu0 %v1289
      %1322 = vmatpush.xpose.msra.mxu0 %v1287
      %1323 = vmatpush.xpose.msra.mxu0 %v1285
      %1324 = vmatpush.xpose.msra.mxu0 %v1283
      %1325 = vmatpush.xpose.msra.mxu0 %v1281
      %1326 = vmatpush.xpose.msra.mxu0 %v1279
      %1327 = vmatmul.f32.gmra.mxu0 %v1247
      %v1328 = vpop.f32.mrf.mxu0
      %v1329 = vadd.f32 0.0, %v1328
      %1330 = vmatmul.f32.gmra.mxu0 %v1249
      %v1331 = vpop.f32.mrf.mxu0
      %v1332 = vadd.f32 0.0, %v1331
      %1333 = vmatmul.f32.gmra.mxu0 %v1251
      %v1334 = vpop.f32.mrf.mxu0
      %v1335 = vadd.f32 0.0, %v1334
      %1336 = vmatmul.f32.gmra.mxu0 %v1253
      %v1337 = vpop.f32.mrf.mxu0
      %v1338 = vadd.f32 0.0, %v1337
      %1339 = vmatmul.f32.gmra.mxu0 %v1255
      %v1340 = vpop.f32.mrf.mxu0
      %v1341 = vadd.f32 0.0, %v1340
      %1342 = vmatmul.f32.gmra.mxu0 %v1257
      %v1343 = vpop.f32.mrf.mxu0
      %v1344 = vadd.f32 0.0, %v1343
      %1345 = vmatmul.f32.gmra.mxu0 %v1259
      %v1346 = vpop.f32.mrf.mxu0
      %v1347 = vadd.f32 0.0, %v1346
      %1348 = vmatmul.f32.gmra.mxu0 %v1261
      %v1349 = vpop.f32.mrf.mxu0
      %v1350 = vadd.f32 0.0, %v1349
      %1351 = vmatmul.f32.gmra.mxu0 %v1263
      %v1352 = vpop.f32.mrf.mxu0
      %v1353 = vadd.f32 0.0, %v1352
      %1354 = vmatmul.f32.gmra.mxu0 %v1265
      %v1355 = vpop.f32.mrf.mxu0
      %v1356 = vadd.f32 0.0, %v1355
      %1357 = vmatmul.f32.gmra.mxu0 %v1267
      %v1358 = vpop.f32.mrf.mxu0
      %v1359 = vadd.f32 0.0, %v1358
      %1360 = vmatmul.f32.gmra.mxu0 %v1269
      %v1361 = vpop.f32.mrf.mxu0
      %v1362 = vadd.f32 0.0, %v1361
      %1363 = vmatmul.f32.gmra.mxu0 %v1271
      %v1364 = vpop.f32.mrf.mxu0
      %v1365 = vadd.f32 0.0, %v1364
      %1366 = vmatmul.f32.gmra.mxu0 %v1273
      %v1367 = vpop.f32.mrf.mxu0
      %v1368 = vadd.f32 0.0, %v1367
      %1369 = vmatmul.f32.gmra.mxu0 %v1275
      %v1370 = vpop.f32.mrf.mxu0
      %v1371 = vadd.f32 0.0, %v1370
      %1372 = vmatmul.f32.gmra.mxu0 %v1277
      %v1373 = vpop.f32.mrf.mxu0
      %v1374 = vadd.f32 0.0, %v1373
      %1375 = vdwg.mxu0
      %v1376 = vsel %vm1117, %v782, 0
      %v1378 = vsel %vm1117, %v784, 0
      %v1380 = vsel %vm1117, %v786, 0
      %v1382 = vsel %vm1117, %v788, 0
      %v1384 = vsel %vm1117, %v790, 0
      %v1386 = vsel %vm1117, %v792, 0
      %v1388 = vsel %vm1117, %v794, 0
      %v1390 = vsel %vm1117, %v796, 0
      %v1392 = vsel %vm1117, %v798, 0
      %v1394 = vsel %vm1117, %v800, 0
      %v1396 = vsel %vm1117, %v802, 0
      %v1398 = vsel %vm1117, %v804, 0
      %v1400 = vsel %vm1117, %v806, 0
      %v1402 = vsel %vm1117, %v808, 0
      %v1404 = vsel %vm1117, %v810, 0
      %v1406 = vsel %vm1117, %v812, 0
      %v1408 = vsel %vm1117, %v894, 0
      %v1410 = vsel %vm1117, %v896, 0
      %v1412 = vsel %vm1117, %v898, 0
      %v1414 = vsel %vm1117, %v900, 0
      %v1416 = vsel %vm1117, %v902, 0
      %v1418 = vsel %vm1117, %v904, 0
      %v1420 = vsel %vm1117, %v906, 0
      %v1422 = vsel %vm1117, %v908, 0
      %v1424 = vsel %vm1117, %v910, 0
      %v1426 = vsel %vm1117, %v912, 0
      %v1428 = vsel %vm1117, %v914, 0
      %v1430 = vsel %vm1117, %v916, 0
      %v1432 = vsel %vm1117, %v918, 0
      %v1434 = vsel %vm1117, %v920, 0
      %v1436 = vsel %vm1117, %v922, 0
      %v1438 = vsel %vm1117, %v924, 0
      %1440 = vmatpush.xpose.msra.mxu0 %v1438
      %1441 = vmatpush.xpose.msra.mxu0 %v1436
      %1442 = vmatpush.xpose.msra.mxu0 %v1434
      %1443 = vmatpush.xpose.msra.mxu0 %v1432
      %1444 = vmatpush.xpose.msra.mxu0 %v1430
      %1445 = vmatpush.xpose.msra.mxu0 %v1428
      %1446 = vmatpush.xpose.msra.mxu0 %v1426
      %1447 = vmatpush.xpose.msra.mxu0 %v1424
      %1448 = vmatpush.xpose.msra.mxu0 %v1422
      %1449 = vmatpush.xpose.msra.mxu0 %v1420
      %1450 = vmatpush.xpose.msra.mxu0 %v1418
      %1451 = vmatpush.xpose.msra.mxu0 %v1416
      %1452 = vmatpush.xpose.msra.mxu0 %v1414
      %1453 = vmatpush.xpose.msra.mxu0 %v1412
      %1454 = vmatpush.xpose.msra.mxu0 %v1410
      %1455 = vmatpush.xpose.msra.mxu0 %v1408
      %1456 = vmatmul.f32.gmra.mxu0 %v1376
      %v1457 = vpop.f32.mrf.mxu0
      %v1458 = vadd.f32 0.0, %v1457
      %1459 = vmatmul.f32.gmra.mxu0 %v1378
      %v1460 = vpop.f32.mrf.mxu0
      %v1461 = vadd.f32 0.0, %v1460
      %1462 = vmatmul.f32.gmra.mxu0 %v1380
      %v1463 = vpop.f32.mrf.mxu0
      %v1464 = vadd.f32 0.0, %v1463
      %1465 = vmatmul.f32.gmra.mxu0 %v1382
      %v1466 = vpop.f32.mrf.mxu0
      %v1467 = vadd.f32 0.0, %v1466
      %1468 = vmatmul.f32.gmra.mxu0 %v1384
      %v1469 = vpop.f32.mrf.mxu0
      %v1470 = vadd.f32 0.0, %v1469
      %1471 = vmatmul.f32.gmra.mxu0 %v1386
      %v1472 = vpop.f32.mrf.mxu0
      %v1473 = vadd.f32 0.0, %v1472
      %1474 = vmatmul.f32.gmra.mxu0 %v1388
      %v1475 = vpop.f32.mrf.mxu0
      %v1476 = vadd.f32 0.0, %v1475
      %1477 = vmatmul.f32.gmra.mxu0 %v1390
      %v1478 = vpop.f32.mrf.mxu0
      %v1479 = vadd.f32 0.0, %v1478
      %1480 = vmatmul.f32.gmra.mxu0 %v1392
      %v1481 = vpop.f32.mrf.mxu0
      %v1482 = vadd.f32 0.0, %v1481
      %1483 = vmatmul.f32.gmra.mxu0 %v1394
      %v1484 = vpop.f32.mrf.mxu0
      %v1485 = vadd.f32 0.0, %v1484
      %1486 = vmatmul.f32.gmra.mxu0 %v1396
      %v1487 = vpop.f32.mrf.mxu0
      %v1488 = vadd.f32 0.0, %v1487
      %1489 = vmatmul.f32.gmra.mxu0 %v1398
      %v1490 = vpop.f32.mrf.mxu0
      %v1491 = vadd.f32 0.0, %v1490
      %1492 = vmatmul.f32.gmra.mxu0 %v1400
      %v1493 = vpop.f32.mrf.mxu0
      %v1494 = vadd.f32 0.0, %v1493
      %1495 = vmatmul.f32.gmra.mxu0 %v1402
      %v1496 = vpop.f32.mrf.mxu0
      %v1497 = vadd.f32 0.0, %v1496
      %1498 = vmatmul.f32.gmra.mxu0 %v1404
      %v1499 = vpop.f32.mrf.mxu0
      %v1500 = vadd.f32 0.0, %v1499
      %1501 = vmatmul.f32.gmra.mxu0 %v1406
      %v1502 = vpop.f32.mrf.mxu0
      %v1503 = vadd.f32 0.0, %v1502
      %1504 = vdwg.mxu0
      %v1505 = vsel %vm1117, %v814, 0
      %v1507 = vsel %vm1117, %v816, 0
      %v1509 = vsel %vm1117, %v818, 0
      %v1511 = vsel %vm1117, %v820, 0
      %v1513 = vsel %vm1117, %v822, 0
      %v1515 = vsel %vm1117, %v824, 0
      %v1517 = vsel %vm1117, %v826, 0
      %v1519 = vsel %vm1117, %v828, 0
      %v1521 = vsel %vm1117, %v830, 0
      %v1523 = vsel %vm1117, %v832, 0
      %v1525 = vsel %vm1117, %v834, 0
      %v1527 = vsel %vm1117, %v836, 0
      %v1529 = vsel %vm1117, %v838, 0
      %v1531 = vsel %vm1117, %v840, 0
      %v1533 = vsel %vm1117, %v842, 0
      %v1535 = vsel %vm1117, %v844, 0
      %v1537 = vsel %vm1117, %v926, 0
      %v1539 = vsel %vm1117, %v928, 0
      %v1541 = vsel %vm1117, %v930, 0
      %v1543 = vsel %vm1117, %v932, 0
      %v1545 = vsel %vm1117, %v934, 0
      %v1547 = vsel %vm1117, %v936, 0
      %v1549 = vsel %vm1117, %v938, 0
      %v1551 = vsel %vm1117, %v940, 0
      %v1553 = vsel %vm1117, %v942, 0
      %v1555 = vsel %vm1117, %v944, 0
      %v1557 = vsel %vm1117, %v946, 0
      %v1559 = vsel %vm1117, %v948, 0
      %v1561 = vsel %vm1117, %v950, 0
      %v1563 = vsel %vm1117, %v952, 0
      %v1565 = vsel %vm1117, %v954, 0
      %v1567 = vsel %vm1117, %v956, 0
      %1569 = vmatpush.xpose.msra.mxu0 %v1567
      %1570 = vmatpush.xpose.msra.mxu0 %v1565
      %1571 = vmatpush.xpose.msra.mxu0 %v1563
      %1572 = vmatpush.xpose.msra.mxu0 %v1561
      %1573 = vmatpush.xpose.msra.mxu0 %v1559
      %1574 = vmatpush.xpose.msra.mxu0 %v1557
      %1575 = vmatpush.xpose.msra.mxu0 %v1555
      %1576 = vmatpush.xpose.msra.mxu0 %v1553
      %1577 = vmatpush.xpose.msra.mxu0 %v1551
      %1578 = vmatpush.xpose.msra.mxu0 %v1549
      %1579 = vmatpush.xpose.msra.mxu0 %v1547
      %1580 = vmatpush.xpose.msra.mxu0 %v1545
      %1581 = vmatpush.xpose.msra.mxu0 %v1543
      %1582 = vmatpush.xpose.msra.mxu0 %v1541
      %1583 = vmatpush.xpose.msra.mxu0 %v1539
      %1584 = vmatpush.xpose.msra.mxu0 %v1537
      %1585 = vmatmul.f32.gmra.mxu0 %v1505
      %v1586 = vpop.f32.mrf.mxu0
      %v1587 = vadd.f32 0.0, %v1586
      %1588 = vmatmul.f32.gmra.mxu0 %v1507
      %v1589 = vpop.f32.mrf.mxu0
      %v1590 = vadd.f32 0.0, %v1589
      %1591 = vmatmul.f32.gmra.mxu0 %v1509
      %v1592 = vpop.f32.mrf.mxu0
      %v1593 = vadd.f32 0.0, %v1592
      %1594 = vmatmul.f32.gmra.mxu0 %v1511
      %v1595 = vpop.f32.mrf.mxu0
      %v1596 = vadd.f32 0.0, %v1595
      %1597 = vmatmul.f32.gmra.mxu0 %v1513
      %v1598 = vpop.f32.mrf.mxu0
      %v1599 = vadd.f32 0.0, %v1598
      %1600 = vmatmul.f32.gmra.mxu0 %v1515
      %v1601 = vpop.f32.mrf.mxu0
      %v1602 = vadd.f32 0.0, %v1601
      %1603 = vmatmul.f32.gmra.mxu0 %v1517
      %v1604 = vpop.f32.mrf.mxu0
      %v1605 = vadd.f32 0.0, %v1604
      %1606 = vmatmul.f32.gmra.mxu0 %v1519
      %v1607 = vpop.f32.mrf.mxu0
      %v1608 = vadd.f32 0.0, %v1607
      %1609 = vmatmul.f32.gmra.mxu0 %v1521
      %v1610 = vpop.f32.mrf.mxu0
      %v1611 = vadd.f32 0.0, %v1610
      %1612 = vmatmul.f32.gmra.mxu0 %v1523
      %v1613 = vpop.f32.mrf.mxu0
      %v1614 = vadd.f32 0.0, %v1613
      %1615 = vmatmul.f32.gmra.mxu0 %v1525
      %v1616 = vpop.f32.mrf.mxu0
      %v1617 = vadd.f32 0.0, %v1616
      %1618 = vmatmul.f32.gmra.mxu0 %v1527
      %v1619 = vpop.f32.mrf.mxu0
      %v1620 = vadd.f32 0.0, %v1619
      %1621 = vmatmul.f32.gmra.mxu0 %v1529
      %v1622 = vpop.f32.mrf.mxu0
      %v1623 = vadd.f32 0.0, %v1622
      %1624 = vmatmul.f32.gmra.mxu0 %v1531
      %v1625 = vpop.f32.mrf.mxu0
      %v1626 = vadd.f32 0.0, %v1625
      %1627 = vmatmul.f32.gmra.mxu0 %v1533
      %v1628 = vpop.f32.mrf.mxu0
      %v1629 = vadd.f32 0.0, %v1628
      %1630 = vmatmul.f32.gmra.mxu0 %v1535
      %v1631 = vpop.f32.mrf.mxu0
      %v1632 = vadd.f32 0.0, %v1631
      %1633 = vdwg.mxu0
      %s1634 = smul.u32 %s27, 128
      %v1635 = vlaneseq
      %v1636 = vand.u32 %v1635, 127
      %v1637 = vstv %s1634
      %v1638 = vadd.s32 %v1637, %v1636
      %vm1639 = vcmp.lt.s32.totalorder %v1638, 320
      %v1640 = vsel %vm1639, 1, 0
      %vm1641 = vcmp.eq.s32.totalorder %v1640, 1
      %v1642 = vsel %vm1641, %v1200, -1e+30
      %v1643 = vsel %vm1641, %v1203, -1e+30
      %v1644 = vsel %vm1641, %v1206, -1e+30
      %v1645 = vsel %vm1641, %v1209, -1e+30
      %v1646 = vsel %vm1641, %v1212, -1e+30
      %v1647 = vsel %vm1641, %v1215, -1e+30
      %v1648 = vsel %vm1641, %v1218, -1e+30
      %v1649 = vsel %vm1641, %v1221, -1e+30
      %v1650 = vsel %vm1641, %v1224, -1e+30
      %v1651 = vsel %vm1641, %v1227, -1e+30
      %v1652 = vsel %vm1641, %v1230, -1e+30
      %v1653 = vsel %vm1641, %v1233, -1e+30
      %v1654 = vsel %vm1641, %v1236, -1e+30
      %v1655 = vsel %vm1641, %v1239, -1e+30
      %v1656 = vsel %vm1641, %v1242, -1e+30
      %v1657 = vsel %vm1641, %v1245, -1e+30
      %v1658 = vsel %vm1641, %v1329, -1e+30
      %v1659 = vsel %vm1641, %v1332, -1e+30
      %v1660 = vsel %vm1641, %v1335, -1e+30
      %v1661 = vsel %vm1641, %v1338, -1e+30
      %v1662 = vsel %vm1641, %v1341, -1e+30
      %v1663 = vsel %vm1641, %v1344, -1e+30
      %v1664 = vsel %vm1641, %v1347, -1e+30
      %v1665 = vsel %vm1641, %v1350, -1e+30
      %v1666 = vsel %vm1641, %v1353, -1e+30
      %v1667 = vsel %vm1641, %v1356, -1e+30
      %v1668 = vsel %vm1641, %v1359, -1e+30
      %v1669 = vsel %vm1641, %v1362, -1e+30
      %v1670 = vsel %vm1641, %v1365, -1e+30
      %v1671 = vsel %vm1641, %v1368, -1e+30
      %v1672 = vsel %vm1641, %v1371, -1e+30
      %v1673 = vsel %vm1641, %v1374, -1e+30
      %v1674 = vsel %vm1641, %v1458, -1e+30
      %v1675 = vsel %vm1641, %v1461, -1e+30
      %v1676 = vsel %vm1641, %v1464, -1e+30
      %v1677 = vsel %vm1641, %v1467, -1e+30
      %v1678 = vsel %vm1641, %v1470, -1e+30
      %v1679 = vsel %vm1641, %v1473, -1e+30
      %v1680 = vsel %vm1641, %v1476, -1e+30
      %v1681 = vsel %vm1641, %v1479, -1e+30
      %v1682 = vsel %vm1641, %v1482, -1e+30
      %v1683 = vsel %vm1641, %v1485, -1e+30
      %v1684 = vsel %vm1641, %v1488, -1e+30
      %v1685 = vsel %vm1641, %v1491, -1e+30
      %v1686 = vsel %vm1641, %v1494, -1e+30
      %v1687 = vsel %vm1641, %v1497, -1e+30
      %v1688 = vsel %vm1641, %v1500, -1e+30
      %v1689 = vsel %vm1641, %v1503, -1e+30
      %v1690 = vsel %vm1641, %v1587, -1e+30
      %v1691 = vsel %vm1641, %v1590, -1e+30
      %v1692 = vsel %vm1641, %v1593, -1e+30
      %v1693 = vsel %vm1641, %v1596, -1e+30
      %v1694 = vsel %vm1641, %v1599, -1e+30
      %v1695 = vsel %vm1641, %v1602, -1e+30
      %v1696 = vsel %vm1641, %v1605, -1e+30
      %v1697 = vsel %vm1641, %v1608, -1e+30
      %v1698 = vsel %vm1641, %v1611, -1e+30
      %v1699 = vsel %vm1641, %v1614, -1e+30
      %v1700 = vsel %vm1641, %v1617, -1e+30
      %v1701 = vsel %vm1641, %v1620, -1e+30
      %v1702 = vsel %vm1641, %v1623, -1e+30
      %v1703 = vsel %vm1641, %v1626, -1e+30
      %v1704 = vsel %vm1641, %v1629, -1e+30
      %v1705 = vsel %vm1641, %v1632, -1e+30
      %v1706 = vld [vmem:[#allocation2] sm:$0xff]
      %v1707 = vld [vmem:[#allocation2 + $0x8] sm:$0xff]
      %v1708 = vld [vmem:[#allocation2 + $0x10] sm:$0xff]
      %v1709 = vld [vmem:[#allocation2 + $0x18] sm:$0xff]
      %v1710 = vld [vmem:[#allocation2 + $0x20] sm:$0xff]
      %v1711 = vld [vmem:[#allocation2 + $0x28] sm:$0xff]
      %v1712 = vld [vmem:[#allocation2 + $0x30] sm:$0xff]
      %v1713 = vld [vmem:[#allocation2 + $0x38] sm:$0xff]
      %v1714 = vld [vmem:[#allocation2 + $0x40] sm:$0xff]
      %v1715 = vld [vmem:[#allocation2 + $0x48] sm:$0xff]
      %v1716 = vld [vmem:[#allocation2 + $0x50] sm:$0xff]
      %v1717 = vld [vmem:[#allocation2 + $0x58] sm:$0xff]
      %v1718 = vld [vmem:[#allocation2 + $0x60] sm:$0xff]
      %v1719 = vld [vmem:[#allocation2 + $0x68] sm:$0xff]
      %v1720 = vld [vmem:[#allocation2 + $0x70] sm:$0xff]
      %v1721 = vld [vmem:[#allocation2 + $0x78] sm:$0xff]
      %v1722 = vld [vmem:[#allocation2 + $0x80] sm:$0xff]
      %v1723 = vld [vmem:[#allocation2 + $0x88] sm:$0xff]
      %v1724 = vld [vmem:[#allocation2 + $0x90] sm:$0xff]
      %v1725 = vld [vmem:[#allocation2 + $0x98] sm:$0xff]
      %v1726 = vld [vmem:[#allocation2 + $0xa0] sm:$0xff]
      %v1727 = vld [vmem:[#allocation2 + $0xa8] sm:$0xff]
      %v1728 = vld [vmem:[#allocation2 + $0xb0] sm:$0xff]
      %v1729 = vld [vmem:[#allocation2 + $0xb8] sm:$0xff]
      %v1730 = vld [vmem:[#allocation2 + $0xc0] sm:$0xff]
      %v1731 = vld [vmem:[#allocation2 + $0xc8] sm:$0xff]
      %v1732 = vld [vmem:[#allocation2 + $0xd0] sm:$0xff]
      %v1733 = vld [vmem:[#allocation2 + $0xd8] sm:$0xff]
      %v1734 = vld [vmem:[#allocation2 + $0xe0] sm:$0xff]
      %v1735 = vld [vmem:[#allocation2 + $0xe8] sm:$0xff]
      %v1736 = vld [vmem:[#allocation2 + $0xf0] sm:$0xff]
      %v1737 = vld [vmem:[#allocation2 + $0xf8] sm:$0xff]
      %v1738 = vld [vmem:[#allocation2 + $0x100] sm:$0xff]
      %v1739 = vld [vmem:[#allocation2 + $0x108] sm:$0xff]
      %v1740 = vld [vmem:[#allocation2 + $0x110] sm:$0xff]
      %v1741 = vld [vmem:[#allocation2 + $0x118] sm:$0xff]
      %v1742 = vld [vmem:[#allocation2 + $0x120] sm:$0xff]
      %v1743 = vld [vmem:[#allocation2 + $0x128] sm:$0xff]
      %v1744 = vld [vmem:[#allocation2 + $0x130] sm:$0xff]
      %v1745 = vld [vmem:[#allocation2 + $0x138] sm:$0xff]
      %v1746 = vld [vmem:[#allocation2 + $0x140] sm:$0xff]
      %v1747 = vld [vmem:[#allocation2 + $0x148] sm:$0xff]
      %v1748 = vld [vmem:[#allocation2 + $0x150] sm:$0xff]
      %v1749 = vld [vmem:[#allocation2 + $0x158] sm:$0xff]
      %v1750 = vld [vmem:[#allocation2 + $0x160] sm:$0xff]
      %v1751 = vld [vmem:[#allocation2 + $0x168] sm:$0xff]
      %v1752 = vld [vmem:[#allocation2 + $0x170] sm:$0xff]
      %v1753 = vld [vmem:[#allocation2 + $0x178] sm:$0xff]
      %v1754 = vld [vmem:[#allocation2 + $0x180] sm:$0xff]
      %v1755 = vld [vmem:[#allocation2 + $0x188] sm:$0xff]
      %v1756 = vld [vmem:[#allocation2 + $0x190] sm:$0xff]
      %v1757 = vld [vmem:[#allocation2 + $0x198] sm:$0xff]
      %v1758 = vld [vmem:[#allocation2 + $0x1a0] sm:$0xff]
      %v1759 = vld [vmem:[#allocation2 + $0x1a8] sm:$0xff]
      %v1760 = vld [vmem:[#allocation2 + $0x1b0] sm:$0xff]
      %v1761 = vld [vmem:[#allocation2 + $0x1b8] sm:$0xff]
      %v1762 = vld [vmem:[#allocation2 + $0x1c0] sm:$0xff]
      %v1763 = vld [vmem:[#allocation2 + $0x1c8] sm:$0xff]
      %v1764 = vld [vmem:[#allocation2 + $0x1d0] sm:$0xff]
      %v1765 = vld [vmem:[#allocation2 + $0x1d8] sm:$0xff]
      %v1766 = vld [vmem:[#allocation2 + $0x1e0] sm:$0xff]
      %v1767 = vld [vmem:[#allocation2 + $0x1e8] sm:$0xff]
      %v1768 = vld [vmem:[#allocation2 + $0x1f0] sm:$0xff]
      %v1769 = vld [vmem:[#allocation2 + $0x1f8] sm:$0xff]
      %1770 = vmax.xlane.f32.xlu0 %v1642
      %v1771 = vpop.xlane.xlu0 %1770
      %1772 = vmax.xlane.f32.xlu0 %v1643
      %v1773 = vpop.xlane.xlu0 %1772
      %1774 = vmax.xlane.f32.xlu0 %v1644
      %v1775 = vpop.xlane.xlu0 %1774
      %1776 = vmax.xlane.f32.xlu0 %v1645
      %v1777 = vpop.xlane.xlu0 %1776
      %1778 = vmax.xlane.f32.xlu0 %v1646
      %v1779 = vpop.xlane.xlu0 %1778
      %1780 = vmax.xlane.f32.xlu0 %v1647
      %v1781 = vpop.xlane.xlu0 %1780
      %1782 = vmax.xlane.f32.xlu0 %v1648
      %v1783 = vpop.xlane.xlu0 %1782
      %1784 = vmax.xlane.f32.xlu0 %v1649
      %v1785 = vpop.xlane.xlu0 %1784
      %1786 = vmax.xlane.f32.xlu0 %v1650
      %v1787 = vpop.xlane.xlu0 %1786
      %1788 = vmax.xlane.f32.xlu0 %v1651
      %v1789 = vpop.xlane.xlu0 %1788
      %1790 = vmax.xlane.f32.xlu0 %v1652
      %v1791 = vpop.xlane.xlu0 %1790
      %1792 = vmax.xlane.f32.xlu0 %v1653
      %v1793 = vpop.xlane.xlu0 %1792
      %1794 = vmax.xlane.f32.xlu0 %v1654
      %v1795 = vpop.xlane.xlu0 %1794
      %1796 = vmax.xlane.f32.xlu0 %v1655
      %v1797 = vpop.xlane.xlu0 %1796
      %1798 = vmax.xlane.f32.xlu0 %v1656
      %v1799 = vpop.xlane.xlu0 %1798
      %1800 = vmax.xlane.f32.xlu0 %v1657
      %v1801 = vpop.xlane.xlu0 %1800
      %1802 = vmax.xlane.f32.xlu0 %v1658
      %v1803 = vpop.xlane.xlu0 %1802
      %1804 = vmax.xlane.f32.xlu0 %v1659
      %v1805 = vpop.xlane.xlu0 %1804
      %1806 = vmax.xlane.f32.xlu0 %v1660
      %v1807 = vpop.xlane.xlu0 %1806
      %1808 = vmax.xlane.f32.xlu0 %v1661
      %v1809 = vpop.xlane.xlu0 %1808
      %1810 = vmax.xlane.f32.xlu0 %v1662
      %v1811 = vpop.xlane.xlu0 %1810
      %1812 = vmax.xlane.f32.xlu0 %v1663
      %v1813 = vpop.xlane.xlu0 %1812
      %1814 = vmax.xlane.f32.xlu0 %v1664
      %v1815 = vpop.xlane.xlu0 %1814
      %1816 = vmax.xlane.f32.xlu0 %v1665
      %v1817 = vpop.xlane.xlu0 %1816
      %1818 = vmax.xlane.f32.xlu0 %v1666
      %v1819 = vpop.xlane.xlu0 %1818
      %1820 = vmax.xlane.f32.xlu0 %v1667
      %v1821 = vpop.xlane.xlu0 %1820
      %1822 = vmax.xlane.f32.xlu0 %v1668
      %v1823 = vpop.xlane.xlu0 %1822
      %1824 = vmax.xlane.f32.xlu0 %v1669
      %v1825 = vpop.xlane.xlu0 %1824
      %1826 = vmax.xlane.f32.xlu0 %v1670
      %v1827 = vpop.xlane.xlu0 %1826
      %1828 = vmax.xlane.f32.xlu0 %v1671
      %v1829 = vpop.xlane.xlu0 %1828
      %1830 = vmax.xlane.f32.xlu0 %v1672
      %v1831 = vpop.xlane.xlu0 %1830
      %1832 = vmax.xlane.f32.xlu0 %v1673
      %v1833 = vpop.xlane.xlu0 %1832
      %1834 = vmax.xlane.f32.xlu0 %v1674
      %v1835 = vpop.xlane.xlu0 %1834
      %1836 = vmax.xlane.f32.xlu0 %v1675
      %v1837 = vpop.xlane.xlu0 %1836
      %1838 = vmax.xlane.f32.xlu0 %v1676
      %v1839 = vpop.xlane.xlu0 %1838
      %1840 = vmax.xlane.f32.xlu0 %v1677
      %v1841 = vpop.xlane.xlu0 %1840
      %1842 = vmax.xlane.f32.xlu0 %v1678
      %v1843 = vpop.xlane.xlu0 %1842
      %1844 = vmax.xlane.f32.xlu0 %v1679
      %v1845 = vpop.xlane.xlu0 %1844
      %1846 = vmax.xlane.f32.xlu0 %v1680
      %v1847 = vpop.xlane.xlu0 %1846
      %1848 = vmax.xlane.f32.xlu0 %v1681
      %v1849 = vpop.xlane.xlu0 %1848
      %1850 = vmax.xlane.f32.xlu0 %v1682
      %v1851 = vpop.xlane.xlu0 %1850
      %1852 = vmax.xlane.f32.xlu0 %v1683
      %v1853 = vpop.xlane.xlu0 %1852
      %1854 = vmax.xlane.f32.xlu0 %v1684
      %v1855 = vpop.xlane.xlu0 %1854
      %1856 = vmax.xlane.f32.xlu0 %v1685
      %v1857 = vpop.xlane.xlu0 %1856
      %1858 = vmax.xlane.f32.xlu0 %v1686
      %v1859 = vpop.xlane.xlu0 %1858
      %1860 = vmax.xlane.f32.xlu0 %v1687
      %v1861 = vpop.xlane.xlu0 %1860
      %1862 = vmax.xlane.f32.xlu0 %v1688
      %v1863 = vpop.xlane.xlu0 %1862
      %1864 = vmax.xlane.f32.xlu0 %v1689
      %v1865 = vpop.xlane.xlu0 %1864
      %1866 = vmax.xlane.f32.xlu0 %v1690
      %v1867 = vpop.xlane.xlu0 %1866
      %1868 = vmax.xlane.f32.xlu0 %v1691
      %v1869 = vpop.xlane.xlu0 %1868
      %1870 = vmax.xlane.f32.xlu0 %v1692
      %v1871 = vpop.xlane.xlu0 %1870
      %1872 = vmax.xlane.f32.xlu0 %v1693
      %v1873 = vpop.xlane.xlu0 %1872
      %1874 = vmax.xlane.f32.xlu0 %v1694
      %v1875 = vpop.xlane.xlu0 %1874
      %1876 = vmax.xlane.f32.xlu0 %v1695
      %v1877 = vpop.xlane.xlu0 %1876
      %1878 = vmax.xlane.f32.xlu0 %v1696
      %v1879 = vpop.xlane.xlu0 %1878
      %1880 = vmax.xlane.f32.xlu0 %v1697
      %v1881 = vpop.xlane.xlu0 %1880
      %1882 = vmax.xlane.f32.xlu0 %v1698
      %v1883 = vpop.xlane.xlu0 %1882
      %1884 = vmax.xlane.f32.xlu0 %v1699
      %v1885 = vpop.xlane.xlu0 %1884
      %1886 = vmax.xlane.f32.xlu0 %v1700
      %v1887 = vpop.xlane.xlu0 %1886
      %1888 = vmax.xlane.f32.xlu0 %v1701
      %v1889 = vpop.xlane.xlu0 %1888
      %1890 = vmax.xlane.f32.xlu0 %v1702
      %v1891 = vpop.xlane.xlu0 %1890
      %1892 = vmax.xlane.f32.xlu0 %v1703
      %v1893 = vpop.xlane.xlu0 %1892
      %1894 = vmax.xlane.f32.xlu0 %v1704
      %v1895 = vpop.xlane.xlu0 %1894
      %1896 = vmax.xlane.f32.xlu0 %v1705
      %v1897 = vpop.xlane.xlu0 %1896
      %v1898 = vmax.f32 %v1706, %v1771
      %v1899 = vmax.f32 %v1707, %v1773
      %v1900 = vmax.f32 %v1708, %v1775
      %v1901 = vmax.f32 %v1709, %v1777
      %v1902 = vmax.f32 %v1710, %v1779
      %v1903 = vmax.f32 %v1711, %v1781
      %v1904 = vmax.f32 %v1712, %v1783
      %v1905 = vmax.f32 %v1713, %v1785
      %v1906 = vmax.f32 %v1714, %v1787
      %v1907 = vmax.f32 %v1715, %v1789
      %v1908 = vmax.f32 %v1716, %v1791
      %v1909 = vmax.f32 %v1717, %v1793
      %v1910 = vmax.f32 %v1718, %v1795
      %v1911 = vmax.f32 %v1719, %v1797
      %v1912 = vmax.f32 %v1720, %v1799
      %v1913 = vmax.f32 %v1721, %v1801
      %v1914 = vmax.f32 %v1722, %v1803
      %v1915 = vmax.f32 %v1723, %v1805
      %v1916 = vmax.f32 %v1724, %v1807
      %v1917 = vmax.f32 %v1725, %v1809
      %v1918 = vmax.f32 %v1726, %v1811
      %v1919 = vmax.f32 %v1727, %v1813
      %v1920 = vmax.f32 %v1728, %v1815
      %v1921 = vmax.f32 %v1729, %v1817
      %v1922 = vmax.f32 %v1730, %v1819
      %v1923 = vmax.f32 %v1731, %v1821
      %v1924 = vmax.f32 %v1732, %v1823
      %v1925 = vmax.f32 %v1733, %v1825
      %v1926 = vmax.f32 %v1734, %v1827
      %v1927 = vmax.f32 %v1735, %v1829
      %v1928 = vmax.f32 %v1736, %v1831
      %v1929 = vmax.f32 %v1737, %v1833
      %v1930 = vmax.f32 %v1738, %v1835
      %v1931 = vmax.f32 %v1739, %v1837
      %v1932 = vmax.f32 %v1740, %v1839
      %v1933 = vmax.f32 %v1741, %v1841
      %v1934 = vmax.f32 %v1742, %v1843
      %v1935 = vmax.f32 %v1743, %v1845
      %v1936 = vmax.f32 %v1744, %v1847
      %v1937 = vmax.f32 %v1745, %v1849
      %v1938 = vmax.f32 %v1746, %v1851
      %v1939 = vmax.f32 %v1747, %v1853
      %v1940 = vmax.f32 %v1748, %v1855
      %v1941 = vmax.f32 %v1749, %v1857
      %v1942 = vmax.f32 %v1750, %v1859
      %v1943 = vmax.f32 %v1751, %v1861
      %v1944 = vmax.f32 %v1752, %v1863
      %v1945 = vmax.f32 %v1753, %v1865
      %v1946 = vmax.f32 %v1754, %v1867
      %v1947 = vmax.f32 %v1755, %v1869
      %v1948 = vmax.f32 %v1756, %v1871
      %v1949 = vmax.f32 %v1757, %v1873
      %v1950 = vmax.f32 %v1758, %v1875
      %v1951 = vmax.f32 %v1759, %v1877
      %v1952 = vmax.f32 %v1760, %v1879
      %v1953 = vmax.f32 %v1761, %v1881
      %v1954 = vmax.f32 %v1762, %v1883
      %v1955 = vmax.f32 %v1763, %v1885
      %v1956 = vmax.f32 %v1764, %v1887
      %v1957 = vmax.f32 %v1765, %v1889
      %v1958 = vmax.f32 %v1766, %v1891
      %v1959 = vmax.f32 %v1767, %v1893
      %v1960 = vmax.f32 %v1768, %v1895
      %v1961 = vmax.f32 %v1769, %v1897
      %v1962 = vsub.f32 %v1706, %v1898
      %v1963 = vsub.f32 %v1707, %v1899
      %v1964 = vsub.f32 %v1708, %v1900
      %v1965 = vsub.f32 %v1709, %v1901
      %v1966 = vsub.f32 %v1710, %v1902
      %v1967 = vsub.f32 %v1711, %v1903
      %v1968 = vsub.f32 %v1712, %v1904
      %v1969 = vsub.f32 %v1713, %v1905
      %v1970 = vsub.f32 %v1714, %v1906
      %v1971 = vsub.f32 %v1715, %v1907
      %v1972 = vsub.f32 %v1716, %v1908
      %v1973 = vsub.f32 %v1717, %v1909
      %v1974 = vsub.f32 %v1718, %v1910
      %v1975 = vsub.f32 %v1719, %v1911
      %v1976 = vsub.f32 %v1720, %v1912
      %v1977 = vsub.f32 %v1721, %v1913
      %v1978 = vsub.f32 %v1722, %v1914
      %v1979 = vsub.f32 %v1723, %v1915
      %v1980 = vsub.f32 %v1724, %v1916
      %v1981 = vsub.f32 %v1725, %v1917
      %v1982 = vsub.f32 %v1726, %v1918
      %v1983 = vsub.f32 %v1727, %v1919
      %v1984 = vsub.f32 %v1728, %v1920
      %v1985 = vsub.f32 %v1729, %v1921
      %v1986 = vsub.f32 %v1730, %v1922
      %v1987 = vsub.f32 %v1731, %v1923
      %v1988 = vsub.f32 %v1732, %v1924
      %v1989 = vsub.f32 %v1733, %v1925
      %v1990 = vsub.f32 %v1734, %v1926
      %v1991 = vsub.f32 %v1735, %v1927
      %v1992 = vsub.f32 %v1736, %v1928
      %v1993 = vsub.f32 %v1737, %v1929
      %v1994 = vsub.f32 %v1738, %v1930
      %v1995 = vsub.f32 %v1739, %v1931
      %v1996 = vsub.f32 %v1740, %v1932
      %v1997 = vsub.f32 %v1741, %v1933
      %v1998 = vsub.f32 %v1742, %v1934
      %v1999 = vsub.f32 %v1743, %v1935
      %v2000 = vsub.f32 %v1744, %v1936
      %v2001 = vsub.f32 %v1745, %v1937
      %v2002 = vsub.f32 %v1746, %v1938
      %v2003 = vsub.f32 %v1747, %v1939
      %v2004 = vsub.f32 %v1748, %v1940
      %v2005 = vsub.f32 %v1749, %v1941
      %v2006 = vsub.f32 %v1750, %v1942
      %v2007 = vsub.f32 %v1751, %v1943
      %v2008 = vsub.f32 %v1752, %v1944
      %v2009 = vsub.f32 %v1753, %v1945
      %v2010 = vsub.f32 %v1754, %v1946
      %v2011 = vsub.f32 %v1755, %v1947
      %v2012 = vsub.f32 %v1756, %v1948
      %v2013 = vsub.f32 %v1757, %v1949
      %v2014 = vsub.f32 %v1758, %v1950
      %v2015 = vsub.f32 %v1759, %v1951
      %v2016 = vsub.f32 %v1760, %v1952
      %v2017 = vsub.f32 %v1761, %v1953
      %v2018 = vsub.f32 %v1762, %v1954
      %v2019 = vsub.f32 %v1763, %v1955
      %v2020 = vsub.f32 %v1764, %v1956
      %v2021 = vsub.f32 %v1765, %v1957
      %v2022 = vsub.f32 %v1766, %v1958
      %v2023 = vsub.f32 %v1767, %v1959
      %v2024 = vsub.f32 %v1768, %v1960
      %v2025 = vsub.f32 %v1769, %v1961
      %v2026 = vmul.f32 %v1962, 1.442695
      %v2027 = vpow.pop %v2026
      %v2028 = vmul.f32 %v1963, 1.442695
      %v2029 = vpow.pop %v2028
      %v2030 = vmul.f32 %v1964, 1.442695
      %v2031 = vpow.pop %v2030
      %v2032 = vmul.f32 %v1965, 1.442695
      %v2033 = vpow.pop %v2032
      %v2034 = vmul.f32 %v1966, 1.442695
      %v2035 = vpow.pop %v2034
      %v2036 = vmul.f32 %v1967, 1.442695
      %v2037 = vpow.pop %v2036
      %v2038 = vmul.f32 %v1968, 1.442695
      %v2039 = vpow.pop %v2038
      %v2040 = vmul.f32 %v1969, 1.442695
      %v2041 = vpow.pop %v2040
      %v2042 = vmul.f32 %v1970, 1.442695
      %v2043 = vpow.pop %v2042
      %v2044 = vmul.f32 %v1971, 1.442695
      %v2045 = vpow.pop %v2044
      %v2046 = vmul.f32 %v1972, 1.442695
      %v2047 = vpow.pop %v2046
      %v2048 = vmul.f32 %v1973, 1.442695
      %v2049 = vpow.pop %v2048
      %v2050 = vmul.f32 %v1974, 1.442695
      %v2051 = vpow.pop %v2050
      %v2052 = vmul.f32 %v1975, 1.442695
      %v2053 = vpow.pop %v2052
      %v2054 = vmul.f32 %v1976, 1.442695
      %v2055 = vpow.pop %v2054
      %v2056 = vmul.f32 %v1977, 1.442695
      %v2057 = vpow.pop %v2056
      %v2058 = vmul.f32 %v1978, 1.442695
      %v2059 = vpow.pop %v2058
      %v2060 = vmul.f32 %v1979, 1.442695
      %v2061 = vpow.pop %v2060
      %v2062 = vmul.f32 %v1980, 1.442695
      %v2063 = vpow.pop %v2062
      %v2064 = vmul.f32 %v1981, 1.442695
      %v2065 = vpow.pop %v2064
      %v2066 = vmul.f32 %v1982, 1.442695
      %v2067 = vpow.pop %v2066
      %v2068 = vmul.f32 %v1983, 1.442695
      %v2069 = vpow.pop %v2068
      %v2070 = vmul.f32 %v1984, 1.442695
      %v2071 = vpow.pop %v2070
      %v2072 = vmul.f32 %v1985, 1.442695
      %v2073 = vpow.pop %v2072
      %v2074 = vmul.f32 %v1986, 1.442695
      %v2075 = vpow.pop %v2074
      %v2076 = vmul.f32 %v1987, 1.442695
      %v2077 = vpow.pop %v2076
      %v2078 = vmul.f32 %v1988, 1.442695
      %v2079 = vpow.pop %v2078
      %v2080 = vmul.f32 %v1989, 1.442695
      %v2081 = vpow.pop %v2080
      %v2082 = vmul.f32 %v1990, 1.442695
      %v2083 = vpow.pop %v2082
      %v2084 = vmul.f32 %v1991, 1.442695
      %v2085 = vpow.pop %v2084
      %v2086 = vmul.f32 %v1992, 1.442695
      %v2087 = vpow.pop %v2086
      %v2088 = vmul.f32 %v1993, 1.442695
      %v2089 = vpow.pop %v2088
      %v2090 = vmul.f32 %v1994, 1.442695
      %v2091 = vpow.pop %v2090
      %v2092 = vmul.f32 %v1995, 1.442695
      %v2093 = vpow.pop %v2092
      %v2094 = vmul.f32 %v1996, 1.442695
      %v2095 = vpow.pop %v2094
      %v2096 = vmul.f32 %v1997, 1.442695
      %v2097 = vpow.pop %v2096
      %v2098 = vmul.f32 %v1998, 1.442695
      %v2099 = vpow.pop %v2098
      %v2100 = vmul.f32 %v1999, 1.442695
      %v2101 = vpow.pop %v2100
      %v2102 = vmul.f32 %v2000, 1.442695
      %v2103 = vpow.pop %v2102
      %v2104 = vmul.f32 %v2001, 1.442695
      %v2105 = vpow.pop %v2104
      %v2106 = vmul.f32 %v2002, 1.442695
      %v2107 = vpow.pop %v2106
      %v2108 = vmul.f32 %v2003, 1.442695
      %v2109 = vpow.pop %v2108
      %v2110 = vmul.f32 %v2004, 1.442695
      %v2111 = vpow.pop %v2110
      %v2112 = vmul.f32 %v2005, 1.442695
      %v2113 = vpow.pop %v2112
      %v2114 = vmul.f32 %v2006, 1.442695
      %v2115 = vpow.pop %v2114
      %v2116 = vmul.f32 %v2007, 1.442695
      %v2117 = vpow.pop %v2116
      %v2118 = vmul.f32 %v2008, 1.442695
      %v2119 = vpow.pop %v2118
      %v2120 = vmul.f32 %v2009, 1.442695
      %v2121 = vpow.pop %v2120
      %v2122 = vmul.f32 %v2010, 1.442695
      %v2123 = vpow.pop %v2122
      %v2124 = vmul.f32 %v2011, 1.442695
      %v2125 = vpow.pop %v2124
      %v2126 = vmul.f32 %v2012, 1.442695
      %v2127 = vpow.pop %v2126
      %v2128 = vmul.f32 %v2013, 1.442695
      %v2129 = vpow.pop %v2128
      %v2130 = vmul.f32 %v2014, 1.442695
      %v2131 = vpow.pop %v2130
      %v2132 = vmul.f32 %v2015, 1.442695
      %v2133 = vpow.pop %v2132
      %v2134 = vmul.f32 %v2016, 1.442695
      %v2135 = vpow.pop %v2134
      %v2136 = vmul.f32 %v2017, 1.442695
      %v2137 = vpow.pop %v2136
      %v2138 = vmul.f32 %v2018, 1.442695
      %v2139 = vpow.pop %v2138
      %v2140 = vmul.f32 %v2019, 1.442695
      %v2141 = vpow.pop %v2140
      %v2142 = vmul.f32 %v2020, 1.442695
      %v2143 = vpow.pop %v2142
      %v2144 = vmul.f32 %v2021, 1.442695
      %v2145 = vpow.pop %v2144
      %v2146 = vmul.f32 %v2022, 1.442695
      %v2147 = vpow.pop %v2146
      %v2148 = vmul.f32 %v2023, 1.442695
      %v2149 = vpow.pop %v2148
      %v2150 = vmul.f32 %v2024, 1.442695
      %v2151 = vpow.pop %v2150
      %v2152 = vmul.f32 %v2025, 1.442695
      %v2153 = vpow.pop %v2152
      %2155 = vset.pattern.permute.xlu0 0
      %2156 = vperm.xlu0 %2155, %v1898
      %v2157 = vpop.permute.xlu0 %2156
      %2160 = vset.pattern.permute.xlu0 0
      %2161 = vperm.xlu0 %2160, %v1899
      %v2162 = vpop.permute.xlu0 %2161
      %2165 = vset.pattern.permute.xlu0 0
      %2166 = vperm.xlu0 %2165, %v1900
      %v2167 = vpop.permute.xlu0 %2166
      %2170 = vset.pattern.permute.xlu0 0
      %2171 = vperm.xlu0 %2170, %v1901
      %v2172 = vpop.permute.xlu0 %2171
      %2175 = vset.pattern.permute.xlu0 0
      %2176 = vperm.xlu0 %2175, %v1902
      %v2177 = vpop.permute.xlu0 %2176
      %2180 = vset.pattern.permute.xlu0 0
      %2181 = vperm.xlu0 %2180, %v1903
      %v2182 = vpop.permute.xlu0 %2181
      %2185 = vset.pattern.permute.xlu0 0
      %2186 = vperm.xlu0 %2185, %v1904
      %v2187 = vpop.permute.xlu0 %2186
      %2190 = vset.pattern.permute.xlu0 0
      %2191 = vperm.xlu0 %2190, %v1905
      %v2192 = vpop.permute.xlu0 %2191
      %2195 = vset.pattern.permute.xlu0 0
      %2196 = vperm.xlu0 %2195, %v1906
      %v2197 = vpop.permute.xlu0 %2196
      %2200 = vset.pattern.permute.xlu0 0
      %2201 = vperm.xlu0 %2200, %v1907
      %v2202 = vpop.permute.xlu0 %2201
      %2205 = vset.pattern.permute.xlu0 0
      %2206 = vperm.xlu0 %2205, %v1908
      %v2207 = vpop.permute.xlu0 %2206
      %2210 = vset.pattern.permute.xlu0 0
      %2211 = vperm.xlu0 %2210, %v1909
      %v2212 = vpop.permute.xlu0 %2211
      %2215 = vset.pattern.permute.xlu0 0
      %2216 = vperm.xlu0 %2215, %v1910
      %v2217 = vpop.permute.xlu0 %2216
      %2220 = vset.pattern.permute.xlu0 0
      %2221 = vperm.xlu0 %2220, %v1911
      %v2222 = vpop.permute.xlu0 %2221
      %2225 = vset.pattern.permute.xlu0 0
      %2226 = vperm.xlu0 %2225, %v1912
      %v2227 = vpop.permute.xlu0 %2226
      %2230 = vset.pattern.permute.xlu0 0
      %2231 = vperm.xlu0 %2230, %v1913
      %v2232 = vpop.permute.xlu0 %2231
      %2235 = vset.pattern.permute.xlu0 0
      %2236 = vperm.xlu0 %2235, %v1914
      %v2237 = vpop.permute.xlu0 %2236
      %2240 = vset.pattern.permute.xlu0 0
      %2241 = vperm.xlu0 %2240, %v1915
      %v2242 = vpop.permute.xlu0 %2241
      %2245 = vset.pattern.permute.xlu0 0
      %2246 = vperm.xlu0 %2245, %v1916
      %v2247 = vpop.permute.xlu0 %2246
      %2250 = vset.pattern.permute.xlu0 0
      %2251 = vperm.xlu0 %2250, %v1917
      %v2252 = vpop.permute.xlu0 %2251
      %2255 = vset.pattern.permute.xlu0 0
      %2256 = vperm.xlu0 %2255, %v1918
      %v2257 = vpop.permute.xlu0 %2256
      %2260 = vset.pattern.permute.xlu0 0
      %2261 = vperm.xlu0 %2260, %v1919
      %v2262 = vpop.permute.xlu0 %2261
      %2265 = vset.pattern.permute.xlu0 0
      %2266 = vperm.xlu0 %2265, %v1920
      %v2267 = vpop.permute.xlu0 %2266
      %2270 = vset.pattern.permute.xlu0 0
      %2271 = vperm.xlu0 %2270, %v1921
      %v2272 = vpop.permute.xlu0 %2271
      %2275 = vset.pattern.permute.xlu0 0
      %2276 = vperm.xlu0 %2275, %v1922
      %v2277 = vpop.permute.xlu0 %2276
      %2280 = vset.pattern.permute.xlu0 0
      %2281 = vperm.xlu0 %2280, %v1923
      %v2282 = vpop.permute.xlu0 %2281
      %2285 = vset.pattern.permute.xlu0 0
      %2286 = vperm.xlu0 %2285, %v1924
      %v2287 = vpop.permute.xlu0 %2286
      %2290 = vset.pattern.permute.xlu0 0
      %2291 = vperm.xlu0 %2290, %v1925
      %v2292 = vpop.permute.xlu0 %2291
      %2295 = vset.pattern.permute.xlu0 0
      %2296 = vperm.xlu0 %2295, %v1926
      %v2297 = vpop.permute.xlu0 %2296
      %2300 = vset.pattern.permute.xlu0 0
      %2301 = vperm.xlu0 %2300, %v1927
      %v2302 = vpop.permute.xlu0 %2301
      %2305 = vset.pattern.permute.xlu0 0
      %2306 = vperm.xlu0 %2305, %v1928
      %v2307 = vpop.permute.xlu0 %2306
      %2310 = vset.pattern.permute.xlu0 0
      %2311 = vperm.xlu0 %2310, %v1929
      %v2312 = vpop.permute.xlu0 %2311
      %2315 = vset.pattern.permute.xlu0 0
      %2316 = vperm.xlu0 %2315, %v1930
      %v2317 = vpop.permute.xlu0 %2316
      %2320 = vset.pattern.permute.xlu0 0
      %2321 = vperm.xlu0 %2320, %v1931
      %v2322 = vpop.permute.xlu0 %2321
      %2325 = vset.pattern.permute.xlu0 0
      %2326 = vperm.xlu0 %2325, %v1932
      %v2327 = vpop.permute.xlu0 %2326
      %2330 = vset.pattern.permute.xlu0 0
      %2331 = vperm.xlu0 %2330, %v1933
      %v2332 = vpop.permute.xlu0 %2331
      %2335 = vset.pattern.permute.xlu0 0
      %2336 = vperm.xlu0 %2335, %v1934
      %v2337 = vpop.permute.xlu0 %2336
      %2340 = vset.pattern.permute.xlu0 0
      %2341 = vperm.xlu0 %2340, %v1935
      %v2342 = vpop.permute.xlu0 %2341
      %2345 = vset.pattern.permute.xlu0 0
      %2346 = vperm.xlu0 %2345, %v1936
      %v2347 = vpop.permute.xlu0 %2346
      %2350 = vset.pattern.permute.xlu0 0
      %2351 = vperm.xlu0 %2350, %v1937
      %v2352 = vpop.permute.xlu0 %2351
      %2355 = vset.pattern.permute.xlu0 0
      %2356 = vperm.xlu0 %2355, %v1938
      %v2357 = vpop.permute.xlu0 %2356
      %2360 = vset.pattern.permute.xlu0 0
      %2361 = vperm.xlu0 %2360, %v1939
      %v2362 = vpop.permute.xlu0 %2361
      %2365 = vset.pattern.permute.xlu0 0
      %2366 = vperm.xlu0 %2365, %v1940
      %v2367 = vpop.permute.xlu0 %2366
      %2370 = vset.pattern.permute.xlu0 0
      %2371 = vperm.xlu0 %2370, %v1941
      %v2372 = vpop.permute.xlu0 %2371
      %2375 = vset.pattern.permute.xlu0 0
      %2376 = vperm.xlu0 %2375, %v1942
      %v2377 = vpop.permute.xlu0 %2376
      %2380 = vset.pattern.permute.xlu0 0
      %2381 = vperm.xlu0 %2380, %v1943
      %v2382 = vpop.permute.xlu0 %2381
      %2385 = vset.pattern.permute.xlu0 0
      %2386 = vperm.xlu0 %2385, %v1944
      %v2387 = vpop.permute.xlu0 %2386
      %2390 = vset.pattern.permute.xlu0 0
      %2391 = vperm.xlu0 %2390, %v1945
      %v2392 = vpop.permute.xlu0 %2391
      %2395 = vset.pattern.permute.xlu0 0
      %2396 = vperm.xlu0 %2395, %v1946
      %v2397 = vpop.permute.xlu0 %2396
      %2400 = vset.pattern.permute.xlu0 0
      %2401 = vperm.xlu0 %2400, %v1947
      %v2402 = vpop.permute.xlu0 %2401
      %2405 = vset.pattern.permute.xlu0 0
      %2406 = vperm.xlu0 %2405, %v1948
      %v2407 = vpop.permute.xlu0 %2406
      %2410 = vset.pattern.permute.xlu0 0
      %2411 = vperm.xlu0 %2410, %v1949
      %v2412 = vpop.permute.xlu0 %2411
      %2415 = vset.pattern.permute.xlu0 0
      %2416 = vperm.xlu0 %2415, %v1950
      %v2417 = vpop.permute.xlu0 %2416
      %2420 = vset.pattern.permute.xlu0 0
      %2421 = vperm.xlu0 %2420, %v1951
      %v2422 = vpop.permute.xlu0 %2421
      %2425 = vset.pattern.permute.xlu0 0
      %2426 = vperm.xlu0 %2425, %v1952
      %v2427 = vpop.permute.xlu0 %2426
      %2430 = vset.pattern.permute.xlu0 0
      %2431 = vperm.xlu0 %2430, %v1953
      %v2432 = vpop.permute.xlu0 %2431
      %2435 = vset.pattern.permute.xlu0 0
      %2436 = vperm.xlu0 %2435, %v1954
      %v2437 = vpop.permute.xlu0 %2436
      %2440 = vset.pattern.permute.xlu0 0
      %2441 = vperm.xlu0 %2440, %v1955
      %v2442 = vpop.permute.xlu0 %2441
      %2445 = vset.pattern.permute.xlu0 0
      %2446 = vperm.xlu0 %2445, %v1956
      %v2447 = vpop.permute.xlu0 %2446
      %2450 = vset.pattern.permute.xlu0 0
      %2451 = vperm.xlu0 %2450, %v1957
      %v2452 = vpop.permute.xlu0 %2451
      %2455 = vset.pattern.permute.xlu0 0
      %2456 = vperm.xlu0 %2455, %v1958
      %v2457 = vpop.permute.xlu0 %2456
      %2460 = vset.pattern.permute.xlu0 0
      %2461 = vperm.xlu0 %2460, %v1959
      %v2462 = vpop.permute.xlu0 %2461
      %2465 = vset.pattern.permute.xlu0 0
      %2466 = vperm.xlu0 %2465, %v1960
      %v2467 = vpop.permute.xlu0 %2466
      %2470 = vset.pattern.permute.xlu0 0
      %2471 = vperm.xlu0 %2470, %v1961
      %v2472 = vpop.permute.xlu0 %2471
      %v2474 = vsub.f32 %v1642, %v2157
      %v2475 = vsub.f32 %v1643, %v2162
      %v2476 = vsub.f32 %v1644, %v2167
      %v2477 = vsub.f32 %v1645, %v2172
      %v2478 = vsub.f32 %v1646, %v2177
      %v2479 = vsub.f32 %v1647, %v2182
      %v2480 = vsub.f32 %v1648, %v2187
      %v2481 = vsub.f32 %v1649, %v2192
      %v2482 = vsub.f32 %v1650, %v2197
      %v2483 = vsub.f32 %v1651, %v2202
      %v2484 = vsub.f32 %v1652, %v2207
      %v2485 = vsub.f32 %v1653, %v2212
      %v2486 = vsub.f32 %v1654, %v2217
      %v2487 = vsub.f32 %v1655, %v2222
      %v2488 = vsub.f32 %v1656, %v2227
      %v2489 = vsub.f32 %v1657, %v2232
      %v2490 = vsub.f32 %v1658, %v2237
      %v2491 = vsub.f32 %v1659, %v2242
      %v2492 = vsub.f32 %v1660, %v2247
      %v2493 = vsub.f32 %v1661, %v2252
      %v2494 = vsub.f32 %v1662, %v2257
      %v2495 = vsub.f32 %v1663, %v2262
      %v2496 = vsub.f32 %v1664, %v2267
      %v2497 = vsub.f32 %v1665, %v2272
      %v2498 = vsub.f32 %v1666, %v2277
      %v2499 = vsub.f32 %v1667, %v2282
      %v2500 = vsub.f32 %v1668, %v2287
      %v2501 = vsub.f32 %v1669, %v2292
      %v2502 = vsub.f32 %v1670, %v2297
      %v2503 = vsub.f32 %v1671, %v2302
      %v2504 = vsub.f32 %v1672, %v2307
      %v2505 = vsub.f32 %v1673, %v2312
      %v2506 = vsub.f32 %v1674, %v2317
      %v2507 = vsub.f32 %v1675, %v2322
      %v2508 = vsub.f32 %v1676, %v2327
      %v2509 = vsub.f32 %v1677, %v2332
      %v2510 = vsub.f32 %v1678, %v2337
      %v2511 = vsub.f32 %v1679, %v2342
      %v2512 = vsub.f32 %v1680, %v2347
      %v2513 = vsub.f32 %v1681, %v2352
      %v2514 = vsub.f32 %v1682, %v2357
      %v2515 = vsub.f32 %v1683, %v2362
      %v2516 = vsub.f32 %v1684, %v2367
      %v2517 = vsub.f32 %v1685, %v2372
      %v2518 = vsub.f32 %v1686, %v2377
      %v2519 = vsub.f32 %v1687, %v2382
      %v2520 = vsub.f32 %v1688, %v2387
      %v2521 = vsub.f32 %v1689, %v2392
      %v2522 = vsub.f32 %v1690, %v2397
      %v2523 = vsub.f32 %v1691, %v2402
      %v2524 = vsub.f32 %v1692, %v2407
      %v2525 = vsub.f32 %v1693, %v2412
      %v2526 = vsub.f32 %v1694, %v2417
      %v2527 = vsub.f32 %v1695, %v2422
      %v2528 = vsub.f32 %v1696, %v2427
      %v2529 = vsub.f32 %v1697, %v2432
      %v2530 = vsub.f32 %v1698, %v2437
      %v2531 = vsub.f32 %v1699, %v2442
      %v2532 = vsub.f32 %v1700, %v2447
      %v2533 = vsub.f32 %v1701, %v2452
      %v2534 = vsub.f32 %v1702, %v2457
      %v2535 = vsub.f32 %v1703, %v2462
      %v2536 = vsub.f32 %v1704, %v2467
      %v2537 = vsub.f32 %v1705, %v2472
      %v2538 = vmul.f32 %v2474, 1.442695
      %v2539 = vpow.pop %v2538
      %v2540 = vmul.f32 %v2475, 1.442695
      %v2541 = vpow.pop %v2540
      %v2542 = vmul.f32 %v2476, 1.442695
      %v2543 = vpow.pop %v2542
      %v2544 = vmul.f32 %v2477, 1.442695
      %v2545 = vpow.pop %v2544
      %v2546 = vmul.f32 %v2478, 1.442695
      %v2547 = vpow.pop %v2546
      %v2548 = vmul.f32 %v2479, 1.442695
      %v2549 = vpow.pop %v2548
      %v2550 = vmul.f32 %v2480, 1.442695
      %v2551 = vpow.pop %v2550
      %v2552 = vmul.f32 %v2481, 1.442695
      %v2553 = vpow.pop %v2552
      %v2554 = vmul.f32 %v2482, 1.442695
      %v2555 = vpow.pop %v2554
      %v2556 = vmul.f32 %v2483, 1.442695
      %v2557 = vpow.pop %v2556
      %v2558 = vmul.f32 %v2484, 1.442695
      %v2559 = vpow.pop %v2558
      %v2560 = vmul.f32 %v2485, 1.442695
      %v2561 = vpow.pop %v2560
      %v2562 = vmul.f32 %v2486, 1.442695
      %v2563 = vpow.pop %v2562
      %v2564 = vmul.f32 %v2487, 1.442695
      %v2565 = vpow.pop %v2564
      %v2566 = vmul.f32 %v2488, 1.442695
      %v2567 = vpow.pop %v2566
      %v2568 = vmul.f32 %v2489, 1.442695
      %v2569 = vpow.pop %v2568
      %v2570 = vmul.f32 %v2490, 1.442695
      %v2571 = vpow.pop %v2570
      %v2572 = vmul.f32 %v2491, 1.442695
      %v2573 = vpow.pop %v2572
      %v2574 = vmul.f32 %v2492, 1.442695
      %v2575 = vpow.pop %v2574
      %v2576 = vmul.f32 %v2493, 1.442695
      %v2577 = vpow.pop %v2576
      %v2578 = vmul.f32 %v2494, 1.442695
      %v2579 = vpow.pop %v2578
      %v2580 = vmul.f32 %v2495, 1.442695
      %v2581 = vpow.pop %v2580
      %v2582 = vmul.f32 %v2496, 1.442695
      %v2583 = vpow.pop %v2582
      %v2584 = vmul.f32 %v2497, 1.442695
      %v2585 = vpow.pop %v2584
      %v2586 = vmul.f32 %v2498, 1.442695
      %v2587 = vpow.pop %v2586
      %v2588 = vmul.f32 %v2499, 1.442695
      %v2589 = vpow.pop %v2588
      %v2590 = vmul.f32 %v2500, 1.442695
      %v2591 = vpow.pop %v2590
      %v2592 = vmul.f32 %v2501, 1.442695
      %v2593 = vpow.pop %v2592
      %v2594 = vmul.f32 %v2502, 1.442695
      %v2595 = vpow.pop %v2594
      %v2596 = vmul.f32 %v2503, 1.442695
      %v2597 = vpow.pop %v2596
      %v2598 = vmul.f32 %v2504, 1.442695
      %v2599 = vpow.pop %v2598
      %v2600 = vmul.f32 %v2505, 1.442695
      %v2601 = vpow.pop %v2600
      %v2602 = vmul.f32 %v2506, 1.442695
      %v2603 = vpow.pop %v2602
      %v2604 = vmul.f32 %v2507, 1.442695
      %v2605 = vpow.pop %v2604
      %v2606 = vmul.f32 %v2508, 1.442695
      %v2607 = vpow.pop %v2606
      %v2608 = vmul.f32 %v2509, 1.442695
      %v2609 = vpow.pop %v2608
      %v2610 = vmul.f32 %v2510, 1.442695
      %v2611 = vpow.pop %v2610
      %v2612 = vmul.f32 %v2511, 1.442695
      %v2613 = vpow.pop %v2612
      %v2614 = vmul.f32 %v2512, 1.442695
      %v2615 = vpow.pop %v2614
      %v2616 = vmul.f32 %v2513, 1.442695
      %v2617 = vpow.pop %v2616
      %v2618 = vmul.f32 %v2514, 1.442695
      %v2619 = vpow.pop %v2618
      %v2620 = vmul.f32 %v2515, 1.442695
      %v2621 = vpow.pop %v2620
      %v2622 = vmul.f32 %v2516, 1.442695
      %v2623 = vpow.pop %v2622
      %v2624 = vmul.f32 %v2517, 1.442695
      %v2625 = vpow.pop %v2624
      %v2626 = vmul.f32 %v2518, 1.442695
      %v2627 = vpow.pop %v2626
      %v2628 = vmul.f32 %v2519, 1.442695
      %v2629 = vpow.pop %v2628
      %v2630 = vmul.f32 %v2520, 1.442695
      %v2631 = vpow.pop %v2630
      %v2632 = vmul.f32 %v2521, 1.442695
      %v2633 = vpow.pop %v2632
      %v2634 = vmul.f32 %v2522, 1.442695
      %v2635 = vpow.pop %v2634
      %v2636 = vmul.f32 %v2523, 1.442695
      %v2637 = vpow.pop %v2636
      %v2638 = vmul.f32 %v2524, 1.442695
      %v2639 = vpow.pop %v2638
      %v2640 = vmul.f32 %v2525, 1.442695
      %v2641 = vpow.pop %v2640
      %v2642 = vmul.f32 %v2526, 1.442695
      %v2643 = vpow.pop %v2642
      %v2644 = vmul.f32 %v2527, 1.442695
      %v2645 = vpow.pop %v2644
      %v2646 = vmul.f32 %v2528, 1.442695
      %v2647 = vpow.pop %v2646
      %v2648 = vmul.f32 %v2529, 1.442695
      %v2649 = vpow.pop %v2648
      %v2650 = vmul.f32 %v2530, 1.442695
      %v2651 = vpow.pop %v2650
      %v2652 = vmul.f32 %v2531, 1.442695
      %v2653 = vpow.pop %v2652
      %v2654 = vmul.f32 %v2532, 1.442695
      %v2655 = vpow.pop %v2654
      %v2656 = vmul.f32 %v2533, 1.442695
      %v2657 = vpow.pop %v2656
      %v2658 = vmul.f32 %v2534, 1.442695
      %v2659 = vpow.pop %v2658
      %v2660 = vmul.f32 %v2535, 1.442695
      %v2661 = vpow.pop %v2660
      %v2662 = vmul.f32 %v2536, 1.442695
      %v2663 = vpow.pop %v2662
      %v2664 = vmul.f32 %v2537, 1.442695
      %v2665 = vpow.pop %v2664
      %v2666 = vld [vmem:[#allocation3] sm:$0xff]
      %v2667 = vld [vmem:[#allocation3 + $0x8] sm:$0xff]
      %v2668 = vld [vmem:[#allocation3 + $0x10] sm:$0xff]
      %v2669 = vld [vmem:[#allocation3 + $0x18] sm:$0xff]
      %v2670 = vld [vmem:[#allocation3 + $0x20] sm:$0xff]
      %v2671 = vld [vmem:[#allocation3 + $0x28] sm:$0xff]
      %v2672 = vld [vmem:[#allocation3 + $0x30] sm:$0xff]
      %v2673 = vld [vmem:[#allocation3 + $0x38] sm:$0xff]
      %v2674 = vld [vmem:[#allocation3 + $0x40] sm:$0xff]
      %v2675 = vld [vmem:[#allocation3 + $0x48] sm:$0xff]
      %v2676 = vld [vmem:[#allocation3 + $0x50] sm:$0xff]
      %v2677 = vld [vmem:[#allocation3 + $0x58] sm:$0xff]
      %v2678 = vld [vmem:[#allocation3 + $0x60] sm:$0xff]
      %v2679 = vld [vmem:[#allocation3 + $0x68] sm:$0xff]
      %v2680 = vld [vmem:[#allocation3 + $0x70] sm:$0xff]
      %v2681 = vld [vmem:[#allocation3 + $0x78] sm:$0xff]
      %v2682 = vld [vmem:[#allocation3 + $0x80] sm:$0xff]
      %v2683 = vld [vmem:[#allocation3 + $0x88] sm:$0xff]
      %v2684 = vld [vmem:[#allocation3 + $0x90] sm:$0xff]
      %v2685 = vld [vmem:[#allocation3 + $0x98] sm:$0xff]
      %v2686 = vld [vmem:[#allocation3 + $0xa0] sm:$0xff]
      %v2687 = vld [vmem:[#allocation3 + $0xa8] sm:$0xff]
      %v2688 = vld [vmem:[#allocation3 + $0xb0] sm:$0xff]
      %v2689 = vld [vmem:[#allocation3 + $0xb8] sm:$0xff]
      %v2690 = vld [vmem:[#allocation3 + $0xc0] sm:$0xff]
      %v2691 = vld [vmem:[#allocation3 + $0xc8] sm:$0xff]
      %v2692 = vld [vmem:[#allocation3 + $0xd0] sm:$0xff]
      %v2693 = vld [vmem:[#allocation3 + $0xd8] sm:$0xff]
      %v2694 = vld [vmem:[#allocation3 + $0xe0] sm:$0xff]
      %v2695 = vld [vmem:[#allocation3 + $0xe8] sm:$0xff]
      %v2696 = vld [vmem:[#allocation3 + $0xf0] sm:$0xff]
      %v2697 = vld [vmem:[#allocation3 + $0xf8] sm:$0xff]
      %v2698 = vld [vmem:[#allocation3 + $0x100] sm:$0xff]
      %v2699 = vld [vmem:[#allocation3 + $0x108] sm:$0xff]
      %v2700 = vld [vmem:[#allocation3 + $0x110] sm:$0xff]
      %v2701 = vld [vmem:[#allocation3 + $0x118] sm:$0xff]
      %v2702 = vld [vmem:[#allocation3 + $0x120] sm:$0xff]
      %v2703 = vld [vmem:[#allocation3 + $0x128] sm:$0xff]
      %v2704 = vld [vmem:[#allocation3 + $0x130] sm:$0xff]
      %v2705 = vld [vmem:[#allocation3 + $0x138] sm:$0xff]
      %v2706 = vld [vmem:[#allocation3 + $0x140] sm:$0xff]
      %v2707 = vld [vmem:[#allocation3 + $0x148] sm:$0xff]
      %v2708 = vld [vmem:[#allocation3 + $0x150] sm:$0xff]
      %v2709 = vld [vmem:[#allocation3 + $0x158] sm:$0xff]
      %v2710 = vld [vmem:[#allocation3 + $0x160] sm:$0xff]
      %v2711 = vld [vmem:[#allocation3 + $0x168] sm:$0xff]
      %v2712 = vld [vmem:[#allocation3 + $0x170] sm:$0xff]
      %v2713 = vld [vmem:[#allocation3 + $0x178] sm:$0xff]
      %v2714 = vld [vmem:[#allocation3 + $0x180] sm:$0xff]
      %v2715 = vld [vmem:[#allocation3 + $0x188] sm:$0xff]
      %v2716 = vld [vmem:[#allocation3 + $0x190] sm:$0xff]
      %v2717 = vld [vmem:[#allocation3 + $0x198] sm:$0xff]
      %v2718 = vld [vmem:[#allocation3 + $0x1a0] sm:$0xff]
      %v2719 = vld [vmem:[#allocation3 + $0x1a8] sm:$0xff]
      %v2720 = vld [vmem:[#allocation3 + $0x1b0] sm:$0xff]
      %v2721 = vld [vmem:[#allocation3 + $0x1b8] sm:$0xff]
      %v2722 = vld [vmem:[#allocation3 + $0x1c0] sm:$0xff]
      %v2723 = vld [vmem:[#allocation3 + $0x1c8] sm:$0xff]
      %v2724 = vld [vmem:[#allocation3 + $0x1d0] sm:$0xff]
      %v2725 = vld [vmem:[#allocation3 + $0x1d8] sm:$0xff]
      %v2726 = vld [vmem:[#allocation3 + $0x1e0] sm:$0xff]
      %v2727 = vld [vmem:[#allocation3 + $0x1e8] sm:$0xff]
      %v2728 = vld [vmem:[#allocation3 + $0x1f0] sm:$0xff]
      %v2729 = vld [vmem:[#allocation3 + $0x1f8] sm:$0xff]
      %v2730 = vmul.f32 %v2027, %v2666
      %v2731 = vmul.f32 %v2029, %v2667
      %v2732 = vmul.f32 %v2031, %v2668
      %v2733 = vmul.f32 %v2033, %v2669
      %v2734 = vmul.f32 %v2035, %v2670
      %v2735 = vmul.f32 %v2037, %v2671
      %v2736 = vmul.f32 %v2039, %v2672
      %v2737 = vmul.f32 %v2041, %v2673
      %v2738 = vmul.f32 %v2043, %v2674
      %v2739 = vmul.f32 %v2045, %v2675
      %v2740 = vmul.f32 %v2047, %v2676
      %v2741 = vmul.f32 %v2049, %v2677
      %v2742 = vmul.f32 %v2051, %v2678
      %v2743 = vmul.f32 %v2053, %v2679
      %v2744 = vmul.f32 %v2055, %v2680
      %v2745 = vmul.f32 %v2057, %v2681
      %v2746 = vmul.f32 %v2059, %v2682
      %v2747 = vmul.f32 %v2061, %v2683
      %v2748 = vmul.f32 %v2063, %v2684
      %v2749 = vmul.f32 %v2065, %v2685
      %v2750 = vmul.f32 %v2067, %v2686
      %v2751 = vmul.f32 %v2069, %v2687
      %v2752 = vmul.f32 %v2071, %v2688
      %v2753 = vmul.f32 %v2073, %v2689
      %v2754 = vmul.f32 %v2075, %v2690
      %v2755 = vmul.f32 %v2077, %v2691
      %v2756 = vmul.f32 %v2079, %v2692
      %v2757 = vmul.f32 %v2081, %v2693
      %v2758 = vmul.f32 %v2083, %v2694
      %v2759 = vmul.f32 %v2085, %v2695
      %v2760 = vmul.f32 %v2087, %v2696
      %v2761 = vmul.f32 %v2089, %v2697
      %v2762 = vmul.f32 %v2091, %v2698
      %v2763 = vmul.f32 %v2093, %v2699
      %v2764 = vmul.f32 %v2095, %v2700
      %v2765 = vmul.f32 %v2097, %v2701
      %v2766 = vmul.f32 %v2099, %v2702
      %v2767 = vmul.f32 %v2101, %v2703
      %v2768 = vmul.f32 %v2103, %v2704
      %v2769 = vmul.f32 %v2105, %v2705
      %v2770 = vmul.f32 %v2107, %v2706
      %v2771 = vmul.f32 %v2109, %v2707
      %v2772 = vmul.f32 %v2111, %v2708
      %v2773 = vmul.f32 %v2113, %v2709
      %v2774 = vmul.f32 %v2115, %v2710
      %v2775 = vmul.f32 %v2117, %v2711
      %v2776 = vmul.f32 %v2119, %v2712
      %v2777 = vmul.f32 %v2121, %v2713
      %v2778 = vmul.f32 %v2123, %v2714
      %v2779 = vmul.f32 %v2125, %v2715
      %v2780 = vmul.f32 %v2127, %v2716
      %v2781 = vmul.f32 %v2129, %v2717
      %v2782 = vmul.f32 %v2131, %v2718
      %v2783 = vmul.f32 %v2133, %v2719
      %v2784 = vmul.f32 %v2135, %v2720
      %v2785 = vmul.f32 %v2137, %v2721
      %v2786 = vmul.f32 %v2139, %v2722
      %v2787 = vmul.f32 %v2141, %v2723
      %v2788 = vmul.f32 %v2143, %v2724
      %v2789 = vmul.f32 %v2145, %v2725
      %v2790 = vmul.f32 %v2147, %v2726
      %v2791 = vmul.f32 %v2149, %v2727
      %v2792 = vmul.f32 %v2151, %v2728
      %v2793 = vmul.f32 %v2153, %v2729
      %2794 = vadd.xlane.f32.xlu0 %v2539
      %v2795 = vpop.xlane.xlu0 %2794
      %2796 = vadd.xlane.f32.xlu0 %v2541
      %v2797 = vpop.xlane.xlu0 %2796
      %2798 = vadd.xlane.f32.xlu0 %v2543
      %v2799 = vpop.xlane.xlu0 %2798
      %2800 = vadd.xlane.f32.xlu0 %v2545
      %v2801 = vpop.xlane.xlu0 %2800
      %2802 = vadd.xlane.f32.xlu0 %v2547
      %v2803 = vpop.xlane.xlu0 %2802
      %2804 = vadd.xlane.f32.xlu0 %v2549
      %v2805 = vpop.xlane.xlu0 %2804
      %2806 = vadd.xlane.f32.xlu0 %v2551
      %v2807 = vpop.xlane.xlu0 %2806
      %2808 = vadd.xlane.f32.xlu0 %v2553
      %v2809 = vpop.xlane.xlu0 %2808
      %2810 = vadd.xlane.f32.xlu0 %v2555
      %v2811 = vpop.xlane.xlu0 %2810
      %2812 = vadd.xlane.f32.xlu0 %v2557
      %v2813 = vpop.xlane.xlu0 %2812
      %2814 = vadd.xlane.f32.xlu0 %v2559
      %v2815 = vpop.xlane.xlu0 %2814
      %2816 = vadd.xlane.f32.xlu0 %v2561
      %v2817 = vpop.xlane.xlu0 %2816
      %2818 = vadd.xlane.f32.xlu0 %v2563
      %v2819 = vpop.xlane.xlu0 %2818
      %2820 = vadd.xlane.f32.xlu0 %v2565
      %v2821 = vpop.xlane.xlu0 %2820
      %2822 = vadd.xlane.f32.xlu0 %v2567
      %v2823 = vpop.xlane.xlu0 %2822
      %2824 = vadd.xlane.f32.xlu0 %v2569
      %v2825 = vpop.xlane.xlu0 %2824
      %2826 = vadd.xlane.f32.xlu0 %v2571
      %v2827 = vpop.xlane.xlu0 %2826
      %2828 = vadd.xlane.f32.xlu0 %v2573
      %v2829 = vpop.xlane.xlu0 %2828
      %2830 = vadd.xlane.f32.xlu0 %v2575
      %v2831 = vpop.xlane.xlu0 %2830
      %2832 = vadd.xlane.f32.xlu0 %v2577
      %v2833 = vpop.xlane.xlu0 %2832
      %2834 = vadd.xlane.f32.xlu0 %v2579
      %v2835 = vpop.xlane.xlu0 %2834
      %2836 = vadd.xlane.f32.xlu0 %v2581
      %v2837 = vpop.xlane.xlu0 %2836
      %2838 = vadd.xlane.f32.xlu0 %v2583
      %v2839 = vpop.xlane.xlu0 %2838
      %2840 = vadd.xlane.f32.xlu0 %v2585
      %v2841 = vpop.xlane.xlu0 %2840
      %2842 = vadd.xlane.f32.xlu0 %v2587
      %v2843 = vpop.xlane.xlu0 %2842
      %2844 = vadd.xlane.f32.xlu0 %v2589
      %v2845 = vpop.xlane.xlu0 %2844
      %2846 = vadd.xlane.f32.xlu0 %v2591
      %v2847 = vpop.xlane.xlu0 %2846
      %2848 = vadd.xlane.f32.xlu0 %v2593
      %v2849 = vpop.xlane.xlu0 %2848
      %2850 = vadd.xlane.f32.xlu0 %v2595
      %v2851 = vpop.xlane.xlu0 %2850
      %2852 = vadd.xlane.f32.xlu0 %v2597
      %v2853 = vpop.xlane.xlu0 %2852
      %2854 = vadd.xlane.f32.xlu0 %v2599
      %v2855 = vpop.xlane.xlu0 %2854
      %2856 = vadd.xlane.f32.xlu0 %v2601
      %v2857 = vpop.xlane.xlu0 %2856
      %2858 = vadd.xlane.f32.xlu0 %v2603
      %v2859 = vpop.xlane.xlu0 %2858
      %2860 = vadd.xlane.f32.xlu0 %v2605
      %v2861 = vpop.xlane.xlu0 %2860
      %2862 = vadd.xlane.f32.xlu0 %v2607
      %v2863 = vpop.xlane.xlu0 %2862
      %2864 = vadd.xlane.f32.xlu0 %v2609
      %v2865 = vpop.xlane.xlu0 %2864
      %2866 = vadd.xlane.f32.xlu0 %v2611
      %v2867 = vpop.xlane.xlu0 %2866
      %2868 = vadd.xlane.f32.xlu0 %v2613
      %v2869 = vpop.xlane.xlu0 %2868
      %2870 = vadd.xlane.f32.xlu0 %v2615
      %v2871 = vpop.xlane.xlu0 %2870
      %2872 = vadd.xlane.f32.xlu0 %v2617
      %v2873 = vpop.xlane.xlu0 %2872
      %2874 = vadd.xlane.f32.xlu0 %v2619
      %v2875 = vpop.xlane.xlu0 %2874
      %2876 = vadd.xlane.f32.xlu0 %v2621
      %v2877 = vpop.xlane.xlu0 %2876
      %2878 = vadd.xlane.f32.xlu0 %v2623
      %v2879 = vpop.xlane.xlu0 %2878
      %2880 = vadd.xlane.f32.xlu0 %v2625
      %v2881 = vpop.xlane.xlu0 %2880
      %2882 = vadd.xlane.f32.xlu0 %v2627
      %v2883 = vpop.xlane.xlu0 %2882
      %2884 = vadd.xlane.f32.xlu0 %v2629
      %v2885 = vpop.xlane.xlu0 %2884
      %2886 = vadd.xlane.f32.xlu0 %v2631
      %v2887 = vpop.xlane.xlu0 %2886
      %2888 = vadd.xlane.f32.xlu0 %v2633
      %v2889 = vpop.xlane.xlu0 %2888
      %2890 = vadd.xlane.f32.xlu0 %v2635
      %v2891 = vpop.xlane.xlu0 %2890
      %2892 = vadd.xlane.f32.xlu0 %v2637
      %v2893 = vpop.xlane.xlu0 %2892
      %2894 = vadd.xlane.f32.xlu0 %v2639
      %v2895 = vpop.xlane.xlu0 %2894
      %2896 = vadd.xlane.f32.xlu0 %v2641
      %v2897 = vpop.xlane.xlu0 %2896
      %2898 = vadd.xlane.f32.xlu0 %v2643
      %v2899 = vpop.xlane.xlu0 %2898
      %2900 = vadd.xlane.f32.xlu0 %v2645
      %v2901 = vpop.xlane.xlu0 %2900
      %2902 = vadd.xlane.f32.xlu0 %v2647
      %v2903 = vpop.xlane.xlu0 %2902
      %2904 = vadd.xlane.f32.xlu0 %v2649
      %v2905 = vpop.xlane.xlu0 %2904
      %2906 = vadd.xlane.f32.xlu0 %v2651
      %v2907 = vpop.xlane.xlu0 %2906
      %2908 = vadd.xlane.f32.xlu0 %v2653
      %v2909 = vpop.xlane.xlu0 %2908
      %2910 = vadd.xlane.f32.xlu0 %v2655
      %v2911 = vpop.xlane.xlu0 %2910
      %2912 = vadd.xlane.f32.xlu0 %v2657
      %v2913 = vpop.xlane.xlu0 %2912
      %2914 = vadd.xlane.f32.xlu0 %v2659
      %v2915 = vpop.xlane.xlu0 %2914
      %2916 = vadd.xlane.f32.xlu0 %v2661
      %v2917 = vpop.xlane.xlu0 %2916
      %2918 = vadd.xlane.f32.xlu0 %v2663
      %v2919 = vpop.xlane.xlu0 %2918
      %2920 = vadd.xlane.f32.xlu0 %v2665
      %v2921 = vpop.xlane.xlu0 %2920
      %v2922 = vadd.f32 %v2730, %v2795
      %v2923 = vadd.f32 %v2731, %v2797
      %v2924 = vadd.f32 %v2732, %v2799
      %v2925 = vadd.f32 %v2733, %v2801
      %v2926 = vadd.f32 %v2734, %v2803
      %v2927 = vadd.f32 %v2735, %v2805
      %v2928 = vadd.f32 %v2736, %v2807
      %v2929 = vadd.f32 %v2737, %v2809
      %v2930 = vadd.f32 %v2738, %v2811
      %v2931 = vadd.f32 %v2739, %v2813
      %v2932 = vadd.f32 %v2740, %v2815
      %v2933 = vadd.f32 %v2741, %v2817
      %v2934 = vadd.f32 %v2742, %v2819
      %v2935 = vadd.f32 %v2743, %v2821
      %v2936 = vadd.f32 %v2744, %v2823
      %v2937 = vadd.f32 %v2745, %v2825
      %v2938 = vadd.f32 %v2746, %v2827
      %v2939 = vadd.f32 %v2747, %v2829
      %v2940 = vadd.f32 %v2748, %v2831
      %v2941 = vadd.f32 %v2749, %v2833
      %v2942 = vadd.f32 %v2750, %v2835
      %v2943 = vadd.f32 %v2751, %v2837
      %v2944 = vadd.f32 %v2752, %v2839
      %v2945 = vadd.f32 %v2753, %v2841
      %v2946 = vadd.f32 %v2754, %v2843
      %v2947 = vadd.f32 %v2755, %v2845
      %v2948 = vadd.f32 %v2756, %v2847
      %v2949 = vadd.f32 %v2757, %v2849
      %v2950 = vadd.f32 %v2758, %v2851
      %v2951 = vadd.f32 %v2759, %v2853
      %v2952 = vadd.f32 %v2760, %v2855
      %v2953 = vadd.f32 %v2761, %v2857
      %v2954 = vadd.f32 %v2762, %v2859
      %v2955 = vadd.f32 %v2763, %v2861
      %v2956 = vadd.f32 %v2764, %v2863
      %v2957 = vadd.f32 %v2765, %v2865
      %v2958 = vadd.f32 %v2766, %v2867
      %v2959 = vadd.f32 %v2767, %v2869
      %v2960 = vadd.f32 %v2768, %v2871
      %v2961 = vadd.f32 %v2769, %v2873
      %v2962 = vadd.f32 %v2770, %v2875
      %v2963 = vadd.f32 %v2771, %v2877
      %v2964 = vadd.f32 %v2772, %v2879
      %v2965 = vadd.f32 %v2773, %v2881
      %v2966 = vadd.f32 %v2774, %v2883
      %v2967 = vadd.f32 %v2775, %v2885
      %v2968 = vadd.f32 %v2776, %v2887
      %v2969 = vadd.f32 %v2777, %v2889
      %v2970 = vadd.f32 %v2778, %v2891
      %v2971 = vadd.f32 %v2779, %v2893
      %v2972 = vadd.f32 %v2780, %v2895
      %v2973 = vadd.f32 %v2781, %v2897
      %v2974 = vadd.f32 %v2782, %v2899
      %v2975 = vadd.f32 %v2783, %v2901
      %v2976 = vadd.f32 %v2784, %v2903
      %v2977 = vadd.f32 %v2785, %v2905
      %v2978 = vadd.f32 %v2786, %v2907
      %v2979 = vadd.f32 %v2787, %v2909
      %v2980 = vadd.f32 %v2788, %v2911
      %v2981 = vadd.f32 %v2789, %v2913
      %v2982 = vadd.f32 %v2790, %v2915
      %v2983 = vadd.f32 %v2791, %v2917
      %v2984 = vadd.f32 %v2792, %v2919
      %v2985 = vadd.f32 %v2793, %v2921
      %vm2986 = vcmask 7168
      %2987 = vst.msk [vmem:[#allocation3] sm:$0xff] %vm2986, %v2922
      %2988 = vst.msk [vmem:[#allocation3 + $0x8] sm:$0xff] %vm2986, %v2923
      %2989 = vst.msk [vmem:[#allocation3 + $0x10] sm:$0xff] %vm2986, %v2924
      %2990 = vst.msk [vmem:[#allocation3 + $0x18] sm:$0xff] %vm2986, %v2925
      %2991 = vst.msk [vmem:[#allocation3 + $0x20] sm:$0xff] %vm2986, %v2926
      %2992 = vst.msk [vmem:[#allocation3 + $0x28] sm:$0xff] %vm2986, %v2927
      %2993 = vst.msk [vmem:[#allocation3 + $0x30] sm:$0xff] %vm2986, %v2928
      %2994 = vst.msk [vmem:[#allocation3 + $0x38] sm:$0xff] %vm2986, %v2929
      %2995 = vst.msk [vmem:[#allocation3 + $0x40] sm:$0xff] %vm2986, %v2930
      %2996 = vst.msk [vmem:[#allocation3 + $0x48] sm:$0xff] %vm2986, %v2931
      %2997 = vst.msk [vmem:[#allocation3 + $0x50] sm:$0xff] %vm2986, %v2932
      %2998 = vst.msk [vmem:[#allocation3 + $0x58] sm:$0xff] %vm2986, %v2933
      %2999 = vst.msk [vmem:[#allocation3 + $0x60] sm:$0xff] %vm2986, %v2934
      %3000 = vst.msk [vmem:[#allocation3 + $0x68] sm:$0xff] %vm2986, %v2935
      %3001 = vst.msk [vmem:[#allocation3 + $0x70] sm:$0xff] %vm2986, %v2936
      %3002 = vst.msk [vmem:[#allocation3 + $0x78] sm:$0xff] %vm2986, %v2937
      %3003 = vst.msk [vmem:[#allocation3 + $0x80] sm:$0xff] %vm2986, %v2938
      %3004 = vst.msk [vmem:[#allocation3 + $0x88] sm:$0xff] %vm2986, %v2939
      %3005 = vst.msk [vmem:[#allocation3 + $0x90] sm:$0xff] %vm2986, %v2940
      %3006 = vst.msk [vmem:[#allocation3 + $0x98] sm:$0xff] %vm2986, %v2941
      %3007 = vst.msk [vmem:[#allocation3 + $0xa0] sm:$0xff] %vm2986, %v2942
      %3008 = vst.msk [vmem:[#allocation3 + $0xa8] sm:$0xff] %vm2986, %v2943
      %3009 = vst.msk [vmem:[#allocation3 + $0xb0] sm:$0xff] %vm2986, %v2944
      %3010 = vst.msk [vmem:[#allocation3 + $0xb8] sm:$0xff] %vm2986, %v2945
      %3011 = vst.msk [vmem:[#allocation3 + $0xc0] sm:$0xff] %vm2986, %v2946
      %3012 = vst.msk [vmem:[#allocation3 + $0xc8] sm:$0xff] %vm2986, %v2947
      %3013 = vst.msk [vmem:[#allocation3 + $0xd0] sm:$0xff] %vm2986, %v2948
      %3014 = vst.msk [vmem:[#allocation3 + $0xd8] sm:$0xff] %vm2986, %v2949
      %3015 = vst.msk [vmem:[#allocation3 + $0xe0] sm:$0xff] %vm2986, %v2950
      %3016 = vst.msk [vmem:[#allocation3 + $0xe8] sm:$0xff] %vm2986, %v2951
      %3017 = vst.msk [vmem:[#allocation3 + $0xf0] sm:$0xff] %vm2986, %v2952
      %3018 = vst.msk [vmem:[#allocation3 + $0xf8] sm:$0xff] %vm2986, %v2953
      %3019 = vst.msk [vmem:[#allocation3 + $0x100] sm:$0xff] %vm2986, %v2954
      %3020 = vst.msk [vmem:[#allocation3 + $0x108] sm:$0xff] %vm2986, %v2955
      %3021 = vst.msk [vmem:[#allocation3 + $0x110] sm:$0xff] %vm2986, %v2956
      %3022 = vst.msk [vmem:[#allocation3 + $0x118] sm:$0xff] %vm2986, %v2957
      %3023 = vst.msk [vmem:[#allocation3 + $0x120] sm:$0xff] %vm2986, %v2958
      %3024 = vst.msk [vmem:[#allocation3 + $0x128] sm:$0xff] %vm2986, %v2959
      %3025 = vst.msk [vmem:[#allocation3 + $0x130] sm:$0xff] %vm2986, %v2960
      %3026 = vst.msk [vmem:[#allocation3 + $0x138] sm:$0xff] %vm2986, %v2961
      %3027 = vst.msk [vmem:[#allocation3 + $0x140] sm:$0xff] %vm2986, %v2962
      %3028 = vst.msk [vmem:[#allocation3 + $0x148] sm:$0xff] %vm2986, %v2963
      %3029 = vst.msk [vmem:[#allocation3 + $0x150] sm:$0xff] %vm2986, %v2964
      %3030 = vst.msk [vmem:[#allocation3 + $0x158] sm:$0xff] %vm2986, %v2965
      %3031 = vst.msk [vmem:[#allocation3 + $0x160] sm:$0xff] %vm2986, %v2966
      %3032 = vst.msk [vmem:[#allocation3 + $0x168] sm:$0xff] %vm2986, %v2967
      %3033 = vst.msk [vmem:[#allocation3 + $0x170] sm:$0xff] %vm2986, %v2968
      %3034 = vst.msk [vmem:[#allocation3 + $0x178] sm:$0xff] %vm2986, %v2969
      %3035 = vst.msk [vmem:[#allocation3 + $0x180] sm:$0xff] %vm2986, %v2970
      %3036 = vst.msk [vmem:[#allocation3 + $0x188] sm:$0xff] %vm2986, %v2971
      %3037 = vst.msk [vmem:[#allocation3 + $0x190] sm:$0xff] %vm2986, %v2972
      %3038 = vst.msk [vmem:[#allocation3 + $0x198] sm:$0xff] %vm2986, %v2973
      %3039 = vst.msk [vmem:[#allocation3 + $0x1a0] sm:$0xff] %vm2986, %v2974
      %3040 = vst.msk [vmem:[#allocation3 + $0x1a8] sm:$0xff] %vm2986, %v2975
      %3041 = vst.msk [vmem:[#allocation3 + $0x1b0] sm:$0xff] %vm2986, %v2976
      %3042 = vst.msk [vmem:[#allocation3 + $0x1b8] sm:$0xff] %vm2986, %v2977
      %3043 = vst.msk [vmem:[#allocation3 + $0x1c0] sm:$0xff] %vm2986, %v2978
      %3044 = vst.msk [vmem:[#allocation3 + $0x1c8] sm:$0xff] %vm2986, %v2979
      %3045 = vst.msk [vmem:[#allocation3 + $0x1d0] sm:$0xff] %vm2986, %v2980
      %3046 = vst.msk [vmem:[#allocation3 + $0x1d8] sm:$0xff] %vm2986, %v2981
      %3047 = vst.msk [vmem:[#allocation3 + $0x1e0] sm:$0xff] %vm2986, %v2982
      %3048 = vst.msk [vmem:[#allocation3 + $0x1e8] sm:$0xff] %vm2986, %v2983
      %3049 = vst.msk [vmem:[#allocation3 + $0x1f0] sm:$0xff] %vm2986, %v2984
      %3050 = vst.msk [vmem:[#allocation3 + $0x1f8] sm:$0xff] %vm2986, %v2985
      %v3051 = vld [vmem:[#allocation4] sm:$0xff]
      %v3052 = vld [vmem:[#allocation4 + $0x8] sm:$0xff]
      %v3053 = vld [vmem:[#allocation4 + $0x10] sm:$0xff]
      %v3054 = vld [vmem:[#allocation4 + $0x18] sm:$0xff]
      %v3055 = vld [vmem:[#allocation4 + $0x20] sm:$0xff]
      %v3056 = vld [vmem:[#allocation4 + $0x28] sm:$0xff]
      %v3057 = vld [vmem:[#allocation4 + $0x30] sm:$0xff]
      %v3058 = vld [vmem:[#allocation4 + $0x38] sm:$0xff]
      %v3059 = vld [vmem:[#allocation4 + $0x40] sm:$0xff]
      %v3060 = vld [vmem:[#allocation4 + $0x48] sm:$0xff]
      %v3061 = vld [vmem:[#allocation4 + $0x50] sm:$0xff]
      %v3062 = vld [vmem:[#allocation4 + $0x58] sm:$0xff]
      %v3063 = vld [vmem:[#allocation4 + $0x60] sm:$0xff]
      %v3064 = vld [vmem:[#allocation4 + $0x68] sm:$0xff]
      %v3065 = vld [vmem:[#allocation4 + $0x70] sm:$0xff]
      %v3066 = vld [vmem:[#allocation4 + $0x78] sm:$0xff]
      %v3067 = vld [vmem:[#allocation4 + $0x80] sm:$0xff]
      %v3068 = vld [vmem:[#allocation4 + $0x88] sm:$0xff]
      %v3069 = vld [vmem:[#allocation4 + $0x90] sm:$0xff]
      %v3070 = vld [vmem:[#allocation4 + $0x98] sm:$0xff]
      %v3071 = vld [vmem:[#allocation4 + $0xa0] sm:$0xff]
      %v3072 = vld [vmem:[#allocation4 + $0xa8] sm:$0xff]
      %v3073 = vld [vmem:[#allocation4 + $0xb0] sm:$0xff]
      %v3074 = vld [vmem:[#allocation4 + $0xb8] sm:$0xff]
      %v3075 = vld [vmem:[#allocation4 + $0xc0] sm:$0xff]
      %v3076 = vld [vmem:[#allocation4 + $0xc8] sm:$0xff]
      %v3077 = vld [vmem:[#allocation4 + $0xd0] sm:$0xff]
      %v3078 = vld [vmem:[#allocation4 + $0xd8] sm:$0xff]
      %v3079 = vld [vmem:[#allocation4 + $0xe0] sm:$0xff]
      %v3080 = vld [vmem:[#allocation4 + $0xe8] sm:$0xff]
      %v3081 = vld [vmem:[#allocation4 + $0xf0] sm:$0xff]
      %v3082 = vld [vmem:[#allocation4 + $0xf8] sm:$0xff]
      %v3083 = vld [vmem:[#allocation4 + $0x100] sm:$0xff]
      %v3084 = vld [vmem:[#allocation4 + $0x108] sm:$0xff]
      %v3085 = vld [vmem:[#allocation4 + $0x110] sm:$0xff]
      %v3086 = vld [vmem:[#allocation4 + $0x118] sm:$0xff]
      %v3087 = vld [vmem:[#allocation4 + $0x120] sm:$0xff]
      %v3088 = vld [vmem:[#allocation4 + $0x128] sm:$0xff]
      %v3089 = vld [vmem:[#allocation4 + $0x130] sm:$0xff]
      %v3090 = vld [vmem:[#allocation4 + $0x138] sm:$0xff]
      %v3091 = vld [vmem:[#allocation4 + $0x140] sm:$0xff]
      %v3092 = vld [vmem:[#allocation4 + $0x148] sm:$0xff]
      %v3093 = vld [vmem:[#allocation4 + $0x150] sm:$0xff]
      %v3094 = vld [vmem:[#allocation4 + $0x158] sm:$0xff]
      %v3095 = vld [vmem:[#allocation4 + $0x160] sm:$0xff]
      %v3096 = vld [vmem:[#allocation4 + $0x168] sm:$0xff]
      %v3097 = vld [vmem:[#allocation4 + $0x170] sm:$0xff]
      %v3098 = vld [vmem:[#allocation4 + $0x178] sm:$0xff]
      %v3099 = vld [vmem:[#allocation4 + $0x180] sm:$0xff]
      %v3100 = vld [vmem:[#allocation4 + $0x188] sm:$0xff]
      %v3101 = vld [vmem:[#allocation4 + $0x190] sm:$0xff]
      %v3102 = vld [vmem:[#allocation4 + $0x198] sm:$0xff]
      %v3103 = vld [vmem:[#allocation4 + $0x1a0] sm:$0xff]
      %v3104 = vld [vmem:[#allocation4 + $0x1a8] sm:$0xff]
      %v3105 = vld [vmem:[#allocation4 + $0x1b0] sm:$0xff]
      %v3106 = vld [vmem:[#allocation4 + $0x1b8] sm:$0xff]
      %v3107 = vld [vmem:[#allocation4 + $0x1c0] sm:$0xff]
      %v3108 = vld [vmem:[#allocation4 + $0x1c8] sm:$0xff]
      %v3109 = vld [vmem:[#allocation4 + $0x1d0] sm:$0xff]
      %v3110 = vld [vmem:[#allocation4 + $0x1d8] sm:$0xff]
      %v3111 = vld [vmem:[#allocation4 + $0x1e0] sm:$0xff]
      %v3112 = vld [vmem:[#allocation4 + $0x1e8] sm:$0xff]
      %v3113 = vld [vmem:[#allocation4 + $0x1f0] sm:$0xff]
      %v3114 = vld [vmem:[#allocation4 + $0x1f8] sm:$0xff]
      %3116 = vset.pattern.permute.xlu0 0
      %3117 = vperm.xlu0 %3116, %v2027
      %v3118 = vpop.permute.xlu0 %3117
      %3121 = vset.pattern.permute.xlu0 0
      %3122 = vperm.xlu0 %3121, %v2029
      %v3123 = vpop.permute.xlu0 %3122
      %3126 = vset.pattern.permute.xlu0 0
      %3127 = vperm.xlu0 %3126, %v2031
      %v3128 = vpop.permute.xlu0 %3127
      %3131 = vset.pattern.permute.xlu0 0
      %3132 = vperm.xlu0 %3131, %v2033
      %v3133 = vpop.permute.xlu0 %3132
      %3136 = vset.pattern.permute.xlu0 0
      %3137 = vperm.xlu0 %3136, %v2035
      %v3138 = vpop.permute.xlu0 %3137
      %3141 = vset.pattern.permute.xlu0 0
      %3142 = vperm.xlu0 %3141, %v2037
      %v3143 = vpop.permute.xlu0 %3142
      %3146 = vset.pattern.permute.xlu0 0
      %3147 = vperm.xlu0 %3146, %v2039
      %v3148 = vpop.permute.xlu0 %3147
      %3151 = vset.pattern.permute.xlu0 0
      %3152 = vperm.xlu0 %3151, %v2041
      %v3153 = vpop.permute.xlu0 %3152
      %3156 = vset.pattern.permute.xlu0 0
      %3157 = vperm.xlu0 %3156, %v2043
      %v3158 = vpop.permute.xlu0 %3157
      %3161 = vset.pattern.permute.xlu0 0
      %3162 = vperm.xlu0 %3161, %v2045
      %v3163 = vpop.permute.xlu0 %3162
      %3166 = vset.pattern.permute.xlu0 0
      %3167 = vperm.xlu0 %3166, %v2047
      %v3168 = vpop.permute.xlu0 %3167
      %3171 = vset.pattern.permute.xlu0 0
      %3172 = vperm.xlu0 %3171, %v2049
      %v3173 = vpop.permute.xlu0 %3172
      %3176 = vset.pattern.permute.xlu0 0
      %3177 = vperm.xlu0 %3176, %v2051
      %v3178 = vpop.permute.xlu0 %3177
      %3181 = vset.pattern.permute.xlu0 0
      %3182 = vperm.xlu0 %3181, %v2053
      %v3183 = vpop.permute.xlu0 %3182
      %3186 = vset.pattern.permute.xlu0 0
      %3187 = vperm.xlu0 %3186, %v2055
      %v3188 = vpop.permute.xlu0 %3187
      %3191 = vset.pattern.permute.xlu0 0
      %3192 = vperm.xlu0 %3191, %v2057
      %v3193 = vpop.permute.xlu0 %3192
      %3196 = vset.pattern.permute.xlu0 0
      %3197 = vperm.xlu0 %3196, %v2059
      %v3198 = vpop.permute.xlu0 %3197
      %3201 = vset.pattern.permute.xlu0 0
      %3202 = vperm.xlu0 %3201, %v2061
      %v3203 = vpop.permute.xlu0 %3202
      %3206 = vset.pattern.permute.xlu0 0
      %3207 = vperm.xlu0 %3206, %v2063
      %v3208 = vpop.permute.xlu0 %3207
      %3211 = vset.pattern.permute.xlu0 0
      %3212 = vperm.xlu0 %3211, %v2065
      %v3213 = vpop.permute.xlu0 %3212
      %3216 = vset.pattern.permute.xlu0 0
      %3217 = vperm.xlu0 %3216, %v2067
      %v3218 = vpop.permute.xlu0 %3217
      %3221 = vset.pattern.permute.xlu0 0
      %3222 = vperm.xlu0 %3221, %v2069
      %v3223 = vpop.permute.xlu0 %3222
      %3226 = vset.pattern.permute.xlu0 0
      %3227 = vperm.xlu0 %3226, %v2071
      %v3228 = vpop.permute.xlu0 %3227
      %3231 = vset.pattern.permute.xlu0 0
      %3232 = vperm.xlu0 %3231, %v2073
      %v3233 = vpop.permute.xlu0 %3232
      %3236 = vset.pattern.permute.xlu0 0
      %3237 = vperm.xlu0 %3236, %v2075
      %v3238 = vpop.permute.xlu0 %3237
      %3241 = vset.pattern.permute.xlu0 0
      %3242 = vperm.xlu0 %3241, %v2077
      %v3243 = vpop.permute.xlu0 %3242
      %3246 = vset.pattern.permute.xlu0 0
      %3247 = vperm.xlu0 %3246, %v2079
      %v3248 = vpop.permute.xlu0 %3247
      %3251 = vset.pattern.permute.xlu0 0
      %3252 = vperm.xlu0 %3251, %v2081
      %v3253 = vpop.permute.xlu0 %3252
      %3256 = vset.pattern.permute.xlu0 0
      %3257 = vperm.xlu0 %3256, %v2083
      %v3258 = vpop.permute.xlu0 %3257
      %3261 = vset.pattern.permute.xlu0 0
      %3262 = vperm.xlu0 %3261, %v2085
      %v3263 = vpop.permute.xlu0 %3262
      %3266 = vset.pattern.permute.xlu0 0
      %3267 = vperm.xlu0 %3266, %v2087
      %v3268 = vpop.permute.xlu0 %3267
      %3271 = vset.pattern.permute.xlu0 0
      %3272 = vperm.xlu0 %3271, %v2089
      %v3273 = vpop.permute.xlu0 %3272
      %3276 = vset.pattern.permute.xlu0 0
      %3277 = vperm.xlu0 %3276, %v2091
      %v3278 = vpop.permute.xlu0 %3277
      %3281 = vset.pattern.permute.xlu0 0
      %3282 = vperm.xlu0 %3281, %v2093
      %v3283 = vpop.permute.xlu0 %3282
      %3286 = vset.pattern.permute.xlu0 0
      %3287 = vperm.xlu0 %3286, %v2095
      %v3288 = vpop.permute.xlu0 %3287
      %3291 = vset.pattern.permute.xlu0 0
      %3292 = vperm.xlu0 %3291, %v2097
      %v3293 = vpop.permute.xlu0 %3292
      %3296 = vset.pattern.permute.xlu0 0
      %3297 = vperm.xlu0 %3296, %v2099
      %v3298 = vpop.permute.xlu0 %3297
      %3301 = vset.pattern.permute.xlu0 0
      %3302 = vperm.xlu0 %3301, %v2101
      %v3303 = vpop.permute.xlu0 %3302
      %3306 = vset.pattern.permute.xlu0 0
      %3307 = vperm.xlu0 %3306, %v2103
      %v3308 = vpop.permute.xlu0 %3307
      %3311 = vset.pattern.permute.xlu0 0
      %3312 = vperm.xlu0 %3311, %v2105
      %v3313 = vpop.permute.xlu0 %3312
      %3316 = vset.pattern.permute.xlu0 0
      %3317 = vperm.xlu0 %3316, %v2107
      %v3318 = vpop.permute.xlu0 %3317
      %3321 = vset.pattern.permute.xlu0 0
      %3322 = vperm.xlu0 %3321, %v2109
      %v3323 = vpop.permute.xlu0 %3322
      %3326 = vset.pattern.permute.xlu0 0
      %3327 = vperm.xlu0 %3326, %v2111
      %v3328 = vpop.permute.xlu0 %3327
      %3331 = vset.pattern.permute.xlu0 0
      %3332 = vperm.xlu0 %3331, %v2113
      %v3333 = vpop.permute.xlu0 %3332
      %3336 = vset.pattern.permute.xlu0 0
      %3337 = vperm.xlu0 %3336, %v2115
      %v3338 = vpop.permute.xlu0 %3337
      %3341 = vset.pattern.permute.xlu0 0
      %3342 = vperm.xlu0 %3341, %v2117
      %v3343 = vpop.permute.xlu0 %3342
      %3346 = vset.pattern.permute.xlu0 0
      %3347 = vperm.xlu0 %3346, %v2119
      %v3348 = vpop.permute.xlu0 %3347
      %3351 = vset.pattern.permute.xlu0 0
      %3352 = vperm.xlu0 %3351, %v2121
      %v3353 = vpop.permute.xlu0 %3352
      %3356 = vset.pattern.permute.xlu0 0
      %3357 = vperm.xlu0 %3356, %v2123
      %v3358 = vpop.permute.xlu0 %3357
      %3361 = vset.pattern.permute.xlu0 0
      %3362 = vperm.xlu0 %3361, %v2125
      %v3363 = vpop.permute.xlu0 %3362
      %3366 = vset.pattern.permute.xlu0 0
      %3367 = vperm.xlu0 %3366, %v2127
      %v3368 = vpop.permute.xlu0 %3367
      %3371 = vset.pattern.permute.xlu0 0
      %3372 = vperm.xlu0 %3371, %v2129
      %v3373 = vpop.permute.xlu0 %3372
      %3376 = vset.pattern.permute.xlu0 0
      %3377 = vperm.xlu0 %3376, %v2131
      %v3378 = vpop.permute.xlu0 %3377
      %3381 = vset.pattern.permute.xlu0 0
      %3382 = vperm.xlu0 %3381, %v2133
      %v3383 = vpop.permute.xlu0 %3382
      %3386 = vset.pattern.permute.xlu0 0
      %3387 = vperm.xlu0 %3386, %v2135
      %v3388 = vpop.permute.xlu0 %3387
      %3391 = vset.pattern.permute.xlu0 0
      %3392 = vperm.xlu0 %3391, %v2137
      %v3393 = vpop.permute.xlu0 %3392
      %3396 = vset.pattern.permute.xlu0 0
      %3397 = vperm.xlu0 %3396, %v2139
      %v3398 = vpop.permute.xlu0 %3397
      %3401 = vset.pattern.permute.xlu0 0
      %3402 = vperm.xlu0 %3401, %v2141
      %v3403 = vpop.permute.xlu0 %3402
      %3406 = vset.pattern.permute.xlu0 0
      %3407 = vperm.xlu0 %3406, %v2143
      %v3408 = vpop.permute.xlu0 %3407
      %3411 = vset.pattern.permute.xlu0 0
      %3412 = vperm.xlu0 %3411, %v2145
      %v3413 = vpop.permute.xlu0 %3412
      %3416 = vset.pattern.permute.xlu0 0
      %3417 = vperm.xlu0 %3416, %v2147
      %v3418 = vpop.permute.xlu0 %3417
      %3421 = vset.pattern.permute.xlu0 0
      %3422 = vperm.xlu0 %3421, %v2149
      %v3423 = vpop.permute.xlu0 %3422
      %3426 = vset.pattern.permute.xlu0 0
      %3427 = vperm.xlu0 %3426, %v2151
      %v3428 = vpop.permute.xlu0 %3427
      %3431 = vset.pattern.permute.xlu0 0
      %3432 = vperm.xlu0 %3431, %v2153
      %v3433 = vpop.permute.xlu0 %3432
      %v3435 = vmul.f32 %v3118, %v3051
      %v3436 = vmul.f32 %v3123, %v3052
      %v3437 = vmul.f32 %v3128, %v3053
      %v3438 = vmul.f32 %v3133, %v3054
      %v3439 = vmul.f32 %v3138, %v3055
      %v3440 = vmul.f32 %v3143, %v3056
      %v3441 = vmul.f32 %v3148, %v3057
      %v3442 = vmul.f32 %v3153, %v3058
      %v3443 = vmul.f32 %v3158, %v3059
      %v3444 = vmul.f32 %v3163, %v3060
      %v3445 = vmul.f32 %v3168, %v3061
      %v3446 = vmul.f32 %v3173, %v3062
      %v3447 = vmul.f32 %v3178, %v3063
      %v3448 = vmul.f32 %v3183, %v3064
      %v3449 = vmul.f32 %v3188, %v3065
      %v3450 = vmul.f32 %v3193, %v3066
      %v3451 = vmul.f32 %v3198, %v3067
      %v3452 = vmul.f32 %v3203, %v3068
      %v3453 = vmul.f32 %v3208, %v3069
      %v3454 = vmul.f32 %v3213, %v3070
      %v3455 = vmul.f32 %v3218, %v3071
      %v3456 = vmul.f32 %v3223, %v3072
      %v3457 = vmul.f32 %v3228, %v3073
      %v3458 = vmul.f32 %v3233, %v3074
      %v3459 = vmul.f32 %v3238, %v3075
      %v3460 = vmul.f32 %v3243, %v3076
      %v3461 = vmul.f32 %v3248, %v3077
      %v3462 = vmul.f32 %v3253, %v3078
      %v3463 = vmul.f32 %v3258, %v3079
      %v3464 = vmul.f32 %v3263, %v3080
      %v3465 = vmul.f32 %v3268, %v3081
      %v3466 = vmul.f32 %v3273, %v3082
      %v3467 = vmul.f32 %v3278, %v3083
      %v3468 = vmul.f32 %v3283, %v3084
      %v3469 = vmul.f32 %v3288, %v3085
      %v3470 = vmul.f32 %v3293, %v3086
      %v3471 = vmul.f32 %v3298, %v3087
      %v3472 = vmul.f32 %v3303, %v3088
      %v3473 = vmul.f32 %v3308, %v3089
      %v3474 = vmul.f32 %v3313, %v3090
      %v3475 = vmul.f32 %v3318, %v3091
      %v3476 = vmul.f32 %v3323, %v3092
      %v3477 = vmul.f32 %v3328, %v3093
      %v3478 = vmul.f32 %v3333, %v3094
      %v3479 = vmul.f32 %v3338, %v3095
      %v3480 = vmul.f32 %v3343, %v3096
      %v3481 = vmul.f32 %v3348, %v3097
      %v3482 = vmul.f32 %v3353, %v3098
      %v3483 = vmul.f32 %v3358, %v3099
      %v3484 = vmul.f32 %v3363, %v3100
      %v3485 = vmul.f32 %v3368, %v3101
      %v3486 = vmul.f32 %v3373, %v3102
      %v3487 = vmul.f32 %v3378, %v3103
      %v3488 = vmul.f32 %v3383, %v3104
      %v3489 = vmul.f32 %v3388, %v3105
      %v3490 = vmul.f32 %v3393, %v3106
      %v3491 = vmul.f32 %v3398, %v3107
      %v3492 = vmul.f32 %v3403, %v3108
      %v3493 = vmul.f32 %v3408, %v3109
      %v3494 = vmul.f32 %v3413, %v3110
      %v3495 = vmul.f32 %v3418, %v3111
      %v3496 = vmul.f32 %v3423, %v3112
      %v3497 = vmul.f32 %v3428, %v3113
      %v3498 = vmul.f32 %v3433, %v3114
      %3499 = vmatpush.msra.mxu0 %v732
      %3500 = vmatpush.msra.mxu0 %v731
      %3501 = vmatpush.msra.mxu0 %v730
      %3502 = vmatpush.msra.mxu0 %v729
      %3503 = vmatpush.msra.mxu0 %v728
      %3504 = vmatpush.msra.mxu0 %v727
      %3505 = vmatpush.msra.mxu0 %v726
      %3506 = vmatpush.msra.mxu0 %v725
      %3507 = vmatpush.msra.mxu0 %v724
      %3508 = vmatpush.msra.mxu0 %v723
      %3509 = vmatpush.msra.mxu0 %v722
      %3510 = vmatpush.msra.mxu0 %v721
      %3511 = vmatpush.msra.mxu0 %v720
      %3512 = vmatpush.msra.mxu0 %v719
      %3513 = vmatpush.msra.mxu0 %v718
      %3514 = vmatpush.msra.mxu0 %v717
      %3515 = vmatmul.f32.gmra.mxu0 %v2539
      %v3516 = vpop.f32.mrf.mxu0
      %v3517 = vadd.f32 0.0, %v3516
      %3518 = vmatmul.f32.gmra.mxu0 %v2541
      %v3519 = vpop.f32.mrf.mxu0
      %v3520 = vadd.f32 0.0, %v3519
      %3521 = vmatmul.f32.gmra.mxu0 %v2543
      %v3522 = vpop.f32.mrf.mxu0
      %v3523 = vadd.f32 0.0, %v3522
      %3524 = vmatmul.f32.gmra.mxu0 %v2545
      %v3525 = vpop.f32.mrf.mxu0
      %v3526 = vadd.f32 0.0, %v3525
      %3527 = vmatmul.f32.gmra.mxu0 %v2547
      %v3528 = vpop.f32.mrf.mxu0
      %v3529 = vadd.f32 0.0, %v3528
      %3530 = vmatmul.f32.gmra.mxu0 %v2549
      %v3531 = vpop.f32.mrf.mxu0
      %v3532 = vadd.f32 0.0, %v3531
      %3533 = vmatmul.f32.gmra.mxu0 %v2551
      %v3534 = vpop.f32.mrf.mxu0
      %v3535 = vadd.f32 0.0, %v3534
      %3536 = vmatmul.f32.gmra.mxu0 %v2553
      %v3537 = vpop.f32.mrf.mxu0
      %v3538 = vadd.f32 0.0, %v3537
      %3539 = vmatmul.f32.gmra.mxu0 %v2555
      %v3540 = vpop.f32.mrf.mxu0
      %v3541 = vadd.f32 0.0, %v3540
      %3542 = vmatmul.f32.gmra.mxu0 %v2557
      %v3543 = vpop.f32.mrf.mxu0
      %v3544 = vadd.f32 0.0, %v3543
      %3545 = vmatmul.f32.gmra.mxu0 %v2559
      %v3546 = vpop.f32.mrf.mxu0
      %v3547 = vadd.f32 0.0, %v3546
      %3548 = vmatmul.f32.gmra.mxu0 %v2561
      %v3549 = vpop.f32.mrf.mxu0
      %v3550 = vadd.f32 0.0, %v3549
      %3551 = vmatmul.f32.gmra.mxu0 %v2563
      %v3552 = vpop.f32.mrf.mxu0
      %v3553 = vadd.f32 0.0, %v3552
      %3554 = vmatmul.f32.gmra.mxu0 %v2565
      %v3555 = vpop.f32.mrf.mxu0
      %v3556 = vadd.f32 0.0, %v3555
      %3557 = vmatmul.f32.gmra.mxu0 %v2567
      %v3558 = vpop.f32.mrf.mxu0
      %v3559 = vadd.f32 0.0, %v3558
      %3560 = vmatmul.f32.gmra.mxu0 %v2569
      %v3561 = vpop.f32.mrf.mxu0
      %v3562 = vadd.f32 0.0, %v3561
      %3563 = vdwg.mxu0
      %3564 = vmatpush.msra.mxu0 %v1004
      %3565 = vmatpush.msra.mxu0 %v1002
      %3566 = vmatpush.msra.mxu0 %v1000
      %3567 = vmatpush.msra.mxu0 %v998
      %3568 = vmatpush.msra.mxu0 %v996
      %3569 = vmatpush.msra.mxu0 %v994
      %3570 = vmatpush.msra.mxu0 %v992
      %3571 = vmatpush.msra.mxu0 %v990
      %3572 = vmatpush.msra.mxu0 %v988
      %3573 = vmatpush.msra.mxu0 %v986
      %3574 = vmatpush.msra.mxu0 %v984
      %3575 = vmatpush.msra.mxu0 %v982
      %3576 = vmatpush.msra.mxu0 %v980
      %3577 = vmatpush.msra.mxu0 %v978
      %3578 = vmatpush.msra.mxu0 %v976
      %3579 = vmatpush.msra.mxu0 %v974
      %3580 = vmatmul.f32.gmra.mxu0 %v2571
      %v3581 = vpop.f32.mrf.mxu0
      %v3582 = vadd.f32 0.0, %v3581
      %3583 = vmatmul.f32.gmra.mxu0 %v2573
      %v3584 = vpop.f32.mrf.mxu0
      %v3585 = vadd.f32 0.0, %v3584
      %3586 = vmatmul.f32.gmra.mxu0 %v2575
      %v3587 = vpop.f32.mrf.mxu0
      %v3588 = vadd.f32 0.0, %v3587
      %3589 = vmatmul.f32.gmra.mxu0 %v2577
      %v3590 = vpop.f32.mrf.mxu0
      %v3591 = vadd.f32 0.0, %v3590
      %3592 = vmatmul.f32.gmra.mxu0 %v2579
      %v3593 = vpop.f32.mrf.mxu0
      %v3594 = vadd.f32 0.0, %v3593
      %3595 = vmatmul.f32.gmra.mxu0 %v2581
      %v3596 = vpop.f32.mrf.mxu0
      %v3597 = vadd.f32 0.0, %v3596
      %3598 = vmatmul.f32.gmra.mxu0 %v2583
      %v3599 = vpop.f32.mrf.mxu0
      %v3600 = vadd.f32 0.0, %v3599
      %3601 = vmatmul.f32.gmra.mxu0 %v2585
      %v3602 = vpop.f32.mrf.mxu0
      %v3603 = vadd.f32 0.0, %v3602
      %3604 = vmatmul.f32.gmra.mxu0 %v2587
      %v3605 = vpop.f32.mrf.mxu0
      %v3606 = vadd.f32 0.0, %v3605
      %3607 = vmatmul.f32.gmra.mxu0 %v2589
      %v3608 = vpop.f32.mrf.mxu0
      %v3609 = vadd.f32 0.0, %v3608
      %3610 = vmatmul.f32.gmra.mxu0 %v2591
      %v3611 = vpop.f32.mrf.mxu0
      %v3612 = vadd.f32 0.0, %v3611
      %3613 = vmatmul.f32.gmra.mxu0 %v2593
      %v3614 = vpop.f32.mrf.mxu0
      %v3615 = vadd.f32 0.0, %v3614
      %3616 = vmatmul.f32.gmra.mxu0 %v2595
      %v3617 = vpop.f32.mrf.mxu0
      %v3618 = vadd.f32 0.0, %v3617
      %3619 = vmatmul.f32.gmra.mxu0 %v2597
      %v3620 = vpop.f32.mrf.mxu0
      %v3621 = vadd.f32 0.0, %v3620
      %3622 = vmatmul.f32.gmra.mxu0 %v2599
      %v3623 = vpop.f32.mrf.mxu0
      %v3624 = vadd.f32 0.0, %v3623
      %3625 = vmatmul.f32.gmra.mxu0 %v2601
      %v3626 = vpop.f32.mrf.mxu0
      %v3627 = vadd.f32 0.0, %v3626
      %3628 = vdwg.mxu0
      %3629 = vmatpush.msra.mxu0 %v1052
      %3630 = vmatpush.msra.mxu0 %v1050
      %3631 = vmatpush.msra.mxu0 %v1048
      %3632 = vmatpush.msra.mxu0 %v1046
      %3633 = vmatpush.msra.mxu0 %v1044
      %3634 = vmatpush.msra.mxu0 %v1042
      %3635 = vmatpush.msra.mxu0 %v1040
      %3636 = vmatpush.msra.mxu0 %v1038
      %3637 = vmatpush.msra.mxu0 %v1036
      %3638 = vmatpush.msra.mxu0 %v1034
      %3639 = vmatpush.msra.mxu0 %v1032
      %3640 = vmatpush.msra.mxu0 %v1030
      %3641 = vmatpush.msra.mxu0 %v1028
      %3642 = vmatpush.msra.mxu0 %v1026
      %3643 = vmatpush.msra.mxu0 %v1024
      %3644 = vmatpush.msra.mxu0 %v1022
      %3645 = vmatmul.f32.gmra.mxu0 %v2603
      %v3646 = vpop.f32.mrf.mxu0
      %v3647 = vadd.f32 0.0, %v3646
      %3648 = vmatmul.f32.gmra.mxu0 %v2605
      %v3649 = vpop.f32.mrf.mxu0
      %v3650 = vadd.f32 0.0, %v3649
      %3651 = vmatmul.f32.gmra.mxu0 %v2607
      %v3652 = vpop.f32.mrf.mxu0
      %v3653 = vadd.f32 0.0, %v3652
      %3654 = vmatmul.f32.gmra.mxu0 %v2609
      %v3655 = vpop.f32.mrf.mxu0
      %v3656 = vadd.f32 0.0, %v3655
      %3657 = vmatmul.f32.gmra.mxu0 %v2611
      %v3658 = vpop.f32.mrf.mxu0
      %v3659 = vadd.f32 0.0, %v3658
      %3660 = vmatmul.f32.gmra.mxu0 %v2613
      %v3661 = vpop.f32.mrf.mxu0
      %v3662 = vadd.f32 0.0, %v3661
      %3663 = vmatmul.f32.gmra.mxu0 %v2615
      %v3664 = vpop.f32.mrf.mxu0
      %v3665 = vadd.f32 0.0, %v3664
      %3666 = vmatmul.f32.gmra.mxu0 %v2617
      %v3667 = vpop.f32.mrf.mxu0
      %v3668 = vadd.f32 0.0, %v3667
      %3669 = vmatmul.f32.gmra.mxu0 %v2619
      %v3670 = vpop.f32.mrf.mxu0
      %v3671 = vadd.f32 0.0, %v3670
      %3672 = vmatmul.f32.gmra.mxu0 %v2621
      %v3673 = vpop.f32.mrf.mxu0
      %v3674 = vadd.f32 0.0, %v3673
      %3675 = vmatmul.f32.gmra.mxu0 %v2623
      %v3676 = vpop.f32.mrf.mxu0
      %v3677 = vadd.f32 0.0, %v3676
      %3678 = vmatmul.f32.gmra.mxu0 %v2625
      %v3679 = vpop.f32.mrf.mxu0
      %v3680 = vadd.f32 0.0, %v3679
      %3681 = vmatmul.f32.gmra.mxu0 %v2627
      %v3682 = vpop.f32.mrf.mxu0
      %v3683 = vadd.f32 0.0, %v3682
      %3684 = vmatmul.f32.gmra.mxu0 %v2629
      %v3685 = vpop.f32.mrf.mxu0
      %v3686 = vadd.f32 0.0, %v3685
      %3687 = vmatmul.f32.gmra.mxu0 %v2631
      %v3688 = vpop.f32.mrf.mxu0
      %v3689 = vadd.f32 0.0, %v3688
      %3690 = vmatmul.f32.gmra.mxu0 %v2633
      %v3691 = vpop.f32.mrf.mxu0
      %v3692 = vadd.f32 0.0, %v3691
      %3693 = vdwg.mxu0
      %3694 = vmatpush.msra.mxu0 %v1100
      %3695 = vmatpush.msra.mxu0 %v1098
      %3696 = vmatpush.msra.mxu0 %v1096
      %3697 = vmatpush.msra.mxu0 %v1094
      %3698 = vmatpush.msra.mxu0 %v1092
      %3699 = vmatpush.msra.mxu0 %v1090
      %3700 = vmatpush.msra.mxu0 %v1088
      %3701 = vmatpush.msra.mxu0 %v1086
      %3702 = vmatpush.msra.mxu0 %v1084
      %3703 = vmatpush.msra.mxu0 %v1082
      %3704 = vmatpush.msra.mxu0 %v1080
      %3705 = vmatpush.msra.mxu0 %v1078
      %3706 = vmatpush.msra.mxu0 %v1076
      %3707 = vmatpush.msra.mxu0 %v1074
      %3708 = vmatpush.msra.mxu0 %v1072
      %3709 = vmatpush.msra.mxu0 %v1070
      %3710 = vmatmul.f32.gmra.mxu0 %v2635
      %v3711 = vpop.f32.mrf.mxu0
      %v3712 = vadd.f32 0.0, %v3711
      %3713 = vmatmul.f32.gmra.mxu0 %v2637
      %v3714 = vpop.f32.mrf.mxu0
      %v3715 = vadd.f32 0.0, %v3714
      %3716 = vmatmul.f32.gmra.mxu0 %v2639
      %v3717 = vpop.f32.mrf.mxu0
      %v3718 = vadd.f32 0.0, %v3717
      %3719 = vmatmul.f32.gmra.mxu0 %v2641
      %v3720 = vpop.f32.mrf.mxu0
      %v3721 = vadd.f32 0.0, %v3720
      %3722 = vmatmul.f32.gmra.mxu0 %v2643
      %v3723 = vpop.f32.mrf.mxu0
      %v3724 = vadd.f32 0.0, %v3723
      %3725 = vmatmul.f32.gmra.mxu0 %v2645
      %v3726 = vpop.f32.mrf.mxu0
      %v3727 = vadd.f32 0.0, %v3726
      %3728 = vmatmul.f32.gmra.mxu0 %v2647
      %v3729 = vpop.f32.mrf.mxu0
      %v3730 = vadd.f32 0.0, %v3729
      %3731 = vmatmul.f32.gmra.mxu0 %v2649
      %v3732 = vpop.f32.mrf.mxu0
      %v3733 = vadd.f32 0.0, %v3732
      %3734 = vmatmul.f32.gmra.mxu0 %v2651
      %v3735 = vpop.f32.mrf.mxu0
      %v3736 = vadd.f32 0.0, %v3735
      %3737 = vmatmul.f32.gmra.mxu0 %v2653
      %v3738 = vpop.f32.mrf.mxu0
      %v3739 = vadd.f32 0.0, %v3738
      %3740 = vmatmul.f32.gmra.mxu0 %v2655
      %v3741 = vpop.f32.mrf.mxu0
      %v3742 = vadd.f32 0.0, %v3741
      %3743 = vmatmul.f32.gmra.mxu0 %v2657
      %v3744 = vpop.f32.mrf.mxu0
      %v3745 = vadd.f32 0.0, %v3744
      %3746 = vmatmul.f32.gmra.mxu0 %v2659
      %v3747 = vpop.f32.mrf.mxu0
      %v3748 = vadd.f32 0.0, %v3747
      %3749 = vmatmul.f32.gmra.mxu0 %v2661
      %v3750 = vpop.f32.mrf.mxu0
      %v3751 = vadd.f32 0.0, %v3750
      %3752 = vmatmul.f32.gmra.mxu0 %v2663
      %v3753 = vpop.f32.mrf.mxu0
      %v3754 = vadd.f32 0.0, %v3753
      %3755 = vmatmul.f32.gmra.mxu0 %v2665
      %v3756 = vpop.f32.mrf.mxu0
      %v3757 = vadd.f32 0.0, %v3756
      %3758 = vdwg.mxu0
      %v3759 = vadd.f32 %v3435, %v3517
      %v3760 = vadd.f32 %v3436, %v3520
      %v3761 = vadd.f32 %v3437, %v3523
      %v3762 = vadd.f32 %v3438, %v3526
      %v3763 = vadd.f32 %v3439, %v3529
      %v3764 = vadd.f32 %v3440, %v3532
      %v3765 = vadd.f32 %v3441, %v3535
      %v3766 = vadd.f32 %v3442, %v3538
      %v3767 = vadd.f32 %v3443, %v3541
      %v3768 = vadd.f32 %v3444, %v3544
      %v3769 = vadd.f32 %v3445, %v3547
      %v3770 = vadd.f32 %v3446, %v3550
      %v3771 = vadd.f32 %v3447, %v3553
      %v3772 = vadd.f32 %v3448, %v3556
      %v3773 = vadd.f32 %v3449, %v3559
      %v3774 = vadd.f32 %v3450, %v3562
      %v3775 = vadd.f32 %v3451, %v3582
      %v3776 = vadd.f32 %v3452, %v3585
      %v3777 = vadd.f32 %v3453, %v3588
      %v3778 = vadd.f32 %v3454, %v3591
      %v3779 = vadd.f32 %v3455, %v3594
      %v3780 = vadd.f32 %v3456, %v3597
      %v3781 = vadd.f32 %v3457, %v3600
      %v3782 = vadd.f32 %v3458, %v3603
      %v3783 = vadd.f32 %v3459, %v3606
      %v3784 = vadd.f32 %v3460, %v3609
      %v3785 = vadd.f32 %v3461, %v3612
      %v3786 = vadd.f32 %v3462, %v3615
      %v3787 = vadd.f32 %v3463, %v3618
      %v3788 = vadd.f32 %v3464, %v3621
      %v3789 = vadd.f32 %v3465, %v3624
      %v3790 = vadd.f32 %v3466, %v3627
      %v3791 = vadd.f32 %v3467, %v3647
      %v3792 = vadd.f32 %v3468, %v3650
      %v3793 = vadd.f32 %v3469, %v3653
      %v3794 = vadd.f32 %v3470, %v3656
      %v3795 = vadd.f32 %v3471, %v3659
      %v3796 = vadd.f32 %v3472, %v3662
      %v3797 = vadd.f32 %v3473, %v3665
      %v3798 = vadd.f32 %v3474, %v3668
      %v3799 = vadd.f32 %v3475, %v3671
      %v3800 = vadd.f32 %v3476, %v3674
      %v3801 = vadd.f32 %v3477, %v3677
      %v3802 = vadd.f32 %v3478, %v3680
      %v3803 = vadd.f32 %v3479, %v3683
      %v3804 = vadd.f32 %v3480, %v3686
      %v3805 = vadd.f32 %v3481, %v3689
      %v3806 = vadd.f32 %v3482, %v3692
      %v3807 = vadd.f32 %v3483, %v3712
      %v3808 = vadd.f32 %v3484, %v3715
      %v3809 = vadd.f32 %v3485, %v3718
      %v3810 = vadd.f32 %v3486, %v3721
      %v3811 = vadd.f32 %v3487, %v3724
      %v3812 = vadd.f32 %v3488, %v3727
      %v3813 = vadd.f32 %v3489, %v3730
      %v3814 = vadd.f32 %v3490, %v3733
      %v3815 = vadd.f32 %v3491, %v3736
      %v3816 = vadd.f32 %v3492, %v3739
      %v3817 = vadd.f32 %v3493, %v3742
      %v3818 = vadd.f32 %v3494, %v3745
      %v3819 = vadd.f32 %v3495, %v3748
      %v3820 = vadd.f32 %v3496, %v3751
      %v3821 = vadd.f32 %v3497, %v3754
      %v3822 = vadd.f32 %v3498, %v3757
      %3823 = vst.msk [vmem:[#allocation4] sm:$0xff] %vm1117, %v3759
      %3824 = vst.msk [vmem:[#allocation4 + $0x8] sm:$0xff] %vm1117, %v3760
      %3825 = vst.msk [vmem:[#allocation4 + $0x10] sm:$0xff] %vm1117, %v3761
      %3826 = vst.msk [vmem:[#allocation4 + $0x18] sm:$0xff] %vm1117, %v3762
      %3827 = vst.msk [vmem:[#allocation4 + $0x20] sm:$0xff] %vm1117, %v3763
      %3828 = vst.msk [vmem:[#allocation4 + $0x28] sm:$0xff] %vm1117, %v3764
      %3829 = vst.msk [vmem:[#allocation4 + $0x30] sm:$0xff] %vm1117, %v3765
      %3830 = vst.msk [vmem:[#allocation4 + $0x38] sm:$0xff] %vm1117, %v3766
      %3831 = vst.msk [vmem:[#allocation4 + $0x40] sm:$0xff] %vm1117, %v3767
      %3832 = vst.msk [vmem:[#allocation4 + $0x48] sm:$0xff] %vm1117, %v3768
      %3833 = vst.msk [vmem:[#allocation4 + $0x50] sm:$0xff] %vm1117, %v3769
      %3834 = vst.msk [vmem:[#allocation4 + $0x58] sm:$0xff] %vm1117, %v3770
      %3835 = vst.msk [vmem:[#allocation4 + $0x60] sm:$0xff] %vm1117, %v3771
      %3836 = vst.msk [vmem:[#allocation4 + $0x68] sm:$0xff] %vm1117, %v3772
      %3837 = vst.msk [vmem:[#allocation4 + $0x70] sm:$0xff] %vm1117, %v3773
      %3838 = vst.msk [vmem:[#allocation4 + $0x78] sm:$0xff] %vm1117, %v3774
      %3839 = vst.msk [vmem:[#allocation4 + $0x80] sm:$0xff] %vm1117, %v3775
      %3840 = vst.msk [vmem:[#allocation4 + $0x88] sm:$0xff] %vm1117, %v3776
      %3841 = vst.msk [vmem:[#allocation4 + $0x90] sm:$0xff] %vm1117, %v3777
      %3842 = vst.msk [vmem:[#allocation4 + $0x98] sm:$0xff] %vm1117, %v3778
      %3843 = vst.msk [vmem:[#allocation4 + $0xa0] sm:$0xff] %vm1117, %v3779
      %3844 = vst.msk [vmem:[#allocation4 + $0xa8] sm:$0xff] %vm1117, %v3780
      %3845 = vst.msk [vmem:[#allocation4 + $0xb0] sm:$0xff] %vm1117, %v3781
      %3846 = vst.msk [vmem:[#allocation4 + $0xb8] sm:$0xff] %vm1117, %v3782
      %3847 = vst.msk [vmem:[#allocation4 + $0xc0] sm:$0xff] %vm1117, %v3783
      %3848 = vst.msk [vmem:[#allocation4 + $0xc8] sm:$0xff] %vm1117, %v3784
      %3849 = vst.msk [vmem:[#allocation4 + $0xd0] sm:$0xff] %vm1117, %v3785
      %3850 = vst.msk [vmem:[#allocation4 + $0xd8] sm:$0xff] %vm1117, %v3786
      %3851 = vst.msk [vmem:[#allocation4 + $0xe0] sm:$0xff] %vm1117, %v3787
      %3852 = vst.msk [vmem:[#allocation4 + $0xe8] sm:$0xff] %vm1117, %v3788
      %3853 = vst.msk [vmem:[#allocation4 + $0xf0] sm:$0xff] %vm1117, %v3789
      %3854 = vst.msk [vmem:[#allocation4 + $0xf8] sm:$0xff] %vm1117, %v3790
      %3855 = vst.msk [vmem:[#allocation4 + $0x100] sm:$0xff] %vm1117, %v3791
      %3856 = vst.msk [vmem:[#allocation4 + $0x108] sm:$0xff] %vm1117, %v3792
      %3857 = vst.msk [vmem:[#allocation4 + $0x110] sm:$0xff] %vm1117, %v3793
      %3858 = vst.msk [vmem:[#allocation4 + $0x118] sm:$0xff] %vm1117, %v3794
      %3859 = vst.msk [vmem:[#allocation4 + $0x120] sm:$0xff] %vm1117, %v3795
      %3860 = vst.msk [vmem:[#allocation4 + $0x128] sm:$0xff] %vm1117, %v3796
      %3861 = vst.msk [vmem:[#allocation4 + $0x130] sm:$0xff] %vm1117, %v3797
      %3862 = vst.msk [vmem:[#allocation4 + $0x138] sm:$0xff] %vm1117, %v3798
      %3863 = vst.msk [vmem:[#allocation4 + $0x140] sm:$0xff] %vm1117, %v3799
      %3864 = vst.msk [vmem:[#allocation4 + $0x148] sm:$0xff] %vm1117, %v3800
      %3865 = vst.msk [vmem:[#allocation4 + $0x150] sm:$0xff] %vm1117, %v3801
      %3866 = vst.msk [vmem:[#allocation4 + $0x158] sm:$0xff] %vm1117, %v3802
      %3867 = vst.msk [vmem:[#allocation4 + $0x160] sm:$0xff] %vm1117, %v3803
      %3868 = vst.msk [vmem:[#allocation4 + $0x168] sm:$0xff] %vm1117, %v3804
      %3869 = vst.msk [vmem:[#allocation4 + $0x170] sm:$0xff] %vm1117, %v3805
      %3870 = vst.msk [vmem:[#allocation4 + $0x178] sm:$0xff] %vm1117, %v3806
      %3871 = vst.msk [vmem:[#allocation4 + $0x180] sm:$0xff] %vm1117, %v3807
      %3872 = vst.msk [vmem:[#allocation4 + $0x188] sm:$0xff] %vm1117, %v3808
      %3873 = vst.msk [vmem:[#allocation4 + $0x190] sm:$0xff] %vm1117, %v3809
      %3874 = vst.msk [vmem:[#allocation4 + $0x198] sm:$0xff] %vm1117, %v3810
      %3875 = vst.msk [vmem:[#allocation4 + $0x1a0] sm:$0xff] %vm1117, %v3811
      %3876 = vst.msk [vmem:[#allocation4 + $0x1a8] sm:$0xff] %vm1117, %v3812
      %3877 = vst.msk [vmem:[#allocation4 + $0x1b0] sm:$0xff] %vm1117, %v3813
      %3878 = vst.msk [vmem:[#allocation4 + $0x1b8] sm:$0xff] %vm1117, %v3814
      %3879 = vst.msk [vmem:[#allocation4 + $0x1c0] sm:$0xff] %vm1117, %v3815
      %3880 = vst.msk [vmem:[#allocation4 + $0x1c8] sm:$0xff] %vm1117, %v3816
      %3881 = vst.msk [vmem:[#allocation4 + $0x1d0] sm:$0xff] %vm1117, %v3817
      %3882 = vst.msk [vmem:[#allocation4 + $0x1d8] sm:$0xff] %vm1117, %v3818
      %3883 = vst.msk [vmem:[#allocation4 + $0x1e0] sm:$0xff] %vm1117, %v3819
      %3884 = vst.msk [vmem:[#allocation4 + $0x1e8] sm:$0xff] %vm1117, %v3820
      %3885 = vst.msk [vmem:[#allocation4 + $0x1f0] sm:$0xff] %vm1117, %v3821
      %3886 = vst.msk [vmem:[#allocation4 + $0x1f8] sm:$0xff] %vm1117, %v3822
      %3887 = vst.msk [vmem:[#allocation2] sm:$0xff] %vm2986, %v1898
      %3888 = vst.msk [vmem:[#allocation2 + $0x8] sm:$0xff] %vm2986, %v1899
      %3889 = vst.msk [vmem:[#allocation2 + $0x10] sm:$0xff] %vm2986, %v1900
      %3890 = vst.msk [vmem:[#allocation2 + $0x18] sm:$0xff] %vm2986, %v1901
      %3891 = vst.msk [vmem:[#allocation2 + $0x20] sm:$0xff] %vm2986, %v1902
      %3892 = vst.msk [vmem:[#allocation2 + $0x28] sm:$0xff] %vm2986, %v1903
      %3893 = vst.msk [vmem:[#allocation2 + $0x30] sm:$0xff] %vm2986, %v1904
      %3894 = vst.msk [vmem:[#allocation2 + $0x38] sm:$0xff] %vm2986, %v1905
      %3895 = vst.msk [vmem:[#allocation2 + $0x40] sm:$0xff] %vm2986, %v1906
      %3896 = vst.msk [vmem:[#allocation2 + $0x48] sm:$0xff] %vm2986, %v1907
      %3897 = vst.msk [vmem:[#allocation2 + $0x50] sm:$0xff] %vm2986, %v1908
      %3898 = vst.msk [vmem:[#allocation2 + $0x58] sm:$0xff] %vm2986, %v1909
      %3899 = vst.msk [vmem:[#allocation2 + $0x60] sm:$0xff] %vm2986, %v1910
      %3900 = vst.msk [vmem:[#allocation2 + $0x68] sm:$0xff] %vm2986, %v1911
      %3901 = vst.msk [vmem:[#allocation2 + $0x70] sm:$0xff] %vm2986, %v1912
      %3902 = vst.msk [vmem:[#allocation2 + $0x78] sm:$0xff] %vm2986, %v1913
      %3903 = vst.msk [vmem:[#allocation2 + $0x80] sm:$0xff] %vm2986, %v1914
      %3904 = vst.msk [vmem:[#allocation2 + $0x88] sm:$0xff] %vm2986, %v1915
      %3905 = vst.msk [vmem:[#allocation2 + $0x90] sm:$0xff] %vm2986, %v1916
      %3906 = vst.msk [vmem:[#allocation2 + $0x98] sm:$0xff] %vm2986, %v1917
      %3907 = vst.msk [vmem:[#allocation2 + $0xa0] sm:$0xff] %vm2986, %v1918
      %3908 = vst.msk [vmem:[#allocation2 + $0xa8] sm:$0xff] %vm2986, %v1919
      %3909 = vst.msk [vmem:[#allocation2 + $0xb0] sm:$0xff] %vm2986, %v1920
      %3910 = vst.msk [vmem:[#allocation2 + $0xb8] sm:$0xff] %vm2986, %v1921
      %3911 = vst.msk [vmem:[#allocation2 + $0xc0] sm:$0xff] %vm2986, %v1922
      %3912 = vst.msk [vmem:[#allocation2 + $0xc8] sm:$0xff] %vm2986, %v1923
      %3913 = vst.msk [vmem:[#allocation2 + $0xd0] sm:$0xff] %vm2986, %v1924
      %3914 = vst.msk [vmem:[#allocation2 + $0xd8] sm:$0xff] %vm2986, %v1925
      %3915 = vst.msk [vmem:[#allocation2 + $0xe0] sm:$0xff] %vm2986, %v1926
      %3916 = vst.msk [vmem:[#allocation2 + $0xe8] sm:$0xff] %vm2986, %v1927
      %3917 = vst.msk [vmem:[#allocation2 + $0xf0] sm:$0xff] %vm2986, %v1928
      %3918 = vst.msk [vmem:[#allocation2 + $0xf8] sm:$0xff] %vm2986, %v1929
      %3919 = vst.msk [vmem:[#allocation2 + $0x100] sm:$0xff] %vm2986, %v1930
      %3920 = vst.msk [vmem:[#allocation2 + $0x108] sm:$0xff] %vm2986, %v1931
      %3921 = vst.msk [vmem:[#allocation2 + $0x110] sm:$0xff] %vm2986, %v1932
      %3922 = vst.msk [vmem:[#allocation2 + $0x118] sm:$0xff] %vm2986, %v1933
      %3923 = vst.msk [vmem:[#allocation2 + $0x120] sm:$0xff] %vm2986, %v1934
      %3924 = vst.msk [vmem:[#allocation2 + $0x128] sm:$0xff] %vm2986, %v1935
      %3925 = vst.msk [vmem:[#allocation2 + $0x130] sm:$0xff] %vm2986, %v1936
      %3926 = vst.msk [vmem:[#allocation2 + $0x138] sm:$0xff] %vm2986, %v1937
      %3927 = vst.msk [vmem:[#allocation2 + $0x140] sm:$0xff] %vm2986, %v1938
      %3928 = vst.msk [vmem:[#allocation2 + $0x148] sm:$0xff] %vm2986, %v1939
      %3929 = vst.msk [vmem:[#allocation2 + $0x150] sm:$0xff] %vm2986, %v1940
      %3930 = vst.msk [vmem:[#allocation2 + $0x158] sm:$0xff] %vm2986, %v1941
      %3931 = vst.msk [vmem:[#allocation2 + $0x160] sm:$0xff] %vm2986, %v1942
      %3932 = vst.msk [vmem:[#allocation2 + $0x168] sm:$0xff] %vm2986, %v1943
      %3933 = vst.msk [vmem:[#allocation2 + $0x170] sm:$0xff] %vm2986, %v1944
      %3934 = vst.msk [vmem:[#allocation2 + $0x178] sm:$0xff] %vm2986, %v1945
      %3935 = vst.msk [vmem:[#allocation2 + $0x180] sm:$0xff] %vm2986, %v1946
      %3936 = vst.msk [vmem:[#allocation2 + $0x188] sm:$0xff] %vm2986, %v1947
      %3937 = vst.msk [vmem:[#allocation2 + $0x190] sm:$0xff] %vm2986, %v1948
      %3938 = vst.msk [vmem:[#allocation2 + $0x198] sm:$0xff] %vm2986, %v1949
      %3939 = vst.msk [vmem:[#allocation2 + $0x1a0] sm:$0xff] %vm2986, %v1950
      %3940 = vst.msk [vmem:[#allocation2 + $0x1a8] sm:$0xff] %vm2986, %v1951
      %3941 = vst.msk [vmem:[#allocation2 + $0x1b0] sm:$0xff] %vm2986, %v1952
      %3942 = vst.msk [vmem:[#allocation2 + $0x1b8] sm:$0xff] %vm2986, %v1953
      %3943 = vst.msk [vmem:[#allocation2 + $0x1c0] sm:$0xff] %vm2986, %v1954
      %3944 = vst.msk [vmem:[#allocation2 + $0x1c8] sm:$0xff] %vm2986, %v1955
      %3945 = vst.msk [vmem:[#allocation2 + $0x1d0] sm:$0xff] %vm2986, %v1956
      %3946 = vst.msk [vmem:[#allocation2 + $0x1d8] sm:$0xff] %vm2986, %v1957
      %3947 = vst.msk [vmem:[#allocation2 + $0x1e0] sm:$0xff] %vm2986, %v1958
      %3948 = vst.msk [vmem:[#allocation2 + $0x1e8] sm:$0xff] %vm2986, %v1959
      %3949 = vst.msk [vmem:[#allocation2 + $0x1f0] sm:$0xff] %vm2986, %v1960
      %3950 = vst.msk [vmem:[#allocation2 + $0x1f8] sm:$0xff] %vm2986, %v1961
      %p3951 = scmp.eq.s32.totalorder %s27, 2
      // Predicated region
      $region61: #{default_encoder_forward.3} parent=55 // pred_check
        %p3952 = pneg %p3951
      $region62: #{default_encoder_forward.3} parent=55 // pred_check_branch
        %3954 = sbr.rel (%p3952) target = $region64
      $region63: #{default_encoder_forward.3} parent=55 // pred_region
        %v3955 = vld [vmem:[#allocation3] sm:$0xff]
        %v3956 = vld [vmem:[#allocation3 + $0x8] sm:$0xff]
        %v3957 = vld [vmem:[#allocation3 + $0x10] sm:$0xff]
        %v3958 = vld [vmem:[#allocation3 + $0x18] sm:$0xff]
        %v3959 = vld [vmem:[#allocation3 + $0x20] sm:$0xff]
        %v3960 = vld [vmem:[#allocation3 + $0x28] sm:$0xff]
        %v3961 = vld [vmem:[#allocation3 + $0x30] sm:$0xff]
        %v3962 = vld [vmem:[#allocation3 + $0x38] sm:$0xff]
        %v3963 = vld [vmem:[#allocation3 + $0x40] sm:$0xff]
        %v3964 = vld [vmem:[#allocation3 + $0x48] sm:$0xff]
        %v3965 = vld [vmem:[#allocation3 + $0x50] sm:$0xff]
        %v3966 = vld [vmem:[#allocation3 + $0x58] sm:$0xff]
        %v3967 = vld [vmem:[#allocation3 + $0x60] sm:$0xff]
        %v3968 = vld [vmem:[#allocation3 + $0x68] sm:$0xff]
        %v3969 = vld [vmem:[#allocation3 + $0x70] sm:$0xff]
        %v3970 = vld [vmem:[#allocation3 + $0x78] sm:$0xff]
        %v3971 = vld [vmem:[#allocation3 + $0x80] sm:$0xff]
        %v3972 = vld [vmem:[#allocation3 + $0x88] sm:$0xff]
        %v3973 = vld [vmem:[#allocation3 + $0x90] sm:$0xff]
        %v3974 = vld [vmem:[#allocation3 + $0x98] sm:$0xff]
        %v3975 = vld [vmem:[#allocation3 + $0xa0] sm:$0xff]
        %v3976 = vld [vmem:[#allocation3 + $0xa8] sm:$0xff]
        %v3977 = vld [vmem:[#allocation3 + $0xb0] sm:$0xff]
        %v3978 = vld [vmem:[#allocation3 + $0xb8] sm:$0xff]
        %v3979 = vld [vmem:[#allocation3 + $0xc0] sm:$0xff]
        %v3980 = vld [vmem:[#allocation3 + $0xc8] sm:$0xff]
        %v3981 = vld [vmem:[#allocation3 + $0xd0] sm:$0xff]
        %v3982 = vld [vmem:[#allocation3 + $0xd8] sm:$0xff]
        %v3983 = vld [vmem:[#allocation3 + $0xe0] sm:$0xff]
        %v3984 = vld [vmem:[#allocation3 + $0xe8] sm:$0xff]
        %v3985 = vld [vmem:[#allocation3 + $0xf0] sm:$0xff]
        %v3986 = vld [vmem:[#allocation3 + $0xf8] sm:$0xff]
        %v3987 = vld [vmem:[#allocation3 + $0x100] sm:$0xff]
        %v3988 = vld [vmem:[#allocation3 + $0x108] sm:$0xff]
        %v3989 = vld [vmem:[#allocation3 + $0x110] sm:$0xff]
        %v3990 = vld [vmem:[#allocation3 + $0x118] sm:$0xff]
        %v3991 = vld [vmem:[#allocation3 + $0x120] sm:$0xff]
        %v3992 = vld [vmem:[#allocation3 + $0x128] sm:$0xff]
        %v3993 = vld [vmem:[#allocation3 + $0x130] sm:$0xff]
        %v3994 = vld [vmem:[#allocation3 + $0x138] sm:$0xff]
        %v3995 = vld [vmem:[#allocation3 + $0x140] sm:$0xff]
        %v3996 = vld [vmem:[#allocation3 + $0x148] sm:$0xff]
        %v3997 = vld [vmem:[#allocation3 + $0x150] sm:$0xff]
        %v3998 = vld [vmem:[#allocation3 + $0x158] sm:$0xff]
        %v3999 = vld [vmem:[#allocation3 + $0x160] sm:$0xff]
        %v4000 = vld [vmem:[#allocation3 + $0x168] sm:$0xff]
        %v4001 = vld [vmem:[#allocation3 + $0x170] sm:$0xff]
        %v4002 = vld [vmem:[#allocation3 + $0x178] sm:$0xff]
        %v4003 = vld [vmem:[#allocation3 + $0x180] sm:$0xff]
        %v4004 = vld [vmem:[#allocation3 + $0x188] sm:$0xff]
        %v4005 = vld [vmem:[#allocation3 + $0x190] sm:$0xff]
        %v4006 = vld [vmem:[#allocation3 + $0x198] sm:$0xff]
        %v4007 = vld [vmem:[#allocation3 + $0x1a0] sm:$0xff]
        %v4008 = vld [vmem:[#allocation3 + $0x1a8] sm:$0xff]
        %v4009 = vld [vmem:[#allocation3 + $0x1b0] sm:$0xff]
        %v4010 = vld [vmem:[#allocation3 + $0x1b8] sm:$0xff]
        %v4011 = vld [vmem:[#allocation3 + $0x1c0] sm:$0xff]
        %v4012 = vld [vmem:[#allocation3 + $0x1c8] sm:$0xff]
        %v4013 = vld [vmem:[#allocation3 + $0x1d0] sm:$0xff]
        %v4014 = vld [vmem:[#allocation3 + $0x1d8] sm:$0xff]
        %v4015 = vld [vmem:[#allocation3 + $0x1e0] sm:$0xff]
        %v4016 = vld [vmem:[#allocation3 + $0x1e8] sm:$0xff]
        %v4017 = vld [vmem:[#allocation3 + $0x1f0] sm:$0xff]
        %v4018 = vld [vmem:[#allocation3 + $0x1f8] sm:$0xff]
        %v4019 = vrcp.pop %v3955
        %v4020 = vmul.f32 %v3955, %v4019
        %v4021 = vsub.f32 1.0, %v4020
        %v4022 = vmul.f32 %v4019, %v4021
        %v4023 = vadd.f32 %v4019, %v4022
        %vm4024 = vweird.f32 %v3955
        %vm4025 = vweird.f32 %v4019
        %vm4026 = vmor %vm4024, %vm4025
        %v4027 = vsel %vm4026, %v4019, %v4023
        %v4028 = vand.u32 2147483647, %v3955
        %vm4029 = vcmp.eq.f32.partialorder %v4028, 8.507059e+37
        %v4030 = vand.u32 %v3955, 2147483648
        %v4031 = vor.u32 1.1754944e-38, %v4030
        %v4032 = vsel %vm4029, %v4031, %v4027
        %v4033 = vmul.f32 1.0, %v4032
        %v4034 = vrcp.pop %v3956
        %v4035 = vmul.f32 %v3956, %v4034
        %v4036 = vsub.f32 1.0, %v4035
        %v4037 = vmul.f32 %v4034, %v4036
        %v4038 = vadd.f32 %v4034, %v4037
        %vm4039 = vweird.f32 %v3956
        %vm4040 = vweird.f32 %v4034
        %vm4041 = vmor %vm4039, %vm4040
        %v4042 = vsel %vm4041, %v4034, %v4038
        %v4043 = vand.u32 2147483647, %v3956
        %vm4044 = vcmp.eq.f32.partialorder %v4043, 8.507059e+37
        %v4045 = vand.u32 %v3956, 2147483648
        %v4046 = vor.u32 1.1754944e-38, %v4045
        %v4047 = vsel %vm4044, %v4046, %v4042
        %v4048 = vmul.f32 1.0, %v4047
        %v4049 = vrcp.pop %v3957
        %v4050 = vmul.f32 %v3957, %v4049
        %v4051 = vsub.f32 1.0, %v4050
        %v4052 = vmul.f32 %v4049, %v4051
        %v4053 = vadd.f32 %v4049, %v4052
        %vm4054 = vweird.f32 %v3957
        %vm4055 = vweird.f32 %v4049
        %vm4056 = vmor %vm4054, %vm4055
        %v4057 = vsel %vm4056, %v4049, %v4053
        %v4058 = vand.u32 2147483647, %v3957
        %vm4059 = vcmp.eq.f32.partialorder %v4058, 8.507059e+37
        %v4060 = vand.u32 %v3957, 2147483648
        %v4061 = vor.u32 1.1754944e-38, %v4060
        %v4062 = vsel %vm4059, %v4061, %v4057
        %v4063 = vmul.f32 1.0, %v4062
        %v4064 = vrcp.pop %v3958
        %v4065 = vmul.f32 %v3958, %v4064
        %v4066 = vsub.f32 1.0, %v4065
        %v4067 = vmul.f32 %v4064, %v4066
        %v4068 = vadd.f32 %v4064, %v4067
        %vm4069 = vweird.f32 %v3958
        %vm4070 = vweird.f32 %v4064
        %vm4071 = vmor %vm4069, %vm4070
        %v4072 = vsel %vm4071, %v4064, %v4068
        %v4073 = vand.u32 2147483647, %v3958
        %vm4074 = vcmp.eq.f32.partialorder %v4073, 8.507059e+37
        %v4075 = vand.u32 %v3958, 2147483648
        %v4076 = vor.u32 1.1754944e-38, %v4075
        %v4077 = vsel %vm4074, %v4076, %v4072
        %v4078 = vmul.f32 1.0, %v4077
        %v4079 = vrcp.pop %v3959
        %v4080 = vmul.f32 %v3959, %v4079
        %v4081 = vsub.f32 1.0, %v4080
        %v4082 = vmul.f32 %v4079, %v4081
        %v4083 = vadd.f32 %v4079, %v4082
        %vm4084 = vweird.f32 %v3959
        %vm4085 = vweird.f32 %v4079
        %vm4086 = vmor %vm4084, %vm4085
        %v4087 = vsel %vm4086, %v4079, %v4083
        %v4088 = vand.u32 2147483647, %v3959
        %vm4089 = vcmp.eq.f32.partialorder %v4088, 8.507059e+37
        %v4090 = vand.u32 %v3959, 2147483648
        %v4091 = vor.u32 1.1754944e-38, %v4090
        %v4092 = vsel %vm4089, %v4091, %v4087
        %v4093 = vmul.f32 1.0, %v4092
        %v4094 = vrcp.pop %v3960
        %v4095 = vmul.f32 %v3960, %v4094
        %v4096 = vsub.f32 1.0, %v4095
        %v4097 = vmul.f32 %v4094, %v4096
        %v4098 = vadd.f32 %v4094, %v4097
        %vm4099 = vweird.f32 %v3960
        %vm4100 = vweird.f32 %v4094
        %vm4101 = vmor %vm4099, %vm4100
        %v4102 = vsel %vm4101, %v4094, %v4098
        %v4103 = vand.u32 2147483647, %v3960
        %vm4104 = vcmp.eq.f32.partialorder %v4103, 8.507059e+37
        %v4105 = vand.u32 %v3960, 2147483648
        %v4106 = vor.u32 1.1754944e-38, %v4105
        %v4107 = vsel %vm4104, %v4106, %v4102
        %v4108 = vmul.f32 1.0, %v4107
        %v4109 = vrcp.pop %v3961
        %v4110 = vmul.f32 %v3961, %v4109
        %v4111 = vsub.f32 1.0, %v4110
        %v4112 = vmul.f32 %v4109, %v4111
        %v4113 = vadd.f32 %v4109, %v4112
        %vm4114 = vweird.f32 %v3961
        %vm4115 = vweird.f32 %v4109
        %vm4116 = vmor %vm4114, %vm4115
        %v4117 = vsel %vm4116, %v4109, %v4113
        %v4118 = vand.u32 2147483647, %v3961
        %vm4119 = vcmp.eq.f32.partialorder %v4118, 8.507059e+37
        %v4120 = vand.u32 %v3961, 2147483648
        %v4121 = vor.u32 1.1754944e-38, %v4120
        %v4122 = vsel %vm4119, %v4121, %v4117
        %v4123 = vmul.f32 1.0, %v4122
        %v4124 = vrcp.pop %v3962
        %v4125 = vmul.f32 %v3962, %v4124
        %v4126 = vsub.f32 1.0, %v4125
        %v4127 = vmul.f32 %v4124, %v4126
        %v4128 = vadd.f32 %v4124, %v4127
        %vm4129 = vweird.f32 %v3962
        %vm4130 = vweird.f32 %v4124
        %vm4131 = vmor %vm4129, %vm4130
        %v4132 = vsel %vm4131, %v4124, %v4128
        %v4133 = vand.u32 2147483647, %v3962
        %vm4134 = vcmp.eq.f32.partialorder %v4133, 8.507059e+37
        %v4135 = vand.u32 %v3962, 2147483648
        %v4136 = vor.u32 1.1754944e-38, %v4135
        %v4137 = vsel %vm4134, %v4136, %v4132
        %v4138 = vmul.f32 1.0, %v4137
        %v4139 = vrcp.pop %v3963
        %v4140 = vmul.f32 %v3963, %v4139
        %v4141 = vsub.f32 1.0, %v4140
        %v4142 = vmul.f32 %v4139, %v4141
        %v4143 = vadd.f32 %v4139, %v4142
        %vm4144 = vweird.f32 %v3963
        %vm4145 = vweird.f32 %v4139
        %vm4146 = vmor %vm4144, %vm4145
        %v4147 = vsel %vm4146, %v4139, %v4143
        %v4148 = vand.u32 2147483647, %v3963
        %vm4149 = vcmp.eq.f32.partialorder %v4148, 8.507059e+37
        %v4150 = vand.u32 %v3963, 2147483648
        %v4151 = vor.u32 1.1754944e-38, %v4150
        %v4152 = vsel %vm4149, %v4151, %v4147
        %v4153 = vmul.f32 1.0, %v4152
        %v4154 = vrcp.pop %v3964
        %v4155 = vmul.f32 %v3964, %v4154
        %v4156 = vsub.f32 1.0, %v4155
        %v4157 = vmul.f32 %v4154, %v4156
        %v4158 = vadd.f32 %v4154, %v4157
        %vm4159 = vweird.f32 %v3964
        %vm4160 = vweird.f32 %v4154
        %vm4161 = vmor %vm4159, %vm4160
        %v4162 = vsel %vm4161, %v4154, %v4158
        %v4163 = vand.u32 2147483647, %v3964
        %vm4164 = vcmp.eq.f32.partialorder %v4163, 8.507059e+37
        %v4165 = vand.u32 %v3964, 2147483648
        %v4166 = vor.u32 1.1754944e-38, %v4165
        %v4167 = vsel %vm4164, %v4166, %v4162
        %v4168 = vmul.f32 1.0, %v4167
        %v4169 = vrcp.pop %v3965
        %v4170 = vmul.f32 %v3965, %v4169
        %v4171 = vsub.f32 1.0, %v4170
        %v4172 = vmul.f32 %v4169, %v4171
        %v4173 = vadd.f32 %v4169, %v4172
        %vm4174 = vweird.f32 %v3965
        %vm4175 = vweird.f32 %v4169
        %vm4176 = vmor %vm4174, %vm4175
        %v4177 = vsel %vm4176, %v4169, %v4173
        %v4178 = vand.u32 2147483647, %v3965
        %vm4179 = vcmp.eq.f32.partialorder %v4178, 8.507059e+37
        %v4180 = vand.u32 %v3965, 2147483648
        %v4181 = vor.u32 1.1754944e-38, %v4180
        %v4182 = vsel %vm4179, %v4181, %v4177
        %v4183 = vmul.f32 1.0, %v4182
        %v4184 = vrcp.pop %v3966
        %v4185 = vmul.f32 %v3966, %v4184
        %v4186 = vsub.f32 1.0, %v4185
        %v4187 = vmul.f32 %v4184, %v4186
        %v4188 = vadd.f32 %v4184, %v4187
        %vm4189 = vweird.f32 %v3966
        %vm4190 = vweird.f32 %v4184
        %vm4191 = vmor %vm4189, %vm4190
        %v4192 = vsel %vm4191, %v4184, %v4188
        %v4193 = vand.u32 2147483647, %v3966
        %vm4194 = vcmp.eq.f32.partialorder %v4193, 8.507059e+37
        %v4195 = vand.u32 %v3966, 2147483648
        %v4196 = vor.u32 1.1754944e-38, %v4195
        %v4197 = vsel %vm4194, %v4196, %v4192
        %v4198 = vmul.f32 1.0, %v4197
        %v4199 = vrcp.pop %v3967
        %v4200 = vmul.f32 %v3967, %v4199
        %v4201 = vsub.f32 1.0, %v4200
        %v4202 = vmul.f32 %v4199, %v4201
        %v4203 = vadd.f32 %v4199, %v4202
        %vm4204 = vweird.f32 %v3967
        %vm4205 = vweird.f32 %v4199
        %vm4206 = vmor %vm4204, %vm4205
        %v4207 = vsel %vm4206, %v4199, %v4203
        %v4208 = vand.u32 2147483647, %v3967
        %vm4209 = vcmp.eq.f32.partialorder %v4208, 8.507059e+37
        %v4210 = vand.u32 %v3967, 2147483648
        %v4211 = vor.u32 1.1754944e-38, %v4210
        %v4212 = vsel %vm4209, %v4211, %v4207
        %v4213 = vmul.f32 1.0, %v4212
        %v4214 = vrcp.pop %v3968
        %v4215 = vmul.f32 %v3968, %v4214
        %v4216 = vsub.f32 1.0, %v4215
        %v4217 = vmul.f32 %v4214, %v4216
        %v4218 = vadd.f32 %v4214, %v4217
        %vm4219 = vweird.f32 %v3968
        %vm4220 = vweird.f32 %v4214
        %vm4221 = vmor %vm4219, %vm4220
        %v4222 = vsel %vm4221, %v4214, %v4218
        %v4223 = vand.u32 2147483647, %v3968
        %vm4224 = vcmp.eq.f32.partialorder %v4223, 8.507059e+37
        %v4225 = vand.u32 %v3968, 2147483648
        %v4226 = vor.u32 1.1754944e-38, %v4225
        %v4227 = vsel %vm4224, %v4226, %v4222
        %v4228 = vmul.f32 1.0, %v4227
        %v4229 = vrcp.pop %v3969
        %v4230 = vmul.f32 %v3969, %v4229
        %v4231 = vsub.f32 1.0, %v4230
        %v4232 = vmul.f32 %v4229, %v4231
        %v4233 = vadd.f32 %v4229, %v4232
        %vm4234 = vweird.f32 %v3969
        %vm4235 = vweird.f32 %v4229
        %vm4236 = vmor %vm4234, %vm4235
        %v4237 = vsel %vm4236, %v4229, %v4233
        %v4238 = vand.u32 2147483647, %v3969
        %vm4239 = vcmp.eq.f32.partialorder %v4238, 8.507059e+37
        %v4240 = vand.u32 %v3969, 2147483648
        %v4241 = vor.u32 1.1754944e-38, %v4240
        %v4242 = vsel %vm4239, %v4241, %v4237
        %v4243 = vmul.f32 1.0, %v4242
        %v4244 = vrcp.pop %v3970
        %v4245 = vmul.f32 %v3970, %v4244
        %v4246 = vsub.f32 1.0, %v4245
        %v4247 = vmul.f32 %v4244, %v4246
        %v4248 = vadd.f32 %v4244, %v4247
        %vm4249 = vweird.f32 %v3970
        %vm4250 = vweird.f32 %v4244
        %vm4251 = vmor %vm4249, %vm4250
        %v4252 = vsel %vm4251, %v4244, %v4248
        %v4253 = vand.u32 2147483647, %v3970
        %vm4254 = vcmp.eq.f32.partialorder %v4253, 8.507059e+37
        %v4255 = vand.u32 %v3970, 2147483648
        %v4256 = vor.u32 1.1754944e-38, %v4255
        %v4257 = vsel %vm4254, %v4256, %v4252
        %v4258 = vmul.f32 1.0, %v4257
        %v4259 = vrcp.pop %v3971
        %v4260 = vmul.f32 %v3971, %v4259
        %v4261 = vsub.f32 1.0, %v4260
        %v4262 = vmul.f32 %v4259, %v4261
        %v4263 = vadd.f32 %v4259, %v4262
        %vm4264 = vweird.f32 %v3971
        %vm4265 = vweird.f32 %v4259
        %vm4266 = vmor %vm4264, %vm4265
        %v4267 = vsel %vm4266, %v4259, %v4263
        %v4268 = vand.u32 2147483647, %v3971
        %vm4269 = vcmp.eq.f32.partialorder %v4268, 8.507059e+37
        %v4270 = vand.u32 %v3971, 2147483648
        %v4271 = vor.u32 1.1754944e-38, %v4270
        %v4272 = vsel %vm4269, %v4271, %v4267
        %v4273 = vmul.f32 1.0, %v4272
        %v4274 = vrcp.pop %v3972
        %v4275 = vmul.f32 %v3972, %v4274
        %v4276 = vsub.f32 1.0, %v4275
        %v4277 = vmul.f32 %v4274, %v4276
        %v4278 = vadd.f32 %v4274, %v4277
        %vm4279 = vweird.f32 %v3972
        %vm4280 = vweird.f32 %v4274
        %vm4281 = vmor %vm4279, %vm4280
        %v4282 = vsel %vm4281, %v4274, %v4278
        %v4283 = vand.u32 2147483647, %v3972
        %vm4284 = vcmp.eq.f32.partialorder %v4283, 8.507059e+37
        %v4285 = vand.u32 %v3972, 2147483648
        %v4286 = vor.u32 1.1754944e-38, %v4285
        %v4287 = vsel %vm4284, %v4286, %v4282
        %v4288 = vmul.f32 1.0, %v4287
        %v4289 = vrcp.pop %v3973
        %v4290 = vmul.f32 %v3973, %v4289
        %v4291 = vsub.f32 1.0, %v4290
        %v4292 = vmul.f32 %v4289, %v4291
        %v4293 = vadd.f32 %v4289, %v4292
        %vm4294 = vweird.f32 %v3973
        %vm4295 = vweird.f32 %v4289
        %vm4296 = vmor %vm4294, %vm4295
        %v4297 = vsel %vm4296, %v4289, %v4293
        %v4298 = vand.u32 2147483647, %v3973
        %vm4299 = vcmp.eq.f32.partialorder %v4298, 8.507059e+37
        %v4300 = vand.u32 %v3973, 2147483648
        %v4301 = vor.u32 1.1754944e-38, %v4300
        %v4302 = vsel %vm4299, %v4301, %v4297
        %v4303 = vmul.f32 1.0, %v4302
        %v4304 = vrcp.pop %v3974
        %v4305 = vmul.f32 %v3974, %v4304
        %v4306 = vsub.f32 1.0, %v4305
        %v4307 = vmul.f32 %v4304, %v4306
        %v4308 = vadd.f32 %v4304, %v4307
        %vm4309 = vweird.f32 %v3974
        %vm4310 = vweird.f32 %v4304
        %vm4311 = vmor %vm4309, %vm4310
        %v4312 = vsel %vm4311, %v4304, %v4308
        %v4313 = vand.u32 2147483647, %v3974
        %vm4314 = vcmp.eq.f32.partialorder %v4313, 8.507059e+37
        %v4315 = vand.u32 %v3974, 2147483648
        %v4316 = vor.u32 1.1754944e-38, %v4315
        %v4317 = vsel %vm4314, %v4316, %v4312
        %v4318 = vmul.f32 1.0, %v4317
        %v4319 = vrcp.pop %v3975
        %v4320 = vmul.f32 %v3975, %v4319
        %v4321 = vsub.f32 1.0, %v4320
        %v4322 = vmul.f32 %v4319, %v4321
        %v4323 = vadd.f32 %v4319, %v4322
        %vm4324 = vweird.f32 %v3975
        %vm4325 = vweird.f32 %v4319
        %vm4326 = vmor %vm4324, %vm4325
        %v4327 = vsel %vm4326, %v4319, %v4323
        %v4328 = vand.u32 2147483647, %v3975
        %vm4329 = vcmp.eq.f32.partialorder %v4328, 8.507059e+37
        %v4330 = vand.u32 %v3975, 2147483648
        %v4331 = vor.u32 1.1754944e-38, %v4330
        %v4332 = vsel %vm4329, %v4331, %v4327
        %v4333 = vmul.f32 1.0, %v4332
        %v4334 = vrcp.pop %v3976
        %v4335 = vmul.f32 %v3976, %v4334
        %v4336 = vsub.f32 1.0, %v4335
        %v4337 = vmul.f32 %v4334, %v4336
        %v4338 = vadd.f32 %v4334, %v4337
        %vm4339 = vweird.f32 %v3976
        %vm4340 = vweird.f32 %v4334
        %vm4341 = vmor %vm4339, %vm4340
        %v4342 = vsel %vm4341, %v4334, %v4338
        %v4343 = vand.u32 2147483647, %v3976
        %vm4344 = vcmp.eq.f32.partialorder %v4343, 8.507059e+37
        %v4345 = vand.u32 %v3976, 2147483648
        %v4346 = vor.u32 1.1754944e-38, %v4345
        %v4347 = vsel %vm4344, %v4346, %v4342
        %v4348 = vmul.f32 1.0, %v4347
        %v4349 = vrcp.pop %v3977
        %v4350 = vmul.f32 %v3977, %v4349
        %v4351 = vsub.f32 1.0, %v4350
        %v4352 = vmul.f32 %v4349, %v4351
        %v4353 = vadd.f32 %v4349, %v4352
        %vm4354 = vweird.f32 %v3977
        %vm4355 = vweird.f32 %v4349
        %vm4356 = vmor %vm4354, %vm4355
        %v4357 = vsel %vm4356, %v4349, %v4353
        %v4358 = vand.u32 2147483647, %v3977
        %vm4359 = vcmp.eq.f32.partialorder %v4358, 8.507059e+37
        %v4360 = vand.u32 %v3977, 2147483648
        %v4361 = vor.u32 1.1754944e-38, %v4360
        %v4362 = vsel %vm4359, %v4361, %v4357
        %v4363 = vmul.f32 1.0, %v4362
        %v4364 = vrcp.pop %v3978
        %v4365 = vmul.f32 %v3978, %v4364
        %v4366 = vsub.f32 1.0, %v4365
        %v4367 = vmul.f32 %v4364, %v4366
        %v4368 = vadd.f32 %v4364, %v4367
        %vm4369 = vweird.f32 %v3978
        %vm4370 = vweird.f32 %v4364
        %vm4371 = vmor %vm4369, %vm4370
        %v4372 = vsel %vm4371, %v4364, %v4368
        %v4373 = vand.u32 2147483647, %v3978
        %vm4374 = vcmp.eq.f32.partialorder %v4373, 8.507059e+37
        %v4375 = vand.u32 %v3978, 2147483648
        %v4376 = vor.u32 1.1754944e-38, %v4375
        %v4377 = vsel %vm4374, %v4376, %v4372
        %v4378 = vmul.f32 1.0, %v4377
        %v4379 = vrcp.pop %v3979
        %v4380 = vmul.f32 %v3979, %v4379
        %v4381 = vsub.f32 1.0, %v4380
        %v4382 = vmul.f32 %v4379, %v4381
        %v4383 = vadd.f32 %v4379, %v4382
        %vm4384 = vweird.f32 %v3979
        %vm4385 = vweird.f32 %v4379
        %vm4386 = vmor %vm4384, %vm4385
        %v4387 = vsel %vm4386, %v4379, %v4383
        %v4388 = vand.u32 2147483647, %v3979
        %vm4389 = vcmp.eq.f32.partialorder %v4388, 8.507059e+37
        %v4390 = vand.u32 %v3979, 2147483648
        %v4391 = vor.u32 1.1754944e-38, %v4390
        %v4392 = vsel %vm4389, %v4391, %v4387
        %v4393 = vmul.f32 1.0, %v4392
        %v4394 = vrcp.pop %v3980
        %v4395 = vmul.f32 %v3980, %v4394
        %v4396 = vsub.f32 1.0, %v4395
        %v4397 = vmul.f32 %v4394, %v4396
        %v4398 = vadd.f32 %v4394, %v4397
        %vm4399 = vweird.f32 %v3980
        %vm4400 = vweird.f32 %v4394
        %vm4401 = vmor %vm4399, %vm4400
        %v4402 = vsel %vm4401, %v4394, %v4398
        %v4403 = vand.u32 2147483647, %v3980
        %vm4404 = vcmp.eq.f32.partialorder %v4403, 8.507059e+37
        %v4405 = vand.u32 %v3980, 2147483648
        %v4406 = vor.u32 1.1754944e-38, %v4405
        %v4407 = vsel %vm4404, %v4406, %v4402
        %v4408 = vmul.f32 1.0, %v4407
        %v4409 = vrcp.pop %v3981
        %v4410 = vmul.f32 %v3981, %v4409
        %v4411 = vsub.f32 1.0, %v4410
        %v4412 = vmul.f32 %v4409, %v4411
        %v4413 = vadd.f32 %v4409, %v4412
        %vm4414 = vweird.f32 %v3981
        %vm4415 = vweird.f32 %v4409
        %vm4416 = vmor %vm4414, %vm4415
        %v4417 = vsel %vm4416, %v4409, %v4413
        %v4418 = vand.u32 2147483647, %v3981
        %vm4419 = vcmp.eq.f32.partialorder %v4418, 8.507059e+37
        %v4420 = vand.u32 %v3981, 2147483648
        %v4421 = vor.u32 1.1754944e-38, %v4420
        %v4422 = vsel %vm4419, %v4421, %v4417
        %v4423 = vmul.f32 1.0, %v4422
        %v4424 = vrcp.pop %v3982
        %v4425 = vmul.f32 %v3982, %v4424
        %v4426 = vsub.f32 1.0, %v4425
        %v4427 = vmul.f32 %v4424, %v4426
        %v4428 = vadd.f32 %v4424, %v4427
        %vm4429 = vweird.f32 %v3982
        %vm4430 = vweird.f32 %v4424
        %vm4431 = vmor %vm4429, %vm4430
        %v4432 = vsel %vm4431, %v4424, %v4428
        %v4433 = vand.u32 2147483647, %v3982
        %vm4434 = vcmp.eq.f32.partialorder %v4433, 8.507059e+37
        %v4435 = vand.u32 %v3982, 2147483648
        %v4436 = vor.u32 1.1754944e-38, %v4435
        %v4437 = vsel %vm4434, %v4436, %v4432
        %v4438 = vmul.f32 1.0, %v4437
        %v4439 = vrcp.pop %v3983
        %v4440 = vmul.f32 %v3983, %v4439
        %v4441 = vsub.f32 1.0, %v4440
        %v4442 = vmul.f32 %v4439, %v4441
        %v4443 = vadd.f32 %v4439, %v4442
        %vm4444 = vweird.f32 %v3983
        %vm4445 = vweird.f32 %v4439
        %vm4446 = vmor %vm4444, %vm4445
        %v4447 = vsel %vm4446, %v4439, %v4443
        %v4448 = vand.u32 2147483647, %v3983
        %vm4449 = vcmp.eq.f32.partialorder %v4448, 8.507059e+37
        %v4450 = vand.u32 %v3983, 2147483648
        %v4451 = vor.u32 1.1754944e-38, %v4450
        %v4452 = vsel %vm4449, %v4451, %v4447
        %v4453 = vmul.f32 1.0, %v4452
        %v4454 = vrcp.pop %v3984
        %v4455 = vmul.f32 %v3984, %v4454
        %v4456 = vsub.f32 1.0, %v4455
        %v4457 = vmul.f32 %v4454, %v4456
        %v4458 = vadd.f32 %v4454, %v4457
        %vm4459 = vweird.f32 %v3984
        %vm4460 = vweird.f32 %v4454
        %vm4461 = vmor %vm4459, %vm4460
        %v4462 = vsel %vm4461, %v4454, %v4458
        %v4463 = vand.u32 2147483647, %v3984
        %vm4464 = vcmp.eq.f32.partialorder %v4463, 8.507059e+37
        %v4465 = vand.u32 %v3984, 2147483648
        %v4466 = vor.u32 1.1754944e-38, %v4465
        %v4467 = vsel %vm4464, %v4466, %v4462
        %v4468 = vmul.f32 1.0, %v4467
        %v4469 = vrcp.pop %v3985
        %v4470 = vmul.f32 %v3985, %v4469
        %v4471 = vsub.f32 1.0, %v4470
        %v4472 = vmul.f32 %v4469, %v4471
        %v4473 = vadd.f32 %v4469, %v4472
        %vm4474 = vweird.f32 %v3985
        %vm4475 = vweird.f32 %v4469
        %vm4476 = vmor %vm4474, %vm4475
        %v4477 = vsel %vm4476, %v4469, %v4473
        %v4478 = vand.u32 2147483647, %v3985
        %vm4479 = vcmp.eq.f32.partialorder %v4478, 8.507059e+37
        %v4480 = vand.u32 %v3985, 2147483648
        %v4481 = vor.u32 1.1754944e-38, %v4480
        %v4482 = vsel %vm4479, %v4481, %v4477
        %v4483 = vmul.f32 1.0, %v4482
        %v4484 = vrcp.pop %v3986
        %v4485 = vmul.f32 %v3986, %v4484
        %v4486 = vsub.f32 1.0, %v4485
        %v4487 = vmul.f32 %v4484, %v4486
        %v4488 = vadd.f32 %v4484, %v4487
        %vm4489 = vweird.f32 %v3986
        %vm4490 = vweird.f32 %v4484
        %vm4491 = vmor %vm4489, %vm4490
        %v4492 = vsel %vm4491, %v4484, %v4488
        %v4493 = vand.u32 2147483647, %v3986
        %vm4494 = vcmp.eq.f32.partialorder %v4493, 8.507059e+37
        %v4495 = vand.u32 %v3986, 2147483648
        %v4496 = vor.u32 1.1754944e-38, %v4495
        %v4497 = vsel %vm4494, %v4496, %v4492
        %v4498 = vmul.f32 1.0, %v4497
        %v4499 = vrcp.pop %v3987
        %v4500 = vmul.f32 %v3987, %v4499
        %v4501 = vsub.f32 1.0, %v4500
        %v4502 = vmul.f32 %v4499, %v4501
        %v4503 = vadd.f32 %v4499, %v4502
        %vm4504 = vweird.f32 %v3987
        %vm4505 = vweird.f32 %v4499
        %vm4506 = vmor %vm4504, %vm4505
        %v4507 = vsel %vm4506, %v4499, %v4503
        %v4508 = vand.u32 2147483647, %v3987
        %vm4509 = vcmp.eq.f32.partialorder %v4508, 8.507059e+37
        %v4510 = vand.u32 %v3987, 2147483648
        %v4511 = vor.u32 1.1754944e-38, %v4510
        %v4512 = vsel %vm4509, %v4511, %v4507
        %v4513 = vmul.f32 1.0, %v4512
        %v4514 = vrcp.pop %v3988
        %v4515 = vmul.f32 %v3988, %v4514
        %v4516 = vsub.f32 1.0, %v4515
        %v4517 = vmul.f32 %v4514, %v4516
        %v4518 = vadd.f32 %v4514, %v4517
        %vm4519 = vweird.f32 %v3988
        %vm4520 = vweird.f32 %v4514
        %vm4521 = vmor %vm4519, %vm4520
        %v4522 = vsel %vm4521, %v4514, %v4518
        %v4523 = vand.u32 2147483647, %v3988
        %vm4524 = vcmp.eq.f32.partialorder %v4523, 8.507059e+37
        %v4525 = vand.u32 %v3988, 2147483648
        %v4526 = vor.u32 1.1754944e-38, %v4525
        %v4527 = vsel %vm4524, %v4526, %v4522
        %v4528 = vmul.f32 1.0, %v4527
        %v4529 = vrcp.pop %v3989
        %v4530 = vmul.f32 %v3989, %v4529
        %v4531 = vsub.f32 1.0, %v4530
        %v4532 = vmul.f32 %v4529, %v4531
        %v4533 = vadd.f32 %v4529, %v4532
        %vm4534 = vweird.f32 %v3989
        %vm4535 = vweird.f32 %v4529
        %vm4536 = vmor %vm4534, %vm4535
        %v4537 = vsel %vm4536, %v4529, %v4533
        %v4538 = vand.u32 2147483647, %v3989
        %vm4539 = vcmp.eq.f32.partialorder %v4538, 8.507059e+37
        %v4540 = vand.u32 %v3989, 2147483648
        %v4541 = vor.u32 1.1754944e-38, %v4540
        %v4542 = vsel %vm4539, %v4541, %v4537
        %v4543 = vmul.f32 1.0, %v4542
        %v4544 = vrcp.pop %v3990
        %v4545 = vmul.f32 %v3990, %v4544
        %v4546 = vsub.f32 1.0, %v4545
        %v4547 = vmul.f32 %v4544, %v4546
        %v4548 = vadd.f32 %v4544, %v4547
        %vm4549 = vweird.f32 %v3990
        %vm4550 = vweird.f32 %v4544
        %vm4551 = vmor %vm4549, %vm4550
        %v4552 = vsel %vm4551, %v4544, %v4548
        %v4553 = vand.u32 2147483647, %v3990
        %vm4554 = vcmp.eq.f32.partialorder %v4553, 8.507059e+37
        %v4555 = vand.u32 %v3990, 2147483648
        %v4556 = vor.u32 1.1754944e-38, %v4555
        %v4557 = vsel %vm4554, %v4556, %v4552
        %v4558 = vmul.f32 1.0, %v4557
        %v4559 = vrcp.pop %v3991
        %v4560 = vmul.f32 %v3991, %v4559
        %v4561 = vsub.f32 1.0, %v4560
        %v4562 = vmul.f32 %v4559, %v4561
        %v4563 = vadd.f32 %v4559, %v4562
        %vm4564 = vweird.f32 %v3991
        %vm4565 = vweird.f32 %v4559
        %vm4566 = vmor %vm4564, %vm4565
        %v4567 = vsel %vm4566, %v4559, %v4563
        %v4568 = vand.u32 2147483647, %v3991
        %vm4569 = vcmp.eq.f32.partialorder %v4568, 8.507059e+37
        %v4570 = vand.u32 %v3991, 2147483648
        %v4571 = vor.u32 1.1754944e-38, %v4570
        %v4572 = vsel %vm4569, %v4571, %v4567
        %v4573 = vmul.f32 1.0, %v4572
        %v4574 = vrcp.pop %v3992
        %v4575 = vmul.f32 %v3992, %v4574
        %v4576 = vsub.f32 1.0, %v4575
        %v4577 = vmul.f32 %v4574, %v4576
        %v4578 = vadd.f32 %v4574, %v4577
        %vm4579 = vweird.f32 %v3992
        %vm4580 = vweird.f32 %v4574
        %vm4581 = vmor %vm4579, %vm4580
        %v4582 = vsel %vm4581, %v4574, %v4578
        %v4583 = vand.u32 2147483647, %v3992
        %vm4584 = vcmp.eq.f32.partialorder %v4583, 8.507059e+37
        %v4585 = vand.u32 %v3992, 2147483648
        %v4586 = vor.u32 1.1754944e-38, %v4585
        %v4587 = vsel %vm4584, %v4586, %v4582
        %v4588 = vmul.f32 1.0, %v4587
        %v4589 = vrcp.pop %v3993
        %v4590 = vmul.f32 %v3993, %v4589
        %v4591 = vsub.f32 1.0, %v4590
        %v4592 = vmul.f32 %v4589, %v4591
        %v4593 = vadd.f32 %v4589, %v4592
        %vm4594 = vweird.f32 %v3993
        %vm4595 = vweird.f32 %v4589
        %vm4596 = vmor %vm4594, %vm4595
        %v4597 = vsel %vm4596, %v4589, %v4593
        %v4598 = vand.u32 2147483647, %v3993
        %vm4599 = vcmp.eq.f32.partialorder %v4598, 8.507059e+37
        %v4600 = vand.u32 %v3993, 2147483648
        %v4601 = vor.u32 1.1754944e-38, %v4600
        %v4602 = vsel %vm4599, %v4601, %v4597
        %v4603 = vmul.f32 1.0, %v4602
        %v4604 = vrcp.pop %v3994
        %v4605 = vmul.f32 %v3994, %v4604
        %v4606 = vsub.f32 1.0, %v4605
        %v4607 = vmul.f32 %v4604, %v4606
        %v4608 = vadd.f32 %v4604, %v4607
        %vm4609 = vweird.f32 %v3994
        %vm4610 = vweird.f32 %v4604
        %vm4611 = vmor %vm4609, %vm4610
        %v4612 = vsel %vm4611, %v4604, %v4608
        %v4613 = vand.u32 2147483647, %v3994
        %vm4614 = vcmp.eq.f32.partialorder %v4613, 8.507059e+37
        %v4615 = vand.u32 %v3994, 2147483648
        %v4616 = vor.u32 1.1754944e-38, %v4615
        %v4617 = vsel %vm4614, %v4616, %v4612
        %v4618 = vmul.f32 1.0, %v4617
        %v4619 = vrcp.pop %v3995
        %v4620 = vmul.f32 %v3995, %v4619
        %v4621 = vsub.f32 1.0, %v4620
        %v4622 = vmul.f32 %v4619, %v4621
        %v4623 = vadd.f32 %v4619, %v4622
        %vm4624 = vweird.f32 %v3995
        %vm4625 = vweird.f32 %v4619
        %vm4626 = vmor %vm4624, %vm4625
        %v4627 = vsel %vm4626, %v4619, %v4623
        %v4628 = vand.u32 2147483647, %v3995
        %vm4629 = vcmp.eq.f32.partialorder %v4628, 8.507059e+37
        %v4630 = vand.u32 %v3995, 2147483648
        %v4631 = vor.u32 1.1754944e-38, %v4630
        %v4632 = vsel %vm4629, %v4631, %v4627
        %v4633 = vmul.f32 1.0, %v4632
        %v4634 = vrcp.pop %v3996
        %v4635 = vmul.f32 %v3996, %v4634
        %v4636 = vsub.f32 1.0, %v4635
        %v4637 = vmul.f32 %v4634, %v4636
        %v4638 = vadd.f32 %v4634, %v4637
        %vm4639 = vweird.f32 %v3996
        %vm4640 = vweird.f32 %v4634
        %vm4641 = vmor %vm4639, %vm4640
        %v4642 = vsel %vm4641, %v4634, %v4638
        %v4643 = vand.u32 2147483647, %v3996
        %vm4644 = vcmp.eq.f32.partialorder %v4643, 8.507059e+37
        %v4645 = vand.u32 %v3996, 2147483648
        %v4646 = vor.u32 1.1754944e-38, %v4645
        %v4647 = vsel %vm4644, %v4646, %v4642
        %v4648 = vmul.f32 1.0, %v4647
        %v4649 = vrcp.pop %v3997
        %v4650 = vmul.f32 %v3997, %v4649
        %v4651 = vsub.f32 1.0, %v4650
        %v4652 = vmul.f32 %v4649, %v4651
        %v4653 = vadd.f32 %v4649, %v4652
        %vm4654 = vweird.f32 %v3997
        %vm4655 = vweird.f32 %v4649
        %vm4656 = vmor %vm4654, %vm4655
        %v4657 = vsel %vm4656, %v4649, %v4653
        %v4658 = vand.u32 2147483647, %v3997
        %vm4659 = vcmp.eq.f32.partialorder %v4658, 8.507059e+37
        %v4660 = vand.u32 %v3997, 2147483648
        %v4661 = vor.u32 1.1754944e-38, %v4660
        %v4662 = vsel %vm4659, %v4661, %v4657
        %v4663 = vmul.f32 1.0, %v4662
        %v4664 = vrcp.pop %v3998
        %v4665 = vmul.f32 %v3998, %v4664
        %v4666 = vsub.f32 1.0, %v4665
        %v4667 = vmul.f32 %v4664, %v4666
        %v4668 = vadd.f32 %v4664, %v4667
        %vm4669 = vweird.f32 %v3998
        %vm4670 = vweird.f32 %v4664
        %vm4671 = vmor %vm4669, %vm4670
        %v4672 = vsel %vm4671, %v4664, %v4668
        %v4673 = vand.u32 2147483647, %v3998
        %vm4674 = vcmp.eq.f32.partialorder %v4673, 8.507059e+37
        %v4675 = vand.u32 %v3998, 2147483648
        %v4676 = vor.u32 1.1754944e-38, %v4675
        %v4677 = vsel %vm4674, %v4676, %v4672
        %v4678 = vmul.f32 1.0, %v4677
        %v4679 = vrcp.pop %v3999
        %v4680 = vmul.f32 %v3999, %v4679
        %v4681 = vsub.f32 1.0, %v4680
        %v4682 = vmul.f32 %v4679, %v4681
        %v4683 = vadd.f32 %v4679, %v4682
        %vm4684 = vweird.f32 %v3999
        %vm4685 = vweird.f32 %v4679
        %vm4686 = vmor %vm4684, %vm4685
        %v4687 = vsel %vm4686, %v4679, %v4683
        %v4688 = vand.u32 2147483647, %v3999
        %vm4689 = vcmp.eq.f32.partialorder %v4688, 8.507059e+37
        %v4690 = vand.u32 %v3999, 2147483648
        %v4691 = vor.u32 1.1754944e-38, %v4690
        %v4692 = vsel %vm4689, %v4691, %v4687
        %v4693 = vmul.f32 1.0, %v4692
        %v4694 = vrcp.pop %v4000
        %v4695 = vmul.f32 %v4000, %v4694
        %v4696 = vsub.f32 1.0, %v4695
        %v4697 = vmul.f32 %v4694, %v4696
        %v4698 = vadd.f32 %v4694, %v4697
        %vm4699 = vweird.f32 %v4000
        %vm4700 = vweird.f32 %v4694
        %vm4701 = vmor %vm4699, %vm4700
        %v4702 = vsel %vm4701, %v4694, %v4698
        %v4703 = vand.u32 2147483647, %v4000
        %vm4704 = vcmp.eq.f32.partialorder %v4703, 8.507059e+37
        %v4705 = vand.u32 %v4000, 2147483648
        %v4706 = vor.u32 1.1754944e-38, %v4705
        %v4707 = vsel %vm4704, %v4706, %v4702
        %v4708 = vmul.f32 1.0, %v4707
        %v4709 = vrcp.pop %v4001
        %v4710 = vmul.f32 %v4001, %v4709
        %v4711 = vsub.f32 1.0, %v4710
        %v4712 = vmul.f32 %v4709, %v4711
        %v4713 = vadd.f32 %v4709, %v4712
        %vm4714 = vweird.f32 %v4001
        %vm4715 = vweird.f32 %v4709
        %vm4716 = vmor %vm4714, %vm4715
        %v4717 = vsel %vm4716, %v4709, %v4713
        %v4718 = vand.u32 2147483647, %v4001
        %vm4719 = vcmp.eq.f32.partialorder %v4718, 8.507059e+37
        %v4720 = vand.u32 %v4001, 2147483648
        %v4721 = vor.u32 1.1754944e-38, %v4720
        %v4722 = vsel %vm4719, %v4721, %v4717
        %v4723 = vmul.f32 1.0, %v4722
        %v4724 = vrcp.pop %v4002
        %v4725 = vmul.f32 %v4002, %v4724
        %v4726 = vsub.f32 1.0, %v4725
        %v4727 = vmul.f32 %v4724, %v4726
        %v4728 = vadd.f32 %v4724, %v4727
        %vm4729 = vweird.f32 %v4002
        %vm4730 = vweird.f32 %v4724
        %vm4731 = vmor %vm4729, %vm4730
        %v4732 = vsel %vm4731, %v4724, %v4728
        %v4733 = vand.u32 2147483647, %v4002
        %vm4734 = vcmp.eq.f32.partialorder %v4733, 8.507059e+37
        %v4735 = vand.u32 %v4002, 2147483648
        %v4736 = vor.u32 1.1754944e-38, %v4735
        %v4737 = vsel %vm4734, %v4736, %v4732
        %v4738 = vmul.f32 1.0, %v4737
        %v4739 = vrcp.pop %v4003
        %v4740 = vmul.f32 %v4003, %v4739
        %v4741 = vsub.f32 1.0, %v4740
        %v4742 = vmul.f32 %v4739, %v4741
        %v4743 = vadd.f32 %v4739, %v4742
        %vm4744 = vweird.f32 %v4003
        %vm4745 = vweird.f32 %v4739
        %vm4746 = vmor %vm4744, %vm4745
        %v4747 = vsel %vm4746, %v4739, %v4743
        %v4748 = vand.u32 2147483647, %v4003
        %vm4749 = vcmp.eq.f32.partialorder %v4748, 8.507059e+37
        %v4750 = vand.u32 %v4003, 2147483648
        %v4751 = vor.u32 1.1754944e-38, %v4750
        %v4752 = vsel %vm4749, %v4751, %v4747
        %v4753 = vmul.f32 1.0, %v4752
        %v4754 = vrcp.pop %v4004
        %v4755 = vmul.f32 %v4004, %v4754
        %v4756 = vsub.f32 1.0, %v4755
        %v4757 = vmul.f32 %v4754, %v4756
        %v4758 = vadd.f32 %v4754, %v4757
        %vm4759 = vweird.f32 %v4004
        %vm4760 = vweird.f32 %v4754
        %vm4761 = vmor %vm4759, %vm4760
        %v4762 = vsel %vm4761, %v4754, %v4758
        %v4763 = vand.u32 2147483647, %v4004
        %vm4764 = vcmp.eq.f32.partialorder %v4763, 8.507059e+37
        %v4765 = vand.u32 %v4004, 2147483648
        %v4766 = vor.u32 1.1754944e-38, %v4765
        %v4767 = vsel %vm4764, %v4766, %v4762
        %v4768 = vmul.f32 1.0, %v4767
        %v4769 = vrcp.pop %v4005
        %v4770 = vmul.f32 %v4005, %v4769
        %v4771 = vsub.f32 1.0, %v4770
        %v4772 = vmul.f32 %v4769, %v4771
        %v4773 = vadd.f32 %v4769, %v4772
        %vm4774 = vweird.f32 %v4005
        %vm4775 = vweird.f32 %v4769
        %vm4776 = vmor %vm4774, %vm4775
        %v4777 = vsel %vm4776, %v4769, %v4773
        %v4778 = vand.u32 2147483647, %v4005
        %vm4779 = vcmp.eq.f32.partialorder %v4778, 8.507059e+37
        %v4780 = vand.u32 %v4005, 2147483648
        %v4781 = vor.u32 1.1754944e-38, %v4780
        %v4782 = vsel %vm4779, %v4781, %v4777
        %v4783 = vmul.f32 1.0, %v4782
        %v4784 = vrcp.pop %v4006
        %v4785 = vmul.f32 %v4006, %v4784
        %v4786 = vsub.f32 1.0, %v4785
        %v4787 = vmul.f32 %v4784, %v4786
        %v4788 = vadd.f32 %v4784, %v4787
        %vm4789 = vweird.f32 %v4006
        %vm4790 = vweird.f32 %v4784
        %vm4791 = vmor %vm4789, %vm4790
        %v4792 = vsel %vm4791, %v4784, %v4788
        %v4793 = vand.u32 2147483647, %v4006
        %vm4794 = vcmp.eq.f32.partialorder %v4793, 8.507059e+37
        %v4795 = vand.u32 %v4006, 2147483648
        %v4796 = vor.u32 1.1754944e-38, %v4795
        %v4797 = vsel %vm4794, %v4796, %v4792
        %v4798 = vmul.f32 1.0, %v4797
        %v4799 = vrcp.pop %v4007
        %v4800 = vmul.f32 %v4007, %v4799
        %v4801 = vsub.f32 1.0, %v4800
        %v4802 = vmul.f32 %v4799, %v4801
        %v4803 = vadd.f32 %v4799, %v4802
        %vm4804 = vweird.f32 %v4007
        %vm4805 = vweird.f32 %v4799
        %vm4806 = vmor %vm4804, %vm4805
        %v4807 = vsel %vm4806, %v4799, %v4803
        %v4808 = vand.u32 2147483647, %v4007
        %vm4809 = vcmp.eq.f32.partialorder %v4808, 8.507059e+37
        %v4810 = vand.u32 %v4007, 2147483648
        %v4811 = vor.u32 1.1754944e-38, %v4810
        %v4812 = vsel %vm4809, %v4811, %v4807
        %v4813 = vmul.f32 1.0, %v4812
        %v4814 = vrcp.pop %v4008
        %v4815 = vmul.f32 %v4008, %v4814
        %v4816 = vsub.f32 1.0, %v4815
        %v4817 = vmul.f32 %v4814, %v4816
        %v4818 = vadd.f32 %v4814, %v4817
        %vm4819 = vweird.f32 %v4008
        %vm4820 = vweird.f32 %v4814
        %vm4821 = vmor %vm4819, %vm4820
        %v4822 = vsel %vm4821, %v4814, %v4818
        %v4823 = vand.u32 2147483647, %v4008
        %vm4824 = vcmp.eq.f32.partialorder %v4823, 8.507059e+37
        %v4825 = vand.u32 %v4008, 2147483648
        %v4826 = vor.u32 1.1754944e-38, %v4825
        %v4827 = vsel %vm4824, %v4826, %v4822
        %v4828 = vmul.f32 1.0, %v4827
        %v4829 = vrcp.pop %v4009
        %v4830 = vmul.f32 %v4009, %v4829
        %v4831 = vsub.f32 1.0, %v4830
        %v4832 = vmul.f32 %v4829, %v4831
        %v4833 = vadd.f32 %v4829, %v4832
        %vm4834 = vweird.f32 %v4009
        %vm4835 = vweird.f32 %v4829
        %vm4836 = vmor %vm4834, %vm4835
        %v4837 = vsel %vm4836, %v4829, %v4833
        %v4838 = vand.u32 2147483647, %v4009
        %vm4839 = vcmp.eq.f32.partialorder %v4838, 8.507059e+37
        %v4840 = vand.u32 %v4009, 2147483648
        %v4841 = vor.u32 1.1754944e-38, %v4840
        %v4842 = vsel %vm4839, %v4841, %v4837
        %v4843 = vmul.f32 1.0, %v4842
        %v4844 = vrcp.pop %v4010
        %v4845 = vmul.f32 %v4010, %v4844
        %v4846 = vsub.f32 1.0, %v4845
        %v4847 = vmul.f32 %v4844, %v4846
        %v4848 = vadd.f32 %v4844, %v4847
        %vm4849 = vweird.f32 %v4010
        %vm4850 = vweird.f32 %v4844
        %vm4851 = vmor %vm4849, %vm4850
        %v4852 = vsel %vm4851, %v4844, %v4848
        %v4853 = vand.u32 2147483647, %v4010
        %vm4854 = vcmp.eq.f32.partialorder %v4853, 8.507059e+37
        %v4855 = vand.u32 %v4010, 2147483648
        %v4856 = vor.u32 1.1754944e-38, %v4855
        %v4857 = vsel %vm4854, %v4856, %v4852
        %v4858 = vmul.f32 1.0, %v4857
        %v4859 = vrcp.pop %v4011
        %v4860 = vmul.f32 %v4011, %v4859
        %v4861 = vsub.f32 1.0, %v4860
        %v4862 = vmul.f32 %v4859, %v4861
        %v4863 = vadd.f32 %v4859, %v4862
        %vm4864 = vweird.f32 %v4011
        %vm4865 = vweird.f32 %v4859
        %vm4866 = vmor %vm4864, %vm4865
        %v4867 = vsel %vm4866, %v4859, %v4863
        %v4868 = vand.u32 2147483647, %v4011
        %vm4869 = vcmp.eq.f32.partialorder %v4868, 8.507059e+37
        %v4870 = vand.u32 %v4011, 2147483648
        %v4871 = vor.u32 1.1754944e-38, %v4870
        %v4872 = vsel %vm4869, %v4871, %v4867
        %v4873 = vmul.f32 1.0, %v4872
        %v4874 = vrcp.pop %v4012
        %v4875 = vmul.f32 %v4012, %v4874
        %v4876 = vsub.f32 1.0, %v4875
        %v4877 = vmul.f32 %v4874, %v4876
        %v4878 = vadd.f32 %v4874, %v4877
        %vm4879 = vweird.f32 %v4012
        %vm4880 = vweird.f32 %v4874
        %vm4881 = vmor %vm4879, %vm4880
        %v4882 = vsel %vm4881, %v4874, %v4878
        %v4883 = vand.u32 2147483647, %v4012
        %vm4884 = vcmp.eq.f32.partialorder %v4883, 8.507059e+37
        %v4885 = vand.u32 %v4012, 2147483648
        %v4886 = vor.u32 1.1754944e-38, %v4885
        %v4887 = vsel %vm4884, %v4886, %v4882
        %v4888 = vmul.f32 1.0, %v4887
        %v4889 = vrcp.pop %v4013
        %v4890 = vmul.f32 %v4013, %v4889
        %v4891 = vsub.f32 1.0, %v4890
        %v4892 = vmul.f32 %v4889, %v4891
        %v4893 = vadd.f32 %v4889, %v4892
        %vm4894 = vweird.f32 %v4013
        %vm4895 = vweird.f32 %v4889
        %vm4896 = vmor %vm4894, %vm4895
        %v4897 = vsel %vm4896, %v4889, %v4893
        %v4898 = vand.u32 2147483647, %v4013
        %vm4899 = vcmp.eq.f32.partialorder %v4898, 8.507059e+37
        %v4900 = vand.u32 %v4013, 2147483648
        %v4901 = vor.u32 1.1754944e-38, %v4900
        %v4902 = vsel %vm4899, %v4901, %v4897
        %v4903 = vmul.f32 1.0, %v4902
        %v4904 = vrcp.pop %v4014
        %v4905 = vmul.f32 %v4014, %v4904
        %v4906 = vsub.f32 1.0, %v4905
        %v4907 = vmul.f32 %v4904, %v4906
        %v4908 = vadd.f32 %v4904, %v4907
        %vm4909 = vweird.f32 %v4014
        %vm4910 = vweird.f32 %v4904
        %vm4911 = vmor %vm4909, %vm4910
        %v4912 = vsel %vm4911, %v4904, %v4908
        %v4913 = vand.u32 2147483647, %v4014
        %vm4914 = vcmp.eq.f32.partialorder %v4913, 8.507059e+37
        %v4915 = vand.u32 %v4014, 2147483648
        %v4916 = vor.u32 1.1754944e-38, %v4915
        %v4917 = vsel %vm4914, %v4916, %v4912
        %v4918 = vmul.f32 1.0, %v4917
        %v4919 = vrcp.pop %v4015
        %v4920 = vmul.f32 %v4015, %v4919
        %v4921 = vsub.f32 1.0, %v4920
        %v4922 = vmul.f32 %v4919, %v4921
        %v4923 = vadd.f32 %v4919, %v4922
        %vm4924 = vweird.f32 %v4015
        %vm4925 = vweird.f32 %v4919
        %vm4926 = vmor %vm4924, %vm4925
        %v4927 = vsel %vm4926, %v4919, %v4923
        %v4928 = vand.u32 2147483647, %v4015
        %vm4929 = vcmp.eq.f32.partialorder %v4928, 8.507059e+37
        %v4930 = vand.u32 %v4015, 2147483648
        %v4931 = vor.u32 1.1754944e-38, %v4930
        %v4932 = vsel %vm4929, %v4931, %v4927
        %v4933 = vmul.f32 1.0, %v4932
        %v4934 = vrcp.pop %v4016
        %v4935 = vmul.f32 %v4016, %v4934
        %v4936 = vsub.f32 1.0, %v4935
        %v4937 = vmul.f32 %v4934, %v4936
        %v4938 = vadd.f32 %v4934, %v4937
        %vm4939 = vweird.f32 %v4016
        %vm4940 = vweird.f32 %v4934
        %vm4941 = vmor %vm4939, %vm4940
        %v4942 = vsel %vm4941, %v4934, %v4938
        %v4943 = vand.u32 2147483647, %v4016
        %vm4944 = vcmp.eq.f32.partialorder %v4943, 8.507059e+37
        %v4945 = vand.u32 %v4016, 2147483648
        %v4946 = vor.u32 1.1754944e-38, %v4945
        %v4947 = vsel %vm4944, %v4946, %v4942
        %v4948 = vmul.f32 1.0, %v4947
        %v4949 = vrcp.pop %v4017
        %v4950 = vmul.f32 %v4017, %v4949
        %v4951 = vsub.f32 1.0, %v4950
        %v4952 = vmul.f32 %v4949, %v4951
        %v4953 = vadd.f32 %v4949, %v4952
        %vm4954 = vweird.f32 %v4017
        %vm4955 = vweird.f32 %v4949
        %vm4956 = vmor %vm4954, %vm4955
        %v4957 = vsel %vm4956, %v4949, %v4953
        %v4958 = vand.u32 2147483647, %v4017
        %vm4959 = vcmp.eq.f32.partialorder %v4958, 8.507059e+37
        %v4960 = vand.u32 %v4017, 2147483648
        %v4961 = vor.u32 1.1754944e-38, %v4960
        %v4962 = vsel %vm4959, %v4961, %v4957
        %v4963 = vmul.f32 1.0, %v4962
        %v4964 = vrcp.pop %v4018
        %v4965 = vmul.f32 %v4018, %v4964
        %v4966 = vsub.f32 1.0, %v4965
        %v4967 = vmul.f32 %v4964, %v4966
        %v4968 = vadd.f32 %v4964, %v4967
        %vm4969 = vweird.f32 %v4018
        %vm4970 = vweird.f32 %v4964
        %vm4971 = vmor %vm4969, %vm4970
        %v4972 = vsel %vm4971, %v4964, %v4968
        %v4973 = vand.u32 2147483647, %v4018
        %vm4974 = vcmp.eq.f32.partialorder %v4973, 8.507059e+37
        %v4975 = vand.u32 %v4018, 2147483648
        %v4976 = vor.u32 1.1754944e-38, %v4975
        %v4977 = vsel %vm4974, %v4976, %v4972
        %v4978 = vmul.f32 1.0, %v4977
        %v4979 = vld [vmem:[#allocation4] sm:$0xff]
        %v4980 = vld [vmem:[#allocation4 + $0x8] sm:$0xff]
        %v4981 = vld [vmem:[#allocation4 + $0x10] sm:$0xff]
        %v4982 = vld [vmem:[#allocation4 + $0x18] sm:$0xff]
        %v4983 = vld [vmem:[#allocation4 + $0x20] sm:$0xff]
        %v4984 = vld [vmem:[#allocation4 + $0x28] sm:$0xff]
        %v4985 = vld [vmem:[#allocation4 + $0x30] sm:$0xff]
        %v4986 = vld [vmem:[#allocation4 + $0x38] sm:$0xff]
        %v4987 = vld [vmem:[#allocation4 + $0x40] sm:$0xff]
        %v4988 = vld [vmem:[#allocation4 + $0x48] sm:$0xff]
        %v4989 = vld [vmem:[#allocation4 + $0x50] sm:$0xff]
        %v4990 = vld [vmem:[#allocation4 + $0x58] sm:$0xff]
        %v4991 = vld [vmem:[#allocation4 + $0x60] sm:$0xff]
        %v4992 = vld [vmem:[#allocation4 + $0x68] sm:$0xff]
        %v4993 = vld [vmem:[#allocation4 + $0x70] sm:$0xff]
        %v4994 = vld [vmem:[#allocation4 + $0x78] sm:$0xff]
        %v4995 = vld [vmem:[#allocation4 + $0x80] sm:$0xff]
        %v4996 = vld [vmem:[#allocation4 + $0x88] sm:$0xff]
        %v4997 = vld [vmem:[#allocation4 + $0x90] sm:$0xff]
        %v4998 = vld [vmem:[#allocation4 + $0x98] sm:$0xff]
        %v4999 = vld [vmem:[#allocation4 + $0xa0] sm:$0xff]
        %v5000 = vld [vmem:[#allocation4 + $0xa8] sm:$0xff]
        %v5001 = vld [vmem:[#allocation4 + $0xb0] sm:$0xff]
        %v5002 = vld [vmem:[#allocation4 + $0xb8] sm:$0xff]
        %v5003 = vld [vmem:[#allocation4 + $0xc0] sm:$0xff]
        %v5004 = vld [vmem:[#allocation4 + $0xc8] sm:$0xff]
        %v5005 = vld [vmem:[#allocation4 + $0xd0] sm:$0xff]
        %v5006 = vld [vmem:[#allocation4 + $0xd8] sm:$0xff]
        %v5007 = vld [vmem:[#allocation4 + $0xe0] sm:$0xff]
        %v5008 = vld [vmem:[#allocation4 + $0xe8] sm:$0xff]
        %v5009 = vld [vmem:[#allocation4 + $0xf0] sm:$0xff]
        %v5010 = vld [vmem:[#allocation4 + $0xf8] sm:$0xff]
        %v5011 = vld [vmem:[#allocation4 + $0x100] sm:$0xff]
        %v5012 = vld [vmem:[#allocation4 + $0x108] sm:$0xff]
        %v5013 = vld [vmem:[#allocation4 + $0x110] sm:$0xff]
        %v5014 = vld [vmem:[#allocation4 + $0x118] sm:$0xff]
        %v5015 = vld [vmem:[#allocation4 + $0x120] sm:$0xff]
        %v5016 = vld [vmem:[#allocation4 + $0x128] sm:$0xff]
        %v5017 = vld [vmem:[#allocation4 + $0x130] sm:$0xff]
        %v5018 = vld [vmem:[#allocation4 + $0x138] sm:$0xff]
        %v5019 = vld [vmem:[#allocation4 + $0x140] sm:$0xff]
        %v5020 = vld [vmem:[#allocation4 + $0x148] sm:$0xff]
        %v5021 = vld [vmem:[#allocation4 + $0x150] sm:$0xff]
        %v5022 = vld [vmem:[#allocation4 + $0x158] sm:$0xff]
        %v5023 = vld [vmem:[#allocation4 + $0x160] sm:$0xff]
        %v5024 = vld [vmem:[#allocation4 + $0x168] sm:$0xff]
        %v5025 = vld [vmem:[#allocation4 + $0x170] sm:$0xff]
        %v5026 = vld [vmem:[#allocation4 + $0x178] sm:$0xff]
        %v5027 = vld [vmem:[#allocation4 + $0x180] sm:$0xff]
        %v5028 = vld [vmem:[#allocation4 + $0x188] sm:$0xff]
        %v5029 = vld [vmem:[#allocation4 + $0x190] sm:$0xff]
        %v5030 = vld [vmem:[#allocation4 + $0x198] sm:$0xff]
        %v5031 = vld [vmem:[#allocation4 + $0x1a0] sm:$0xff]
        %v5032 = vld [vmem:[#allocation4 + $0x1a8] sm:$0xff]
        %v5033 = vld [vmem:[#allocation4 + $0x1b0] sm:$0xff]
        %v5034 = vld [vmem:[#allocation4 + $0x1b8] sm:$0xff]
        %v5035 = vld [vmem:[#allocation4 + $0x1c0] sm:$0xff]
        %v5036 = vld [vmem:[#allocation4 + $0x1c8] sm:$0xff]
        %v5037 = vld [vmem:[#allocation4 + $0x1d0] sm:$0xff]
        %v5038 = vld [vmem:[#allocation4 + $0x1d8] sm:$0xff]
        %v5039 = vld [vmem:[#allocation4 + $0x1e0] sm:$0xff]
        %v5040 = vld [vmem:[#allocation4 + $0x1e8] sm:$0xff]
        %v5041 = vld [vmem:[#allocation4 + $0x1f0] sm:$0xff]
        %v5042 = vld [vmem:[#allocation4 + $0x1f8] sm:$0xff]
        %5044 = vset.pattern.permute.xlu0 0
        %5045 = vperm.xlu0 %5044, %v4033
        %v5046 = vpop.permute.xlu0 %5045
        %5049 = vset.pattern.permute.xlu0 0
        %5050 = vperm.xlu0 %5049, %v4048
        %v5051 = vpop.permute.xlu0 %5050
        %5054 = vset.pattern.permute.xlu0 0
        %5055 = vperm.xlu0 %5054, %v4063
        %v5056 = vpop.permute.xlu0 %5055
        %5059 = vset.pattern.permute.xlu0 0
        %5060 = vperm.xlu0 %5059, %v4078
        %v5061 = vpop.permute.xlu0 %5060
        %5064 = vset.pattern.permute.xlu0 0
        %5065 = vperm.xlu0 %5064, %v4093
        %v5066 = vpop.permute.xlu0 %5065
        %5069 = vset.pattern.permute.xlu0 0
        %5070 = vperm.xlu0 %5069, %v4108
        %v5071 = vpop.permute.xlu0 %5070
        %5074 = vset.pattern.permute.xlu0 0
        %5075 = vperm.xlu0 %5074, %v4123
        %v5076 = vpop.permute.xlu0 %5075
        %5079 = vset.pattern.permute.xlu0 0
        %5080 = vperm.xlu0 %5079, %v4138
        %v5081 = vpop.permute.xlu0 %5080
        %5084 = vset.pattern.permute.xlu0 0
        %5085 = vperm.xlu0 %5084, %v4153
        %v5086 = vpop.permute.xlu0 %5085
        %5089 = vset.pattern.permute.xlu0 0
        %5090 = vperm.xlu0 %5089, %v4168
        %v5091 = vpop.permute.xlu0 %5090
        %5094 = vset.pattern.permute.xlu0 0
        %5095 = vperm.xlu0 %5094, %v4183
        %v5096 = vpop.permute.xlu0 %5095
        %5099 = vset.pattern.permute.xlu0 0
        %5100 = vperm.xlu0 %5099, %v4198
        %v5101 = vpop.permute.xlu0 %5100
        %5104 = vset.pattern.permute.xlu0 0
        %5105 = vperm.xlu0 %5104, %v4213
        %v5106 = vpop.permute.xlu0 %5105
        %5109 = vset.pattern.permute.xlu0 0
        %5110 = vperm.xlu0 %5109, %v4228
        %v5111 = vpop.permute.xlu0 %5110
        %5114 = vset.pattern.permute.xlu0 0
        %5115 = vperm.xlu0 %5114, %v4243
        %v5116 = vpop.permute.xlu0 %5115
        %5119 = vset.pattern.permute.xlu0 0
        %5120 = vperm.xlu0 %5119, %v4258
        %v5121 = vpop.permute.xlu0 %5120
        %5124 = vset.pattern.permute.xlu0 0
        %5125 = vperm.xlu0 %5124, %v4273
        %v5126 = vpop.permute.xlu0 %5125
        %5129 = vset.pattern.permute.xlu0 0
        %5130 = vperm.xlu0 %5129, %v4288
        %v5131 = vpop.permute.xlu0 %5130
        %5134 = vset.pattern.permute.xlu0 0
        %5135 = vperm.xlu0 %5134, %v4303
        %v5136 = vpop.permute.xlu0 %5135
        %5139 = vset.pattern.permute.xlu0 0
        %5140 = vperm.xlu0 %5139, %v4318
        %v5141 = vpop.permute.xlu0 %5140
        %5144 = vset.pattern.permute.xlu0 0
        %5145 = vperm.xlu0 %5144, %v4333
        %v5146 = vpop.permute.xlu0 %5145
        %5149 = vset.pattern.permute.xlu0 0
        %5150 = vperm.xlu0 %5149, %v4348
        %v5151 = vpop.permute.xlu0 %5150
        %5154 = vset.pattern.permute.xlu0 0
        %5155 = vperm.xlu0 %5154, %v4363
        %v5156 = vpop.permute.xlu0 %5155
        %5159 = vset.pattern.permute.xlu0 0
        %5160 = vperm.xlu0 %5159, %v4378
        %v5161 = vpop.permute.xlu0 %5160
        %5164 = vset.pattern.permute.xlu0 0
        %5165 = vperm.xlu0 %5164, %v4393
        %v5166 = vpop.permute.xlu0 %5165
        %5169 = vset.pattern.permute.xlu0 0
        %5170 = vperm.xlu0 %5169, %v4408
        %v5171 = vpop.permute.xlu0 %5170
        %5174 = vset.pattern.permute.xlu0 0
        %5175 = vperm.xlu0 %5174, %v4423
        %v5176 = vpop.permute.xlu0 %5175
        %5179 = vset.pattern.permute.xlu0 0
        %5180 = vperm.xlu0 %5179, %v4438
        %v5181 = vpop.permute.xlu0 %5180
        %5184 = vset.pattern.permute.xlu0 0
        %5185 = vperm.xlu0 %5184, %v4453
        %v5186 = vpop.permute.xlu0 %5185
        %5189 = vset.pattern.permute.xlu0 0
        %5190 = vperm.xlu0 %5189, %v4468
        %v5191 = vpop.permute.xlu0 %5190
        %5194 = vset.pattern.permute.xlu0 0
        %5195 = vperm.xlu0 %5194, %v4483
        %v5196 = vpop.permute.xlu0 %5195
        %5199 = vset.pattern.permute.xlu0 0
        %5200 = vperm.xlu0 %5199, %v4498
        %v5201 = vpop.permute.xlu0 %5200
        %5204 = vset.pattern.permute.xlu0 0
        %5205 = vperm.xlu0 %5204, %v4513
        %v5206 = vpop.permute.xlu0 %5205
        %5209 = vset.pattern.permute.xlu0 0
        %5210 = vperm.xlu0 %5209, %v4528
        %v5211 = vpop.permute.xlu0 %5210
        %5214 = vset.pattern.permute.xlu0 0
        %5215 = vperm.xlu0 %5214, %v4543
        %v5216 = vpop.permute.xlu0 %5215
        %5219 = vset.pattern.permute.xlu0 0
        %5220 = vperm.xlu0 %5219, %v4558
        %v5221 = vpop.permute.xlu0 %5220
        %5224 = vset.pattern.permute.xlu0 0
        %5225 = vperm.xlu0 %5224, %v4573
        %v5226 = vpop.permute.xlu0 %5225
        %5229 = vset.pattern.permute.xlu0 0
        %5230 = vperm.xlu0 %5229, %v4588
        %v5231 = vpop.permute.xlu0 %5230
        %5234 = vset.pattern.permute.xlu0 0
        %5235 = vperm.xlu0 %5234, %v4603
        %v5236 = vpop.permute.xlu0 %5235
        %5239 = vset.pattern.permute.xlu0 0
        %5240 = vperm.xlu0 %5239, %v4618
        %v5241 = vpop.permute.xlu0 %5240
        %5244 = vset.pattern.permute.xlu0 0
        %5245 = vperm.xlu0 %5244, %v4633
        %v5246 = vpop.permute.xlu0 %5245
        %5249 = vset.pattern.permute.xlu0 0
        %5250 = vperm.xlu0 %5249, %v4648
        %v5251 = vpop.permute.xlu0 %5250
        %5254 = vset.pattern.permute.xlu0 0
        %5255 = vperm.xlu0 %5254, %v4663
        %v5256 = vpop.permute.xlu0 %5255
        %5259 = vset.pattern.permute.xlu0 0
        %5260 = vperm.xlu0 %5259, %v4678
        %v5261 = vpop.permute.xlu0 %5260
        %5264 = vset.pattern.permute.xlu0 0
        %5265 = vperm.xlu0 %5264, %v4693
        %v5266 = vpop.permute.xlu0 %5265
        %5269 = vset.pattern.permute.xlu0 0
        %5270 = vperm.xlu0 %5269, %v4708
        %v5271 = vpop.permute.xlu0 %5270
        %5274 = vset.pattern.permute.xlu0 0
        %5275 = vperm.xlu0 %5274, %v4723
        %v5276 = vpop.permute.xlu0 %5275
        %5279 = vset.pattern.permute.xlu0 0
        %5280 = vperm.xlu0 %5279, %v4738
        %v5281 = vpop.permute.xlu0 %5280
        %5284 = vset.pattern.permute.xlu0 0
        %5285 = vperm.xlu0 %5284, %v4753
        %v5286 = vpop.permute.xlu0 %5285
        %5289 = vset.pattern.permute.xlu0 0
        %5290 = vperm.xlu0 %5289, %v4768
        %v5291 = vpop.permute.xlu0 %5290
        %5294 = vset.pattern.permute.xlu0 0
        %5295 = vperm.xlu0 %5294, %v4783
        %v5296 = vpop.permute.xlu0 %5295
        %5299 = vset.pattern.permute.xlu0 0
        %5300 = vperm.xlu0 %5299, %v4798
        %v5301 = vpop.permute.xlu0 %5300
        %5304 = vset.pattern.permute.xlu0 0
        %5305 = vperm.xlu0 %5304, %v4813
        %v5306 = vpop.permute.xlu0 %5305
        %5309 = vset.pattern.permute.xlu0 0
        %5310 = vperm.xlu0 %5309, %v4828
        %v5311 = vpop.permute.xlu0 %5310
        %5314 = vset.pattern.permute.xlu0 0
        %5315 = vperm.xlu0 %5314, %v4843
        %v5316 = vpop.permute.xlu0 %5315
        %5319 = vset.pattern.permute.xlu0 0
        %5320 = vperm.xlu0 %5319, %v4858
        %v5321 = vpop.permute.xlu0 %5320
        %5324 = vset.pattern.permute.xlu0 0
        %5325 = vperm.xlu0 %5324, %v4873
        %v5326 = vpop.permute.xlu0 %5325
        %5329 = vset.pattern.permute.xlu0 0
        %5330 = vperm.xlu0 %5329, %v4888
        %v5331 = vpop.permute.xlu0 %5330
        %5334 = vset.pattern.permute.xlu0 0
        %5335 = vperm.xlu0 %5334, %v4903
        %v5336 = vpop.permute.xlu0 %5335
        %5339 = vset.pattern.permute.xlu0 0
        %5340 = vperm.xlu0 %5339, %v4918
        %v5341 = vpop.permute.xlu0 %5340
        %5344 = vset.pattern.permute.xlu0 0
        %5345 = vperm.xlu0 %5344, %v4933
        %v5346 = vpop.permute.xlu0 %5345
        %5349 = vset.pattern.permute.xlu0 0
        %5350 = vperm.xlu0 %5349, %v4948
        %v5351 = vpop.permute.xlu0 %5350
        %5354 = vset.pattern.permute.xlu0 0
        %5355 = vperm.xlu0 %5354, %v4963
        %v5356 = vpop.permute.xlu0 %5355
        %5359 = vset.pattern.permute.xlu0 0
        %5360 = vperm.xlu0 %5359, %v4978
        %v5361 = vpop.permute.xlu0 %5360
        %v5363 = vmul.f32 %v4979, %v5046
        %v5364 = vmul.f32 %v4980, %v5051
        %v5365 = vmul.f32 %v4981, %v5056
        %v5366 = vmul.f32 %v4982, %v5061
        %v5367 = vmul.f32 %v4983, %v5066
        %v5368 = vmul.f32 %v4984, %v5071
        %v5369 = vmul.f32 %v4985, %v5076
        %v5370 = vmul.f32 %v4986, %v5081
        %v5371 = vmul.f32 %v4987, %v5086
        %v5372 = vmul.f32 %v4988, %v5091
        %v5373 = vmul.f32 %v4989, %v5096
        %v5374 = vmul.f32 %v4990, %v5101
        %v5375 = vmul.f32 %v4991, %v5106
        %v5376 = vmul.f32 %v4992, %v5111
        %v5377 = vmul.f32 %v4993, %v5116
        %v5378 = vmul.f32 %v4994, %v5121
        %v5379 = vmul.f32 %v4995, %v5126
        %v5380 = vmul.f32 %v4996, %v5131
        %v5381 = vmul.f32 %v4997, %v5136
        %v5382 = vmul.f32 %v4998, %v5141
        %v5383 = vmul.f32 %v4999, %v5146
        %v5384 = vmul.f32 %v5000, %v5151
        %v5385 = vmul.f32 %v5001, %v5156
        %v5386 = vmul.f32 %v5002, %v5161
        %v5387 = vmul.f32 %v5003, %v5166
        %v5388 = vmul.f32 %v5004, %v5171
        %v5389 = vmul.f32 %v5005, %v5176
        %v5390 = vmul.f32 %v5006, %v5181
        %v5391 = vmul.f32 %v5007, %v5186
        %v5392 = vmul.f32 %v5008, %v5191
        %v5393 = vmul.f32 %v5009, %v5196
        %v5394 = vmul.f32 %v5010, %v5201
        %v5395 = vmul.f32 %v5011, %v5206
        %v5396 = vmul.f32 %v5012, %v5211
        %v5397 = vmul.f32 %v5013, %v5216
        %v5398 = vmul.f32 %v5014, %v5221
        %v5399 = vmul.f32 %v5015, %v5226
        %v5400 = vmul.f32 %v5016, %v5231
        %v5401 = vmul.f32 %v5017, %v5236
        %v5402 = vmul.f32 %v5018, %v5241
        %v5403 = vmul.f32 %v5019, %v5246
        %v5404 = vmul.f32 %v5020, %v5251
        %v5405 = vmul.f32 %v5021, %v5256
        %v5406 = vmul.f32 %v5022, %v5261
        %v5407 = vmul.f32 %v5023, %v5266
        %v5408 = vmul.f32 %v5024, %v5271
        %v5409 = vmul.f32 %v5025, %v5276
        %v5410 = vmul.f32 %v5026, %v5281
        %v5411 = vmul.f32 %v5027, %v5286
        %v5412 = vmul.f32 %v5028, %v5291
        %v5413 = vmul.f32 %v5029, %v5296
        %v5414 = vmul.f32 %v5030, %v5301
        %v5415 = vmul.f32 %v5031, %v5306
        %v5416 = vmul.f32 %v5032, %v5311
        %v5417 = vmul.f32 %v5033, %v5316
        %v5418 = vmul.f32 %v5034, %v5321
        %v5419 = vmul.f32 %v5035, %v5326
        %v5420 = vmul.f32 %v5036, %v5331
        %v5421 = vmul.f32 %v5037, %v5336
        %v5422 = vmul.f32 %v5038, %v5341
        %v5423 = vmul.f32 %v5039, %v5346
        %v5424 = vmul.f32 %v5040, %v5351
        %v5425 = vmul.f32 %v5041, %v5356
        %v5426 = vmul.f32 %v5042, %v5361
        %5443 = vrot.lane.b32.xlu0 %v5379, 24
        %v5444 = vpop.permute.xlu0 %5443
        %5445 = vrot.lane.b32.xlu0 %v5380, 24
        %v5446 = vpop.permute.xlu0 %5445
        %5447 = vrot.lane.b32.xlu0 %v5381, 24
        %v5448 = vpop.permute.xlu0 %5447
        %5449 = vrot.lane.b32.xlu0 %v5382, 24
        %v5450 = vpop.permute.xlu0 %5449
        %5451 = vrot.lane.b32.xlu0 %v5383, 24
        %v5452 = vpop.permute.xlu0 %5451
        %5453 = vrot.lane.b32.xlu0 %v5384, 24
        %v5454 = vpop.permute.xlu0 %5453
        %5455 = vrot.lane.b32.xlu0 %v5385, 24
        %v5456 = vpop.permute.xlu0 %5455
        %5457 = vrot.lane.b32.xlu0 %v5386, 24
        %v5458 = vpop.permute.xlu0 %5457
        %5459 = vrot.lane.b32.xlu0 %v5387, 24
        %v5460 = vpop.permute.xlu0 %5459
        %5461 = vrot.lane.b32.xlu0 %v5388, 24
        %v5462 = vpop.permute.xlu0 %5461
        %5463 = vrot.lane.b32.xlu0 %v5389, 24
        %v5464 = vpop.permute.xlu0 %5463
        %5465 = vrot.lane.b32.xlu0 %v5390, 24
        %v5466 = vpop.permute.xlu0 %5465
        %5467 = vrot.lane.b32.xlu0 %v5391, 24
        %v5468 = vpop.permute.xlu0 %5467
        %5469 = vrot.lane.b32.xlu0 %v5392, 24
        %v5470 = vpop.permute.xlu0 %5469
        %5471 = vrot.lane.b32.xlu0 %v5393, 24
        %v5472 = vpop.permute.xlu0 %5471
        %5473 = vrot.lane.b32.xlu0 %v5394, 24
        %v5474 = vpop.permute.xlu0 %5473
        %5507 = vrot.lane.b32.xlu0 %v5395, 48
        %v5508 = vpop.permute.xlu0 %5507
        %5509 = vrot.lane.b32.xlu0 %v5396, 48
        %v5510 = vpop.permute.xlu0 %5509
        %5511 = vrot.lane.b32.xlu0 %v5397, 48
        %v5512 = vpop.permute.xlu0 %5511
        %5513 = vrot.lane.b32.xlu0 %v5398, 48
        %v5514 = vpop.permute.xlu0 %5513
        %5515 = vrot.lane.b32.xlu0 %v5399, 48
        %v5516 = vpop.permute.xlu0 %5515
        %5517 = vrot.lane.b32.xlu0 %v5400, 48
        %v5518 = vpop.permute.xlu0 %5517
        %5519 = vrot.lane.b32.xlu0 %v5401, 48
        %v5520 = vpop.permute.xlu0 %5519
        %5521 = vrot.lane.b32.xlu0 %v5402, 48
        %v5522 = vpop.permute.xlu0 %5521
        %5523 = vrot.lane.b32.xlu0 %v5403, 48
        %v5524 = vpop.permute.xlu0 %5523
        %5525 = vrot.lane.b32.xlu0 %v5404, 48
        %v5526 = vpop.permute.xlu0 %5525
        %5527 = vrot.lane.b32.xlu0 %v5405, 48
        %v5528 = vpop.permute.xlu0 %5527
        %5529 = vrot.lane.b32.xlu0 %v5406, 48
        %v5530 = vpop.permute.xlu0 %5529
        %5531 = vrot.lane.b32.xlu0 %v5407, 48
        %v5532 = vpop.permute.xlu0 %5531
        %5533 = vrot.lane.b32.xlu0 %v5408, 48
        %v5534 = vpop.permute.xlu0 %5533
        %5535 = vrot.lane.b32.xlu0 %v5409, 48
        %v5536 = vpop.permute.xlu0 %5535
        %5537 = vrot.lane.b32.xlu0 %v5410, 48
        %v5538 = vpop.permute.xlu0 %5537
        %5571 = vrot.lane.b32.xlu0 %v5411, 72
        %v5572 = vpop.permute.xlu0 %5571
        %5573 = vrot.lane.b32.xlu0 %v5412, 72
        %v5574 = vpop.permute.xlu0 %5573
        %5575 = vrot.lane.b32.xlu0 %v5413, 72
        %v5576 = vpop.permute.xlu0 %5575
        %5577 = vrot.lane.b32.xlu0 %v5414, 72
        %v5578 = vpop.permute.xlu0 %5577
        %5579 = vrot.lane.b32.xlu0 %v5415, 72
        %v5580 = vpop.permute.xlu0 %5579
        %5581 = vrot.lane.b32.xlu0 %v5416, 72
        %v5582 = vpop.permute.xlu0 %5581
        %5583 = vrot.lane.b32.xlu0 %v5417, 72
        %v5584 = vpop.permute.xlu0 %5583
        %5585 = vrot.lane.b32.xlu0 %v5418, 72
        %v5586 = vpop.permute.xlu0 %5585
        %5587 = vrot.lane.b32.xlu0 %v5419, 72
        %v5588 = vpop.permute.xlu0 %5587
        %5589 = vrot.lane.b32.xlu0 %v5420, 72
        %v5590 = vpop.permute.xlu0 %5589
        %5591 = vrot.lane.b32.xlu0 %v5421, 72
        %v5592 = vpop.permute.xlu0 %5591
        %5593 = vrot.lane.b32.xlu0 %v5422, 72
        %v5594 = vpop.permute.xlu0 %5593
        %5595 = vrot.lane.b32.xlu0 %v5423, 72
        %v5596 = vpop.permute.xlu0 %5595
        %5597 = vrot.lane.b32.xlu0 %v5424, 72
        %v5598 = vpop.permute.xlu0 %5597
        %5599 = vrot.lane.b32.xlu0 %v5425, 72
        %v5600 = vpop.permute.xlu0 %5599
        %5601 = vrot.lane.b32.xlu0 %v5426, 72
        %v5602 = vpop.permute.xlu0 %5601
        %v5619 = vsel %vm1117, %v5363, %v5444
        %v5620 = vsel %vm1117, %v5364, %v5446
        %v5621 = vsel %vm1117, %v5365, %v5448
        %v5622 = vsel %vm1117, %v5366, %v5450
        %v5623 = vsel %vm1117, %v5367, %v5452
        %v5624 = vsel %vm1117, %v5368, %v5454
        %v5625 = vsel %vm1117, %v5369, %v5456
        %v5626 = vsel %vm1117, %v5370, %v5458
        %v5627 = vsel %vm1117, %v5371, %v5460
        %v5628 = vsel %vm1117, %v5372, %v5462
        %v5629 = vsel %vm1117, %v5373, %v5464
        %v5630 = vsel %vm1117, %v5374, %v5466
        %v5631 = vsel %vm1117, %v5375, %v5468
        %v5632 = vsel %vm1117, %v5376, %v5470
        %v5633 = vsel %vm1117, %v5377, %v5472
        %v5634 = vsel %vm1117, %v5378, %v5474
        %vm5635 = vcmask 392192
        %v5636 = vsel %vm5635, %v5619, %v5508
        %v5637 = vsel %vm5635, %v5620, %v5510
        %v5638 = vsel %vm5635, %v5621, %v5512
        %v5639 = vsel %vm5635, %v5622, %v5514
        %v5640 = vsel %vm5635, %v5623, %v5516
        %v5641 = vsel %vm5635, %v5624, %v5518
        %v5642 = vsel %vm5635, %v5625, %v5520
        %v5643 = vsel %vm5635, %v5626, %v5522
        %v5644 = vsel %vm5635, %v5627, %v5524
        %v5645 = vsel %vm5635, %v5628, %v5526
        %v5646 = vsel %vm5635, %v5629, %v5528
        %v5647 = vsel %vm5635, %v5630, %v5530
        %v5648 = vsel %vm5635, %v5631, %v5532
        %v5649 = vsel %vm5635, %v5632, %v5534
        %v5650 = vsel %vm5635, %v5633, %v5536
        %v5651 = vsel %vm5635, %v5634, %v5538
        %vm5652 = vcmask 588800
        %v5653 = vsel %vm5652, %v5636, %v5572
        %v5654 = vsel %vm5652, %v5637, %v5574
        %v5655 = vsel %vm5652, %v5638, %v5576
        %v5656 = vsel %vm5652, %v5639, %v5578
        %v5657 = vsel %vm5652, %v5640, %v5580
        %v5658 = vsel %vm5652, %v5641, %v5582
        %v5659 = vsel %vm5652, %v5642, %v5584
        %v5660 = vsel %vm5652, %v5643, %v5586
        %v5661 = vsel %vm5652, %v5644, %v5588
        %v5662 = vsel %vm5652, %v5645, %v5590
        %v5663 = vsel %vm5652, %v5646, %v5592
        %v5664 = vsel %vm5652, %v5647, %v5594
        %v5665 = vsel %vm5652, %v5648, %v5596
        %v5666 = vsel %vm5652, %v5649, %v5598
        %v5667 = vsel %vm5652, %v5650, %v5600
        %v5668 = vsel %vm5652, %v5651, %v5602
        %vm5669 = vcmask 785408
        %v5670 = vsel %vm5669, %v5653, 0.0
        %v5671 = vsel %vm5669, %v5654, 0.0
        %v5672 = vsel %vm5669, %v5655, 0.0
        %v5673 = vsel %vm5669, %v5656, 0.0
        %v5674 = vsel %vm5669, %v5657, 0.0
        %v5675 = vsel %vm5669, %v5658, 0.0
        %v5676 = vsel %vm5669, %v5659, 0.0
        %v5677 = vsel %vm5669, %v5660, 0.0
        %v5678 = vsel %vm5669, %v5661, 0.0
        %v5679 = vsel %vm5669, %v5662, 0.0
        %v5680 = vsel %vm5669, %v5663, 0.0
        %v5681 = vsel %vm5669, %v5664, 0.0
        %v5682 = vsel %vm5669, %v5665, 0.0
        %v5683 = vsel %vm5669, %v5666, 0.0
        %v5684 = vsel %vm5669, %v5667, 0.0
        %v5685 = vsel %vm5669, %v5668, 0.0
        %v5686 = vld [vmem:[%s4] sm:$0xff]
        %v5687 = vld [vmem:[%s4 + $0x8] sm:$0xff]
        %v5688 = vld [vmem:[%s4 + $0x10] sm:$0xff]
        %v5689 = vld [vmem:[%s4 + $0x18] sm:$0xff]
        %v5690 = vld [vmem:[%s4 + $0x20] sm:$0xff]
        %v5691 = vld [vmem:[%s4 + $0x28] sm:$0xff]
        %v5692 = vld [vmem:[%s4 + $0x30] sm:$0xff]
        %v5693 = vld [vmem:[%s4 + $0x38] sm:$0xff]
        %v5694 = vld [vmem:[%s4 + $0x40] sm:$0xff]
        %v5695 = vld [vmem:[%s4 + $0x48] sm:$0xff]
        %v5696 = vld [vmem:[%s4 + $0x50] sm:$0xff]
        %v5697 = vld [vmem:[%s4 + $0x58] sm:$0xff]
        %v5698 = vld [vmem:[%s4 + $0x60] sm:$0xff]
        %v5699 = vld [vmem:[%s4 + $0x68] sm:$0xff]
        %v5700 = vld [vmem:[%s4 + $0x70] sm:$0xff]
        %v5701 = vld [vmem:[%s4 + $0x78] sm:$0xff]
        %v5702 = vld [vmem:[%s8] sm:$0x1]
        %v5703 = vperm.slane %v5702, 0
        %5704 = vmatpush.msra.mxu0 %v5701
        %5705 = vmatpush.msra.mxu0 %v5700
        %5706 = vmatpush.msra.mxu0 %v5699
        %5707 = vmatpush.msra.mxu0 %v5698
        %5708 = vmatpush.msra.mxu0 %v5697
        %5709 = vmatpush.msra.mxu0 %v5696
        %5710 = vmatpush.msra.mxu0 %v5695
        %5711 = vmatpush.msra.mxu0 %v5694
        %5712 = vmatpush.msra.mxu0 %v5693
        %5713 = vmatpush.msra.mxu0 %v5692
        %5714 = vmatpush.msra.mxu0 %v5691
        %5715 = vmatpush.msra.mxu0 %v5690
        %5716 = vmatpush.msra.mxu0 %v5689
        %5717 = vmatpush.msra.mxu0 %v5688
        %5718 = vmatpush.msra.mxu0 %v5687
        %5719 = vmatpush.msra.mxu0 %v5686
        %5720 = vmatmul.f32.gmra.mxu0 %v5670
        %v5721 = vpop.f32.mrf.mxu0
        %v5722 = vadd.f32 %v5703, %v5721
        %5723 = vmatmul.f32.gmra.mxu0 %v5671
        %v5724 = vpop.f32.mrf.mxu0
        %v5725 = vadd.f32 %v5703, %v5724
        %5726 = vmatmul.f32.gmra.mxu0 %v5672
        %v5727 = vpop.f32.mrf.mxu0
        %v5728 = vadd.f32 %v5703, %v5727
        %5729 = vmatmul.f32.gmra.mxu0 %v5673
        %v5730 = vpop.f32.mrf.mxu0
        %v5731 = vadd.f32 %v5703, %v5730
        %5732 = vmatmul.f32.gmra.mxu0 %v5674
        %v5733 = vpop.f32.mrf.mxu0
        %v5734 = vadd.f32 %v5703, %v5733
        %5735 = vmatmul.f32.gmra.mxu0 %v5675
        %v5736 = vpop.f32.mrf.mxu0
        %v5737 = vadd.f32 %v5703, %v5736
        %5738 = vmatmul.f32.gmra.mxu0 %v5676
        %v5739 = vpop.f32.mrf.mxu0
        %v5740 = vadd.f32 %v5703, %v5739
        %5741 = vmatmul.f32.gmra.mxu0 %v5677
        %v5742 = vpop.f32.mrf.mxu0
        %v5743 = vadd.f32 %v5703, %v5742
        %5744 = vmatmul.f32.gmra.mxu0 %v5678
        %v5745 = vpop.f32.mrf.mxu0
        %v5746 = vadd.f32 %v5703, %v5745
        %5747 = vmatmul.f32.gmra.mxu0 %v5679
        %v5748 = vpop.f32.mrf.mxu0
        %v5749 = vadd.f32 %v5703, %v5748
        %5750 = vmatmul.f32.gmra.mxu0 %v5680
        %v5751 = vpop.f32.mrf.mxu0
        %v5752 = vadd.f32 %v5703, %v5751
        %5753 = vmatmul.f32.gmra.mxu0 %v5681
        %v5754 = vpop.f32.mrf.mxu0
        %v5755 = vadd.f32 %v5703, %v5754
        %5756 = vmatmul.f32.gmra.mxu0 %v5682
        %v5757 = vpop.f32.mrf.mxu0
        %v5758 = vadd.f32 %v5703, %v5757
        %5759 = vmatmul.f32.gmra.mxu0 %v5683
        %v5760 = vpop.f32.mrf.mxu0
        %v5761 = vadd.f32 %v5703, %v5760
        %5762 = vmatmul.f32.gmra.mxu0 %v5684
        %v5763 = vpop.f32.mrf.mxu0
        %v5764 = vadd.f32 %v5703, %v5763
        %5765 = vmatmul.f32.gmra.mxu0 %v5685
        %v5766 = vpop.f32.mrf.mxu0
        %v5767 = vadd.f32 %v5703, %v5766
        %5768 = vdwg.mxu0
        %v5769 = vld [vmem:[%s445] sm:$0xff]
        %v5770 = vld [vmem:[%s445 + $0x8] sm:$0xff]
        %v5771 = vld [vmem:[%s445 + $0x10] sm:$0xff]
        %v5772 = vld [vmem:[%s445 + $0x18] sm:$0xff]
        %v5773 = vld [vmem:[%s445 + $0x20] sm:$0xff]
        %v5774 = vld [vmem:[%s445 + $0x28] sm:$0xff]
        %v5775 = vld [vmem:[%s445 + $0x30] sm:$0xff]
        %v5776 = vld [vmem:[%s445 + $0x38] sm:$0xff]
        %v5777 = vld [vmem:[%s445 + $0x40] sm:$0xff]
        %v5778 = vld [vmem:[%s445 + $0x48] sm:$0xff]
        %v5779 = vld [vmem:[%s445 + $0x50] sm:$0xff]
        %v5780 = vld [vmem:[%s445 + $0x58] sm:$0xff]
        %v5781 = vld [vmem:[%s445 + $0x60] sm:$0xff]
        %v5782 = vld [vmem:[%s445 + $0x68] sm:$0xff]
        %v5783 = vld [vmem:[%s445 + $0x70] sm:$0xff]
        %v5784 = vld [vmem:[%s445 + $0x78] sm:$0xff]
        %v5785 = vadd.f32 %v5769, %v5722
        %v5786 = vadd.f32 %v5770, %v5725
        %v5787 = vadd.f32 %v5771, %v5728
        %v5788 = vadd.f32 %v5772, %v5731
        %v5789 = vadd.f32 %v5773, %v5734
        %v5790 = vadd.f32 %v5774, %v5737
        %v5791 = vadd.f32 %v5775, %v5740
        %v5792 = vadd.f32 %v5776, %v5743
        %v5793 = vadd.f32 %v5777, %v5746
        %v5794 = vadd.f32 %v5778, %v5749
        %v5795 = vadd.f32 %v5779, %v5752
        %v5796 = vadd.f32 %v5780, %v5755
        %v5797 = vadd.f32 %v5781, %v5758
        %v5798 = vadd.f32 %v5782, %v5761
        %v5799 = vadd.f32 %v5783, %v5764
        %v5800 = vadd.f32 %v5784, %v5767
        %v5801 = vld [vmem:[%s8 + $0x1] sm:$0x1]
        %v5802 = vld [vmem:[%s8 + $0x2] sm:$0x1]
        %5803 = vadd.xlane.f32.xlu0 %v5785
        %v5804 = vpop.xlane.xlu0 %5803
        %5805 = vadd.xlane.f32.xlu0 %v5786
        %v5806 = vpop.xlane.xlu0 %5805
        %5807 = vadd.xlane.f32.xlu0 %v5787
        %v5808 = vpop.xlane.xlu0 %5807
        %5809 = vadd.xlane.f32.xlu0 %v5788
        %v5810 = vpop.xlane.xlu0 %5809
        %5811 = vadd.xlane.f32.xlu0 %v5789
        %v5812 = vpop.xlane.xlu0 %5811
        %5813 = vadd.xlane.f32.xlu0 %v5790
        %v5814 = vpop.xlane.xlu0 %5813
        %5815 = vadd.xlane.f32.xlu0 %v5791
        %v5816 = vpop.xlane.xlu0 %5815
        %5817 = vadd.xlane.f32.xlu0 %v5792
        %v5818 = vpop.xlane.xlu0 %5817
        %5819 = vadd.xlane.f32.xlu0 %v5793
        %v5820 = vpop.xlane.xlu0 %5819
        %5821 = vadd.xlane.f32.xlu0 %v5794
        %v5822 = vpop.xlane.xlu0 %5821
        %5823 = vadd.xlane.f32.xlu0 %v5795
        %v5824 = vpop.xlane.xlu0 %5823
        %5825 = vadd.xlane.f32.xlu0 %v5796
        %v5826 = vpop.xlane.xlu0 %5825
        %5827 = vadd.xlane.f32.xlu0 %v5797
        %v5828 = vpop.xlane.xlu0 %5827
        %5829 = vadd.xlane.f32.xlu0 %v5798
        %v5830 = vpop.xlane.xlu0 %5829
        %5831 = vadd.xlane.f32.xlu0 %v5799
        %v5832 = vpop.xlane.xlu0 %5831
        %5833 = vadd.xlane.f32.xlu0 %v5800
        %v5834 = vpop.xlane.xlu0 %5833
        %v5835 = vmul.f32 %v5804, 0.010416667
        %v5836 = vmul.f32 %v5806, 0.010416667
        %v5837 = vmul.f32 %v5808, 0.010416667
        %v5838 = vmul.f32 %v5810, 0.010416667
        %v5839 = vmul.f32 %v5812, 0.010416667
        %v5840 = vmul.f32 %v5814, 0.010416667
        %v5841 = vmul.f32 %v5816, 0.010416667
        %v5842 = vmul.f32 %v5818, 0.010416667
        %v5843 = vmul.f32 %v5820, 0.010416667
        %v5844 = vmul.f32 %v5822, 0.010416667
        %v5845 = vmul.f32 %v5824, 0.010416667
        %v5846 = vmul.f32 %v5826, 0.010416667
        %v5847 = vmul.f32 %v5828, 0.010416667
        %v5848 = vmul.f32 %v5830, 0.010416667
        %v5849 = vmul.f32 %v5832, 0.010416667
        %v5850 = vmul.f32 %v5834, 0.010416667
        %v5851 = vsub.f32 %v5785, %v5835
        %v5852 = vsub.f32 %v5786, %v5836
        %v5853 = vsub.f32 %v5787, %v5837
        %v5854 = vsub.f32 %v5788, %v5838
        %v5855 = vsub.f32 %v5789, %v5839
        %v5856 = vsub.f32 %v5790, %v5840
        %v5857 = vsub.f32 %v5791, %v5841
        %v5858 = vsub.f32 %v5792, %v5842
        %v5859 = vsub.f32 %v5793, %v5843
        %v5860 = vsub.f32 %v5794, %v5844
        %v5861 = vsub.f32 %v5795, %v5845
        %v5862 = vsub.f32 %v5796, %v5846
        %v5863 = vsub.f32 %v5797, %v5847
        %v5864 = vsub.f32 %v5798, %v5848
        %v5865 = vsub.f32 %v5799, %v5849
        %v5866 = vsub.f32 %v5800, %v5850
        %v5867 = vmul.f32 %v5851, %v5851
        %v5868 = vmul.f32 %v5852, %v5852
        %v5869 = vmul.f32 %v5853, %v5853
        %v5870 = vmul.f32 %v5854, %v5854
        %v5871 = vmul.f32 %v5855, %v5855
        %v5872 = vmul.f32 %v5856, %v5856
        %v5873 = vmul.f32 %v5857, %v5857
        %v5874 = vmul.f32 %v5858, %v5858
        %v5875 = vmul.f32 %v5859, %v5859
        %v5876 = vmul.f32 %v5860, %v5860
        %v5877 = vmul.f32 %v5861, %v5861
        %v5878 = vmul.f32 %v5862, %v5862
        %v5879 = vmul.f32 %v5863, %v5863
        %v5880 = vmul.f32 %v5864, %v5864
        %v5881 = vmul.f32 %v5865, %v5865
        %v5882 = vmul.f32 %v5866, %v5866
        %5883 = vadd.xlane.f32.xlu0 %v5867
        %v5884 = vpop.xlane.xlu0 %5883
        %5885 = vadd.xlane.f32.xlu0 %v5868
        %v5886 = vpop.xlane.xlu0 %5885
        %5887 = vadd.xlane.f32.xlu0 %v5869
        %v5888 = vpop.xlane.xlu0 %5887
        %5889 = vadd.xlane.f32.xlu0 %v5870
        %v5890 = vpop.xlane.xlu0 %5889
        %5891 = vadd.xlane.f32.xlu0 %v5871
        %v5892 = vpop.xlane.xlu0 %5891
        %5893 = vadd.xlane.f32.xlu0 %v5872
        %v5894 = vpop.xlane.xlu0 %5893
        %5895 = vadd.xlane.f32.xlu0 %v5873
        %v5896 = vpop.xlane.xlu0 %5895
        %5897 = vadd.xlane.f32.xlu0 %v5874
        %v5898 = vpop.xlane.xlu0 %5897
        %5899 = vadd.xlane.f32.xlu0 %v5875
        %v5900 = vpop.xlane.xlu0 %5899
        %5901 = vadd.xlane.f32.xlu0 %v5876
        %v5902 = vpop.xlane.xlu0 %5901
        %5903 = vadd.xlane.f32.xlu0 %v5877
        %v5904 = vpop.xlane.xlu0 %5903
        %5905 = vadd.xlane.f32.xlu0 %v5878
        %v5906 = vpop.xlane.xlu0 %5905
        %5907 = vadd.xlane.f32.xlu0 %v5879
        %v5908 = vpop.xlane.xlu0 %5907
        %5909 = vadd.xlane.f32.xlu0 %v5880
        %v5910 = vpop.xlane.xlu0 %5909
        %5911 = vadd.xlane.f32.xlu0 %v5881
        %v5912 = vpop.xlane.xlu0 %5911
        %5913 = vadd.xlane.f32.xlu0 %v5882
        %v5914 = vpop.xlane.xlu0 %5913
        %v5915 = vmul.f32 %v5835, 32.0
        %v5916 = vmul.f32 %v5836, 32.0
        %v5917 = vmul.f32 %v5837, 32.0
        %v5918 = vmul.f32 %v5838, 32.0
        %v5919 = vmul.f32 %v5839, 32.0
        %v5920 = vmul.f32 %v5840, 32.0
        %v5921 = vmul.f32 %v5841, 32.0
        %v5922 = vmul.f32 %v5842, 32.0
        %v5923 = vmul.f32 %v5843, 32.0
        %v5924 = vmul.f32 %v5844, 32.0
        %v5925 = vmul.f32 %v5845, 32.0
        %v5926 = vmul.f32 %v5846, 32.0
        %v5927 = vmul.f32 %v5847, 32.0
        %v5928 = vmul.f32 %v5848, 32.0
        %v5929 = vmul.f32 %v5849, 32.0
        %v5930 = vmul.f32 %v5850, 32.0
        %v5931 = vmul.f32 %v5915, %v5835
        %v5932 = vmul.f32 %v5916, %v5836
        %v5933 = vmul.f32 %v5917, %v5837
        %v5934 = vmul.f32 %v5918, %v5838
        %v5935 = vmul.f32 %v5919, %v5839
        %v5936 = vmul.f32 %v5920, %v5840
        %v5937 = vmul.f32 %v5921, %v5841
        %v5938 = vmul.f32 %v5922, %v5842
        %v5939 = vmul.f32 %v5923, %v5843
        %v5940 = vmul.f32 %v5924, %v5844
        %v5941 = vmul.f32 %v5925, %v5845
        %v5942 = vmul.f32 %v5926, %v5846
        %v5943 = vmul.f32 %v5927, %v5847
        %v5944 = vmul.f32 %v5928, %v5848
        %v5945 = vmul.f32 %v5929, %v5849
        %v5946 = vmul.f32 %v5930, %v5850
        %v5947 = vsub.f32 %v5884, %v5931
        %v5948 = vsub.f32 %v5886, %v5932
        %v5949 = vsub.f32 %v5888, %v5933
        %v5950 = vsub.f32 %v5890, %v5934
        %v5951 = vsub.f32 %v5892, %v5935
        %v5952 = vsub.f32 %v5894, %v5936
        %v5953 = vsub.f32 %v5896, %v5937
        %v5954 = vsub.f32 %v5898, %v5938
        %v5955 = vsub.f32 %v5900, %v5939
        %v5956 = vsub.f32 %v5902, %v5940
        %v5957 = vsub.f32 %v5904, %v5941
        %v5958 = vsub.f32 %v5906, %v5942
        %v5959 = vsub.f32 %v5908, %v5943
        %v5960 = vsub.f32 %v5910, %v5944
        %v5961 = vsub.f32 %v5912, %v5945
        %v5962 = vsub.f32 %v5914, %v5946
        %v5963 = vmul.f32 %v5947, 0.010416667
        %v5964 = vmul.f32 %v5948, 0.010416667
        %v5965 = vmul.f32 %v5949, 0.010416667
        %v5966 = vmul.f32 %v5950, 0.010416667
        %v5967 = vmul.f32 %v5951, 0.010416667
        %v5968 = vmul.f32 %v5952, 0.010416667
        %v5969 = vmul.f32 %v5953, 0.010416667
        %v5970 = vmul.f32 %v5954, 0.010416667
        %v5971 = vmul.f32 %v5955, 0.010416667
        %v5972 = vmul.f32 %v5956, 0.010416667
        %v5973 = vmul.f32 %v5957, 0.010416667
        %v5974 = vmul.f32 %v5958, 0.010416667
        %v5975 = vmul.f32 %v5959, 0.010416667
        %v5976 = vmul.f32 %v5960, 0.010416667
        %v5977 = vmul.f32 %v5961, 0.010416667
        %v5978 = vmul.f32 %v5962, 0.010416667
        %v5979 = vadd.f32 %v5963, 1e-05
        %v5980 = vadd.f32 %v5964, 1e-05
        %v5981 = vadd.f32 %v5965, 1e-05
        %v5982 = vadd.f32 %v5966, 1e-05
        %v5983 = vadd.f32 %v5967, 1e-05
        %v5984 = vadd.f32 %v5968, 1e-05
        %v5985 = vadd.f32 %v5969, 1e-05
        %v5986 = vadd.f32 %v5970, 1e-05
        %v5987 = vadd.f32 %v5971, 1e-05
        %v5988 = vadd.f32 %v5972, 1e-05
        %v5989 = vadd.f32 %v5973, 1e-05
        %v5990 = vadd.f32 %v5974, 1e-05
        %v5991 = vadd.f32 %v5975, 1e-05
        %v5992 = vadd.f32 %v5976, 1e-05
        %v5993 = vadd.f32 %v5977, 1e-05
        %v5994 = vadd.f32 %v5978, 1e-05
        %v5995 = vrsqrt.pop %v5979
        %v5996 = vmul.f32 %v5995, %v5979
        %v5997 = vmul.f32 %v5996, %v5995
        %v5998 = vmul.f32 0.5, %v5997
        %v5999 = vsub.f32 1.5, %v5998
        %v6000 = vmul.f32 %v5995, %v5999
        %vm6001 = vweird.f32 %v5979
        %vm6002 = vweird.f32 %v5995
        %vm6003 = vmor %vm6001, %vm6002
        %v6004 = vsel %vm6003, %v5995, %v6000
        %v6005 = vrsqrt.pop %v5980
        %v6006 = vmul.f32 %v6005, %v5980
        %v6007 = vmul.f32 %v6006, %v6005
        %v6008 = vmul.f32 0.5, %v6007
        %v6009 = vsub.f32 1.5, %v6008
        %v6010 = vmul.f32 %v6005, %v6009
        %vm6011 = vweird.f32 %v5980
        %vm6012 = vweird.f32 %v6005
        %vm6013 = vmor %vm6011, %vm6012
        %v6014 = vsel %vm6013, %v6005, %v6010
        %v6015 = vrsqrt.pop %v5981
        %v6016 = vmul.f32 %v6015, %v5981
        %v6017 = vmul.f32 %v6016, %v6015
        %v6018 = vmul.f32 0.5, %v6017
        %v6019 = vsub.f32 1.5, %v6018
        %v6020 = vmul.f32 %v6015, %v6019
        %vm6021 = vweird.f32 %v5981
        %vm6022 = vweird.f32 %v6015
        %vm6023 = vmor %vm6021, %vm6022
        %v6024 = vsel %vm6023, %v6015, %v6020
        %v6025 = vrsqrt.pop %v5982
        %v6026 = vmul.f32 %v6025, %v5982
        %v6027 = vmul.f32 %v6026, %v6025
        %v6028 = vmul.f32 0.5, %v6027
        %v6029 = vsub.f32 1.5, %v6028
        %v6030 = vmul.f32 %v6025, %v6029
        %vm6031 = vweird.f32 %v5982
        %vm6032 = vweird.f32 %v6025
        %vm6033 = vmor %vm6031, %vm6032
        %v6034 = vsel %vm6033, %v6025, %v6030
        %v6035 = vrsqrt.pop %v5983
        %v6036 = vmul.f32 %v6035, %v5983
        %v6037 = vmul.f32 %v6036, %v6035
        %v6038 = vmul.f32 0.5, %v6037
        %v6039 = vsub.f32 1.5, %v6038
        %v6040 = vmul.f32 %v6035, %v6039
        %vm6041 = vweird.f32 %v5983
        %vm6042 = vweird.f32 %v6035
        %vm6043 = vmor %vm6041, %vm6042
        %v6044 = vsel %vm6043, %v6035, %v6040
        %v6045 = vrsqrt.pop %v5984
        %v6046 = vmul.f32 %v6045, %v5984
        %v6047 = vmul.f32 %v6046, %v6045
        %v6048 = vmul.f32 0.5, %v6047
        %v6049 = vsub.f32 1.5, %v6048
        %v6050 = vmul.f32 %v6045, %v6049
        %vm6051 = vweird.f32 %v5984
        %vm6052 = vweird.f32 %v6045
        %vm6053 = vmor %vm6051, %vm6052
        %v6054 = vsel %vm6053, %v6045, %v6050
        %v6055 = vrsqrt.pop %v5985
        %v6056 = vmul.f32 %v6055, %v5985
        %v6057 = vmul.f32 %v6056, %v6055
        %v6058 = vmul.f32 0.5, %v6057
        %v6059 = vsub.f32 1.5, %v6058
        %v6060 = vmul.f32 %v6055, %v6059
        %vm6061 = vweird.f32 %v5985
        %vm6062 = vweird.f32 %v6055
        %vm6063 = vmor %vm6061, %vm6062
        %v6064 = vsel %vm6063, %v6055, %v6060
        %v6065 = vrsqrt.pop %v5986
        %v6066 = vmul.f32 %v6065, %v5986
        %v6067 = vmul.f32 %v6066, %v6065
        %v6068 = vmul.f32 0.5, %v6067
        %v6069 = vsub.f32 1.5, %v6068
        %v6070 = vmul.f32 %v6065, %v6069
        %vm6071 = vweird.f32 %v5986
        %vm6072 = vweird.f32 %v6065
        %vm6073 = vmor %vm6071, %vm6072
        %v6074 = vsel %vm6073, %v6065, %v6070
        %v6075 = vrsqrt.pop %v5987
        %v6076 = vmul.f32 %v6075, %v5987
        %v6077 = vmul.f32 %v6076, %v6075
        %v6078 = vmul.f32 0.5, %v6077
        %v6079 = vsub.f32 1.5, %v6078
        %v6080 = vmul.f32 %v6075, %v6079
        %vm6081 = vweird.f32 %v5987
        %vm6082 = vweird.f32 %v6075
        %vm6083 = vmor %vm6081, %vm6082
        %v6084 = vsel %vm6083, %v6075, %v6080
        %v6085 = vrsqrt.pop %v5988
        %v6086 = vmul.f32 %v6085, %v5988
        %v6087 = vmul.f32 %v6086, %v6085
        %v6088 = vmul.f32 0.5, %v6087
        %v6089 = vsub.f32 1.5, %v6088
        %v6090 = vmul.f32 %v6085, %v6089
        %vm6091 = vweird.f32 %v5988
        %vm6092 = vweird.f32 %v6085
        %vm6093 = vmor %vm6091, %vm6092
        %v6094 = vsel %vm6093, %v6085, %v6090
        %v6095 = vrsqrt.pop %v5989
        %v6096 = vmul.f32 %v6095, %v5989
        %v6097 = vmul.f32 %v6096, %v6095
        %v6098 = vmul.f32 0.5, %v6097
        %v6099 = vsub.f32 1.5, %v6098
        %v6100 = vmul.f32 %v6095, %v6099
        %vm6101 = vweird.f32 %v5989
        %vm6102 = vweird.f32 %v6095
        %vm6103 = vmor %vm6101, %vm6102
        %v6104 = vsel %vm6103, %v6095, %v6100
        %v6105 = vrsqrt.pop %v5990
        %v6106 = vmul.f32 %v6105, %v5990
        %v6107 = vmul.f32 %v6106, %v6105
        %v6108 = vmul.f32 0.5, %v6107
        %v6109 = vsub.f32 1.5, %v6108
        %v6110 = vmul.f32 %v6105, %v6109
        %vm6111 = vweird.f32 %v5990
        %vm6112 = vweird.f32 %v6105
        %vm6113 = vmor %vm6111, %vm6112
        %v6114 = vsel %vm6113, %v6105, %v6110
        %v6115 = vrsqrt.pop %v5991
        %v6116 = vmul.f32 %v6115, %v5991
        %v6117 = vmul.f32 %v6116, %v6115
        %v6118 = vmul.f32 0.5, %v6117
        %v6119 = vsub.f32 1.5, %v6118
        %v6120 = vmul.f32 %v6115, %v6119
        %vm6121 = vweird.f32 %v5991
        %vm6122 = vweird.f32 %v6115
        %vm6123 = vmor %vm6121, %vm6122
        %v6124 = vsel %vm6123, %v6115, %v6120
        %v6125 = vrsqrt.pop %v5992
        %v6126 = vmul.f32 %v6125, %v5992
        %v6127 = vmul.f32 %v6126, %v6125
        %v6128 = vmul.f32 0.5, %v6127
        %v6129 = vsub.f32 1.5, %v6128
        %v6130 = vmul.f32 %v6125, %v6129
        %vm6131 = vweird.f32 %v5992
        %vm6132 = vweird.f32 %v6125
        %vm6133 = vmor %vm6131, %vm6132
        %v6134 = vsel %vm6133, %v6125, %v6130
        %v6135 = vrsqrt.pop %v5993
        %v6136 = vmul.f32 %v6135, %v5993
        %v6137 = vmul.f32 %v6136, %v6135
        %v6138 = vmul.f32 0.5, %v6137
        %v6139 = vsub.f32 1.5, %v6138
        %v6140 = vmul.f32 %v6135, %v6139
        %vm6141 = vweird.f32 %v5993
        %vm6142 = vweird.f32 %v6135
        %vm6143 = vmor %vm6141, %vm6142
        %v6144 = vsel %vm6143, %v6135, %v6140
        %v6145 = vrsqrt.pop %v5994
        %v6146 = vmul.f32 %v6145, %v5994
        %v6147 = vmul.f32 %v6146, %v6145
        %v6148 = vmul.f32 0.5, %v6147
        %v6149 = vsub.f32 1.5, %v6148
        %v6150 = vmul.f32 %v6145, %v6149
        %vm6151 = vweird.f32 %v5994
        %vm6152 = vweird.f32 %v6145
        %vm6153 = vmor %vm6151, %vm6152
        %v6154 = vsel %vm6153, %v6145, %v6150
        %v6155 = vmul.f32 %v5851, %v6004
        %v6156 = vmul.f32 %v5852, %v6014
        %v6157 = vmul.f32 %v5853, %v6024
        %v6158 = vmul.f32 %v5854, %v6034
        %v6159 = vmul.f32 %v5855, %v6044
        %v6160 = vmul.f32 %v5856, %v6054
        %v6161 = vmul.f32 %v5857, %v6064
        %v6162 = vmul.f32 %v5858, %v6074
        %v6163 = vmul.f32 %v5859, %v6084
        %v6164 = vmul.f32 %v5860, %v6094
        %v6165 = vmul.f32 %v5861, %v6104
        %v6166 = vmul.f32 %v5862, %v6114
        %v6167 = vmul.f32 %v5863, %v6124
        %v6168 = vmul.f32 %v5864, %v6134
        %v6169 = vmul.f32 %v5865, %v6144
        %v6170 = vmul.f32 %v5866, %v6154
        %v6171 = vperm.slane %v5801, 0
        %v6172 = vmul.f32 %v6155, %v6171
        %v6173 = vmul.f32 %v6156, %v6171
        %v6174 = vmul.f32 %v6157, %v6171
        %v6175 = vmul.f32 %v6158, %v6171
        %v6176 = vmul.f32 %v6159, %v6171
        %v6177 = vmul.f32 %v6160, %v6171
        %v6178 = vmul.f32 %v6161, %v6171
        %v6179 = vmul.f32 %v6162, %v6171
        %v6180 = vmul.f32 %v6163, %v6171
        %v6181 = vmul.f32 %v6164, %v6171
        %v6182 = vmul.f32 %v6165, %v6171
        %v6183 = vmul.f32 %v6166, %v6171
        %v6184 = vmul.f32 %v6167, %v6171
        %v6185 = vmul.f32 %v6168, %v6171
        %v6186 = vmul.f32 %v6169, %v6171
        %v6187 = vmul.f32 %v6170, %v6171
        %v6188 = vperm.slane %v5802, 0
        %v6189 = vadd.f32 %v6172, %v6188
        %v6190 = vadd.f32 %v6173, %v6188
        %v6191 = vadd.f32 %v6174, %v6188
        %v6192 = vadd.f32 %v6175, %v6188
        %v6193 = vadd.f32 %v6176, %v6188
        %v6194 = vadd.f32 %v6177, %v6188
        %v6195 = vadd.f32 %v6178, %v6188
        %v6196 = vadd.f32 %v6179, %v6188
        %v6197 = vadd.f32 %v6180, %v6188
        %v6198 = vadd.f32 %v6181, %v6188
        %v6199 = vadd.f32 %v6182, %v6188
        %v6200 = vadd.f32 %v6183, %v6188
        %v6201 = vadd.f32 %v6184, %v6188
        %v6202 = vadd.f32 %v6185, %v6188
        %v6203 = vadd.f32 %v6186, %v6188
        %v6204 = vadd.f32 %v6187, %v6188
        %v6205 = vld [vmem:[%s5] sm:$0xff]
        %v6206 = vld [vmem:[%s5 + $0x8] sm:$0xff]
        %v6207 = vld [vmem:[%s5 + $0x10] sm:$0xff]
        %v6208 = vld [vmem:[%s5 + $0x18] sm:$0xff]
        %v6209 = vld [vmem:[%s5 + $0x20] sm:$0xff]
        %v6210 = vld [vmem:[%s5 + $0x28] sm:$0xff]
        %v6211 = vld [vmem:[%s5 + $0x30] sm:$0xff]
        %v6212 = vld [vmem:[%s5 + $0x38] sm:$0xff]
        %v6213 = vld [vmem:[%s5 + $0x40] sm:$0xff]
        %v6214 = vld [vmem:[%s5 + $0x48] sm:$0xff]
        %v6215 = vld [vmem:[%s5 + $0x50] sm:$0xff]
        %v6216 = vld [vmem:[%s5 + $0x58] sm:$0xff]
        %v6217 = vld [vmem:[%s5 + $0x60] sm:$0xff]
        %v6218 = vld [vmem:[%s5 + $0x68] sm:$0xff]
        %v6219 = vld [vmem:[%s5 + $0x70] sm:$0xff]
        %v6220 = vld [vmem:[%s5 + $0x78] sm:$0xff]
        %v6221 = vld [vmem:[%s5 + $0x80] sm:$0xff]
        %v6222 = vld [vmem:[%s5 + $0x88] sm:$0xff]
        %v6223 = vld [vmem:[%s5 + $0x90] sm:$0xff]
        %v6224 = vld [vmem:[%s5 + $0x98] sm:$0xff]
        %v6225 = vld [vmem:[%s5 + $0xa0] sm:$0xff]
        %v6226 = vld [vmem:[%s5 + $0xa8] sm:$0xff]
        %v6227 = vld [vmem:[%s5 + $0xb0] sm:$0xff]
        %v6228 = vld [vmem:[%s5 + $0xb8] sm:$0xff]
        %v6229 = vld [vmem:[%s5 + $0xc0] sm:$0xff]
        %v6230 = vld [vmem:[%s5 + $0xc8] sm:$0xff]
        %v6231 = vld [vmem:[%s5 + $0xd0] sm:$0xff]
        %v6232 = vld [vmem:[%s5 + $0xd8] sm:$0xff]
        %v6233 = vld [vmem:[%s5 + $0xe0] sm:$0xff]
        %v6234 = vld [vmem:[%s5 + $0xe8] sm:$0xff]
        %v6235 = vld [vmem:[%s5 + $0xf0] sm:$0xff]
        %v6236 = vld [vmem:[%s5 + $0xf8] sm:$0xff]
        %v6237 = vld [vmem:[%s6] sm:$0x3]
        %v6239 = vperm.slane %v6237, 0
        %v6240 = vperm.slane %v6237, 1
        %6243 = vmatpush.msra.mxu0 %v6235
        %6244 = vmatpush.msra.mxu0 %v6233
        %6245 = vmatpush.msra.mxu0 %v6231
        %6246 = vmatpush.msra.mxu0 %v6229
        %6247 = vmatpush.msra.mxu0 %v6227
        %6248 = vmatpush.msra.mxu0 %v6225
        %6249 = vmatpush.msra.mxu0 %v6223
        %6250 = vmatpush.msra.mxu0 %v6221
        %6251 = vmatpush.msra.mxu0 %v6219
        %6252 = vmatpush.msra.mxu0 %v6217
        %6253 = vmatpush.msra.mxu0 %v6215
        %6254 = vmatpush.msra.mxu0 %v6213
        %6255 = vmatpush.msra.mxu0 %v6211
        %6256 = vmatpush.msra.mxu0 %v6209
        %6257 = vmatpush.msra.mxu0 %v6207
        %6258 = vmatpush.msra.mxu0 %v6205
        %6259 = vmatmul.f32.gmra.mxu0 %v6189
        %v6260 = vpop.f32.mrf.mxu0
        %v6261 = vadd.f32 %v6239, %v6260
        %6262 = vmatmul.f32.gmra.mxu0 %v6190
        %v6263 = vpop.f32.mrf.mxu0
        %v6264 = vadd.f32 %v6239, %v6263
        %6265 = vmatmul.f32.gmra.mxu0 %v6191
        %v6266 = vpop.f32.mrf.mxu0
        %v6267 = vadd.f32 %v6239, %v6266
        %6268 = vmatmul.f32.gmra.mxu0 %v6192
        %v6269 = vpop.f32.mrf.mxu0
        %v6270 = vadd.f32 %v6239, %v6269
        %6271 = vmatmul.f32.gmra.mxu0 %v6193
        %v6272 = vpop.f32.mrf.mxu0
        %v6273 = vadd.f32 %v6239, %v6272
        %6274 = vmatmul.f32.gmra.mxu0 %v6194
        %v6275 = vpop.f32.mrf.mxu0
        %v6276 = vadd.f32 %v6239, %v6275
        %6277 = vmatmul.f32.gmra.mxu0 %v6195
        %v6278 = vpop.f32.mrf.mxu0
        %v6279 = vadd.f32 %v6239, %v6278
        %6280 = vmatmul.f32.gmra.mxu0 %v6196
        %v6281 = vpop.f32.mrf.mxu0
        %v6282 = vadd.f32 %v6239, %v6281
        %6283 = vmatmul.f32.gmra.mxu0 %v6197
        %v6284 = vpop.f32.mrf.mxu0
        %v6285 = vadd.f32 %v6239, %v6284
        %6286 = vmatmul.f32.gmra.mxu0 %v6198
        %v6287 = vpop.f32.mrf.mxu0
        %v6288 = vadd.f32 %v6239, %v6287
        %6289 = vmatmul.f32.gmra.mxu0 %v6199
        %v6290 = vpop.f32.mrf.mxu0
        %v6291 = vadd.f32 %v6239, %v6290
        %6292 = vmatmul.f32.gmra.mxu0 %v6200
        %v6293 = vpop.f32.mrf.mxu0
        %v6294 = vadd.f32 %v6239, %v6293
        %6295 = vmatmul.f32.gmra.mxu0 %v6201
        %v6296 = vpop.f32.mrf.mxu0
        %v6297 = vadd.f32 %v6239, %v6296
        %6298 = vmatmul.f32.gmra.mxu0 %v6202
        %v6299 = vpop.f32.mrf.mxu0
        %v6300 = vadd.f32 %v6239, %v6299
        %6301 = vmatmul.f32.gmra.mxu0 %v6203
        %v6302 = vpop.f32.mrf.mxu0
        %v6303 = vadd.f32 %v6239, %v6302
        %6304 = vmatmul.f32.gmra.mxu0 %v6204
        %v6305 = vpop.f32.mrf.mxu0
        %v6306 = vadd.f32 %v6239, %v6305
        %6307 = vdwg.mxu0
        %6308 = vmatpush.msra.mxu0 %v6236
        %6309 = vmatpush.msra.mxu0 %v6234
        %6310 = vmatpush.msra.mxu0 %v6232
        %6311 = vmatpush.msra.mxu0 %v6230
        %6312 = vmatpush.msra.mxu0 %v6228
        %6313 = vmatpush.msra.mxu0 %v6226
        %6314 = vmatpush.msra.mxu0 %v6224
        %6315 = vmatpush.msra.mxu0 %v6222
        %6316 = vmatpush.msra.mxu0 %v6220
        %6317 = vmatpush.msra.mxu0 %v6218
        %6318 = vmatpush.msra.mxu0 %v6216
        %6319 = vmatpush.msra.mxu0 %v6214
        %6320 = vmatpush.msra.mxu0 %v6212
        %6321 = vmatpush.msra.mxu0 %v6210
        %6322 = vmatpush.msra.mxu0 %v6208
        %6323 = vmatpush.msra.mxu0 %v6206
        %6324 = vmatmul.f32.gmra.mxu0 %v6189
        %v6325 = vpop.f32.mrf.mxu0
        %v6326 = vadd.f32 %v6240, %v6325
        %6327 = vmatmul.f32.gmra.mxu0 %v6190
        %v6328 = vpop.f32.mrf.mxu0
        %v6329 = vadd.f32 %v6240, %v6328
        %6330 = vmatmul.f32.gmra.mxu0 %v6191
        %v6331 = vpop.f32.mrf.mxu0
        %v6332 = vadd.f32 %v6240, %v6331
        %6333 = vmatmul.f32.gmra.mxu0 %v6192
        %v6334 = vpop.f32.mrf.mxu0
        %v6335 = vadd.f32 %v6240, %v6334
        %6336 = vmatmul.f32.gmra.mxu0 %v6193
        %v6337 = vpop.f32.mrf.mxu0
        %v6338 = vadd.f32 %v6240, %v6337
        %6339 = vmatmul.f32.gmra.mxu0 %v6194
        %v6340 = vpop.f32.mrf.mxu0
        %v6341 = vadd.f32 %v6240, %v6340
        %6342 = vmatmul.f32.gmra.mxu0 %v6195
        %v6343 = vpop.f32.mrf.mxu0
        %v6344 = vadd.f32 %v6240, %v6343
        %6345 = vmatmul.f32.gmra.mxu0 %v6196
        %v6346 = vpop.f32.mrf.mxu0
        %v6347 = vadd.f32 %v6240, %v6346
        %6348 = vmatmul.f32.gmra.mxu0 %v6197
        %v6349 = vpop.f32.mrf.mxu0
        %v6350 = vadd.f32 %v6240, %v6349
        %6351 = vmatmul.f32.gmra.mxu0 %v6198
        %v6352 = vpop.f32.mrf.mxu0
        %v6353 = vadd.f32 %v6240, %v6352
        %6354 = vmatmul.f32.gmra.mxu0 %v6199
        %v6355 = vpop.f32.mrf.mxu0
        %v6356 = vadd.f32 %v6240, %v6355
        %6357 = vmatmul.f32.gmra.mxu0 %v6200
        %v6358 = vpop.f32.mrf.mxu0
        %v6359 = vadd.f32 %v6240, %v6358
        %6360 = vmatmul.f32.gmra.mxu0 %v6201
        %v6361 = vpop.f32.mrf.mxu0
        %v6362 = vadd.f32 %v6240, %v6361
        %6363 = vmatmul.f32.gmra.mxu0 %v6202
        %v6364 = vpop.f32.mrf.mxu0
        %v6365 = vadd.f32 %v6240, %v6364
        %6366 = vmatmul.f32.gmra.mxu0 %v6203
        %v6367 = vpop.f32.mrf.mxu0
        %v6368 = vadd.f32 %v6240, %v6367
        %6369 = vmatmul.f32.gmra.mxu0 %v6204
        %v6370 = vpop.f32.mrf.mxu0
        %v6371 = vadd.f32 %v6240, %v6370
        %6372 = vdwg.mxu0
        %v6373 = vmax.f32 %v6261, 0.0
        %v6374 = vmax.f32 %v6326, 0.0
        %v6375 = vmax.f32 %v6264, 0.0
        %v6376 = vmax.f32 %v6329, 0.0
        %v6377 = vmax.f32 %v6267, 0.0
        %v6378 = vmax.f32 %v6332, 0.0
        %v6379 = vmax.f32 %v6270, 0.0
        %v6380 = vmax.f32 %v6335, 0.0
        %v6381 = vmax.f32 %v6273, 0.0
        %v6382 = vmax.f32 %v6338, 0.0
        %v6383 = vmax.f32 %v6276, 0.0
        %v6384 = vmax.f32 %v6341, 0.0
        %v6385 = vmax.f32 %v6279, 0.0
        %v6386 = vmax.f32 %v6344, 0.0
        %v6387 = vmax.f32 %v6282, 0.0
        %v6388 = vmax.f32 %v6347, 0.0
        %v6389 = vmax.f32 %v6285, 0.0
        %v6390 = vmax.f32 %v6350, 0.0
        %v6391 = vmax.f32 %v6288, 0.0
        %v6392 = vmax.f32 %v6353, 0.0
        %v6393 = vmax.f32 %v6291, 0.0
        %v6394 = vmax.f32 %v6356, 0.0
        %v6395 = vmax.f32 %v6294, 0.0
        %v6396 = vmax.f32 %v6359, 0.0
        %v6397 = vmax.f32 %v6297, 0.0
        %v6398 = vmax.f32 %v6362, 0.0
        %v6399 = vmax.f32 %v6300, 0.0
        %v6400 = vmax.f32 %v6365, 0.0
        %v6401 = vmax.f32 %v6303, 0.0
        %v6402 = vmax.f32 %v6368, 0.0
        %v6403 = vmax.f32 %v6306, 0.0
        %v6404 = vmax.f32 %v6371, 0.0
        %v6405 = vld [vmem:[%s7] sm:$0xff]
        %v6406 = vld [vmem:[%s7 + $0x8] sm:$0xff]
        %v6407 = vld [vmem:[%s7 + $0x10] sm:$0xff]
        %v6408 = vld [vmem:[%s7 + $0x18] sm:$0xff]
        %v6409 = vld [vmem:[%s7 + $0x20] sm:$0xff]
        %v6410 = vld [vmem:[%s7 + $0x28] sm:$0xff]
        %v6411 = vld [vmem:[%s7 + $0x30] sm:$0xff]
        %v6412 = vld [vmem:[%s7 + $0x38] sm:$0xff]
        %v6413 = vld [vmem:[%s7 + $0x40] sm:$0xff]
        %v6414 = vld [vmem:[%s7 + $0x48] sm:$0xff]
        %v6415 = vld [vmem:[%s7 + $0x50] sm:$0xff]
        %v6416 = vld [vmem:[%s7 + $0x58] sm:$0xff]
        %v6417 = vld [vmem:[%s7 + $0x60] sm:$0xff]
        %v6418 = vld [vmem:[%s7 + $0x68] sm:$0xff]
        %v6419 = vld [vmem:[%s7 + $0x70] sm:$0xff]
        %v6420 = vld [vmem:[%s7 + $0x78] sm:$0xff]
        %v6421 = vld [vmem:[%s7 + $0x80] sm:$0xff]
        %v6422 = vld [vmem:[%s7 + $0x88] sm:$0xff]
        %v6423 = vld [vmem:[%s7 + $0x90] sm:$0xff]
        %v6424 = vld [vmem:[%s7 + $0x98] sm:$0xff]
        %v6425 = vld [vmem:[%s7 + $0xa0] sm:$0xff]
        %v6426 = vld [vmem:[%s7 + $0xa8] sm:$0xff]
        %v6427 = vld [vmem:[%s7 + $0xb0] sm:$0xff]
        %v6428 = vld [vmem:[%s7 + $0xb8] sm:$0xff]
        %v6429 = vld [vmem:[%s7 + $0xc0] sm:$0xff]
        %v6430 = vld [vmem:[%s7 + $0xc8] sm:$0xff]
        %v6431 = vld [vmem:[%s7 + $0xd0] sm:$0xff]
        %v6432 = vld [vmem:[%s7 + $0xd8] sm:$0xff]
        %v6433 = vld [vmem:[%s7 + $0xe0] sm:$0xff]
        %v6434 = vld [vmem:[%s7 + $0xe8] sm:$0xff]
        %v6435 = vld [vmem:[%s7 + $0xf0] sm:$0xff]
        %v6436 = vld [vmem:[%s7 + $0xf8] sm:$0xff]
        %v6437 = vld [vmem:[%s8 + $0x3] sm:$0x1]
        %v6438 = vperm.slane %v6437, 0
        %6439 = vmatpush.msra.mxu0 %v6420
        %6440 = vmatpush.msra.mxu0 %v6419
        %6441 = vmatpush.msra.mxu0 %v6418
        %6442 = vmatpush.msra.mxu0 %v6417
        %6443 = vmatpush.msra.mxu0 %v6416
        %6444 = vmatpush.msra.mxu0 %v6415
        %6445 = vmatpush.msra.mxu0 %v6414
        %6446 = vmatpush.msra.mxu0 %v6413
        %6447 = vmatpush.msra.mxu0 %v6412
        %6448 = vmatpush.msra.mxu0 %v6411
        %6449 = vmatpush.msra.mxu0 %v6410
        %6450 = vmatpush.msra.mxu0 %v6409
        %6451 = vmatpush.msra.mxu0 %v6408
        %6452 = vmatpush.msra.mxu0 %v6407
        %6453 = vmatpush.msra.mxu0 %v6406
        %6454 = vmatpush.msra.mxu0 %v6405
        %6455 = vmatmul.f32.gmra.mxu0 %v6373
        %v6456 = vpop.f32.mrf.mxu0
        %v6457 = vadd.f32 %v6438, %v6456
        %6458 = vmatmul.f32.gmra.mxu0 %v6375
        %v6459 = vpop.f32.mrf.mxu0
        %v6460 = vadd.f32 %v6438, %v6459
        %6461 = vmatmul.f32.gmra.mxu0 %v6377
        %v6462 = vpop.f32.mrf.mxu0
        %v6463 = vadd.f32 %v6438, %v6462
        %6464 = vmatmul.f32.gmra.mxu0 %v6379
        %v6465 = vpop.f32.mrf.mxu0
        %v6466 = vadd.f32 %v6438, %v6465
        %6467 = vmatmul.f32.gmra.mxu0 %v6381
        %v6468 = vpop.f32.mrf.mxu0
        %v6469 = vadd.f32 %v6438, %v6468
        %6470 = vmatmul.f32.gmra.mxu0 %v6383
        %v6471 = vpop.f32.mrf.mxu0
        %v6472 = vadd.f32 %v6438, %v6471
        %6473 = vmatmul.f32.gmra.mxu0 %v6385
        %v6474 = vpop.f32.mrf.mxu0
        %v6475 = vadd.f32 %v6438, %v6474
        %6476 = vmatmul.f32.gmra.mxu0 %v6387
        %v6477 = vpop.f32.mrf.mxu0
        %v6478 = vadd.f32 %v6438, %v6477
        %6479 = vmatmul.f32.gmra.mxu0 %v6389
        %v6480 = vpop.f32.mrf.mxu0
        %v6481 = vadd.f32 %v6438, %v6480
        %6482 = vmatmul.f32.gmra.mxu0 %v6391
        %v6483 = vpop.f32.mrf.mxu0
        %v6484 = vadd.f32 %v6438, %v6483
        %6485 = vmatmul.f32.gmra.mxu0 %v6393
        %v6486 = vpop.f32.mrf.mxu0
        %v6487 = vadd.f32 %v6438, %v6486
        %6488 = vmatmul.f32.gmra.mxu0 %v6395
        %v6489 = vpop.f32.mrf.mxu0
        %v6490 = vadd.f32 %v6438, %v6489
        %6491 = vmatmul.f32.gmra.mxu0 %v6397
        %v6492 = vpop.f32.mrf.mxu0
        %v6493 = vadd.f32 %v6438, %v6492
        %6494 = vmatmul.f32.gmra.mxu0 %v6399
        %v6495 = vpop.f32.mrf.mxu0
        %v6496 = vadd.f32 %v6438, %v6495
        %6497 = vmatmul.f32.gmra.mxu0 %v6401
        %v6498 = vpop.f32.mrf.mxu0
        %v6499 = vadd.f32 %v6438, %v6498
        %6500 = vmatmul.f32.gmra.mxu0 %v6403
        %v6501 = vpop.f32.mrf.mxu0
        %v6502 = vadd.f32 %v6438, %v6501
        %6503 = vdwg.mxu0
        %6504 = vmatpush.msra.mxu0 %v6436
        %6505 = vmatpush.msra.mxu0 %v6435
        %6506 = vmatpush.msra.mxu0 %v6434
        %6507 = vmatpush.msra.mxu0 %v6433
        %6508 = vmatpush.msra.mxu0 %v6432
        %6509 = vmatpush.msra.mxu0 %v6431
        %6510 = vmatpush.msra.mxu0 %v6430
        %6511 = vmatpush.msra.mxu0 %v6429
        %6512 = vmatpush.msra.mxu0 %v6428
        %6513 = vmatpush.msra.mxu0 %v6427
        %6514 = vmatpush.msra.mxu0 %v6426
        %6515 = vmatpush.msra.mxu0 %v6425
        %6516 = vmatpush.msra.mxu0 %v6424
        %6517 = vmatpush.msra.mxu0 %v6423
        %6518 = vmatpush.msra.mxu0 %v6422
        %6519 = vmatpush.msra.mxu0 %v6421
        %6520 = vmatmul.f32.gmra.mxu0 %v6374
        %v6521 = vpop.f32.mrf.mxu0
        %v6522 = vadd.f32 %v6457, %v6521
        %6523 = vmatmul.f32.gmra.mxu0 %v6376
        %v6524 = vpop.f32.mrf.mxu0
        %v6525 = vadd.f32 %v6460, %v6524
        %6526 = vmatmul.f32.gmra.mxu0 %v6378
        %v6527 = vpop.f32.mrf.mxu0
        %v6528 = vadd.f32 %v6463, %v6527
        %6529 = vmatmul.f32.gmra.mxu0 %v6380
        %v6530 = vpop.f32.mrf.mxu0
        %v6531 = vadd.f32 %v6466, %v6530
        %6532 = vmatmul.f32.gmra.mxu0 %v6382
        %v6533 = vpop.f32.mrf.mxu0
        %v6534 = vadd.f32 %v6469, %v6533
        %6535 = vmatmul.f32.gmra.mxu0 %v6384
        %v6536 = vpop.f32.mrf.mxu0
        %v6537 = vadd.f32 %v6472, %v6536
        %6538 = vmatmul.f32.gmra.mxu0 %v6386
        %v6539 = vpop.f32.mrf.mxu0
        %v6540 = vadd.f32 %v6475, %v6539
        %6541 = vmatmul.f32.gmra.mxu0 %v6388
        %v6542 = vpop.f32.mrf.mxu0
        %v6543 = vadd.f32 %v6478, %v6542
        %6544 = vmatmul.f32.gmra.mxu0 %v6390
        %v6545 = vpop.f32.mrf.mxu0
        %v6546 = vadd.f32 %v6481, %v6545
        %6547 = vmatmul.f32.gmra.mxu0 %v6392
        %v6548 = vpop.f32.mrf.mxu0
        %v6549 = vadd.f32 %v6484, %v6548
        %6550 = vmatmul.f32.gmra.mxu0 %v6394
        %v6551 = vpop.f32.mrf.mxu0
        %v6552 = vadd.f32 %v6487, %v6551
        %6553 = vmatmul.f32.gmra.mxu0 %v6396
        %v6554 = vpop.f32.mrf.mxu0
        %v6555 = vadd.f32 %v6490, %v6554
        %6556 = vmatmul.f32.gmra.mxu0 %v6398
        %v6557 = vpop.f32.mrf.mxu0
        %v6558 = vadd.f32 %v6493, %v6557
        %6559 = vmatmul.f32.gmra.mxu0 %v6400
        %v6560 = vpop.f32.mrf.mxu0
        %v6561 = vadd.f32 %v6496, %v6560
        %6562 = vmatmul.f32.gmra.mxu0 %v6402
        %v6563 = vpop.f32.mrf.mxu0
        %v6564 = vadd.f32 %v6499, %v6563
        %6565 = vmatmul.f32.gmra.mxu0 %v6404
        %v6566 = vpop.f32.mrf.mxu0
        %v6567 = vadd.f32 %v6502, %v6566
        %6568 = vdwg.mxu0
        %v6569 = vadd.f32 %v6189, %v6522
        %v6570 = vadd.f32 %v6190, %v6525
        %v6571 = vadd.f32 %v6191, %v6528
        %v6572 = vadd.f32 %v6192, %v6531
        %v6573 = vadd.f32 %v6193, %v6534
        %v6574 = vadd.f32 %v6194, %v6537
        %v6575 = vadd.f32 %v6195, %v6540
        %v6576 = vadd.f32 %v6196, %v6543
        %v6577 = vadd.f32 %v6197, %v6546
        %v6578 = vadd.f32 %v6198, %v6549
        %v6579 = vadd.f32 %v6199, %v6552
        %v6580 = vadd.f32 %v6200, %v6555
        %v6581 = vadd.f32 %v6201, %v6558
        %v6582 = vadd.f32 %v6202, %v6561
        %v6583 = vadd.f32 %v6203, %v6564
        %v6584 = vadd.f32 %v6204, %v6567
        %v6585 = vld [vmem:[%s8 + $0x4] sm:$0x1]
        %v6586 = vld [vmem:[%s8 + $0x5] sm:$0x1]
        %6587 = vadd.xlane.f32.xlu0 %v6569
        %v6588 = vpop.xlane.xlu0 %6587
        %6589 = vadd.xlane.f32.xlu0 %v6570
        %v6590 = vpop.xlane.xlu0 %6589
        %6591 = vadd.xlane.f32.xlu0 %v6571
        %v6592 = vpop.xlane.xlu0 %6591
        %6593 = vadd.xlane.f32.xlu0 %v6572
        %v6594 = vpop.xlane.xlu0 %6593
        %6595 = vadd.xlane.f32.xlu0 %v6573
        %v6596 = vpop.xlane.xlu0 %6595
        %6597 = vadd.xlane.f32.xlu0 %v6574
        %v6598 = vpop.xlane.xlu0 %6597
        %6599 = vadd.xlane.f32.xlu0 %v6575
        %v6600 = vpop.xlane.xlu0 %6599
        %6601 = vadd.xlane.f32.xlu0 %v6576
        %v6602 = vpop.xlane.xlu0 %6601
        %6603 = vadd.xlane.f32.xlu0 %v6577
        %v6604 = vpop.xlane.xlu0 %6603
        %6605 = vadd.xlane.f32.xlu0 %v6578
        %v6606 = vpop.xlane.xlu0 %6605
        %6607 = vadd.xlane.f32.xlu0 %v6579
        %v6608 = vpop.xlane.xlu0 %6607
        %6609 = vadd.xlane.f32.xlu0 %v6580
        %v6610 = vpop.xlane.xlu0 %6609
        %6611 = vadd.xlane.f32.xlu0 %v6581
        %v6612 = vpop.xlane.xlu0 %6611
        %6613 = vadd.xlane.f32.xlu0 %v6582
        %v6614 = vpop.xlane.xlu0 %6613
        %6615 = vadd.xlane.f32.xlu0 %v6583
        %v6616 = vpop.xlane.xlu0 %6615
        %6617 = vadd.xlane.f32.xlu0 %v6584
        %v6618 = vpop.xlane.xlu0 %6617
        %v6619 = vmul.f32 %v6588, 0.010416667
        %v6620 = vmul.f32 %v6590, 0.010416667
        %v6621 = vmul.f32 %v6592, 0.010416667
        %v6622 = vmul.f32 %v6594, 0.010416667
        %v6623 = vmul.f32 %v6596, 0.010416667
        %v6624 = vmul.f32 %v6598, 0.010416667
        %v6625 = vmul.f32 %v6600, 0.010416667
        %v6626 = vmul.f32 %v6602, 0.010416667
        %v6627 = vmul.f32 %v6604, 0.010416667
        %v6628 = vmul.f32 %v6606, 0.010416667
        %v6629 = vmul.f32 %v6608, 0.010416667
        %v6630 = vmul.f32 %v6610, 0.010416667
        %v6631 = vmul.f32 %v6612, 0.010416667
        %v6632 = vmul.f32 %v6614, 0.010416667
        %v6633 = vmul.f32 %v6616, 0.010416667
        %v6634 = vmul.f32 %v6618, 0.010416667
        %v6635 = vsub.f32 %v6569, %v6619
        %v6636 = vsub.f32 %v6570, %v6620
        %v6637 = vsub.f32 %v6571, %v6621
        %v6638 = vsub.f32 %v6572, %v6622
        %v6639 = vsub.f32 %v6573, %v6623
        %v6640 = vsub.f32 %v6574, %v6624
        %v6641 = vsub.f32 %v6575, %v6625
        %v6642 = vsub.f32 %v6576, %v6626
        %v6643 = vsub.f32 %v6577, %v6627
        %v6644 = vsub.f32 %v6578, %v6628
        %v6645 = vsub.f32 %v6579, %v6629
        %v6646 = vsub.f32 %v6580, %v6630
        %v6647 = vsub.f32 %v6581, %v6631
        %v6648 = vsub.f32 %v6582, %v6632
        %v6649 = vsub.f32 %v6583, %v6633
        %v6650 = vsub.f32 %v6584, %v6634
        %v6651 = vmul.f32 %v6635, %v6635
        %v6652 = vmul.f32 %v6636, %v6636
        %v6653 = vmul.f32 %v6637, %v6637
        %v6654 = vmul.f32 %v6638, %v6638
        %v6655 = vmul.f32 %v6639, %v6639
        %v6656 = vmul.f32 %v6640, %v6640
        %v6657 = vmul.f32 %v6641, %v6641
        %v6658 = vmul.f32 %v6642, %v6642
        %v6659 = vmul.f32 %v6643, %v6643
        %v6660 = vmul.f32 %v6644, %v6644
        %v6661 = vmul.f32 %v6645, %v6645
        %v6662 = vmul.f32 %v6646, %v6646
        %v6663 = vmul.f32 %v6647, %v6647
        %v6664 = vmul.f32 %v6648, %v6648
        %v6665 = vmul.f32 %v6649, %v6649
        %v6666 = vmul.f32 %v6650, %v6650
        %6667 = vadd.xlane.f32.xlu0 %v6651
        %v6668 = vpop.xlane.xlu0 %6667
        %6669 = vadd.xlane.f32.xlu0 %v6652
        %v6670 = vpop.xlane.xlu0 %6669
        %6671 = vadd.xlane.f32.xlu0 %v6653
        %v6672 = vpop.xlane.xlu0 %6671
        %6673 = vadd.xlane.f32.xlu0 %v6654
        %v6674 = vpop.xlane.xlu0 %6673
        %6675 = vadd.xlane.f32.xlu0 %v6655
        %v6676 = vpop.xlane.xlu0 %6675
        %6677 = vadd.xlane.f32.xlu0 %v6656
        %v6678 = vpop.xlane.xlu0 %6677
        %6679 = vadd.xlane.f32.xlu0 %v6657
        %v6680 = vpop.xlane.xlu0 %6679
        %6681 = vadd.xlane.f32.xlu0 %v6658
        %v6682 = vpop.xlane.xlu0 %6681
        %6683 = vadd.xlane.f32.xlu0 %v6659
        %v6684 = vpop.xlane.xlu0 %6683
        %6685 = vadd.xlane.f32.xlu0 %v6660
        %v6686 = vpop.xlane.xlu0 %6685
        %6687 = vadd.xlane.f32.xlu0 %v6661
        %v6688 = vpop.xlane.xlu0 %6687
        %6689 = vadd.xlane.f32.xlu0 %v6662
        %v6690 = vpop.xlane.xlu0 %6689
        %6691 = vadd.xlane.f32.xlu0 %v6663
        %v6692 = vpop.xlane.xlu0 %6691
        %6693 = vadd.xlane.f32.xlu0 %v6664
        %v6694 = vpop.xlane.xlu0 %6693
        %6695 = vadd.xlane.f32.xlu0 %v6665
        %v6696 = vpop.xlane.xlu0 %6695
        %6697 = vadd.xlane.f32.xlu0 %v6666
        %v6698 = vpop.xlane.xlu0 %6697
        %v6699 = vmul.f32 %v6619, 32.0
        %v6700 = vmul.f32 %v6620, 32.0
        %v6701 = vmul.f32 %v6621, 32.0
        %v6702 = vmul.f32 %v6622, 32.0
        %v6703 = vmul.f32 %v6623, 32.0
        %v6704 = vmul.f32 %v6624, 32.0
        %v6705 = vmul.f32 %v6625, 32.0
        %v6706 = vmul.f32 %v6626, 32.0
        %v6707 = vmul.f32 %v6627, 32.0
        %v6708 = vmul.f32 %v6628, 32.0
        %v6709 = vmul.f32 %v6629, 32.0
        %v6710 = vmul.f32 %v6630, 32.0
        %v6711 = vmul.f32 %v6631, 32.0
        %v6712 = vmul.f32 %v6632, 32.0
        %v6713 = vmul.f32 %v6633, 32.0
        %v6714 = vmul.f32 %v6634, 32.0
        %v6715 = vmul.f32 %v6699, %v6619
        %v6716 = vmul.f32 %v6700, %v6620
        %v6717 = vmul.f32 %v6701, %v6621
        %v6718 = vmul.f32 %v6702, %v6622
        %v6719 = vmul.f32 %v6703, %v6623
        %v6720 = vmul.f32 %v6704, %v6624
        %v6721 = vmul.f32 %v6705, %v6625
        %v6722 = vmul.f32 %v6706, %v6626
        %v6723 = vmul.f32 %v6707, %v6627
        %v6724 = vmul.f32 %v6708, %v6628
        %v6725 = vmul.f32 %v6709, %v6629
        %v6726 = vmul.f32 %v6710, %v6630
        %v6727 = vmul.f32 %v6711, %v6631
        %v6728 = vmul.f32 %v6712, %v6632
        %v6729 = vmul.f32 %v6713, %v6633
        %v6730 = vmul.f32 %v6714, %v6634
        %v6731 = vsub.f32 %v6668, %v6715
        %v6732 = vsub.f32 %v6670, %v6716
        %v6733 = vsub.f32 %v6672, %v6717
        %v6734 = vsub.f32 %v6674, %v6718
        %v6735 = vsub.f32 %v6676, %v6719
        %v6736 = vsub.f32 %v6678, %v6720
        %v6737 = vsub.f32 %v6680, %v6721
        %v6738 = vsub.f32 %v6682, %v6722
        %v6739 = vsub.f32 %v6684, %v6723
        %v6740 = vsub.f32 %v6686, %v6724
        %v6741 = vsub.f32 %v6688, %v6725
        %v6742 = vsub.f32 %v6690, %v6726
        %v6743 = vsub.f32 %v6692, %v6727
        %v6744 = vsub.f32 %v6694, %v6728
        %v6745 = vsub.f32 %v6696, %v6729
        %v6746 = vsub.f32 %v6698, %v6730
        %v6747 = vmul.f32 %v6731, 0.010416667
        %v6748 = vmul.f32 %v6732, 0.010416667
        %v6749 = vmul.f32 %v6733, 0.010416667
        %v6750 = vmul.f32 %v6734, 0.010416667
        %v6751 = vmul.f32 %v6735, 0.010416667
        %v6752 = vmul.f32 %v6736, 0.010416667
        %v6753 = vmul.f32 %v6737, 0.010416667
        %v6754 = vmul.f32 %v6738, 0.010416667
        %v6755 = vmul.f32 %v6739, 0.010416667
        %v6756 = vmul.f32 %v6740, 0.010416667
        %v6757 = vmul.f32 %v6741, 0.010416667
        %v6758 = vmul.f32 %v6742, 0.010416667
        %v6759 = vmul.f32 %v6743, 0.010416667
        %v6760 = vmul.f32 %v6744, 0.010416667
        %v6761 = vmul.f32 %v6745, 0.010416667
        %v6762 = vmul.f32 %v6746, 0.010416667
        %v6763 = vadd.f32 %v6747, 1e-05
        %v6764 = vadd.f32 %v6748, 1e-05
        %v6765 = vadd.f32 %v6749, 1e-05
        %v6766 = vadd.f32 %v6750, 1e-05
        %v6767 = vadd.f32 %v6751, 1e-05
        %v6768 = vadd.f32 %v6752, 1e-05
        %v6769 = vadd.f32 %v6753, 1e-05
        %v6770 = vadd.f32 %v6754, 1e-05
        %v6771 = vadd.f32 %v6755, 1e-05
        %v6772 = vadd.f32 %v6756, 1e-05
        %v6773 = vadd.f32 %v6757, 1e-05
        %v6774 = vadd.f32 %v6758, 1e-05
        %v6775 = vadd.f32 %v6759, 1e-05
        %v6776 = vadd.f32 %v6760, 1e-05
        %v6777 = vadd.f32 %v6761, 1e-05
        %v6778 = vadd.f32 %v6762, 1e-05
        %v6779 = vrsqrt.pop %v6763
        %v6780 = vmul.f32 %v6779, %v6763
        %v6781 = vmul.f32 %v6780, %v6779
        %v6782 = vmul.f32 0.5, %v6781
        %v6783 = vsub.f32 1.5, %v6782
        %v6784 = vmul.f32 %v6779, %v6783
        %vm6785 = vweird.f32 %v6763
        %vm6786 = vweird.f32 %v6779
        %vm6787 = vmor %vm6785, %vm6786
        %v6788 = vsel %vm6787, %v6779, %v6784
        %v6789 = vrsqrt.pop %v6764
        %v6790 = vmul.f32 %v6789, %v6764
        %v6791 = vmul.f32 %v6790, %v6789
        %v6792 = vmul.f32 0.5, %v6791
        %v6793 = vsub.f32 1.5, %v6792
        %v6794 = vmul.f32 %v6789, %v6793
        %vm6795 = vweird.f32 %v6764
        %vm6796 = vweird.f32 %v6789
        %vm6797 = vmor %vm6795, %vm6796
        %v6798 = vsel %vm6797, %v6789, %v6794
        %v6799 = vrsqrt.pop %v6765
        %v6800 = vmul.f32 %v6799, %v6765
        %v6801 = vmul.f32 %v6800, %v6799
        %v6802 = vmul.f32 0.5, %v6801
        %v6803 = vsub.f32 1.5, %v6802
        %v6804 = vmul.f32 %v6799, %v6803
        %vm6805 = vweird.f32 %v6765
        %vm6806 = vweird.f32 %v6799
        %vm6807 = vmor %vm6805, %vm6806
        %v6808 = vsel %vm6807, %v6799, %v6804
        %v6809 = vrsqrt.pop %v6766
        %v6810 = vmul.f32 %v6809, %v6766
        %v6811 = vmul.f32 %v6810, %v6809
        %v6812 = vmul.f32 0.5, %v6811
        %v6813 = vsub.f32 1.5, %v6812
        %v6814 = vmul.f32 %v6809, %v6813
        %vm6815 = vweird.f32 %v6766
        %vm6816 = vweird.f32 %v6809
        %vm6817 = vmor %vm6815, %vm6816
        %v6818 = vsel %vm6817, %v6809, %v6814
        %v6819 = vrsqrt.pop %v6767
        %v6820 = vmul.f32 %v6819, %v6767
        %v6821 = vmul.f32 %v6820, %v6819
        %v6822 = vmul.f32 0.5, %v6821
        %v6823 = vsub.f32 1.5, %v6822
        %v6824 = vmul.f32 %v6819, %v6823
        %vm6825 = vweird.f32 %v6767
        %vm6826 = vweird.f32 %v6819
        %vm6827 = vmor %vm6825, %vm6826
        %v6828 = vsel %vm6827, %v6819, %v6824
        %v6829 = vrsqrt.pop %v6768
        %v6830 = vmul.f32 %v6829, %v6768
        %v6831 = vmul.f32 %v6830, %v6829
        %v6832 = vmul.f32 0.5, %v6831
        %v6833 = vsub.f32 1.5, %v6832
        %v6834 = vmul.f32 %v6829, %v6833
        %vm6835 = vweird.f32 %v6768
        %vm6836 = vweird.f32 %v6829
        %vm6837 = vmor %vm6835, %vm6836
        %v6838 = vsel %vm6837, %v6829, %v6834
        %v6839 = vrsqrt.pop %v6769
        %v6840 = vmul.f32 %v6839, %v6769
        %v6841 = vmul.f32 %v6840, %v6839
        %v6842 = vmul.f32 0.5, %v6841
        %v6843 = vsub.f32 1.5, %v6842
        %v6844 = vmul.f32 %v6839, %v6843
        %vm6845 = vweird.f32 %v6769
        %vm6846 = vweird.f32 %v6839
        %vm6847 = vmor %vm6845, %vm6846
        %v6848 = vsel %vm6847, %v6839, %v6844
        %v6849 = vrsqrt.pop %v6770
        %v6850 = vmul.f32 %v6849, %v6770
        %v6851 = vmul.f32 %v6850, %v6849
        %v6852 = vmul.f32 0.5, %v6851
        %v6853 = vsub.f32 1.5, %v6852
        %v6854 = vmul.f32 %v6849, %v6853
        %vm6855 = vweird.f32 %v6770
        %vm6856 = vweird.f32 %v6849
        %vm6857 = vmor %vm6855, %vm6856
        %v6858 = vsel %vm6857, %v6849, %v6854
        %v6859 = vrsqrt.pop %v6771
        %v6860 = vmul.f32 %v6859, %v6771
        %v6861 = vmul.f32 %v6860, %v6859
        %v6862 = vmul.f32 0.5, %v6861
        %v6863 = vsub.f32 1.5, %v6862
        %v6864 = vmul.f32 %v6859, %v6863
        %vm6865 = vweird.f32 %v6771
        %vm6866 = vweird.f32 %v6859
        %vm6867 = vmor %vm6865, %vm6866
        %v6868 = vsel %vm6867, %v6859, %v6864
        %v6869 = vrsqrt.pop %v6772
        %v6870 = vmul.f32 %v6869, %v6772
        %v6871 = vmul.f32 %v6870, %v6869
        %v6872 = vmul.f32 0.5, %v6871
        %v6873 = vsub.f32 1.5, %v6872
        %v6874 = vmul.f32 %v6869, %v6873
        %vm6875 = vweird.f32 %v6772
        %vm6876 = vweird.f32 %v6869
        %vm6877 = vmor %vm6875, %vm6876
        %v6878 = vsel %vm6877, %v6869, %v6874
        %v6879 = vrsqrt.pop %v6773
        %v6880 = vmul.f32 %v6879, %v6773
        %v6881 = vmul.f32 %v6880, %v6879
        %v6882 = vmul.f32 0.5, %v6881
        %v6883 = vsub.f32 1.5, %v6882
        %v6884 = vmul.f32 %v6879, %v6883
        %vm6885 = vweird.f32 %v6773
        %vm6886 = vweird.f32 %v6879
        %vm6887 = vmor %vm6885, %vm6886
        %v6888 = vsel %vm6887, %v6879, %v6884
        %v6889 = vrsqrt.pop %v6774
        %v6890 = vmul.f32 %v6889, %v6774
        %v6891 = vmul.f32 %v6890, %v6889
        %v6892 = vmul.f32 0.5, %v6891
        %v6893 = vsub.f32 1.5, %v6892
        %v6894 = vmul.f32 %v6889, %v6893
        %vm6895 = vweird.f32 %v6774
        %vm6896 = vweird.f32 %v6889
        %vm6897 = vmor %vm6895, %vm6896
        %v6898 = vsel %vm6897, %v6889, %v6894
        %v6899 = vrsqrt.pop %v6775
        %v6900 = vmul.f32 %v6899, %v6775
        %v6901 = vmul.f32 %v6900, %v6899
        %v6902 = vmul.f32 0.5, %v6901
        %v6903 = vsub.f32 1.5, %v6902
        %v6904 = vmul.f32 %v6899, %v6903
        %vm6905 = vweird.f32 %v6775
        %vm6906 = vweird.f32 %v6899
        %vm6907 = vmor %vm6905, %vm6906
        %v6908 = vsel %vm6907, %v6899, %v6904
        %v6909 = vrsqrt.pop %v6776
        %v6910 = vmul.f32 %v6909, %v6776
        %v6911 = vmul.f32 %v6910, %v6909
        %v6912 = vmul.f32 0.5, %v6911
        %v6913 = vsub.f32 1.5, %v6912
        %v6914 = vmul.f32 %v6909, %v6913
        %vm6915 = vweird.f32 %v6776
        %vm6916 = vweird.f32 %v6909
        %vm6917 = vmor %vm6915, %vm6916
        %v6918 = vsel %vm6917, %v6909, %v6914
        %v6919 = vrsqrt.pop %v6777
        %v6920 = vmul.f32 %v6919, %v6777
        %v6921 = vmul.f32 %v6920, %v6919
        %v6922 = vmul.f32 0.5, %v6921
        %v6923 = vsub.f32 1.5, %v6922
        %v6924 = vmul.f32 %v6919, %v6923
        %vm6925 = vweird.f32 %v6777
        %vm6926 = vweird.f32 %v6919
        %vm6927 = vmor %vm6925, %vm6926
        %v6928 = vsel %vm6927, %v6919, %v6924
        %v6929 = vrsqrt.pop %v6778
        %v6930 = vmul.f32 %v6929, %v6778
        %v6931 = vmul.f32 %v6930, %v6929
        %v6932 = vmul.f32 0.5, %v6931
        %v6933 = vsub.f32 1.5, %v6932
        %v6934 = vmul.f32 %v6929, %v6933
        %vm6935 = vweird.f32 %v6778
        %vm6936 = vweird.f32 %v6929
        %vm6937 = vmor %vm6935, %vm6936
        %v6938 = vsel %vm6937, %v6929, %v6934
        %v6939 = vmul.f32 %v6635, %v6788
        %v6940 = vmul.f32 %v6636, %v6798
        %v6941 = vmul.f32 %v6637, %v6808
        %v6942 = vmul.f32 %v6638, %v6818
        %v6943 = vmul.f32 %v6639, %v6828
        %v6944 = vmul.f32 %v6640, %v6838
        %v6945 = vmul.f32 %v6641, %v6848
        %v6946 = vmul.f32 %v6642, %v6858
        %v6947 = vmul.f32 %v6643, %v6868
        %v6948 = vmul.f32 %v6644, %v6878
        %v6949 = vmul.f32 %v6645, %v6888
        %v6950 = vmul.f32 %v6646, %v6898
        %v6951 = vmul.f32 %v6647, %v6908
        %v6952 = vmul.f32 %v6648, %v6918
        %v6953 = vmul.f32 %v6649, %v6928
        %v6954 = vmul.f32 %v6650, %v6938
        %v6955 = vperm.slane %v6585, 0
        %v6956 = vmul.f32 %v6939, %v6955
        %v6957 = vmul.f32 %v6940, %v6955
        %v6958 = vmul.f32 %v6941, %v6955
        %v6959 = vmul.f32 %v6942, %v6955
        %v6960 = vmul.f32 %v6943, %v6955
        %v6961 = vmul.f32 %v6944, %v6955
        %v6962 = vmul.f32 %v6945, %v6955
        %v6963 = vmul.f32 %v6946, %v6955
        %v6964 = vmul.f32 %v6947, %v6955
        %v6965 = vmul.f32 %v6948, %v6955
        %v6966 = vmul.f32 %v6949, %v6955
        %v6967 = vmul.f32 %v6950, %v6955
        %v6968 = vmul.f32 %v6951, %v6955
        %v6969 = vmul.f32 %v6952, %v6955
        %v6970 = vmul.f32 %v6953, %v6955
        %v6971 = vmul.f32 %v6954, %v6955
        %v6972 = vperm.slane %v6586, 0
        %v6973 = vadd.f32 %v6956, %v6972
        %v6974 = vadd.f32 %v6957, %v6972
        %v6975 = vadd.f32 %v6958, %v6972
        %v6976 = vadd.f32 %v6959, %v6972
        %v6977 = vadd.f32 %v6960, %v6972
        %v6978 = vadd.f32 %v6961, %v6972
        %v6979 = vadd.f32 %v6962, %v6972
        %v6980 = vadd.f32 %v6963, %v6972
        %v6981 = vadd.f32 %v6964, %v6972
        %v6982 = vadd.f32 %v6965, %v6972
        %v6983 = vadd.f32 %v6966, %v6972
        %v6984 = vadd.f32 %v6967, %v6972
        %v6985 = vadd.f32 %v6968, %v6972
        %v6986 = vadd.f32 %v6969, %v6972
        %v6987 = vadd.f32 %v6970, %v6972
        %v6988 = vadd.f32 %v6971, %v6972
        %6989 = vst [vmem:[%s485] sm:$0xff] %v6973
        %6990 = vst [vmem:[%s485 + $0x8] sm:$0xff] %v6974
        %6991 = vst [vmem:[%s485 + $0x10] sm:$0xff] %v6975
        %6992 = vst [vmem:[%s485 + $0x18] sm:$0xff] %v6976
        %6993 = vst [vmem:[%s485 + $0x20] sm:$0xff] %v6977
        %6994 = vst [vmem:[%s485 + $0x28] sm:$0xff] %v6978
        %6995 = vst [vmem:[%s485 + $0x30] sm:$0xff] %v6979
        %6996 = vst [vmem:[%s485 + $0x38] sm:$0xff] %v6980
        %6997 = vst [vmem:[%s485 + $0x40] sm:$0xff] %v6981
        %6998 = vst [vmem:[%s485 + $0x48] sm:$0xff] %v6982
        %6999 = vst [vmem:[%s485 + $0x50] sm:$0xff] %v6983
        %7000 = vst [vmem:[%s485 + $0x58] sm:$0xff] %v6984
        %7001 = vst [vmem:[%s485 + $0x60] sm:$0xff] %v6985
        %7002 = vst [vmem:[%s485 + $0x68] sm:$0xff] %v6986
        %7003 = vst [vmem:[%s485 + $0x70] sm:$0xff] %v6987
        %7004 = vst [vmem:[%s485 + $0x78] sm:$0xff] %v6988
      $region64: #{default_encoder_forward.3} parent=55 // pred_fallthru
        _
      %s7005 = smul.u32 16, %s26
      %p7006 = scmp.lt.s32.totalorder %s25, 1
      %s7007 = scalar_select %p7006, %s25, 1
      %p7008 = scmp.lt.s32.totalorder %s7005, 47
      %s7009 = scalar_select %p7008, %s7005, 47
      %s7010 = smul.addr %s7007, 48
      %s7011 = sadd.s32 %s7009, %s7010
      %s7012 = smul.addr %s7011, 8
      %s7013 = scalar_lea.vmem %s9, %s7012
      // Predicated region
      $region65: #{default_encoder_forward.3} parent=55 // pred_check
        %p7014 = pneg %p276
      $region66: #{default_encoder_forward.3} parent=55 // pred_check_branch
        %7016 = sbr.rel (%p7014) target = $region68
      $region67: #{default_encoder_forward.3} parent=55 // pred_region
        %s7017 = smul.u32 16, %s26
      $region68: #{default_encoder_forward.3} parent=55 // pred_fallthru
        _
    $region56: #{default_encoder_forward.3} parent=5 // pred_fallthru
      _
    %p7018 = scmp.le.s32.totalorder 2, %s15
    // Predicated region
    $region69: #{default_encoder_forward.3} parent=5 // pred_check
      %p7019 = pneg %p7018
    $region70: #{default_encoder_forward.3} parent=5 // pred_check_branch
      %7021 = sbr.rel (%p7019) target = $region72
    $region71: #{default_encoder_forward.3} parent=5 // pred_region
      %s7022 = ssub.s32 %s15, 2
      // Predicated region
      $region73: #{default_encoder_forward.3} parent=71 // pred_check
        %p7023 = pneg %p282
      $region74: #{default_encoder_forward.3} parent=71 // pred_check_branch
        %7025 = sbr.rel (%p7023) target = $region76
      $region75: #{default_encoder_forward.3} parent=71 // pred_region
        %s7026 = smul.u32 16, %s29
        %p7027 = scmp.lt.s32.totalorder %s28, 1
        %s7028 = scalar_select %p7027, %s28, 1
        %p7029 = scmp.lt.s32.totalorder %s7026, 47
        %s7030 = scalar_select %p7029, %s7026, 47
        %s7031 = smul.addr %s7028, 48
        %s7032 = sadd.s32 %s7030, %s7031
        %s7033 = smul.addr %s7032, 8
        %s7034 = scalar_lea.vmem %s9, %s7033
      $region76: #{default_encoder_forward.3} parent=71 // pred_fallthru
        _
    $region72: #{default_encoder_forward.3} parent=5 // pred_fallthru
      _
  $region6: #{default_encoder_forward.3} parent=0 // loop_footer
    %s19 = sadd.s32 1, %s15
  $region7: #{default_encoder_forward.3} parent=0 // loop_footer_branch
    %14 = sbr.rel target = $region3
  $region8: #{default_encoder_forward.3} parent=0 // loop_exit
    _

</llo_original>
